<compile_context>
chip_gen: v5e
topology: v5e:2x2
jax: 0.10.0
libtpu: 0.0.40
codegen_flags: <defaults>
</compile_context>

<pallas_src>
import jax
import jax.numpy as jnp
from jax import lax
from jax.experimental import pallas as pl
from jax.experimental.pallas import tpu as pltpu

EMBEDDING_DIM = 32
MODEL_DIM = 30
MODEL_DIM_PAD = 32     # pad D 30 -> 32 (zero columns) for lane/sublane friendliness
HIDDEN = 256
BATCH_PAD = 8          # pad batch to one full sublane so VPU/EUP vregs are fully used


def _lstm_kernel(x_ref,             # (T*Bp, Dp)  bf16  time-major, flattened over (t, b)
                 wih1_ref,          # (Dp, 4H)    bf16
                 whh1_ref,          # (H, 4H)     bf16
                 b1_ref,            # (1, 4H)     f32   (b_ih1 + b_hh1)
                 w2_ref,            # (2H, 4H)    bf16  stacked [Wih2; Whh2]
                 b2_ref,            # (1, 4H)     f32   (b_ih2 + b_hh2)
                 wout_ref,          # (H, E)      bf16
                 bout_ref,          # (1, E)      f32
                 o_ref):            # (Bp, E)     f32
    TB = x_ref.shape[0]
    H = whh1_ref.shape[0]
    Bp = o_ref.shape[0]
    T = TB // Bp

    # ---- Hoisted layer-1 input projection: one MXU matmul for all timesteps ----
    # (T*Bp, Dp) @ (Dp, 4H) -> (T*Bp, 4H) f32; removes x@Wih1 (and the
    # lane-misaligned D operand) from the serial recurrence.
    x1 = (jnp.dot(x_ref[...], wih1_ref[...], preferred_element_type=jnp.float32)
          + b1_ref[...])

    b2 = b2_ref[...]

    def gates_to_hc(g, c):
        # PyTorch gate order: i, f, g, o; all nonlinearities / state math in f32
        i = jax.nn.sigmoid(g[:, 0 * H:1 * H])
        f = jax.nn.sigmoid(g[:, 1 * H:2 * H])
        gg = jnp.tanh(g[:, 2 * H:3 * H])
        o = jax.nn.sigmoid(g[:, 3 * H:4 * H])
        c_new = f * c + i * gg
        h_new = o * jnp.tanh(c_new)
        return h_new, c_new

    z = jnp.zeros((Bp, H), jnp.float32)
    h1, c1, h2, c2 = z, z, z, z

    # Fully unrolled time loop (T is small & static): gives the LLO scheduler
    # cross-step visibility so MXU pushes of step t+1 / layer 2 overlap the
    # EUP/VPU work of step t.
    for t in range(T):
        # layer 1: only the recurrent matmul is on the critical path
        g1 = x1[t * Bp:(t + 1) * Bp, :] + jnp.dot(
            h1.astype(jnp.bfloat16), whh1_ref[...],
            preferred_element_type=jnp.float32)
        h1, c1 = gates_to_hc(g1, c1)

        # layer 2: single fused matmul  [h1_new, h2] @ [Wih2; Whh2]
        xh = jnp.concatenate(
            [h1.astype(jnp.bfloat16), h2.astype(jnp.bfloat16)], axis=1)
        g2 = jnp.dot(xh, w2_ref[...], preferred_element_type=jnp.float32) + b2
        h2, c2 = gates_to_hc(g2, c2)

    # ---- Epilogue: leaky_relu -> Linear -> L2-normalize ----
    act = jnp.where(h2 > 0, h2, 0.01 * h2)                  # F.leaky_relu default slope
    emb = (jnp.dot(act.astype(jnp.bfloat16), wout_ref[...],
                   preferred_element_type=jnp.float32) + bout_ref[...])
    ss = jnp.sum(emb * emb, axis=1, keepdims=True)
    inv = lax.rsqrt(jnp.maximum(ss, 1e-24))                  # == 1 / max(||emb||, 1e-12)
    o_ref[...] = emb * inv


def init_params(key, model_dim=MODEL_DIM, hidden=HIDDEN, emb=EMBEDDING_DIM):
    """Deterministic synthetic parameters (PyTorch-style uniform init),
    repacked into the kernel layout (bf16 matmul operands, f32 biases)."""
    ks = jax.random.split(key, 10)
    bound = 1.0 / jnp.sqrt(hidden)

    def u(kk, shape):
        return jax.random.uniform(kk, shape, jnp.float32, -bound, bound)

    # PyTorch-shaped parameters
    w_ih1 = u(ks[0], (4 * hidden, model_dim))
    w_hh1 = u(ks[1], (4 * hidden, hidden))
    b1 = u(ks[2], (4 * hidden,)) + u(ks[3], (4 * hidden,))   # b_ih1 + b_hh1
    w_ih2 = u(ks[4], (4 * hidden, hidden))
    w_hh2 = u(ks[5], (4 * hidden, hidden))
    b2 = u(ks[6], (4 * hidden,)) + u(ks[7], (4 * hidden,))   # b_ih2 + b_hh2
    w_out = u(ks[8], (emb, hidden))
    b_out = u(ks[9], (emb,))

    # Kernel layouts: (in_dim, 4H) weights, D padded 30->32, layer-2 weights
    # stacked for the single fused matmul.
    wih1 = jnp.zeros((MODEL_DIM_PAD, 4 * hidden), jnp.float32)
    wih1 = wih1.at[:model_dim, :].set(jnp.transpose(w_ih1))
    whh1 = jnp.transpose(w_hh1)
    w2 = jnp.concatenate([jnp.transpose(w_ih2), jnp.transpose(w_hh2)], axis=0)
    wout = jnp.transpose(w_out)

    return (
        wih1.astype(jnp.bfloat16),
        whh1.astype(jnp.bfloat16),
        b1[None, :],
        w2.astype(jnp.bfloat16),
        b2[None, :],
        wout.astype(jnp.bfloat16),
        b_out[None, :],
    )


def lstm_forward(x, params):
    """x: (B, T, MODEL_DIM) float32, batch_first (PyTorch convention)."""
    B, T, D = x.shape
    # Pad batch to a full sublane and D to 32 lanes; go time-major and flatten
    # (t, b) so the hoisted projection is one (T*Bp, Dp) matmul and the loop
    # slices sublane-aligned rows x1[t*Bp:(t+1)*Bp].
    x_p = jnp.zeros((BATCH_PAD, T, MODEL_DIM_PAD), jnp.float32)
    x_p = x_p.at[:B, :, :D].set(x)
    x_tm = jnp.transpose(x_p, (1, 0, 2)).reshape(T * BATCH_PAD, MODEL_DIM_PAD)
    x_tm = x_tm.astype(jnp.bfloat16)

    vmem = pl.BlockSpec(memory_space=pltpu.MemorySpace.VMEM)
    out = pl.pallas_call(
        _lstm_kernel,
        out_shape=jax.ShapeDtypeStruct((BATCH_PAD, EMBEDDING_DIM), jnp.float32),
        in_specs=[vmem] * (1 + len(params)),
        out_specs=vmem,
    )(x_tm, *params)
    return out[:B]


if __name__ == "__main__":
    key = jax.random.PRNGKey(0)
    k_param, k_x = jax.random.split(key)

    B, T = 2, 8
    params = init_params(k_param)
    x = jax.random.normal(k_x, (B, T, MODEL_DIM), jnp.float32)

    out = jax.jit(lstm_forward)(x, params)
    out = jax.block_until_ready(out)

    assert out.shape == (B, EMBEDDING_DIM)
    assert bool(jnp.all(jnp.isfinite(out)))
    # rows should be unit-norm after F.normalize
    norms = jnp.sqrt(jnp.sum(out * out, axis=1))
    assert bool(jnp.all(jnp.abs(norms - 1.0) < 1e-3))
    print("KERNEL_OK")
</pallas_src>

<mosaic_0001>
module attributes {stable_mosaic.version = 11 : i64} {
  func.func @_lstm_kernel(%arg0: memref<64x32xbf16, #tpu.memory_space<vmem>>, %arg1: memref<32x1024xbf16, #tpu.memory_space<vmem>>, %arg2: memref<256x1024xbf16, #tpu.memory_space<vmem>>, %arg3: memref<1x1024xf32, #tpu.memory_space<vmem>>, %arg4: memref<512x1024xbf16, #tpu.memory_space<vmem>>, %arg5: memref<1x1024xf32, #tpu.memory_space<vmem>>, %arg6: memref<256x32xbf16, #tpu.memory_space<vmem>>, %arg7: memref<1x32xf32, #tpu.memory_space<vmem>>, %arg8: memref<8x32xf32, #tpu.memory_space<vmem>>) attributes {dimension_semantics = [], scalar_prefetch = 0 : i64, scratch_operands = 0 : i64, tpu.core_type = #tpu.core_type<tc>} {
    %c0 = arith.constant 0 : index
    %c0_0 = arith.constant 0 : index
    %0 = vector.load %arg0[%c0, %c0_0] : memref<64x32xbf16, #tpu.memory_space<vmem>>, vector<64x32xbf16>
    %c0_1 = arith.constant 0 : index
    %c0_2 = arith.constant 0 : index
    %1 = vector.load %arg1[%c0_1, %c0_2] : memref<32x1024xbf16, #tpu.memory_space<vmem>>, vector<32x1024xbf16>
    %cst = arith.constant dense<0.000000e+00> : vector<64x1024xf32>
    %2 = tpu.matmul %0, %1, %cst {dimension_numbers = #tpu.dot_dimension_numbers<[1], [0], [0], [1], [0, 0, 1, 1], [], []>} : vector<64x32xbf16>, vector<32x1024xbf16>, vector<64x1024xf32> -> vector<64x1024xf32>
    %c0_3 = arith.constant 0 : index
    %c0_4 = arith.constant 0 : index
    %3 = vector.load %arg3[%c0_3, %c0_4] : memref<1x1024xf32, #tpu.memory_space<vmem>>, vector<1x1024xf32>
    %4 = vector.broadcast %3 : vector<1x1024xf32> to vector<64x1024xf32>
    %5 = arith.addf %2, %4 : vector<64x1024xf32>
    %c0_5 = arith.constant 0 : index
    %c0_6 = arith.constant 0 : index
    %6 = vector.load %arg5[%c0_5, %c0_6] : memref<1x1024xf32, #tpu.memory_space<vmem>>, vector<1x1024xf32>
    %cst_7 = arith.constant 0.000000e+00 : f32
    %7 = vector.broadcast %cst_7 : f32 to vector<8x256xf32>
    %8 = vector.extract_strided_slice %5 {offsets = [0, 0], sizes = [8, 1024], strides = [1, 1]} : vector<64x1024xf32> to vector<8x1024xf32>
    %9 = arith.truncf %7 : vector<8x256xf32> to vector<8x256xbf16>
    %c0_8 = arith.constant 0 : index
    %c0_9 = arith.constant 0 : index
    %10 = vector.load %arg2[%c0_8, %c0_9] : memref<256x1024xbf16, #tpu.memory_space<vmem>>, vector<256x1024xbf16>
    %cst_10 = arith.constant dense<0.000000e+00> : vector<8x1024xf32>
    %11 = tpu.matmul %9, %10, %cst_10 {dimension_numbers = #tpu.dot_dimension_numbers<[1], [0], [0], [1], [0, 0, 1, 1], [], []>} : vector<8x256xbf16>, vector<256x1024xbf16>, vector<8x1024xf32> -> vector<8x1024xf32>
    %12 = arith.addf %8, %11 : vector<8x1024xf32>
    %13 = vector.extract_strided_slice %12 {offsets = [0, 0], sizes = [8, 256], strides = [1, 1]} : vector<8x1024xf32> to vector<8x256xf32>
    %14 = arith.negf %13 : vector<8x256xf32>
    %15 = math.exp %14 : vector<8x256xf32>
    %cst_11 = arith.constant 1.000000e+00 : f32
    %16 = vector.broadcast %cst_11 : f32 to vector<8x256xf32>
    %17 = arith.addf %16, %15 : vector<8x256xf32>
    %18 = arith.divf %16, %17 : vector<8x256xf32>
    %19 = vector.extract_strided_slice %12 {offsets = [0, 256], sizes = [8, 256], strides = [1, 1]} : vector<8x1024xf32> to vector<8x256xf32>
    %20 = arith.negf %19 : vector<8x256xf32>
    %21 = math.exp %20 : vector<8x256xf32>
    %cst_12 = arith.constant 1.000000e+00 : f32
    %22 = vector.broadcast %cst_12 : f32 to vector<8x256xf32>
    %23 = arith.addf %22, %21 : vector<8x256xf32>
    %24 = arith.divf %22, %23 : vector<8x256xf32>
    %25 = vector.extract_strided_slice %12 {offsets = [0, 512], sizes = [8, 256], strides = [1, 1]} : vector<8x1024xf32> to vector<8x256xf32>
    %26 = math.tanh %25 : vector<8x256xf32>
    %27 = vector.extract_strided_slice %12 {offsets = [0, 768], sizes = [8, 256], strides = [1, 1]} : vector<8x1024xf32> to vector<8x256xf32>
    %28 = arith.negf %27 : vector<8x256xf32>
    %29 = math.exp %28 : vector<8x256xf32>
    %cst_13 = arith.constant 1.000000e+00 : f32
    %30 = vector.broadcast %cst_13 : f32 to vector<8x256xf32>
    %31 = arith.addf %30, %29 : vector<8x256xf32>
    %32 = arith.divf %30, %31 : vector<8x256xf32>
    %33 = arith.mulf %24, %7 : vector<8x256xf32>
    %34 = arith.mulf %18, %26 : vector<8x256xf32>
    %35 = arith.addf %33, %34 : vector<8x256xf32>
    %36 = math.tanh %35 : vector<8x256xf32>
    %37 = arith.mulf %32, %36 : vector<8x256xf32>
    %38 = arith.truncf %37 : vector<8x256xf32> to vector<8x256xbf16>
    %39 = arith.truncf %7 : vector<8x256xf32> to vector<8x256xbf16>
    %40 = tpu.concatenate %38, %39 in 1 : vector<8x256xbf16>, vector<8x256xbf16> -> vector<8x512xbf16>
    %c0_14 = arith.constant 0 : index
    %c0_15 = arith.constant 0 : index
    %41 = vector.load %arg4[%c0_14, %c0_15] : memref<512x1024xbf16, #tpu.memory_space<vmem>>, vector<512x1024xbf16>
    %cst_16 = arith.constant dense<0.000000e+00> : vector<8x1024xf32>
    %42 = tpu.matmul %40, %41, %cst_16 {dimension_numbers = #tpu.dot_dimension_numbers<[1], [0], [0], [1], [0, 0, 1, 1], [], []>} : vector<8x512xbf16>, vector<512x1024xbf16>, vector<8x1024xf32> -> vector<8x1024xf32>
    %43 = vector.broadcast %6 : vector<1x1024xf32> to vector<8x1024xf32>
    %44 = arith.addf %42, %43 : vector<8x1024xf32>
    %45 = vector.extract_strided_slice %44 {offsets = [0, 0], sizes = [8, 256], strides = [1, 1]} : vector<8x1024xf32> to vector<8x256xf32>
    %46 = arith.negf %45 : vector<8x256xf32>
    %47 = math.exp %46 : vector<8x256xf32>
    %cst_17 = arith.constant 1.000000e+00 : f32
    %48 = vector.broadcast %cst_17 : f32 to vector<8x256xf32>
    %49 = arith.addf %48, %47 : vector<8x256xf32>
    %50 = arith.divf %48, %49 : vector<8x256xf32>
    %51 = vector.extract_strided_slice %44 {offsets = [0, 256], sizes = [8, 256], strides = [1, 1]} : vector<8x1024xf32> to vector<8x256xf32>
    %52 = arith.negf %51 : vector<8x256xf32>
    %53 = math.exp %52 : vector<8x256xf32>
    %cst_18 = arith.constant 1.000000e+00 : f32
    %54 = vector.broadcast %cst_18 : f32 to vector<8x256xf32>
    %55 = arith.addf %54, %53 : vector<8x256xf32>
    %56 = arith.divf %54, %55 : vector<8x256xf32>
    %57 = vector.extract_strided_slice %44 {offsets = [0, 512], sizes = [8, 256], strides = [1, 1]} : vector<8x1024xf32> to vector<8x256xf32>
    %58 = math.tanh %57 : vector<8x256xf32>
    %59 = vector.extract_strided_slice %44 {offsets = [0, 768], sizes = [8, 256], strides = [1, 1]} : vector<8x1024xf32> to vector<8x256xf32>
    %60 = arith.negf %59 : vector<8x256xf32>
    %61 = math.exp %60 : vector<8x256xf32>
    %cst_19 = arith.constant 1.000000e+00 : f32
    %62 = vector.broadcast %cst_19 : f32 to vector<8x256xf32>
    %63 = arith.addf %62, %61 : vector<8x256xf32>
    %64 = arith.divf %62, %63 : vector<8x256xf32>
    %65 = arith.mulf %56, %7 : vector<8x256xf32>
    %66 = arith.mulf %50, %58 : vector<8x256xf32>
    %67 = arith.addf %65, %66 : vector<8x256xf32>
    %68 = math.tanh %67 : vector<8x256xf32>
    %69 = arith.mulf %64, %68 : vector<8x256xf32>
    %70 = vector.extract_strided_slice %5 {offsets = [8, 0], sizes = [8, 1024], strides = [1, 1]} : vector<64x1024xf32> to vector<8x1024xf32>
    %71 = arith.truncf %37 : vector<8x256xf32> to vector<8x256xbf16>
    %c0_20 = arith.constant 0 : index
    %c0_21 = arith.constant 0 : index
    %72 = vector.load %arg2[%c0_20, %c0_21] : memref<256x1024xbf16, #tpu.memory_space<vmem>>, vector<256x1024xbf16>
    %cst_22 = arith.constant dense<0.000000e+00> : vector<8x1024xf32>
    %73 = tpu.matmul %71, %72, %cst_22 {dimension_numbers = #tpu.dot_dimension_numbers<[1], [0], [0], [1], [0, 0, 1, 1], [], []>} : vector<8x256xbf16>, vector<256x1024xbf16>, vector<8x1024xf32> -> vector<8x1024xf32>
    %74 = arith.addf %70, %73 : vector<8x1024xf32>
    %75 = vector.extract_strided_slice %74 {offsets = [0, 0], sizes = [8, 256], strides = [1, 1]} : vector<8x1024xf32> to vector<8x256xf32>
    %76 = arith.negf %75 : vector<8x256xf32>
    %77 = math.exp %76 : vector<8x256xf32>
    %cst_23 = arith.constant 1.000000e+00 : f32
    %78 = vector.broadcast %cst_23 : f32 to vector<8x256xf32>
    %79 = arith.addf %78, %77 : vector<8x256xf32>
    %80 = arith.divf %78, %79 : vector<8x256xf32>
    %81 = vector.extract_strided_slice %74 {offsets = [0, 256], sizes = [8, 256], strides = [1, 1]} : vector<8x1024xf32> to vector<8x256xf32>
    %82 = arith.negf %81 : vector<8x256xf32>
    %83 = math.exp %82 : vector<8x256xf32>
    %cst_24 = arith.constant 1.000000e+00 : f32
    %84 = vector.broadcast %cst_24 : f32 to vector<8x256xf32>
    %85 = arith.addf %84, %83 : vector<8x256xf32>
    %86 = arith.divf %84, %85 : vector<8x256xf32>
    %87 = vector.extract_strided_slice %74 {offsets = [0, 512], sizes = [8, 256], strides = [1, 1]} : vector<8x1024xf32> to vector<8x256xf32>
    %88 = math.tanh %87 : vector<8x256xf32>
    %89 = vector.extract_strided_slice %74 {offsets = [0, 768], sizes = [8, 256], strides = [1, 1]} : vector<8x1024xf32> to vector<8x256xf32>
    %90 = arith.negf %89 : vector<8x256xf32>
    %91 = math.exp %90 : vector<8x256xf32>
    %cst_25 = arith.constant 1.000000e+00 : f32
    %92 = vector.broadcast %cst_25 : f32 to vector<8x256xf32>
    %93 = arith.addf %92, %91 : vector<8x256xf32>
    %94 = arith.divf %92, %93 : vector<8x256xf32>
    %95 = arith.mulf %86, %35 : vector<8x256xf32>
    %96 = arith.mulf %80, %88 : vector<8x256xf32>
    %97 = arith.addf %95, %96 : vector<8x256xf32>
    %98 = math.tanh %97 : vector<8x256xf32>
    %99 = arith.mulf %94, %98 : vector<8x256xf32>
    %100 = arith.truncf %99 : vector<8x256xf32> to vector<8x256xbf16>
    %101 = arith.truncf %69 : vector<8x256xf32> to vector<8x256xbf16>
    %102 = tpu.concatenate %100, %101 in 1 : vector<8x256xbf16>, vector<8x256xbf16> -> vector<8x512xbf16>
    %c0_26 = arith.constant 0 : index
    %c0_27 = arith.constant 0 : index
    %103 = vector.load %arg4[%c0_26, %c0_27] : memref<512x1024xbf16, #tpu.memory_space<vmem>>, vector<512x1024xbf16>
    %cst_28 = arith.constant dense<0.000000e+00> : vector<8x1024xf32>
    %104 = tpu.matmul %102, %103, %cst_28 {dimension_numbers = #tpu.dot_dimension_numbers<[1], [0], [0], [1], [0, 0, 1, 1], [], []>} : vector<8x512xbf16>, vector<512x1024xbf16>, vector<8x1024xf32> -> vector<8x1024xf32>
    %105 = vector.broadcast %6 : vector<1x1024xf32> to vector<8x1024xf32>
    %106 = arith.addf %104, %105 : vector<8x1024xf32>
    %107 = vector.extract_strided_slice %106 {offsets = [0, 0], sizes = [8, 256], strides = [1, 1]} : vector<8x1024xf32> to vector<8x256xf32>
    %108 = arith.negf %107 : vector<8x256xf32>
    %109 = math.exp %108 : vector<8x256xf32>
    %cst_29 = arith.constant 1.000000e+00 : f32
    %110 = vector.broadcast %cst_29 : f32 to vector<8x256xf32>
    %111 = arith.addf %110, %109 : vector<8x256xf32>
    %112 = arith.divf %110, %111 : vector<8x256xf32>
    %113 = vector.extract_strided_slice %106 {offsets = [0, 256], sizes = [8, 256], strides = [1, 1]} : vector<8x1024xf32> to vector<8x256xf32>
    %114 = arith.negf %113 : vector<8x256xf32>
    %115 = math.exp %114 : vector<8x256xf32>
    %cst_30 = arith.constant 1.000000e+00 : f32
    %116 = vector.broadcast %cst_30 : f32 to vector<8x256xf32>
    %117 = arith.addf %116, %115 : vector<8x256xf32>
    %118 = arith.divf %116, %117 : vector<8x256xf32>
    %119 = vector.extract_strided_slice %106 {offsets = [0, 512], sizes = [8, 256], strides = [1, 1]} : vector<8x1024xf32> to vector<8x256xf32>
    %120 = math.tanh %119 : vector<8x256xf32>
    %121 = vector.extract_strided_slice %106 {offsets = [0, 768], sizes = [8, 256], strides = [1, 1]} : vector<8x1024xf32> to vector<8x256xf32>
    %122 = arith.negf %121 : vector<8x256xf32>
    %123 = math.exp %122 : vector<8x256xf32>
    %cst_31 = arith.constant 1.000000e+00 : f32
    %124 = vector.broadcast %cst_31 : f32 to vector<8x256xf32>
    %125 = arith.addf %124, %123 : vector<8x256xf32>
    %126 = arith.divf %124, %125 : vector<8x256xf32>
    %127 = arith.mulf %118, %67 : vector<8x256xf32>
    %128 = arith.mulf %112, %120 : vector<8x256xf32>
    %129 = arith.addf %127, %128 : vector<8x256xf32>
    %130 = math.tanh %129 : vector<8x256xf32>
    %131 = arith.mulf %126, %130 : vector<8x256xf32>
    %132 = vector.extract_strided_slice %5 {offsets = [16, 0], sizes = [8, 1024], strides = [1, 1]} : vector<64x1024xf32> to vector<8x1024xf32>
    %133 = arith.truncf %99 : vector<8x256xf32> to vector<8x256xbf16>
    %c0_32 = arith.constant 0 : index
    %c0_33 = arith.constant 0 : index
    %134 = vector.load %arg2[%c0_32, %c0_33] : memref<256x1024xbf16, #tpu.memory_space<vmem>>, vector<256x1024xbf16>
    %cst_34 = arith.constant dense<0.000000e+00> : vector<8x1024xf32>
    %135 = tpu.matmul %133, %134, %cst_34 {dimension_numbers = #tpu.dot_dimension_numbers<[1], [0], [0], [1], [0, 0, 1, 1], [], []>} : vector<8x256xbf16>, vector<256x1024xbf16>, vector<8x1024xf32> -> vector<8x1024xf32>
    %136 = arith.addf %132, %135 : vector<8x1024xf32>
    %137 = vector.extract_strided_slice %136 {offsets = [0, 0], sizes = [8, 256], strides = [1, 1]} : vector<8x1024xf32> to vector<8x256xf32>
    %138 = arith.negf %137 : vector<8x256xf32>
    %139 = math.exp %138 : vector<8x256xf32>
    %cst_35 = arith.constant 1.000000e+00 : f32
    %140 = vector.broadcast %cst_35 : f32 to vector<8x256xf32>
    %141 = arith.addf %140, %139 : vector<8x256xf32>
    %142 = arith.divf %140, %141 : vector<8x256xf32>
    %143 = vector.extract_strided_slice %136 {offsets = [0, 256], sizes = [8, 256], strides = [1, 1]} : vector<8x1024xf32> to vector<8x256xf32>
    %144 = arith.negf %143 : vector<8x256xf32>
    %145 = math.exp %144 : vector<8x256xf32>
    %cst_36 = arith.constant 1.000000e+00 : f32
    %146 = vector.broadcast %cst_36 : f32 to vector<8x256xf32>
    %147 = arith.addf %146, %145 : vector<8x256xf32>
    %148 = arith.divf %146, %147 : vector<8x256xf32>
    %149 = vector.extract_strided_slice %136 {offsets = [0, 512], sizes = [8, 256], strides = [1, 1]} : vector<8x1024xf32> to vector<8x256xf32>
    %150 = math.tanh %149 : vector<8x256xf32>
    %151 = vector.extract_strided_slice %136 {offsets = [0, 768], sizes = [8, 256], strides = [1, 1]} : vector<8x1024xf32> to vector<8x256xf32>
    %152 = arith.negf %151 : vector<8x256xf32>
    %153 = math.exp %152 : vector<8x256xf32>
    %cst_37 = arith.constant 1.000000e+00 : f32
    %154 = vector.broadcast %cst_37 : f32 to vector<8x256xf32>
    %155 = arith.addf %154, %153 : vector<8x256xf32>
    %156 = arith.divf %154, %155 : vector<8x256xf32>
    %157 = arith.mulf %148, %97 : vector<8x256xf32>
    %158 = arith.mulf %142, %150 : vector<8x256xf32>
    %159 = arith.addf %157, %158 : vector<8x256xf32>
    %160 = math.tanh %159 : vector<8x256xf32>
    %161 = arith.mulf %156, %160 : vector<8x256xf32>
    %162 = arith.truncf %161 : vector<8x256xf32> to vector<8x256xbf16>
    %163 = arith.truncf %131 : vector<8x256xf32> to vector<8x256xbf16>
    %164 = tpu.concatenate %162, %163 in 1 : vector<8x256xbf16>, vector<8x256xbf16> -> vector<8x512xbf16>
    %c0_38 = arith.constant 0 : index
    %c0_39 = arith.constant 0 : index
    %165 = vector.load %arg4[%c0_38, %c0_39] : memref<512x1024xbf16, #tpu.memory_space<vmem>>, vector<512x1024xbf16>
    %cst_40 = arith.constant dense<0.000000e+00> : vector<8x1024xf32>
    %166 = tpu.matmul %164, %165, %cst_40 {dimension_numbers = #tpu.dot_dimension_numbers<[1], [0], [0], [1], [0, 0, 1, 1], [], []>} : vector<8x512xbf16>, vector<512x1024xbf16>, vector<8x1024xf32> -> vector<8x1024xf32>
    %167 = vector.broadcast %6 : vector<1x1024xf32> to vector<8x1024xf32>
    %168 = arith.addf %166, %167 : vector<8x1024xf32>
    %169 = vector.extract_strided_slice %168 {offsets = [0, 0], sizes = [8, 256], strides = [1, 1]} : vector<8x1024xf32> to vector<8x256xf32>
    %170 = arith.negf %169 : vector<8x256xf32>
    %171 = math.exp %170 : vector<8x256xf32>
    %cst_41 = arith.constant 1.000000e+00 : f32
    %172 = vector.broadcast %cst_41 : f32 to vector<8x256xf32>
    %173 = arith.addf %172, %171 : vector<8x256xf32>
    %174 = arith.divf %172, %173 : vector<8x256xf32>
    %175 = vector.extract_strided_slice %168 {offsets = [0, 256], sizes = [8, 256], strides = [1, 1]} : vector<8x1024xf32> to vector<8x256xf32>
    %176 = arith.negf %175 : vector<8x256xf32>
    %177 = math.exp %176 : vector<8x256xf32>
    %cst_42 = arith.constant 1.000000e+00 : f32
    %178 = vector.broadcast %cst_42 : f32 to vector<8x256xf32>
    %179 = arith.addf %178, %177 : vector<8x256xf32>
    %180 = arith.divf %178, %179 : vector<8x256xf32>
    %181 = vector.extract_strided_slice %168 {offsets = [0, 512], sizes = [8, 256], strides = [1, 1]} : vector<8x1024xf32> to vector<8x256xf32>
    %182 = math.tanh %181 : vector<8x256xf32>
    %183 = vector.extract_strided_slice %168 {offsets = [0, 768], sizes = [8, 256], strides = [1, 1]} : vector<8x1024xf32> to vector<8x256xf32>
    %184 = arith.negf %183 : vector<8x256xf32>
    %185 = math.exp %184 : vector<8x256xf32>
    %cst_43 = arith.constant 1.000000e+00 : f32
    %186 = vector.broadcast %cst_43 : f32 to vector<8x256xf32>
    %187 = arith.addf %186, %185 : vector<8x256xf32>
    %188 = arith.divf %186, %187 : vector<8x256xf32>
    %189 = arith.mulf %180, %129 : vector<8x256xf32>
    %190 = arith.mulf %174, %182 : vector<8x256xf32>
    %191 = arith.addf %189, %190 : vector<8x256xf32>
    %192 = math.tanh %191 : vector<8x256xf32>
    %193 = arith.mulf %188, %192 : vector<8x256xf32>
    %194 = vector.extract_strided_slice %5 {offsets = [24, 0], sizes = [8, 1024], strides = [1, 1]} : vector<64x1024xf32> to vector<8x1024xf32>
    %195 = arith.truncf %161 : vector<8x256xf32> to vector<8x256xbf16>
    %c0_44 = arith.constant 0 : index
    %c0_45 = arith.constant 0 : index
    %196 = vector.load %arg2[%c0_44, %c0_45] : memref<256x1024xbf16, #tpu.memory_space<vmem>>, vector<256x1024xbf16>
    %cst_46 = arith.constant dense<0.000000e+00> : vector<8x1024xf32>
    %197 = tpu.matmul %195, %196, %cst_46 {dimension_numbers = #tpu.dot_dimension_numbers<[1], [0], [0], [1], [0, 0, 1, 1], [], []>} : vector<8x256xbf16>, vector<256x1024xbf16>, vector<8x1024xf32> -> vector<8x1024xf32>
    %198 = arith.addf %194, %197 : vector<8x1024xf32>
    %199 = vector.extract_strided_slice %198 {offsets = [0, 0], sizes = [8, 256], strides = [1, 1]} : vector<8x1024xf32> to vector<8x256xf32>
    %200 = arith.negf %199 : vector<8x256xf32>
    %201 = math.exp %200 : vector<8x256xf32>
    %cst_47 = arith.constant 1.000000e+00 : f32
    %202 = vector.broadcast %cst_47 : f32 to vector<8x256xf32>
    %203 = arith.addf %202, %201 : vector<8x256xf32>
    %204 = arith.divf %202, %203 : vector<8x256xf32>
    %205 = vector.extract_strided_slice %198 {offsets = [0, 256], sizes = [8, 256], strides = [1, 1]} : vector<8x1024xf32> to vector<8x256xf32>
    %206 = arith.negf %205 : vector<8x256xf32>
    %207 = math.exp %206 : vector<8x256xf32>
    %cst_48 = arith.constant 1.000000e+00 : f32
    %208 = vector.broadcast %cst_48 : f32 to vector<8x256xf32>
    %209 = arith.addf %208, %207 : vector<8x256xf32>
    %210 = arith.divf %208, %209 : vector<8x256xf32>
    %211 = vector.extract_strided_slice %198 {offsets = [0, 512], sizes = [8, 256], strides = [1, 1]} : vector<8x1024xf32> to vector<8x256xf32>
    %212 = math.tanh %211 : vector<8x256xf32>
    %213 = vector.extract_strided_slice %198 {offsets = [0, 768], sizes = [8, 256], strides = [1, 1]} : vector<8x1024xf32> to vector<8x256xf32>
    %214 = arith.negf %213 : vector<8x256xf32>
    %215 = math.exp %214 : vector<8x256xf32>
    %cst_49 = arith.constant 1.000000e+00 : f32
    %216 = vector.broadcast %cst_49 : f32 to vector<8x256xf32>
    %217 = arith.addf %216, %215 : vector<8x256xf32>
    %218 = arith.divf %216, %217 : vector<8x256xf32>
    %219 = arith.mulf %210, %159 : vector<8x256xf32>
    %220 = arith.mulf %204, %212 : vector<8x256xf32>
    %221 = arith.addf %219, %220 : vector<8x256xf32>
    %222 = math.tanh %221 : vector<8x256xf32>
    %223 = arith.mulf %218, %222 : vector<8x256xf32>
    %224 = arith.truncf %223 : vector<8x256xf32> to vector<8x256xbf16>
    %225 = arith.truncf %193 : vector<8x256xf32> to vector<8x256xbf16>
    %226 = tpu.concatenate %224, %225 in 1 : vector<8x256xbf16>, vector<8x256xbf16> -> vector<8x512xbf16>
    %c0_50 = arith.constant 0 : index
    %c0_51 = arith.constant 0 : index
    %227 = vector.load %arg4[%c0_50, %c0_51] : memref<512x1024xbf16, #tpu.memory_space<vmem>>, vector<512x1024xbf16>
    %cst_52 = arith.constant dense<0.000000e+00> : vector<8x1024xf32>
    %228 = tpu.matmul %226, %227, %cst_52 {dimension_numbers = #tpu.dot_dimension_numbers<[1], [0], [0], [1], [0, 0, 1, 1], [], []>} : vector<8x512xbf16>, vector<512x1024xbf16>, vector<8x1024xf32> -> vector<8x1024xf32>
    %229 = vector.broadcast %6 : vector<1x1024xf32> to vector<8x1024xf32>
    %230 = arith.addf %228, %229 : vector<8x1024xf32>
    %231 = vector.extract_strided_slice %230 {offsets = [0, 0], sizes = [8, 256], strides = [1, 1]} : vector<8x1024xf32> to vector<8x256xf32>
    %232 = arith.negf %231 : vector<8x256xf32>
    %233 = math.exp %232 : vector<8x256xf32>
    %cst_53 = arith.constant 1.000000e+00 : f32
    %234 = vector.broadcast %cst_53 : f32 to vector<8x256xf32>
    %235 = arith.addf %234, %233 : vector<8x256xf32>
    %236 = arith.divf %234, %235 : vector<8x256xf32>
    %237 = vector.extract_strided_slice %230 {offsets = [0, 256], sizes = [8, 256], strides = [1, 1]} : vector<8x1024xf32> to vector<8x256xf32>
    %238 = arith.negf %237 : vector<8x256xf32>
    %239 = math.exp %238 : vector<8x256xf32>
    %cst_54 = arith.constant 1.000000e+00 : f32
    %240 = vector.broadcast %cst_54 : f32 to vector<8x256xf32>
    %241 = arith.addf %240, %239 : vector<8x256xf32>
    %242 = arith.divf %240, %241 : vector<8x256xf32>
    %243 = vector.extract_strided_slice %230 {offsets = [0, 512], sizes = [8, 256], strides = [1, 1]} : vector<8x1024xf32> to vector<8x256xf32>
    %244 = math.tanh %243 : vector<8x256xf32>
    %245 = vector.extract_strided_slice %230 {offsets = [0, 768], sizes = [8, 256], strides = [1, 1]} : vector<8x1024xf32> to vector<8x256xf32>
    %246 = arith.negf %245 : vector<8x256xf32>
    %247 = math.exp %246 : vector<8x256xf32>
    %cst_55 = arith.constant 1.000000e+00 : f32
    %248 = vector.broadcast %cst_55 : f32 to vector<8x256xf32>
    %249 = arith.addf %248, %247 : vector<8x256xf32>
    %250 = arith.divf %248, %249 : vector<8x256xf32>
    %251 = arith.mulf %242, %191 : vector<8x256xf32>
    %252 = arith.mulf %236, %244 : vector<8x256xf32>
    %253 = arith.addf %251, %252 : vector<8x256xf32>
    %254 = math.tanh %253 : vector<8x256xf32>
    %255 = arith.mulf %250, %254 : vector<8x256xf32>
    %256 = vector.extract_strided_slice %5 {offsets = [32, 0], sizes = [8, 1024], strides = [1, 1]} : vector<64x1024xf32> to vector<8x1024xf32>
    %257 = arith.truncf %223 : vector<8x256xf32> to vector<8x256xbf16>
    %c0_56 = arith.constant 0 : index
    %c0_57 = arith.constant 0 : index
    %258 = vector.load %arg2[%c0_56, %c0_57] : memref<256x1024xbf16, #tpu.memory_space<vmem>>, vector<256x1024xbf16>
    %cst_58 = arith.constant dense<0.000000e+00> : vector<8x1024xf32>
    %259 = tpu.matmul %257, %258, %cst_58 {dimension_numbers = #tpu.dot_dimension_numbers<[1], [0], [0], [1], [0, 0, 1, 1], [], []>} : vector<8x256xbf16>, vector<256x1024xbf16>, vector<8x1024xf32> -> vector<8x1024xf32>
    %260 = arith.addf %256, %259 : vector<8x1024xf32>
    %261 = vector.extract_strided_slice %260 {offsets = [0, 0], sizes = [8, 256], strides = [1, 1]} : vector<8x1024xf32> to vector<8x256xf32>
    %262 = arith.negf %261 : vector<8x256xf32>
    %263 = math.exp %262 : vector<8x256xf32>
    %cst_59 = arith.constant 1.000000e+00 : f32
    %264 = vector.broadcast %cst_59 : f32 to vector<8x256xf32>
    %265 = arith.addf %264, %263 : vector<8x256xf32>
    %266 = arith.divf %264, %265 : vector<8x256xf32>
    %267 = vector.extract_strided_slice %260 {offsets = [0, 256], sizes = [8, 256], strides = [1, 1]} : vector<8x1024xf32> to vector<8x256xf32>
    %268 = arith.negf %267 : vector<8x256xf32>
    %269 = math.exp %268 : vector<8x256xf32>
    %cst_60 = arith.constant 1.000000e+00 : f32
    %270 = vector.broadcast %cst_60 : f32 to vector<8x256xf32>
    %271 = arith.addf %270, %269 : vector<8x256xf32>
    %272 = arith.divf %270, %271 : vector<8x256xf32>
    %273 = vector.extract_strided_slice %260 {offsets = [0, 512], sizes = [8, 256], strides = [1, 1]} : vector<8x1024xf32> to vector<8x256xf32>
    %274 = math.tanh %273 : vector<8x256xf32>
    %275 = vector.extract_strided_slice %260 {offsets = [0, 768], sizes = [8, 256], strides = [1, 1]} : vector<8x1024xf32> to vector<8x256xf32>
    %276 = arith.negf %275 : vector<8x256xf32>
    %277 = math.exp %276 : vector<8x256xf32>
    %cst_61 = arith.constant 1.000000e+00 : f32
    %278 = vector.broadcast %cst_61 : f32 to vector<8x256xf32>
    %279 = arith.addf %278, %277 : vector<8x256xf32>
    %280 = arith.divf %278, %279 : vector<8x256xf32>
    %281 = arith.mulf %272, %221 : vector<8x256xf32>
    %282 = arith.mulf %266, %274 : vector<8x256xf32>
    %283 = arith.addf %281, %282 : vector<8x256xf32>
    %284 = math.tanh %283 : vector<8x256xf32>
    %285 = arith.mulf %280, %284 : vector<8x256xf32>
    %286 = arith.truncf %285 : vector<8x256xf32> to vector<8x256xbf16>
    %287 = arith.truncf %255 : vector<8x256xf32> to vector<8x256xbf16>
    %288 = tpu.concatenate %286, %287 in 1 : vector<8x256xbf16>, vector<8x256xbf16> -> vector<8x512xbf16>
    %c0_62 = arith.constant 0 : index
    %c0_63 = arith.constant 0 : index
    %289 = vector.load %arg4[%c0_62, %c0_63] : memref<512x1024xbf16, #tpu.memory_space<vmem>>, vector<512x1024xbf16>
    %cst_64 = arith.constant dense<0.000000e+00> : vector<8x1024xf32>
    %290 = tpu.matmul %288, %289, %cst_64 {dimension_numbers = #tpu.dot_dimension_numbers<[1], [0], [0], [1], [0, 0, 1, 1], [], []>} : vector<8x512xbf16>, vector<512x1024xbf16>, vector<8x1024xf32> -> vector<8x1024xf32>
    %291 = vector.broadcast %6 : vector<1x1024xf32> to vector<8x1024xf32>
    %292 = arith.addf %290, %291 : vector<8x1024xf32>
    %293 = vector.extract_strided_slice %292 {offsets = [0, 0], sizes = [8, 256], strides = [1, 1]} : vector<8x1024xf32> to vector<8x256xf32>
    %294 = arith.negf %293 : vector<8x256xf32>
    %295 = math.exp %294 : vector<8x256xf32>
    %cst_65 = arith.constant 1.000000e+00 : f32
    %296 = vector.broadcast %cst_65 : f32 to vector<8x256xf32>
    %297 = arith.addf %296, %295 : vector<8x256xf32>
    %298 = arith.divf %296, %297 : vector<8x256xf32>
    %299 = vector.extract_strided_slice %292 {offsets = [0, 256], sizes = [8, 256], strides = [1, 1]} : vector<8x1024xf32> to vector<8x256xf32>
    %300 = arith.negf %299 : vector<8x256xf32>
    %301 = math.exp %300 : vector<8x256xf32>
    %cst_66 = arith.constant 1.000000e+00 : f32
    %302 = vector.broadcast %cst_66 : f32 to vector<8x256xf32>
    %303 = arith.addf %302, %301 : vector<8x256xf32>
    %304 = arith.divf %302, %303 : vector<8x256xf32>
    %305 = vector.extract_strided_slice %292 {offsets = [0, 512], sizes = [8, 256], strides = [1, 1]} : vector<8x1024xf32> to vector<8x256xf32>
    %306 = math.tanh %305 : vector<8x256xf32>
    %307 = vector.extract_strided_slice %292 {offsets = [0, 768], sizes = [8, 256], strides = [1, 1]} : vector<8x1024xf32> to vector<8x256xf32>
    %308 = arith.negf %307 : vector<8x256xf32>
    %309 = math.exp %308 : vector<8x256xf32>
    %cst_67 = arith.constant 1.000000e+00 : f32
    %310 = vector.broadcast %cst_67 : f32 to vector<8x256xf32>
    %311 = arith.addf %310, %309 : vector<8x256xf32>
    %312 = arith.divf %310, %311 : vector<8x256xf32>
    %313 = arith.mulf %304, %253 : vector<8x256xf32>
    %314 = arith.mulf %298, %306 : vector<8x256xf32>
    %315 = arith.addf %313, %314 : vector<8x256xf32>
    %316 = math.tanh %315 : vector<8x256xf32>
    %317 = arith.mulf %312, %316 : vector<8x256xf32>
    %318 = vector.extract_strided_slice %5 {offsets = [40, 0], sizes = [8, 1024], strides = [1, 1]} : vector<64x1024xf32> to vector<8x1024xf32>
    %319 = arith.truncf %285 : vector<8x256xf32> to vector<8x256xbf16>
    %c0_68 = arith.constant 0 : index
    %c0_69 = arith.constant 0 : index
    %320 = vector.load %arg2[%c0_68, %c0_69] : memref<256x1024xbf16, #tpu.memory_space<vmem>>, vector<256x1024xbf16>
    %cst_70 = arith.constant dense<0.000000e+00> : vector<8x1024xf32>
    %321 = tpu.matmul %319, %320, %cst_70 {dimension_numbers = #tpu.dot_dimension_numbers<[1], [0], [0], [1], [0, 0, 1, 1], [], []>} : vector<8x256xbf16>, vector<256x1024xbf16>, vector<8x1024xf32> -> vector<8x1024xf32>
    %322 = arith.addf %318, %321 : vector<8x1024xf32>
    %323 = vector.extract_strided_slice %322 {offsets = [0, 0], sizes = [8, 256], strides = [1, 1]} : vector<8x1024xf32> to vector<8x256xf32>
    %324 = arith.negf %323 : vector<8x256xf32>
    %325 = math.exp %324 : vector<8x256xf32>
    %cst_71 = arith.constant 1.000000e+00 : f32
    %326 = vector.broadcast %cst_71 : f32 to vector<8x256xf32>
    %327 = arith.addf %326, %325 : vector<8x256xf32>
    %328 = arith.divf %326, %327 : vector<8x256xf32>
    %329 = vector.extract_strided_slice %322 {offsets = [0, 256], sizes = [8, 256], strides = [1, 1]} : vector<8x1024xf32> to vector<8x256xf32>
    %330 = arith.negf %329 : vector<8x256xf32>
    %331 = math.exp %330 : vector<8x256xf32>
    %cst_72 = arith.constant 1.000000e+00 : f32
    %332 = vector.broadcast %cst_72 : f32 to vector<8x256xf32>
    %333 = arith.addf %332, %331 : vector<8x256xf32>
    %334 = arith.divf %332, %333 : vector<8x256xf32>
    %335 = vector.extract_strided_slice %322 {offsets = [0, 512], sizes = [8, 256], strides = [1, 1]} : vector<8x1024xf32> to vector<8x256xf32>
    %336 = math.tanh %335 : vector<8x256xf32>
    %337 = vector.extract_strided_slice %322 {offsets = [0, 768], sizes = [8, 256], strides = [1, 1]} : vector<8x1024xf32> to vector<8x256xf32>
    %338 = arith.negf %337 : vector<8x256xf32>
    %339 = math.exp %338 : vector<8x256xf32>
    %cst_73 = arith.constant 1.000000e+00 : f32
    %340 = vector.broadcast %cst_73 : f32 to vector<8x256xf32>
    %341 = arith.addf %340, %339 : vector<8x256xf32>
    %342 = arith.divf %340, %341 : vector<8x256xf32>
    %343 = arith.mulf %334, %283 : vector<8x256xf32>
    %344 = arith.mulf %328, %336 : vector<8x256xf32>
    %345 = arith.addf %343, %344 : vector<8x256xf32>
    %346 = math.tanh %345 : vector<8x256xf32>
    %347 = arith.mulf %342, %346 : vector<8x256xf32>
    %348 = arith.truncf %347 : vector<8x256xf32> to vector<8x256xbf16>
    %349 = arith.truncf %317 : vector<8x256xf32> to vector<8x256xbf16>
    %350 = tpu.concatenate %348, %349 in 1 : vector<8x256xbf16>, vector<8x256xbf16> -> vector<8x512xbf16>
    %c0_74 = arith.constant 0 : index
    %c0_75 = arith.constant 0 : index
    %351 = vector.load %arg4[%c0_74, %c0_75] : memref<512x1024xbf16, #tpu.memory_space<vmem>>, vector<512x1024xbf16>
    %cst_76 = arith.constant dense<0.000000e+00> : vector<8x1024xf32>
    %352 = tpu.matmul %350, %351, %cst_76 {dimension_numbers = #tpu.dot_dimension_numbers<[1], [0], [0], [1], [0, 0, 1, 1], [], []>} : vector<8x512xbf16>, vector<512x1024xbf16>, vector<8x1024xf32> -> vector<8x1024xf32>
    %353 = vector.broadcast %6 : vector<1x1024xf32> to vector<8x1024xf32>
    %354 = arith.addf %352, %353 : vector<8x1024xf32>
    %355 = vector.extract_strided_slice %354 {offsets = [0, 0], sizes = [8, 256], strides = [1, 1]} : vector<8x1024xf32> to vector<8x256xf32>
    %356 = arith.negf %355 : vector<8x256xf32>
    %357 = math.exp %356 : vector<8x256xf32>
    %cst_77 = arith.constant 1.000000e+00 : f32
    %358 = vector.broadcast %cst_77 : f32 to vector<8x256xf32>
    %359 = arith.addf %358, %357 : vector<8x256xf32>
    %360 = arith.divf %358, %359 : vector<8x256xf32>
    %361 = vector.extract_strided_slice %354 {offsets = [0, 256], sizes = [8, 256], strides = [1, 1]} : vector<8x1024xf32> to vector<8x256xf32>
    %362 = arith.negf %361 : vector<8x256xf32>
    %363 = math.exp %362 : vector<8x256xf32>
    %cst_78 = arith.constant 1.000000e+00 : f32
    %364 = vector.broadcast %cst_78 : f32 to vector<8x256xf32>
    %365 = arith.addf %364, %363 : vector<8x256xf32>
    %366 = arith.divf %364, %365 : vector<8x256xf32>
    %367 = vector.extract_strided_slice %354 {offsets = [0, 512], sizes = [8, 256], strides = [1, 1]} : vector<8x1024xf32> to vector<8x256xf32>
    %368 = math.tanh %367 : vector<8x256xf32>
    %369 = vector.extract_strided_slice %354 {offsets = [0, 768], sizes = [8, 256], strides = [1, 1]} : vector<8x1024xf32> to vector<8x256xf32>
    %370 = arith.negf %369 : vector<8x256xf32>
    %371 = math.exp %370 : vector<8x256xf32>
    %cst_79 = arith.constant 1.000000e+00 : f32
    %372 = vector.broadcast %cst_79 : f32 to vector<8x256xf32>
    %373 = arith.addf %372, %371 : vector<8x256xf32>
    %374 = arith.divf %372, %373 : vector<8x256xf32>
    %375 = arith.mulf %366, %315 : vector<8x256xf32>
    %376 = arith.mulf %360, %368 : vector<8x256xf32>
    %377 = arith.addf %375, %376 : vector<8x256xf32>
    %378 = math.tanh %377 : vector<8x256xf32>
    %379 = arith.mulf %374, %378 : vector<8x256xf32>
    %380 = vector.extract_strided_slice %5 {offsets = [48, 0], sizes = [8, 1024], strides = [1, 1]} : vector<64x1024xf32> to vector<8x1024xf32>
    %381 = arith.truncf %347 : vector<8x256xf32> to vector<8x256xbf16>
    %c0_80 = arith.constant 0 : index
    %c0_81 = arith.constant 0 : index
    %382 = vector.load %arg2[%c0_80, %c0_81] : memref<256x1024xbf16, #tpu.memory_space<vmem>>, vector<256x1024xbf16>
    %cst_82 = arith.constant dense<0.000000e+00> : vector<8x1024xf32>
    %383 = tpu.matmul %381, %382, %cst_82 {dimension_numbers = #tpu.dot_dimension_numbers<[1], [0], [0], [1], [0, 0, 1, 1], [], []>} : vector<8x256xbf16>, vector<256x1024xbf16>, vector<8x1024xf32> -> vector<8x1024xf32>
    %384 = arith.addf %380, %383 : vector<8x1024xf32>
    %385 = vector.extract_strided_slice %384 {offsets = [0, 0], sizes = [8, 256], strides = [1, 1]} : vector<8x1024xf32> to vector<8x256xf32>
    %386 = arith.negf %385 : vector<8x256xf32>
    %387 = math.exp %386 : vector<8x256xf32>
    %cst_83 = arith.constant 1.000000e+00 : f32
    %388 = vector.broadcast %cst_83 : f32 to vector<8x256xf32>
    %389 = arith.addf %388, %387 : vector<8x256xf32>
    %390 = arith.divf %388, %389 : vector<8x256xf32>
    %391 = vector.extract_strided_slice %384 {offsets = [0, 256], sizes = [8, 256], strides = [1, 1]} : vector<8x1024xf32> to vector<8x256xf32>
    %392 = arith.negf %391 : vector<8x256xf32>
    %393 = math.exp %392 : vector<8x256xf32>
    %cst_84 = arith.constant 1.000000e+00 : f32
    %394 = vector.broadcast %cst_84 : f32 to vector<8x256xf32>
    %395 = arith.addf %394, %393 : vector<8x256xf32>
    %396 = arith.divf %394, %395 : vector<8x256xf32>
    %397 = vector.extract_strided_slice %384 {offsets = [0, 512], sizes = [8, 256], strides = [1, 1]} : vector<8x1024xf32> to vector<8x256xf32>
    %398 = math.tanh %397 : vector<8x256xf32>
    %399 = vector.extract_strided_slice %384 {offsets = [0, 768], sizes = [8, 256], strides = [1, 1]} : vector<8x1024xf32> to vector<8x256xf32>
    %400 = arith.negf %399 : vector<8x256xf32>
    %401 = math.exp %400 : vector<8x256xf32>
    %cst_85 = arith.constant 1.000000e+00 : f32
    %402 = vector.broadcast %cst_85 : f32 to vector<8x256xf32>
    %403 = arith.addf %402, %401 : vector<8x256xf32>
    %404 = arith.divf %402, %403 : vector<8x256xf32>
    %405 = arith.mulf %396, %345 : vector<8x256xf32>
    %406 = arith.mulf %390, %398 : vector<8x256xf32>
    %407 = arith.addf %405, %406 : vector<8x256xf32>
    %408 = math.tanh %407 : vector<8x256xf32>
    %409 = arith.mulf %404, %408 : vector<8x256xf32>
    %410 = arith.truncf %409 : vector<8x256xf32> to vector<8x256xbf16>
    %411 = arith.truncf %379 : vector<8x256xf32> to vector<8x256xbf16>
    %412 = tpu.concatenate %410, %411 in 1 : vector<8x256xbf16>, vector<8x256xbf16> -> vector<8x512xbf16>
    %c0_86 = arith.constant 0 : index
    %c0_87 = arith.constant 0 : index
    %413 = vector.load %arg4[%c0_86, %c0_87] : memref<512x1024xbf16, #tpu.memory_space<vmem>>, vector<512x1024xbf16>
    %cst_88 = arith.constant dense<0.000000e+00> : vector<8x1024xf32>
    %414 = tpu.matmul %412, %413, %cst_88 {dimension_numbers = #tpu.dot_dimension_numbers<[1], [0], [0], [1], [0, 0, 1, 1], [], []>} : vector<8x512xbf16>, vector<512x1024xbf16>, vector<8x1024xf32> -> vector<8x1024xf32>
    %415 = vector.broadcast %6 : vector<1x1024xf32> to vector<8x1024xf32>
    %416 = arith.addf %414, %415 : vector<8x1024xf32>
    %417 = vector.extract_strided_slice %416 {offsets = [0, 0], sizes = [8, 256], strides = [1, 1]} : vector<8x1024xf32> to vector<8x256xf32>
    %418 = arith.negf %417 : vector<8x256xf32>
    %419 = math.exp %418 : vector<8x256xf32>
    %cst_89 = arith.constant 1.000000e+00 : f32
    %420 = vector.broadcast %cst_89 : f32 to vector<8x256xf32>
    %421 = arith.addf %420, %419 : vector<8x256xf32>
    %422 = arith.divf %420, %421 : vector<8x256xf32>
    %423 = vector.extract_strided_slice %416 {offsets = [0, 256], sizes = [8, 256], strides = [1, 1]} : vector<8x1024xf32> to vector<8x256xf32>
    %424 = arith.negf %423 : vector<8x256xf32>
    %425 = math.exp %424 : vector<8x256xf32>
    %cst_90 = arith.constant 1.000000e+00 : f32
    %426 = vector.broadcast %cst_90 : f32 to vector<8x256xf32>
    %427 = arith.addf %426, %425 : vector<8x256xf32>
    %428 = arith.divf %426, %427 : vector<8x256xf32>
    %429 = vector.extract_strided_slice %416 {offsets = [0, 512], sizes = [8, 256], strides = [1, 1]} : vector<8x1024xf32> to vector<8x256xf32>
    %430 = math.tanh %429 : vector<8x256xf32>
    %431 = vector.extract_strided_slice %416 {offsets = [0, 768], sizes = [8, 256], strides = [1, 1]} : vector<8x1024xf32> to vector<8x256xf32>
    %432 = arith.negf %431 : vector<8x256xf32>
    %433 = math.exp %432 : vector<8x256xf32>
    %cst_91 = arith.constant 1.000000e+00 : f32
    %434 = vector.broadcast %cst_91 : f32 to vector<8x256xf32>
    %435 = arith.addf %434, %433 : vector<8x256xf32>
    %436 = arith.divf %434, %435 : vector<8x256xf32>
    %437 = arith.mulf %428, %377 : vector<8x256xf32>
    %438 = arith.mulf %422, %430 : vector<8x256xf32>
    %439 = arith.addf %437, %438 : vector<8x256xf32>
    %440 = math.tanh %439 : vector<8x256xf32>
    %441 = arith.mulf %436, %440 : vector<8x256xf32>
    %442 = vector.extract_strided_slice %5 {offsets = [56, 0], sizes = [8, 1024], strides = [1, 1]} : vector<64x1024xf32> to vector<8x1024xf32>
    %443 = arith.truncf %409 : vector<8x256xf32> to vector<8x256xbf16>
    %c0_92 = arith.constant 0 : index
    %c0_93 = arith.constant 0 : index
    %444 = vector.load %arg2[%c0_92, %c0_93] : memref<256x1024xbf16, #tpu.memory_space<vmem>>, vector<256x1024xbf16>
    %cst_94 = arith.constant dense<0.000000e+00> : vector<8x1024xf32>
    %445 = tpu.matmul %443, %444, %cst_94 {dimension_numbers = #tpu.dot_dimension_numbers<[1], [0], [0], [1], [0, 0, 1, 1], [], []>} : vector<8x256xbf16>, vector<256x1024xbf16>, vector<8x1024xf32> -> vector<8x1024xf32>
    %446 = arith.addf %442, %445 : vector<8x1024xf32>
    %447 = vector.extract_strided_slice %446 {offsets = [0, 0], sizes = [8, 256], strides = [1, 1]} : vector<8x1024xf32> to vector<8x256xf32>
    %448 = arith.negf %447 : vector<8x256xf32>
    %449 = math.exp %448 : vector<8x256xf32>
    %cst_95 = arith.constant 1.000000e+00 : f32
    %450 = vector.broadcast %cst_95 : f32 to vector<8x256xf32>
    %451 = arith.addf %450, %449 : vector<8x256xf32>
    %452 = arith.divf %450, %451 : vector<8x256xf32>
    %453 = vector.extract_strided_slice %446 {offsets = [0, 256], sizes = [8, 256], strides = [1, 1]} : vector<8x1024xf32> to vector<8x256xf32>
    %454 = arith.negf %453 : vector<8x256xf32>
    %455 = math.exp %454 : vector<8x256xf32>
    %cst_96 = arith.constant 1.000000e+00 : f32
    %456 = vector.broadcast %cst_96 : f32 to vector<8x256xf32>
    %457 = arith.addf %456, %455 : vector<8x256xf32>
    %458 = arith.divf %456, %457 : vector<8x256xf32>
    %459 = vector.extract_strided_slice %446 {offsets = [0, 512], sizes = [8, 256], strides = [1, 1]} : vector<8x1024xf32> to vector<8x256xf32>
    %460 = math.tanh %459 : vector<8x256xf32>
    %461 = vector.extract_strided_slice %446 {offsets = [0, 768], sizes = [8, 256], strides = [1, 1]} : vector<8x1024xf32> to vector<8x256xf32>
    %462 = arith.negf %461 : vector<8x256xf32>
    %463 = math.exp %462 : vector<8x256xf32>
    %cst_97 = arith.constant 1.000000e+00 : f32
    %464 = vector.broadcast %cst_97 : f32 to vector<8x256xf32>
    %465 = arith.addf %464, %463 : vector<8x256xf32>
    %466 = arith.divf %464, %465 : vector<8x256xf32>
    %467 = arith.mulf %458, %407 : vector<8x256xf32>
    %468 = arith.mulf %452, %460 : vector<8x256xf32>
    %469 = arith.addf %467, %468 : vector<8x256xf32>
    %470 = math.tanh %469 : vector<8x256xf32>
    %471 = arith.mulf %466, %470 : vector<8x256xf32>
    %472 = arith.truncf %471 : vector<8x256xf32> to vector<8x256xbf16>
    %473 = arith.truncf %441 : vector<8x256xf32> to vector<8x256xbf16>
    %474 = tpu.concatenate %472, %473 in 1 : vector<8x256xbf16>, vector<8x256xbf16> -> vector<8x512xbf16>
    %c0_98 = arith.constant 0 : index
    %c0_99 = arith.constant 0 : index
    %475 = vector.load %arg4[%c0_98, %c0_99] : memref<512x1024xbf16, #tpu.memory_space<vmem>>, vector<512x1024xbf16>
    %cst_100 = arith.constant dense<0.000000e+00> : vector<8x1024xf32>
    %476 = tpu.matmul %474, %475, %cst_100 {dimension_numbers = #tpu.dot_dimension_numbers<[1], [0], [0], [1], [0, 0, 1, 1], [], []>} : vector<8x512xbf16>, vector<512x1024xbf16>, vector<8x1024xf32> -> vector<8x1024xf32>
    %477 = vector.broadcast %6 : vector<1x1024xf32> to vector<8x1024xf32>
    %478 = arith.addf %476, %477 : vector<8x1024xf32>
    %479 = vector.extract_strided_slice %478 {offsets = [0, 0], sizes = [8, 256], strides = [1, 1]} : vector<8x1024xf32> to vector<8x256xf32>
    %480 = arith.negf %479 : vector<8x256xf32>
    %481 = math.exp %480 : vector<8x256xf32>
    %cst_101 = arith.constant 1.000000e+00 : f32
    %482 = vector.broadcast %cst_101 : f32 to vector<8x256xf32>
    %483 = arith.addf %482, %481 : vector<8x256xf32>
    %484 = arith.divf %482, %483 : vector<8x256xf32>
    %485 = vector.extract_strided_slice %478 {offsets = [0, 256], sizes = [8, 256], strides = [1, 1]} : vector<8x1024xf32> to vector<8x256xf32>
    %486 = arith.negf %485 : vector<8x256xf32>
    %487 = math.exp %486 : vector<8x256xf32>
    %cst_102 = arith.constant 1.000000e+00 : f32
    %488 = vector.broadcast %cst_102 : f32 to vector<8x256xf32>
    %489 = arith.addf %488, %487 : vector<8x256xf32>
    %490 = arith.divf %488, %489 : vector<8x256xf32>
    %491 = vector.extract_strided_slice %478 {offsets = [0, 512], sizes = [8, 256], strides = [1, 1]} : vector<8x1024xf32> to vector<8x256xf32>
    %492 = math.tanh %491 : vector<8x256xf32>
    %493 = vector.extract_strided_slice %478 {offsets = [0, 768], sizes = [8, 256], strides = [1, 1]} : vector<8x1024xf32> to vector<8x256xf32>
    %494 = arith.negf %493 : vector<8x256xf32>
    %495 = math.exp %494 : vector<8x256xf32>
    %cst_103 = arith.constant 1.000000e+00 : f32
    %496 = vector.broadcast %cst_103 : f32 to vector<8x256xf32>
    %497 = arith.addf %496, %495 : vector<8x256xf32>
    %498 = arith.divf %496, %497 : vector<8x256xf32>
    %499 = arith.mulf %490, %439 : vector<8x256xf32>
    %500 = arith.mulf %484, %492 : vector<8x256xf32>
    %501 = arith.addf %499, %500 : vector<8x256xf32>
    %502 = math.tanh %501 : vector<8x256xf32>
    %503 = arith.mulf %498, %502 : vector<8x256xf32>
    %cst_104 = arith.constant 0.000000e+00 : f32
    %504 = vector.broadcast %cst_104 : f32 to vector<8x256xf32>
    %505 = arith.cmpf ogt, %503, %504 : vector<8x256xf32>
    %cst_105 = arith.constant 0.00999999977 : f32
    %506 = vector.broadcast %cst_105 : f32 to vector<8x256xf32>
    %507 = arith.mulf %506, %503 : vector<8x256xf32>
    %508 = arith.select %505, %503, %507 : vector<8x256xi1>, vector<8x256xf32>
    %509 = arith.truncf %508 : vector<8x256xf32> to vector<8x256xbf16>
    %c0_106 = arith.constant 0 : index
    %c0_107 = arith.constant 0 : index
    %510 = vector.load %arg6[%c0_106, %c0_107] : memref<256x32xbf16, #tpu.memory_space<vmem>>, vector<256x32xbf16>
    %cst_108 = arith.constant dense<0.000000e+00> : vector<8x32xf32>
    %511 = tpu.matmul %509, %510, %cst_108 {dimension_numbers = #tpu.dot_dimension_numbers<[1], [0], [0], [1], [0, 0, 1, 1], [], []>} : vector<8x256xbf16>, vector<256x32xbf16>, vector<8x32xf32> -> vector<8x32xf32>
    %c0_109 = arith.constant 0 : index
    %c0_110 = arith.constant 0 : index
    %512 = vector.load %arg7[%c0_109, %c0_110] : memref<1x32xf32, #tpu.memory_space<vmem>>, vector<1x32xf32>
    %513 = vector.broadcast %512 : vector<1x32xf32> to vector<8x32xf32>
    %514 = arith.addf %511, %513 : vector<8x32xf32>
    %515 = arith.mulf %514, %514 : vector<8x32xf32>
    %cst_111 = arith.constant dense<0.000000e+00> : vector<8xf32>
    %516 = vector.multi_reduction <add>, %515, %cst_111 [1] : vector<8x32xf32> to vector<8xf32>
    %517 = vector.shape_cast %516 : vector<8xf32> to vector<8x1xf32>
    %cst_112 = arith.constant 1.000000e-24 : f32
    %518 = vector.broadcast %cst_112 : f32 to vector<8x1xf32>
    %519 = arith.maximumf %517, %518 : vector<8x1xf32>
    %520 = math.rsqrt %519 : vector<8x1xf32>
    %521 = vector.broadcast %520 : vector<8x1xf32> to vector<8x32xf32>
    %522 = arith.mulf %514, %521 : vector<8x32xf32>
    %c0_113 = arith.constant 0 : index
    %c0_114 = arith.constant 0 : index
    %523 = vector.load %arg8[%c0_113, %c0_114] : memref<8x32xf32, #tpu.memory_space<vmem>>, vector<8x32xf32>
    tpu.vector_store %arg8[%c0_113, %c0_114], %522 {strides = array<i32>} : memref<8x32xf32, #tpu.memory_space<vmem>>, vector<8x32xf32>,
    return
  }
}

</mosaic_0001>

<llo_original>
// kernel: lstm_forward.1
$region0: #{lstm_forward.1}
  #allocation0 [shape = 'u32[]', space=smem, size = 0x4, offset = 0x4, fixed_abs, tag = 'smem constant byte address 0x4 - core index']
  #allocation1 [shape = 'u32[72,128]{1,0:T(1,128)}', space=vmem, size = 0x9000, scoped, tag = 'internal scratch']
  %s0 = inlined_call_operand.vmem [shape: bf16[64,32], index: 0, kind: input, shape index: {}]
  %s1 = inlined_call_operand.vmem [shape: bf16[32,1024], index: 1, kind: input, shape index: {}]
  %s2 = inlined_call_operand.hbm [shape: bf16[256,1024], index: 2, kind: input, shape index: {}]
  %s3 = inlined_call_operand.vmem [shape: f32[1,1024], index: 3, kind: input, shape index: {}]
  %s4 = inlined_call_operand.hbm [shape: bf16[512,1024], index: 4, kind: input, shape index: {}]
  %s5 = inlined_call_operand.vmem [shape: f32[1,1024], index: 5, kind: input, shape index: {}]
  %s6 = inlined_call_operand.vmem [shape: bf16[256,32], index: 6, kind: input, shape index: {}]
  %s7 = inlined_call_operand.vmem [shape: f32[1,32], index: 7, kind: input, shape index: {}]
  %s8 = inlined_call_operand.vmem [shape: f32[8,32], index: 8, kind: output, shape index: {}]
  %s9 = sld [smem:[#allocation0]]
  $region50: #{lstm_forward.1} parent=0
    _
  %s11 = ssub.s32 1, %s9
  %s12 = scalar_select 0, %s11, %s9
  $region1: #{lstm_forward.1} parent=0
    #allocation2 [shape = 'u8[524288]{0}', space=vmem, size = 0x80000, scoped, tag = 'input window, operand 2, single buffered']
    #allocation3 [shape = 's32[1]{0}', space=sflag, size = 0x4, scoped, tag = 'scoped memory for lstm_forward.1']
    #allocation4 [shape = 'u8[1048576]{0}', space=vmem, size = 0x100000, scoped, tag = 'input window, operand 4, single buffered']
    #allocation5 [shape = 's32[1]{0}', space=sflag, size = 0x4, scoped, tag = 'scoped memory for lstm_forward.1']
    %13 = vsyncpa [#allocation3], 0
    %14 = vsyncpa [#allocation5], 0
    // Predicated region
    $region2: #{lstm_forward.1} parent=1 // pred_check
      _
    $region3: #{lstm_forward.1} parent=1 // pred_check_branch
      %16 = sbr.rel (0) target = $region5
    $region4: #{lstm_forward.1} parent=1 // pred_region
      _
    $region5: #{lstm_forward.1} parent=1 // pred_fallthru
      _
    // Predicated region
    $region6: #{lstm_forward.1} parent=1 // pred_check
      _
    $region7: #{lstm_forward.1} parent=1 // pred_check_branch
      %18 = sbr.rel (0) target = $region9
    $region8: #{lstm_forward.1} parent=1 // pred_region
      _
    $region9: #{lstm_forward.1} parent=1 // pred_fallthru
      _
    // Predicated region
    $region10: #{lstm_forward.1} parent=1 // pred_check
      _
    $region11: #{lstm_forward.1} parent=1 // pred_check_branch
      %20 = sbr.rel (0) target = $region13
    $region12: #{lstm_forward.1} parent=1 // pred_region
      %22 = vsyncadd [#allocation3], 0
      %s23 = sshll.u32 %s2, 4
      %s24 = int_to_ptr.hbm [resolvable:$true] %s23
      %s25 = sshll.u32 [#allocation2], 4
      %s26 = int_to_ptr.vmem [resolvable:$true] %s25
      %31 = dma.hbm_to_vmem [thread:$0]  %s24, 16384, %s26, [#allocation3], 512, 512, 32
    $region13: #{lstm_forward.1} parent=1 // pred_fallthru
      _
    // Predicated region
    $region14: #{lstm_forward.1} parent=1 // pred_check
      _
    $region15: #{lstm_forward.1} parent=1 // pred_check_branch
      %33 = sbr.rel (0) target = $region17
    $region16: #{lstm_forward.1} parent=1 // pred_region
      _
    $region17: #{lstm_forward.1} parent=1 // pred_fallthru
      _
    // Predicated region
    $region18: #{lstm_forward.1} parent=1 // pred_check
      _
    $region19: #{lstm_forward.1} parent=1 // pred_check_branch
      %35 = sbr.rel (0) target = $region21
    $region20: #{lstm_forward.1} parent=1 // pred_region
      %37 = vsyncadd [#allocation5], 0
      %s38 = sshll.u32 %s4, 4
      %s39 = int_to_ptr.hbm [resolvable:$true] %s38
      %s40 = sshll.u32 [#allocation4], 4
      %s41 = int_to_ptr.vmem [resolvable:$true] %s40
      %46 = dma.hbm_to_vmem [thread:$0]  %s39, 32768, %s41, [#allocation5], 512, 512, 32
    $region21: #{lstm_forward.1} parent=1 // pred_fallthru
      _
    // Predicated region
    $region22: #{lstm_forward.1} parent=1 // pred_check
      _
    $region23: #{lstm_forward.1} parent=1 // pred_check_branch
      %48 = sbr.rel (0) target = $region25
    $region24: #{lstm_forward.1} parent=1 // pred_region
      _
    $region25: #{lstm_forward.1} parent=1 // pred_fallthru
      _
    // Predicated region
    $region26: #{lstm_forward.1} parent=1 // pred_check
      _
    $region27: #{lstm_forward.1} parent=1 // pred_check_branch
      %50 = sbr.rel (0) target = $region29
    $region28: #{lstm_forward.1} parent=1 // pred_region
      _
    $region29: #{lstm_forward.1} parent=1 // pred_fallthru
      _
    // Predicated region
    $region30: #{lstm_forward.1} parent=1 // pred_check
      _
    $region31: #{lstm_forward.1} parent=1 // pred_check_branch
      %52 = sbr.rel (0) target = $region33
    $region32: #{lstm_forward.1} parent=1 // pred_region
      _
    $region33: #{lstm_forward.1} parent=1 // pred_fallthru
      _
    // Predicated region
    $region34: #{lstm_forward.1} parent=1 // pred_check
      _
    $region35: #{lstm_forward.1} parent=1 // pred_check_branch
      %54 = sbr.rel (0) target = $region37
    $region36: #{lstm_forward.1} parent=1 // pred_region
      %56 = dma.done [#allocation3], 16384
    $region37: #{lstm_forward.1} parent=1 // pred_fallthru
      _
    // Predicated region
    $region38: #{lstm_forward.1} parent=1 // pred_check
      _
    $region39: #{lstm_forward.1} parent=1 // pred_check_branch
      %58 = sbr.rel (0) target = $region41
    $region40: #{lstm_forward.1} parent=1 // pred_region
      %60 = dma.done [#allocation5], 32768
    $region41: #{lstm_forward.1} parent=1 // pred_fallthru
      _
    %v62 = vld [vmem:[%s0] sm:$0xf]
    %v63 = vld [vmem:[%s0 + $0x4] sm:$0xf]
    %v64 = vld [vmem:[%s0 + $0x8] sm:$0xf]
    %v65 = vld [vmem:[%s0 + $0xc] sm:$0xf]
    %v66 = vld [vmem:[%s0 + $0x10] sm:$0xf]
    %v67 = vld [vmem:[%s0 + $0x14] sm:$0xf]
    %v68 = vld [vmem:[%s0 + $0x18] sm:$0xf]
    %v69 = vld [vmem:[%s0 + $0x1c] sm:$0xf]
    %v70 = vld [vmem:[%s1] sm:$0xff]
    %v71 = vld [vmem:[%s1 + $0x8] sm:$0xff]
    %v72 = vld [vmem:[%s1 + $0x10] sm:$0xff]
    %v73 = vld [vmem:[%s1 + $0x18] sm:$0xff]
    %v74 = vld [vmem:[%s1 + $0x20] sm:$0xff]
    %v75 = vld [vmem:[%s1 + $0x28] sm:$0xff]
    %v76 = vld [vmem:[%s1 + $0x30] sm:$0xff]
    %v77 = vld [vmem:[%s1 + $0x38] sm:$0xff]
    %v78 = vld [vmem:[%s1 + $0x40] sm:$0xff]
    %v79 = vld [vmem:[%s1 + $0x48] sm:$0xff]
    %v80 = vld [vmem:[%s1 + $0x50] sm:$0xff]
    %v81 = vld [vmem:[%s1 + $0x58] sm:$0xff]
    %v82 = vld [vmem:[%s1 + $0x60] sm:$0xff]
    %v83 = vld [vmem:[%s1 + $0x68] sm:$0xff]
    %v84 = vld [vmem:[%s1 + $0x70] sm:$0xff]
    %v85 = vld [vmem:[%s1 + $0x78] sm:$0xff]
    %v86 = vld [vmem:[%s3] sm:$0xff]
    %v88 = vperm.slane %v86, 0
    %v89 = vperm.slane %v86, 1
    %v90 = vperm.slane %v86, 2
    %v91 = vperm.slane %v86, 3
    %v92 = vperm.slane %v86, 4
    %v93 = vperm.slane %v86, 5
    %v94 = vperm.slane %v86, 6
    %v95 = vperm.slane %v86, 7
    %v112 = vunpack.c.l.b16 %v62
    %v113 = vunpack.c.l.b16 %v63
    %v114 = vunpack.c.l.b16 %v64
    %v115 = vunpack.c.l.b16 %v65
    %v116 = vunpack.c.l.b16 %v66
    %v117 = vunpack.c.l.b16 %v67
    %v118 = vunpack.c.l.b16 %v68
    %v119 = vunpack.c.l.b16 %v69
    %v120 = vpack.c.b16 %v113, %v112
    %v121 = vpack.c.b16 %v115, %v114
    %v122 = vpack.c.b16 %v117, %v116
    %v123 = vpack.c.b16 %v119, %v118
    %v140 = vunpack.c.l.b16 %v70
    %v141 = vunpack.c.h.b16 %v70
    %v142 = vunpack.c.l.b16 %v71
    %v143 = vunpack.c.h.b16 %v71
    %v144 = vunpack.c.l.b16 %v72
    %v145 = vunpack.c.h.b16 %v72
    %v146 = vunpack.c.l.b16 %v73
    %v147 = vunpack.c.h.b16 %v73
    %v148 = vunpack.c.l.b16 %v74
    %v149 = vunpack.c.h.b16 %v74
    %v150 = vunpack.c.l.b16 %v75
    %v151 = vunpack.c.h.b16 %v75
    %v152 = vunpack.c.l.b16 %v76
    %v153 = vunpack.c.h.b16 %v76
    %v154 = vunpack.c.l.b16 %v77
    %v155 = vunpack.c.h.b16 %v77
    %v156 = vunpack.c.l.b16 %v78
    %v157 = vunpack.c.h.b16 %v78
    %v158 = vunpack.c.l.b16 %v79
    %v159 = vunpack.c.h.b16 %v79
    %v160 = vunpack.c.l.b16 %v80
    %v161 = vunpack.c.h.b16 %v80
    %v162 = vunpack.c.l.b16 %v81
    %v163 = vunpack.c.h.b16 %v81
    %v164 = vunpack.c.l.b16 %v82
    %v165 = vunpack.c.h.b16 %v82
    %v166 = vunpack.c.l.b16 %v83
    %v167 = vunpack.c.h.b16 %v83
    %v168 = vunpack.c.l.b16 %v84
    %v169 = vunpack.c.h.b16 %v84
    %v170 = vunpack.c.l.b16 %v85
    %v171 = vunpack.c.h.b16 %v85
    %v172 = vpack.c.b16 %v148, %v140
    %v173 = vpack.c.b16 %v149, %v141
    %v174 = vpack.c.b16 %v150, %v142
    %v175 = vpack.c.b16 %v151, %v143
    %v176 = vpack.c.b16 %v152, %v144
    %v177 = vpack.c.b16 %v153, %v145
    %v178 = vpack.c.b16 %v154, %v146
    %v179 = vpack.c.b16 %v155, %v147
    %v180 = vpack.c.b16 %v164, %v156
    %v181 = vpack.c.b16 %v165, %v157
    %v182 = vpack.c.b16 %v166, %v158
    %v183 = vpack.c.b16 %v167, %v159
    %v184 = vpack.c.b16 %v168, %v160
    %v185 = vpack.c.b16 %v169, %v161
    %v186 = vpack.c.b16 %v170, %v162
    %v187 = vpack.c.b16 %v171, %v163
    %vm204 = vcmask 261120
    %v206 = vsel %vm204, %v120, 0
    %v209 = vsel %vm204, %v121, 0
    %v212 = vsel %vm204, %v122, 0
    %v215 = vsel %vm204, %v123, 0
    %217 = vmatpush.bf16.msra.mxu0 0
    %218 = vmatpush.bf16.msra.mxu0 0
    %219 = vmatpush.bf16.msra.mxu0 0
    %220 = vmatpush.bf16.msra.mxu0 0
    %221 = vmatpush.bf16.msra.mxu0 0
    %222 = vmatpush.bf16.msra.mxu0 0
    %223 = vmatpush.bf16.msra.mxu0 %v180
    %224 = vmatpush.bf16.msra.mxu0 %v172
    %225 = vmatmul.bf16.gmra.mxu0 %v206
    %v226 = vpop.f32.mrf.mxu0
    %v227 = vadd.f32 %v88, %v226
    %v228 = vpop.f32.mrf.mxu0
    %v229 = vadd.f32 %v88, %v228
    %230 = vmatmul.bf16.gmra.mxu0 %v209
    %v231 = vpop.f32.mrf.mxu0
    %v232 = vadd.f32 %v88, %v231
    %v233 = vpop.f32.mrf.mxu0
    %v234 = vadd.f32 %v88, %v233
    %235 = vmatmul.bf16.gmra.mxu0 %v212
    %v236 = vpop.f32.mrf.mxu0
    %v237 = vadd.f32 %v88, %v236
    %v238 = vpop.f32.mrf.mxu0
    %v239 = vadd.f32 %v88, %v238
    %240 = vmatmul.bf16.gmra.mxu0 %v215
    %v241 = vpop.f32.mrf.mxu0
    %v242 = vadd.f32 %v88, %v241
    %v243 = vpop.f32.mrf.mxu0
    %v244 = vadd.f32 %v88, %v243
    %245 = vdwg.mxu0
    %246 = vmatpush.bf16.msra.mxu0 0
    %247 = vmatpush.bf16.msra.mxu0 0
    %248 = vmatpush.bf16.msra.mxu0 0
    %249 = vmatpush.bf16.msra.mxu0 0
    %250 = vmatpush.bf16.msra.mxu0 0
    %251 = vmatpush.bf16.msra.mxu0 0
    %252 = vmatpush.bf16.msra.mxu0 %v181
    %253 = vmatpush.bf16.msra.mxu0 %v173
    %254 = vmatmul.bf16.gmra.mxu0 %v206
    %v255 = vpop.f32.mrf.mxu0
    %v256 = vadd.f32 %v89, %v255
    %v257 = vpop.f32.mrf.mxu0
    %v258 = vadd.f32 %v89, %v257
    %259 = vmatmul.bf16.gmra.mxu0 %v209
    %v260 = vpop.f32.mrf.mxu0
    %v261 = vadd.f32 %v89, %v260
    %v262 = vpop.f32.mrf.mxu0
    %v263 = vadd.f32 %v89, %v262
    %264 = vmatmul.bf16.gmra.mxu0 %v212
    %v265 = vpop.f32.mrf.mxu0
    %v266 = vadd.f32 %v89, %v265
    %v267 = vpop.f32.mrf.mxu0
    %v268 = vadd.f32 %v89, %v267
    %269 = vmatmul.bf16.gmra.mxu0 %v215
    %v270 = vpop.f32.mrf.mxu0
    %v271 = vadd.f32 %v89, %v270
    %v272 = vpop.f32.mrf.mxu0
    %v273 = vadd.f32 %v89, %v272
    %274 = vdwg.mxu0
    %275 = vmatpush.bf16.msra.mxu0 0
    %276 = vmatpush.bf16.msra.mxu0 0
    %277 = vmatpush.bf16.msra.mxu0 0
    %278 = vmatpush.bf16.msra.mxu0 0
    %279 = vmatpush.bf16.msra.mxu0 0
    %280 = vmatpush.bf16.msra.mxu0 0
    %281 = vmatpush.bf16.msra.mxu0 %v182
    %282 = vmatpush.bf16.msra.mxu0 %v174
    %283 = vmatmul.bf16.gmra.mxu0 %v206
    %v284 = vpop.f32.mrf.mxu0
    %v285 = vadd.f32 %v90, %v284
    %v286 = vpop.f32.mrf.mxu0
    %v287 = vadd.f32 %v90, %v286
    %288 = vmatmul.bf16.gmra.mxu0 %v209
    %v289 = vpop.f32.mrf.mxu0
    %v290 = vadd.f32 %v90, %v289
    %v291 = vpop.f32.mrf.mxu0
    %v292 = vadd.f32 %v90, %v291
    %293 = vmatmul.bf16.gmra.mxu0 %v212
    %v294 = vpop.f32.mrf.mxu0
    %v295 = vadd.f32 %v90, %v294
    %v296 = vpop.f32.mrf.mxu0
    %v297 = vadd.f32 %v90, %v296
    %298 = vmatmul.bf16.gmra.mxu0 %v215
    %v299 = vpop.f32.mrf.mxu0
    %v300 = vadd.f32 %v90, %v299
    %v301 = vpop.f32.mrf.mxu0
    %v302 = vadd.f32 %v90, %v301
    %303 = vdwg.mxu0
    %304 = vmatpush.bf16.msra.mxu0 0
    %305 = vmatpush.bf16.msra.mxu0 0
    %306 = vmatpush.bf16.msra.mxu0 0
    %307 = vmatpush.bf16.msra.mxu0 0
    %308 = vmatpush.bf16.msra.mxu0 0
    %309 = vmatpush.bf16.msra.mxu0 0
    %310 = vmatpush.bf16.msra.mxu0 %v183
    %311 = vmatpush.bf16.msra.mxu0 %v175
    %312 = vmatmul.bf16.gmra.mxu0 %v206
    %v313 = vpop.f32.mrf.mxu0
    %v314 = vadd.f32 %v91, %v313
    %v315 = vpop.f32.mrf.mxu0
    %v316 = vadd.f32 %v91, %v315
    %317 = vmatmul.bf16.gmra.mxu0 %v209
    %v318 = vpop.f32.mrf.mxu0
    %v319 = vadd.f32 %v91, %v318
    %v320 = vpop.f32.mrf.mxu0
    %v321 = vadd.f32 %v91, %v320
    %322 = vmatmul.bf16.gmra.mxu0 %v212
    %v323 = vpop.f32.mrf.mxu0
    %v324 = vadd.f32 %v91, %v323
    %v325 = vpop.f32.mrf.mxu0
    %v326 = vadd.f32 %v91, %v325
    %327 = vmatmul.bf16.gmra.mxu0 %v215
    %v328 = vpop.f32.mrf.mxu0
    %v329 = vadd.f32 %v91, %v328
    %v330 = vpop.f32.mrf.mxu0
    %v331 = vadd.f32 %v91, %v330
    %332 = vdwg.mxu0
    %333 = vmatpush.bf16.msra.mxu0 0
    %334 = vmatpush.bf16.msra.mxu0 0
    %335 = vmatpush.bf16.msra.mxu0 0
    %336 = vmatpush.bf16.msra.mxu0 0
    %337 = vmatpush.bf16.msra.mxu0 0
    %338 = vmatpush.bf16.msra.mxu0 0
    %339 = vmatpush.bf16.msra.mxu0 %v184
    %340 = vmatpush.bf16.msra.mxu0 %v176
    %341 = vmatmul.bf16.gmra.mxu0 %v206
    %v342 = vpop.f32.mrf.mxu0
    %v343 = vadd.f32 %v92, %v342
    %v344 = vpop.f32.mrf.mxu0
    %v345 = vadd.f32 %v92, %v344
    %346 = vmatmul.bf16.gmra.mxu0 %v209
    %v347 = vpop.f32.mrf.mxu0
    %v348 = vadd.f32 %v92, %v347
    %v349 = vpop.f32.mrf.mxu0
    %v350 = vadd.f32 %v92, %v349
    %351 = vmatmul.bf16.gmra.mxu0 %v212
    %v352 = vpop.f32.mrf.mxu0
    %v353 = vadd.f32 %v92, %v352
    %v354 = vpop.f32.mrf.mxu0
    %v355 = vadd.f32 %v92, %v354
    %356 = vmatmul.bf16.gmra.mxu0 %v215
    %v357 = vpop.f32.mrf.mxu0
    %v358 = vadd.f32 %v92, %v357
    %v359 = vpop.f32.mrf.mxu0
    %v360 = vadd.f32 %v92, %v359
    %361 = vdwg.mxu0
    %362 = vmatpush.bf16.msra.mxu0 0
    %363 = vmatpush.bf16.msra.mxu0 0
    %364 = vmatpush.bf16.msra.mxu0 0
    %365 = vmatpush.bf16.msra.mxu0 0
    %366 = vmatpush.bf16.msra.mxu0 0
    %367 = vmatpush.bf16.msra.mxu0 0
    %368 = vmatpush.bf16.msra.mxu0 %v185
    %369 = vmatpush.bf16.msra.mxu0 %v177
    %370 = vmatmul.bf16.gmra.mxu0 %v206
    %v371 = vpop.f32.mrf.mxu0
    %v372 = vadd.f32 %v93, %v371
    %v373 = vpop.f32.mrf.mxu0
    %v374 = vadd.f32 %v93, %v373
    %375 = vmatmul.bf16.gmra.mxu0 %v209
    %v376 = vpop.f32.mrf.mxu0
    %v377 = vadd.f32 %v93, %v376
    %v378 = vpop.f32.mrf.mxu0
    %v379 = vadd.f32 %v93, %v378
    %380 = vmatmul.bf16.gmra.mxu0 %v212
    %v381 = vpop.f32.mrf.mxu0
    %v382 = vadd.f32 %v93, %v381
    %v383 = vpop.f32.mrf.mxu0
    %v384 = vadd.f32 %v93, %v383
    %385 = vmatmul.bf16.gmra.mxu0 %v215
    %v386 = vpop.f32.mrf.mxu0
    %v387 = vadd.f32 %v93, %v386
    %v388 = vpop.f32.mrf.mxu0
    %v389 = vadd.f32 %v93, %v388
    %390 = vdwg.mxu0
    %391 = vmatpush.bf16.msra.mxu0 0
    %392 = vmatpush.bf16.msra.mxu0 0
    %393 = vmatpush.bf16.msra.mxu0 0
    %394 = vmatpush.bf16.msra.mxu0 0
    %395 = vmatpush.bf16.msra.mxu0 0
    %396 = vmatpush.bf16.msra.mxu0 0
    %397 = vmatpush.bf16.msra.mxu0 %v186
    %398 = vmatpush.bf16.msra.mxu0 %v178
    %399 = vmatmul.bf16.gmra.mxu0 %v206
    %v400 = vpop.f32.mrf.mxu0
    %v401 = vadd.f32 %v94, %v400
    %v402 = vpop.f32.mrf.mxu0
    %v403 = vadd.f32 %v94, %v402
    %404 = vmatmul.bf16.gmra.mxu0 %v209
    %v405 = vpop.f32.mrf.mxu0
    %v406 = vadd.f32 %v94, %v405
    %v407 = vpop.f32.mrf.mxu0
    %v408 = vadd.f32 %v94, %v407
    %409 = vmatmul.bf16.gmra.mxu0 %v212
    %v410 = vpop.f32.mrf.mxu0
    %v411 = vadd.f32 %v94, %v410
    %v412 = vpop.f32.mrf.mxu0
    %v413 = vadd.f32 %v94, %v412
    %414 = vmatmul.bf16.gmra.mxu0 %v215
    %v415 = vpop.f32.mrf.mxu0
    %v416 = vadd.f32 %v94, %v415
    %v417 = vpop.f32.mrf.mxu0
    %v418 = vadd.f32 %v94, %v417
    %419 = vdwg.mxu0
    %420 = vmatpush.bf16.msra.mxu0 0
    %421 = vmatpush.bf16.msra.mxu0 0
    %422 = vmatpush.bf16.msra.mxu0 0
    %423 = vmatpush.bf16.msra.mxu0 0
    %424 = vmatpush.bf16.msra.mxu0 0
    %425 = vmatpush.bf16.msra.mxu0 0
    %426 = vmatpush.bf16.msra.mxu0 %v187
    %427 = vmatpush.bf16.msra.mxu0 %v179
    %428 = vmatmul.bf16.gmra.mxu0 %v206
    %v429 = vpop.f32.mrf.mxu0
    %v430 = vadd.f32 %v95, %v429
    %v431 = vpop.f32.mrf.mxu0
    %v432 = vadd.f32 %v95, %v431
    %433 = vmatmul.bf16.gmra.mxu0 %v209
    %v434 = vpop.f32.mrf.mxu0
    %v435 = vadd.f32 %v95, %v434
    %v436 = vpop.f32.mrf.mxu0
    %v437 = vadd.f32 %v95, %v436
    %438 = vmatmul.bf16.gmra.mxu0 %v212
    %v439 = vpop.f32.mrf.mxu0
    %v440 = vadd.f32 %v95, %v439
    %v441 = vpop.f32.mrf.mxu0
    %v442 = vadd.f32 %v95, %v441
    %443 = vmatmul.bf16.gmra.mxu0 %v215
    %v444 = vpop.f32.mrf.mxu0
    %v445 = vadd.f32 %v95, %v444
    %v446 = vpop.f32.mrf.mxu0
    %v447 = vadd.f32 %v95, %v446
    %448 = vdwg.mxu0
    %v449 = vld [vmem:[%s5] sm:$0xff]
    %v450 = vld [vmem:[#allocation2] sm:$0xff]
    %v451 = vld [vmem:[#allocation2 + $0x8] sm:$0xff]
    %v452 = vld [vmem:[#allocation2 + $0x10] sm:$0xff]
    %v453 = vld [vmem:[#allocation2 + $0x18] sm:$0xff]
    %v454 = vld [vmem:[#allocation2 + $0x20] sm:$0xff]
    %v455 = vld [vmem:[#allocation2 + $0x28] sm:$0xff]
    %v456 = vld [vmem:[#allocation2 + $0x30] sm:$0xff]
    %v457 = vld [vmem:[#allocation2 + $0x38] sm:$0xff]
    %v458 = vld [vmem:[#allocation2 + $0x40] sm:$0xff]
    %v459 = vld [vmem:[#allocation2 + $0x48] sm:$0xff]
    %v460 = vld [vmem:[#allocation2 + $0x50] sm:$0xff]
    %v461 = vld [vmem:[#allocation2 + $0x58] sm:$0xff]
    %v462 = vld [vmem:[#allocation2 + $0x60] sm:$0xff]
    %v463 = vld [vmem:[#allocation2 + $0x68] sm:$0xff]
    %v464 = vld [vmem:[#allocation2 + $0x70] sm:$0xff]
    %v465 = vld [vmem:[#allocation2 + $0x78] sm:$0xff]
    %v466 = vld [vmem:[#allocation2 + $0x80] sm:$0xff]
    %v467 = vld [vmem:[#allocation2 + $0x88] sm:$0xff]
    %v468 = vld [vmem:[#allocation2 + $0x90] sm:$0xff]
    %v469 = vld [vmem:[#allocation2 + $0x98] sm:$0xff]
    %v470 = vld [vmem:[#allocation2 + $0xa0] sm:$0xff]
    %v471 = vld [vmem:[#allocation2 + $0xa8] sm:$0xff]
    %v472 = vld [vmem:[#allocation2 + $0xb0] sm:$0xff]
    %v473 = vld [vmem:[#allocation2 + $0xb8] sm:$0xff]
    %v474 = vld [vmem:[#allocation2 + $0xc0] sm:$0xff]
    %v475 = vld [vmem:[#allocation2 + $0xc8] sm:$0xff]
    %v476 = vld [vmem:[#allocation2 + $0xd0] sm:$0xff]
    %v477 = vld [vmem:[#allocation2 + $0xd8] sm:$0xff]
    %v478 = vld [vmem:[#allocation2 + $0xe0] sm:$0xff]
    %v479 = vld [vmem:[#allocation2 + $0xe8] sm:$0xff]
    %v480 = vld [vmem:[#allocation2 + $0xf0] sm:$0xff]
    %v481 = vld [vmem:[#allocation2 + $0xf8] sm:$0xff]
    %v482 = vld [vmem:[#allocation2 + $0x100] sm:$0xff]
    %v483 = vld [vmem:[#allocation2 + $0x108] sm:$0xff]
    %v484 = vld [vmem:[#allocation2 + $0x110] sm:$0xff]
    %v485 = vld [vmem:[#allocation2 + $0x118] sm:$0xff]
    %v486 = vld [vmem:[#allocation2 + $0x120] sm:$0xff]
    %v487 = vld [vmem:[#allocation2 + $0x128] sm:$0xff]
    %v488 = vld [vmem:[#allocation2 + $0x130] sm:$0xff]
    %v489 = vld [vmem:[#allocation2 + $0x138] sm:$0xff]
    %v490 = vld [vmem:[#allocation2 + $0x140] sm:$0xff]
    %v491 = vld [vmem:[#allocation2 + $0x148] sm:$0xff]
    %v492 = vld [vmem:[#allocation2 + $0x150] sm:$0xff]
    %v493 = vld [vmem:[#allocation2 + $0x158] sm:$0xff]
    %v494 = vld [vmem:[#allocation2 + $0x160] sm:$0xff]
    %v495 = vld [vmem:[#allocation2 + $0x168] sm:$0xff]
    %v496 = vld [vmem:[#allocation2 + $0x170] sm:$0xff]
    %v497 = vld [vmem:[#allocation2 + $0x178] sm:$0xff]
    %v498 = vld [vmem:[#allocation2 + $0x180] sm:$0xff]
    %v499 = vld [vmem:[#allocation2 + $0x188] sm:$0xff]
    %v500 = vld [vmem:[#allocation2 + $0x190] sm:$0xff]
    %v501 = vld [vmem:[#allocation2 + $0x198] sm:$0xff]
    %v502 = vld [vmem:[#allocation2 + $0x1a0] sm:$0xff]
    %v503 = vld [vmem:[#allocation2 + $0x1a8] sm:$0xff]
    %v504 = vld [vmem:[#allocation2 + $0x1b0] sm:$0xff]
    %v505 = vld [vmem:[#allocation2 + $0x1b8] sm:$0xff]
    %v506 = vld [vmem:[#allocation2 + $0x1c0] sm:$0xff]
    %v507 = vld [vmem:[#allocation2 + $0x1c8] sm:$0xff]
    %v508 = vld [vmem:[#allocation2 + $0x1d0] sm:$0xff]
    %v509 = vld [vmem:[#allocation2 + $0x1d8] sm:$0xff]
    %v510 = vld [vmem:[#allocation2 + $0x1e0] sm:$0xff]
    %v511 = vld [vmem:[#allocation2 + $0x1e8] sm:$0xff]
    %v512 = vld [vmem:[#allocation2 + $0x1f0] sm:$0xff]
    %v513 = vld [vmem:[#allocation2 + $0x1f8] sm:$0xff]
    %v514 = vld [vmem:[#allocation2 + $0x200] sm:$0xff]
    %v515 = vld [vmem:[#allocation2 + $0x208] sm:$0xff]
    %v516 = vld [vmem:[#allocation2 + $0x210] sm:$0xff]
    %v517 = vld [vmem:[#allocation2 + $0x218] sm:$0xff]
    %v518 = vld [vmem:[#allocation2 + $0x220] sm:$0xff]
    %v519 = vld [vmem:[#allocation2 + $0x228] sm:$0xff]
    %v520 = vld [vmem:[#allocation2 + $0x230] sm:$0xff]
    %v521 = vld [vmem:[#allocation2 + $0x238] sm:$0xff]
    %v522 = vld [vmem:[#allocation2 + $0x240] sm:$0xff]
    %v523 = vld [vmem:[#allocation2 + $0x248] sm:$0xff]
    %v524 = vld [vmem:[#allocation2 + $0x250] sm:$0xff]
    %v525 = vld [vmem:[#allocation2 + $0x258] sm:$0xff]
    %v526 = vld [vmem:[#allocation2 + $0x260] sm:$0xff]
    %v527 = vld [vmem:[#allocation2 + $0x268] sm:$0xff]
    %v528 = vld [vmem:[#allocation2 + $0x270] sm:$0xff]
    %v529 = vld [vmem:[#allocation2 + $0x278] sm:$0xff]
    %v530 = vld [vmem:[#allocation2 + $0x280] sm:$0xff]
    %v531 = vld [vmem:[#allocation2 + $0x288] sm:$0xff]
    %v532 = vld [vmem:[#allocation2 + $0x290] sm:$0xff]
    %v533 = vld [vmem:[#allocation2 + $0x298] sm:$0xff]
    %v534 = vld [vmem:[#allocation2 + $0x2a0] sm:$0xff]
    %v535 = vld [vmem:[#allocation2 + $0x2a8] sm:$0xff]
    %v536 = vld [vmem:[#allocation2 + $0x2b0] sm:$0xff]
    %v537 = vld [vmem:[#allocation2 + $0x2b8] sm:$0xff]
    %v538 = vld [vmem:[#allocation2 + $0x2c0] sm:$0xff]
    %v539 = vld [vmem:[#allocation2 + $0x2c8] sm:$0xff]
    %v540 = vld [vmem:[#allocation2 + $0x2d0] sm:$0xff]
    %v541 = vld [vmem:[#allocation2 + $0x2d8] sm:$0xff]
    %v542 = vld [vmem:[#allocation2 + $0x2e0] sm:$0xff]
    %v543 = vld [vmem:[#allocation2 + $0x2e8] sm:$0xff]
    %v544 = vld [vmem:[#allocation2 + $0x2f0] sm:$0xff]
    %v545 = vld [vmem:[#allocation2 + $0x2f8] sm:$0xff]
    %v546 = vld [vmem:[#allocation2 + $0x300] sm:$0xff]
    %v547 = vld [vmem:[#allocation2 + $0x308] sm:$0xff]
    %v548 = vld [vmem:[#allocation2 + $0x310] sm:$0xff]
    %v549 = vld [vmem:[#allocation2 + $0x318] sm:$0xff]
    %v550 = vld [vmem:[#allocation2 + $0x320] sm:$0xff]
    %v551 = vld [vmem:[#allocation2 + $0x328] sm:$0xff]
    %v552 = vld [vmem:[#allocation2 + $0x330] sm:$0xff]
    %v553 = vld [vmem:[#allocation2 + $0x338] sm:$0xff]
    %v554 = vld [vmem:[#allocation2 + $0x340] sm:$0xff]
    %v555 = vld [vmem:[#allocation2 + $0x348] sm:$0xff]
    %v556 = vld [vmem:[#allocation2 + $0x350] sm:$0xff]
    %v557 = vld [vmem:[#allocation2 + $0x358] sm:$0xff]
    %v558 = vld [vmem:[#allocation2 + $0x360] sm:$0xff]
    %v559 = vld [vmem:[#allocation2 + $0x368] sm:$0xff]
    %v560 = vld [vmem:[#allocation2 + $0x370] sm:$0xff]
    %v561 = vld [vmem:[#allocation2 + $0x378] sm:$0xff]
    %v562 = vld [vmem:[#allocation2 + $0x380] sm:$0xff]
    %v563 = vld [vmem:[#allocation2 + $0x388] sm:$0xff]
    %v564 = vld [vmem:[#allocation2 + $0x390] sm:$0xff]
    %v565 = vld [vmem:[#allocation2 + $0x398] sm:$0xff]
    %v566 = vld [vmem:[#allocation2 + $0x3a0] sm:$0xff]
    %v567 = vld [vmem:[#allocation2 + $0x3a8] sm:$0xff]
    %v568 = vld [vmem:[#allocation2 + $0x3b0] sm:$0xff]
    %v569 = vld [vmem:[#allocation2 + $0x3b8] sm:$0xff]
    %v570 = vld [vmem:[#allocation2 + $0x3c0] sm:$0xff]
    %v571 = vld [vmem:[#allocation2 + $0x3c8] sm:$0xff]
    %v572 = vld [vmem:[#allocation2 + $0x3d0] sm:$0xff]
    %v573 = vld [vmem:[#allocation2 + $0x3d8] sm:$0xff]
    %v574 = vld [vmem:[#allocation2 + $0x3e0] sm:$0xff]
    %v575 = vld [vmem:[#allocation2 + $0x3e8] sm:$0xff]
    %v576 = vld [vmem:[#allocation2 + $0x3f0] sm:$0xff]
    %v577 = vld [vmem:[#allocation2 + $0x3f8] sm:$0xff]
    %v706 = vunpack.c.l.b16 %v450
    %v707 = vunpack.c.h.b16 %v450
    %v708 = vunpack.c.l.b16 %v451
    %v709 = vunpack.c.h.b16 %v451
    %v710 = vunpack.c.l.b16 %v452
    %v711 = vunpack.c.h.b16 %v452
    %v712 = vunpack.c.l.b16 %v453
    %v713 = vunpack.c.h.b16 %v453
    %v714 = vunpack.c.l.b16 %v454
    %v715 = vunpack.c.h.b16 %v454
    %v716 = vunpack.c.l.b16 %v455
    %v717 = vunpack.c.h.b16 %v455
    %v718 = vunpack.c.l.b16 %v456
    %v719 = vunpack.c.h.b16 %v456
    %v720 = vunpack.c.l.b16 %v457
    %v721 = vunpack.c.h.b16 %v457
    %v722 = vunpack.c.l.b16 %v458
    %v723 = vunpack.c.h.b16 %v458
    %v724 = vunpack.c.l.b16 %v459
    %v725 = vunpack.c.h.b16 %v459
    %v726 = vunpack.c.l.b16 %v460
    %v727 = vunpack.c.h.b16 %v460
    %v728 = vunpack.c.l.b16 %v461
    %v729 = vunpack.c.h.b16 %v461
    %v730 = vunpack.c.l.b16 %v462
    %v731 = vunpack.c.h.b16 %v462
    %v732 = vunpack.c.l.b16 %v463
    %v733 = vunpack.c.h.b16 %v463
    %v734 = vunpack.c.l.b16 %v464
    %v735 = vunpack.c.h.b16 %v464
    %v736 = vunpack.c.l.b16 %v465
    %v737 = vunpack.c.h.b16 %v465
    %v738 = vunpack.c.l.b16 %v466
    %v739 = vunpack.c.h.b16 %v466
    %v740 = vunpack.c.l.b16 %v467
    %v741 = vunpack.c.h.b16 %v467
    %v742 = vunpack.c.l.b16 %v468
    %v743 = vunpack.c.h.b16 %v468
    %v744 = vunpack.c.l.b16 %v469
    %v745 = vunpack.c.h.b16 %v469
    %v746 = vunpack.c.l.b16 %v470
    %v747 = vunpack.c.h.b16 %v470
    %v748 = vunpack.c.l.b16 %v471
    %v749 = vunpack.c.h.b16 %v471
    %v750 = vunpack.c.l.b16 %v472
    %v751 = vunpack.c.h.b16 %v472
    %v752 = vunpack.c.l.b16 %v473
    %v753 = vunpack.c.h.b16 %v473
    %v754 = vunpack.c.l.b16 %v474
    %v755 = vunpack.c.h.b16 %v474
    %v756 = vunpack.c.l.b16 %v475
    %v757 = vunpack.c.h.b16 %v475
    %v758 = vunpack.c.l.b16 %v476
    %v759 = vunpack.c.h.b16 %v476
    %v760 = vunpack.c.l.b16 %v477
    %v761 = vunpack.c.h.b16 %v477
    %v762 = vunpack.c.l.b16 %v478
    %v763 = vunpack.c.h.b16 %v478
    %v764 = vunpack.c.l.b16 %v479
    %v765 = vunpack.c.h.b16 %v479
    %v766 = vunpack.c.l.b16 %v480
    %v767 = vunpack.c.h.b16 %v480
    %v768 = vunpack.c.l.b16 %v481
    %v769 = vunpack.c.h.b16 %v481
    %v770 = vunpack.c.l.b16 %v482
    %v771 = vunpack.c.h.b16 %v482
    %v772 = vunpack.c.l.b16 %v483
    %v773 = vunpack.c.h.b16 %v483
    %v774 = vunpack.c.l.b16 %v484
    %v775 = vunpack.c.h.b16 %v484
    %v776 = vunpack.c.l.b16 %v485
    %v777 = vunpack.c.h.b16 %v485
    %v778 = vunpack.c.l.b16 %v486
    %v779 = vunpack.c.h.b16 %v486
    %v780 = vunpack.c.l.b16 %v487
    %v781 = vunpack.c.h.b16 %v487
    %v782 = vunpack.c.l.b16 %v488
    %v783 = vunpack.c.h.b16 %v488
    %v784 = vunpack.c.l.b16 %v489
    %v785 = vunpack.c.h.b16 %v489
    %v786 = vunpack.c.l.b16 %v490
    %v787 = vunpack.c.h.b16 %v490
    %v788 = vunpack.c.l.b16 %v491
    %v789 = vunpack.c.h.b16 %v491
    %v790 = vunpack.c.l.b16 %v492
    %v791 = vunpack.c.h.b16 %v492
    %v792 = vunpack.c.l.b16 %v493
    %v793 = vunpack.c.h.b16 %v493
    %v794 = vunpack.c.l.b16 %v494
    %v795 = vunpack.c.h.b16 %v494
    %v796 = vunpack.c.l.b16 %v495
    %v797 = vunpack.c.h.b16 %v495
    %v798 = vunpack.c.l.b16 %v496
    %v799 = vunpack.c.h.b16 %v496
    %v800 = vunpack.c.l.b16 %v497
    %v801 = vunpack.c.h.b16 %v497
    %v802 = vunpack.c.l.b16 %v498
    %v803 = vunpack.c.h.b16 %v498
    %v804 = vunpack.c.l.b16 %v499
    %v805 = vunpack.c.h.b16 %v499
    %v806 = vunpack.c.l.b16 %v500
    %v807 = vunpack.c.h.b16 %v500
    %v808 = vunpack.c.l.b16 %v501
    %v809 = vunpack.c.h.b16 %v501
    %v810 = vunpack.c.l.b16 %v502
    %v811 = vunpack.c.h.b16 %v502
    %v812 = vunpack.c.l.b16 %v503
    %v813 = vunpack.c.h.b16 %v503
    %v814 = vunpack.c.l.b16 %v504
    %v815 = vunpack.c.h.b16 %v504
    %v816 = vunpack.c.l.b16 %v505
    %v817 = vunpack.c.h.b16 %v505
    %v818 = vunpack.c.l.b16 %v506
    %v819 = vunpack.c.h.b16 %v506
    %v820 = vunpack.c.l.b16 %v507
    %v821 = vunpack.c.h.b16 %v507
    %v822 = vunpack.c.l.b16 %v508
    %v823 = vunpack.c.h.b16 %v508
    %v824 = vunpack.c.l.b16 %v509
    %v825 = vunpack.c.h.b16 %v509
    %v826 = vunpack.c.l.b16 %v510
    %v827 = vunpack.c.h.b16 %v510
    %v828 = vunpack.c.l.b16 %v511
    %v829 = vunpack.c.h.b16 %v511
    %v830 = vunpack.c.l.b16 %v512
    %v831 = vunpack.c.h.b16 %v512
    %v832 = vunpack.c.l.b16 %v513
    %v833 = vunpack.c.h.b16 %v513
    %v834 = vunpack.c.l.b16 %v514
    %v835 = vunpack.c.h.b16 %v514
    %v836 = vunpack.c.l.b16 %v515
    %v837 = vunpack.c.h.b16 %v515
    %v838 = vunpack.c.l.b16 %v516
    %v839 = vunpack.c.h.b16 %v516
    %v840 = vunpack.c.l.b16 %v517
    %v841 = vunpack.c.h.b16 %v517
    %v842 = vunpack.c.l.b16 %v518
    %v843 = vunpack.c.h.b16 %v518
    %v844 = vunpack.c.l.b16 %v519
    %v845 = vunpack.c.h.b16 %v519
    %v846 = vunpack.c.l.b16 %v520
    %v847 = vunpack.c.h.b16 %v520
    %v848 = vunpack.c.l.b16 %v521
    %v849 = vunpack.c.h.b16 %v521
    %v850 = vunpack.c.l.b16 %v522
    %v851 = vunpack.c.h.b16 %v522
    %v852 = vunpack.c.l.b16 %v523
    %v853 = vunpack.c.h.b16 %v523
    %v854 = vunpack.c.l.b16 %v524
    %v855 = vunpack.c.h.b16 %v524
    %v856 = vunpack.c.l.b16 %v525
    %v857 = vunpack.c.h.b16 %v525
    %v858 = vunpack.c.l.b16 %v526
    %v859 = vunpack.c.h.b16 %v526
    %v860 = vunpack.c.l.b16 %v527
    %v861 = vunpack.c.h.b16 %v527
    %v862 = vunpack.c.l.b16 %v528
    %v863 = vunpack.c.h.b16 %v528
    %v864 = vunpack.c.l.b16 %v529
    %v865 = vunpack.c.h.b16 %v529
    %v866 = vunpack.c.l.b16 %v530
    %v867 = vunpack.c.h.b16 %v530
    %v868 = vunpack.c.l.b16 %v531
    %v869 = vunpack.c.h.b16 %v531
    %v870 = vunpack.c.l.b16 %v532
    %v871 = vunpack.c.h.b16 %v532
    %v872 = vunpack.c.l.b16 %v533
    %v873 = vunpack.c.h.b16 %v533
    %v874 = vunpack.c.l.b16 %v534
    %v875 = vunpack.c.h.b16 %v534
    %v876 = vunpack.c.l.b16 %v535
    %v877 = vunpack.c.h.b16 %v535
    %v878 = vunpack.c.l.b16 %v536
    %v879 = vunpack.c.h.b16 %v536
    %v880 = vunpack.c.l.b16 %v537
    %v881 = vunpack.c.h.b16 %v537
    %v882 = vunpack.c.l.b16 %v538
    %v883 = vunpack.c.h.b16 %v538
    %v884 = vunpack.c.l.b16 %v539
    %v885 = vunpack.c.h.b16 %v539
    %v886 = vunpack.c.l.b16 %v540
    %v887 = vunpack.c.h.b16 %v540
    %v888 = vunpack.c.l.b16 %v541
    %v889 = vunpack.c.h.b16 %v541
    %v890 = vunpack.c.l.b16 %v542
    %v891 = vunpack.c.h.b16 %v542
    %v892 = vunpack.c.l.b16 %v543
    %v893 = vunpack.c.h.b16 %v543
    %v894 = vunpack.c.l.b16 %v544
    %v895 = vunpack.c.h.b16 %v544
    %v896 = vunpack.c.l.b16 %v545
    %v897 = vunpack.c.h.b16 %v545
    %v898 = vunpack.c.l.b16 %v546
    %v899 = vunpack.c.h.b16 %v546
    %v900 = vunpack.c.l.b16 %v547
    %v901 = vunpack.c.h.b16 %v547
    %v902 = vunpack.c.l.b16 %v548
    %v903 = vunpack.c.h.b16 %v548
    %v904 = vunpack.c.l.b16 %v549
    %v905 = vunpack.c.h.b16 %v549
    %v906 = vunpack.c.l.b16 %v550
    %v907 = vunpack.c.h.b16 %v550
    %v908 = vunpack.c.l.b16 %v551
    %v909 = vunpack.c.h.b16 %v551
    %v910 = vunpack.c.l.b16 %v552
    %v911 = vunpack.c.h.b16 %v552
    %v912 = vunpack.c.l.b16 %v553
    %v913 = vunpack.c.h.b16 %v553
    %v914 = vunpack.c.l.b16 %v554
    %v915 = vunpack.c.h.b16 %v554
    %v916 = vunpack.c.l.b16 %v555
    %v917 = vunpack.c.h.b16 %v555
    %v918 = vunpack.c.l.b16 %v556
    %v919 = vunpack.c.h.b16 %v556
    %v920 = vunpack.c.l.b16 %v557
    %v921 = vunpack.c.h.b16 %v557
    %v922 = vunpack.c.l.b16 %v558
    %v923 = vunpack.c.h.b16 %v558
    %v924 = vunpack.c.l.b16 %v559
    %v925 = vunpack.c.h.b16 %v559
    %v926 = vunpack.c.l.b16 %v560
    %v927 = vunpack.c.h.b16 %v560
    %v928 = vunpack.c.l.b16 %v561
    %v929 = vunpack.c.h.b16 %v561
    %v930 = vunpack.c.l.b16 %v562
    %v931 = vunpack.c.h.b16 %v562
    %v932 = vunpack.c.l.b16 %v563
    %v933 = vunpack.c.h.b16 %v563
    %v934 = vunpack.c.l.b16 %v564
    %v935 = vunpack.c.h.b16 %v564
    %v936 = vunpack.c.l.b16 %v565
    %v937 = vunpack.c.h.b16 %v565
    %v938 = vunpack.c.l.b16 %v566
    %v939 = vunpack.c.h.b16 %v566
    %v940 = vunpack.c.l.b16 %v567
    %v941 = vunpack.c.h.b16 %v567
    %v942 = vunpack.c.l.b16 %v568
    %v943 = vunpack.c.h.b16 %v568
    %v944 = vunpack.c.l.b16 %v569
    %v945 = vunpack.c.h.b16 %v569
    %v946 = vunpack.c.l.b16 %v570
    %v947 = vunpack.c.h.b16 %v570
    %v948 = vunpack.c.l.b16 %v571
    %v949 = vunpack.c.h.b16 %v571
    %v950 = vunpack.c.l.b16 %v572
    %v951 = vunpack.c.h.b16 %v572
    %v952 = vunpack.c.l.b16 %v573
    %v953 = vunpack.c.h.b16 %v573
    %v954 = vunpack.c.l.b16 %v574
    %v955 = vunpack.c.h.b16 %v574
    %v956 = vunpack.c.l.b16 %v575
    %v957 = vunpack.c.h.b16 %v575
    %v958 = vunpack.c.l.b16 %v576
    %v959 = vunpack.c.h.b16 %v576
    %v960 = vunpack.c.l.b16 %v577
    %v961 = vunpack.c.h.b16 %v577
    %v962 = vpack.c.b16 %v714, %v706
    %v963 = vpack.c.b16 %v715, %v707
    %v964 = vpack.c.b16 %v716, %v708
    %v965 = vpack.c.b16 %v717, %v709
    %v966 = vpack.c.b16 %v718, %v710
    %v967 = vpack.c.b16 %v719, %v711
    %v968 = vpack.c.b16 %v720, %v712
    %v969 = vpack.c.b16 %v721, %v713
    %v970 = vpack.c.b16 %v730, %v722
    %v971 = vpack.c.b16 %v731, %v723
    %v972 = vpack.c.b16 %v732, %v724
    %v973 = vpack.c.b16 %v733, %v725
    %v974 = vpack.c.b16 %v734, %v726
    %v975 = vpack.c.b16 %v735, %v727
    %v976 = vpack.c.b16 %v736, %v728
    %v977 = vpack.c.b16 %v737, %v729
    %v978 = vpack.c.b16 %v746, %v738
    %v979 = vpack.c.b16 %v747, %v739
    %v980 = vpack.c.b16 %v748, %v740
    %v981 = vpack.c.b16 %v749, %v741
    %v982 = vpack.c.b16 %v750, %v742
    %v983 = vpack.c.b16 %v751, %v743
    %v984 = vpack.c.b16 %v752, %v744
    %v985 = vpack.c.b16 %v753, %v745
    %v986 = vpack.c.b16 %v762, %v754
    %v987 = vpack.c.b16 %v763, %v755
    %v988 = vpack.c.b16 %v764, %v756
    %v989 = vpack.c.b16 %v765, %v757
    %v990 = vpack.c.b16 %v766, %v758
    %v991 = vpack.c.b16 %v767, %v759
    %v992 = vpack.c.b16 %v768, %v760
    %v993 = vpack.c.b16 %v769, %v761
    %v994 = vpack.c.b16 %v778, %v770
    %v995 = vpack.c.b16 %v779, %v771
    %v996 = vpack.c.b16 %v780, %v772
    %v997 = vpack.c.b16 %v781, %v773
    %v998 = vpack.c.b16 %v782, %v774
    %v999 = vpack.c.b16 %v783, %v775
    %v1000 = vpack.c.b16 %v784, %v776
    %v1001 = vpack.c.b16 %v785, %v777
    %v1002 = vpack.c.b16 %v794, %v786
    %v1003 = vpack.c.b16 %v795, %v787
    %v1004 = vpack.c.b16 %v796, %v788
    %v1005 = vpack.c.b16 %v797, %v789
    %v1006 = vpack.c.b16 %v798, %v790
    %v1007 = vpack.c.b16 %v799, %v791
    %v1008 = vpack.c.b16 %v800, %v792
    %v1009 = vpack.c.b16 %v801, %v793
    %v1010 = vpack.c.b16 %v810, %v802
    %v1011 = vpack.c.b16 %v811, %v803
    %v1012 = vpack.c.b16 %v812, %v804
    %v1013 = vpack.c.b16 %v813, %v805
    %v1014 = vpack.c.b16 %v814, %v806
    %v1015 = vpack.c.b16 %v815, %v807
    %v1016 = vpack.c.b16 %v816, %v808
    %v1017 = vpack.c.b16 %v817, %v809
    %v1018 = vpack.c.b16 %v826, %v818
    %v1019 = vpack.c.b16 %v827, %v819
    %v1020 = vpack.c.b16 %v828, %v820
    %v1021 = vpack.c.b16 %v829, %v821
    %v1022 = vpack.c.b16 %v830, %v822
    %v1023 = vpack.c.b16 %v831, %v823
    %v1024 = vpack.c.b16 %v832, %v824
    %v1025 = vpack.c.b16 %v833, %v825
    %v1026 = vpack.c.b16 %v842, %v834
    %v1027 = vpack.c.b16 %v843, %v835
    %v1028 = vpack.c.b16 %v844, %v836
    %v1029 = vpack.c.b16 %v845, %v837
    %v1030 = vpack.c.b16 %v846, %v838
    %v1031 = vpack.c.b16 %v847, %v839
    %v1032 = vpack.c.b16 %v848, %v840
    %v1033 = vpack.c.b16 %v849, %v841
    %v1034 = vpack.c.b16 %v858, %v850
    %v1035 = vpack.c.b16 %v859, %v851
    %v1036 = vpack.c.b16 %v860, %v852
    %v1037 = vpack.c.b16 %v861, %v853
    %v1038 = vpack.c.b16 %v862, %v854
    %v1039 = vpack.c.b16 %v863, %v855
    %v1040 = vpack.c.b16 %v864, %v856
    %v1041 = vpack.c.b16 %v865, %v857
    %v1042 = vpack.c.b16 %v874, %v866
    %v1043 = vpack.c.b16 %v875, %v867
    %v1044 = vpack.c.b16 %v876, %v868
    %v1045 = vpack.c.b16 %v877, %v869
    %v1046 = vpack.c.b16 %v878, %v870
    %v1047 = vpack.c.b16 %v879, %v871
    %v1048 = vpack.c.b16 %v880, %v872
    %v1049 = vpack.c.b16 %v881, %v873
    %v1050 = vpack.c.b16 %v890, %v882
    %v1051 = vpack.c.b16 %v891, %v883
    %v1052 = vpack.c.b16 %v892, %v884
    %v1053 = vpack.c.b16 %v893, %v885
    %v1054 = vpack.c.b16 %v894, %v886
    %v1055 = vpack.c.b16 %v895, %v887
    %v1056 = vpack.c.b16 %v896, %v888
    %v1057 = vpack.c.b16 %v897, %v889
    %v1058 = vpack.c.b16 %v906, %v898
    %v1059 = vpack.c.b16 %v907, %v899
    %v1060 = vpack.c.b16 %v908, %v900
    %v1061 = vpack.c.b16 %v909, %v901
    %v1062 = vpack.c.b16 %v910, %v902
    %v1063 = vpack.c.b16 %v911, %v903
    %v1064 = vpack.c.b16 %v912, %v904
    %v1065 = vpack.c.b16 %v913, %v905
    %v1066 = vpack.c.b16 %v922, %v914
    %v1067 = vpack.c.b16 %v923, %v915
    %v1068 = vpack.c.b16 %v924, %v916
    %v1069 = vpack.c.b16 %v925, %v917
    %v1070 = vpack.c.b16 %v926, %v918
    %v1071 = vpack.c.b16 %v927, %v919
    %v1072 = vpack.c.b16 %v928, %v920
    %v1073 = vpack.c.b16 %v929, %v921
    %v1074 = vpack.c.b16 %v938, %v930
    %v1075 = vpack.c.b16 %v939, %v931
    %v1076 = vpack.c.b16 %v940, %v932
    %v1077 = vpack.c.b16 %v941, %v933
    %v1078 = vpack.c.b16 %v942, %v934
    %v1079 = vpack.c.b16 %v943, %v935
    %v1080 = vpack.c.b16 %v944, %v936
    %v1081 = vpack.c.b16 %v945, %v937
    %v1082 = vpack.c.b16 %v954, %v946
    %v1083 = vpack.c.b16 %v955, %v947
    %v1084 = vpack.c.b16 %v956, %v948
    %v1085 = vpack.c.b16 %v957, %v949
    %v1086 = vpack.c.b16 %v958, %v950
    %v1087 = vpack.c.b16 %v959, %v951
    %v1088 = vpack.c.b16 %v960, %v952
    %v1089 = vpack.c.b16 %v961, %v953
    %1218 = vmatpush.bf16.msra.mxu0 %v1018
    %1219 = vmatpush.bf16.msra.mxu0 %v1010
    %1220 = vmatpush.bf16.msra.mxu0 %v1002
    %1221 = vmatpush.bf16.msra.mxu0 %v994
    %1222 = vmatpush.bf16.msra.mxu0 %v986
    %1223 = vmatpush.bf16.msra.mxu0 %v978
    %1224 = vmatpush.bf16.msra.mxu0 %v970
    %1225 = vmatpush.bf16.msra.mxu0 %v962
    %1226 = vmatmul.bf16.gmra.mxu0 0
    %v1227 = vpop.f32.mrf.mxu0
    %v1228 = vadd.f32 0.0, %v1227
    %v1229 = vpop.f32.mrf.mxu0
    %1230 = vdwg.mxu0
    %1231 = vmatpush.bf16.msra.mxu0 %v1082
    %1232 = vmatpush.bf16.msra.mxu0 %v1074
    %1233 = vmatpush.bf16.msra.mxu0 %v1066
    %1234 = vmatpush.bf16.msra.mxu0 %v1058
    %1235 = vmatpush.bf16.msra.mxu0 %v1050
    %1236 = vmatpush.bf16.msra.mxu0 %v1042
    %1237 = vmatpush.bf16.msra.mxu0 %v1034
    %1238 = vmatpush.bf16.msra.mxu0 %v1026
    %1239 = vmatmul.bf16.gmra.mxu0 0
    %v1240 = vpop.f32.mrf.mxu0
    %v1241 = vadd.f32 %v1228, %v1240
    %v1242 = vpop.f32.mrf.mxu0
    %1243 = vdwg.mxu0
    %1244 = vmatpush.bf16.msra.mxu0 %v1019
    %1245 = vmatpush.bf16.msra.mxu0 %v1011
    %1246 = vmatpush.bf16.msra.mxu0 %v1003
    %1247 = vmatpush.bf16.msra.mxu0 %v995
    %1248 = vmatpush.bf16.msra.mxu0 %v987
    %1249 = vmatpush.bf16.msra.mxu0 %v979
    %1250 = vmatpush.bf16.msra.mxu0 %v971
    %1251 = vmatpush.bf16.msra.mxu0 %v963
    %1252 = vmatmul.bf16.gmra.mxu0 0
    %v1253 = vpop.f32.mrf.mxu0
    %v1254 = vadd.f32 0.0, %v1253
    %v1255 = vpop.f32.mrf.mxu0
    %1256 = vdwg.mxu0
    %1257 = vmatpush.bf16.msra.mxu0 %v1083
    %1258 = vmatpush.bf16.msra.mxu0 %v1075
    %1259 = vmatpush.bf16.msra.mxu0 %v1067
    %1260 = vmatpush.bf16.msra.mxu0 %v1059
    %1261 = vmatpush.bf16.msra.mxu0 %v1051
    %1262 = vmatpush.bf16.msra.mxu0 %v1043
    %1263 = vmatpush.bf16.msra.mxu0 %v1035
    %1264 = vmatpush.bf16.msra.mxu0 %v1027
    %1265 = vmatmul.bf16.gmra.mxu0 0
    %v1266 = vpop.f32.mrf.mxu0
    %v1267 = vadd.f32 %v1254, %v1266
    %v1268 = vpop.f32.mrf.mxu0
    %1269 = vdwg.mxu0
    %1270 = vmatpush.bf16.msra.mxu0 %v1020
    %1271 = vmatpush.bf16.msra.mxu0 %v1012
    %1272 = vmatpush.bf16.msra.mxu0 %v1004
    %1273 = vmatpush.bf16.msra.mxu0 %v996
    %1274 = vmatpush.bf16.msra.mxu0 %v988
    %1275 = vmatpush.bf16.msra.mxu0 %v980
    %1276 = vmatpush.bf16.msra.mxu0 %v972
    %1277 = vmatpush.bf16.msra.mxu0 %v964
    %1278 = vmatmul.bf16.gmra.mxu0 0
    %v1279 = vpop.f32.mrf.mxu0
    %v1280 = vadd.f32 0.0, %v1279
    %v1281 = vpop.f32.mrf.mxu0
    %1282 = vdwg.mxu0
    %1283 = vmatpush.bf16.msra.mxu0 %v1084
    %1284 = vmatpush.bf16.msra.mxu0 %v1076
    %1285 = vmatpush.bf16.msra.mxu0 %v1068
    %1286 = vmatpush.bf16.msra.mxu0 %v1060
    %1287 = vmatpush.bf16.msra.mxu0 %v1052
    %1288 = vmatpush.bf16.msra.mxu0 %v1044
    %1289 = vmatpush.bf16.msra.mxu0 %v1036
    %1290 = vmatpush.bf16.msra.mxu0 %v1028
    %1291 = vmatmul.bf16.gmra.mxu0 0
    %v1292 = vpop.f32.mrf.mxu0
    %v1293 = vadd.f32 %v1280, %v1292
    %v1294 = vpop.f32.mrf.mxu0
    %1295 = vdwg.mxu0
    %1296 = vmatpush.bf16.msra.mxu0 %v1021
    %1297 = vmatpush.bf16.msra.mxu0 %v1013
    %1298 = vmatpush.bf16.msra.mxu0 %v1005
    %1299 = vmatpush.bf16.msra.mxu0 %v997
    %1300 = vmatpush.bf16.msra.mxu0 %v989
    %1301 = vmatpush.bf16.msra.mxu0 %v981
    %1302 = vmatpush.bf16.msra.mxu0 %v973
    %1303 = vmatpush.bf16.msra.mxu0 %v965
    %1304 = vmatmul.bf16.gmra.mxu0 0
    %v1305 = vpop.f32.mrf.mxu0
    %v1306 = vadd.f32 0.0, %v1305
    %v1307 = vpop.f32.mrf.mxu0
    %1308 = vdwg.mxu0
    %1309 = vmatpush.bf16.msra.mxu0 %v1085
    %1310 = vmatpush.bf16.msra.mxu0 %v1077
    %1311 = vmatpush.bf16.msra.mxu0 %v1069
    %1312 = vmatpush.bf16.msra.mxu0 %v1061
    %1313 = vmatpush.bf16.msra.mxu0 %v1053
    %1314 = vmatpush.bf16.msra.mxu0 %v1045
    %1315 = vmatpush.bf16.msra.mxu0 %v1037
    %1316 = vmatpush.bf16.msra.mxu0 %v1029
    %1317 = vmatmul.bf16.gmra.mxu0 0
    %v1318 = vpop.f32.mrf.mxu0
    %v1319 = vadd.f32 %v1306, %v1318
    %v1320 = vpop.f32.mrf.mxu0
    %1321 = vdwg.mxu0
    %1322 = vmatpush.bf16.msra.mxu0 %v1022
    %1323 = vmatpush.bf16.msra.mxu0 %v1014
    %1324 = vmatpush.bf16.msra.mxu0 %v1006
    %1325 = vmatpush.bf16.msra.mxu0 %v998
    %1326 = vmatpush.bf16.msra.mxu0 %v990
    %1327 = vmatpush.bf16.msra.mxu0 %v982
    %1328 = vmatpush.bf16.msra.mxu0 %v974
    %1329 = vmatpush.bf16.msra.mxu0 %v966
    %1330 = vmatmul.bf16.gmra.mxu0 0
    %v1331 = vpop.f32.mrf.mxu0
    %v1332 = vadd.f32 0.0, %v1331
    %v1333 = vpop.f32.mrf.mxu0
    %1334 = vdwg.mxu0
    %1335 = vmatpush.bf16.msra.mxu0 %v1086
    %1336 = vmatpush.bf16.msra.mxu0 %v1078
    %1337 = vmatpush.bf16.msra.mxu0 %v1070
    %1338 = vmatpush.bf16.msra.mxu0 %v1062
    %1339 = vmatpush.bf16.msra.mxu0 %v1054
    %1340 = vmatpush.bf16.msra.mxu0 %v1046
    %1341 = vmatpush.bf16.msra.mxu0 %v1038
    %1342 = vmatpush.bf16.msra.mxu0 %v1030
    %1343 = vmatmul.bf16.gmra.mxu0 0
    %v1344 = vpop.f32.mrf.mxu0
    %v1345 = vadd.f32 %v1332, %v1344
    %v1346 = vpop.f32.mrf.mxu0
    %1347 = vdwg.mxu0
    %1348 = vmatpush.bf16.msra.mxu0 %v1023
    %1349 = vmatpush.bf16.msra.mxu0 %v1015
    %1350 = vmatpush.bf16.msra.mxu0 %v1007
    %1351 = vmatpush.bf16.msra.mxu0 %v999
    %1352 = vmatpush.bf16.msra.mxu0 %v991
    %1353 = vmatpush.bf16.msra.mxu0 %v983
    %1354 = vmatpush.bf16.msra.mxu0 %v975
    %1355 = vmatpush.bf16.msra.mxu0 %v967
    %1356 = vmatmul.bf16.gmra.mxu0 0
    %v1357 = vpop.f32.mrf.mxu0
    %v1358 = vadd.f32 0.0, %v1357
    %v1359 = vpop.f32.mrf.mxu0
    %1360 = vdwg.mxu0
    %1361 = vmatpush.bf16.msra.mxu0 %v1087
    %1362 = vmatpush.bf16.msra.mxu0 %v1079
    %1363 = vmatpush.bf16.msra.mxu0 %v1071
    %1364 = vmatpush.bf16.msra.mxu0 %v1063
    %1365 = vmatpush.bf16.msra.mxu0 %v1055
    %1366 = vmatpush.bf16.msra.mxu0 %v1047
    %1367 = vmatpush.bf16.msra.mxu0 %v1039
    %1368 = vmatpush.bf16.msra.mxu0 %v1031
    %1369 = vmatmul.bf16.gmra.mxu0 0
    %v1370 = vpop.f32.mrf.mxu0
    %v1371 = vadd.f32 %v1358, %v1370
    %v1372 = vpop.f32.mrf.mxu0
    %1373 = vdwg.mxu0
    %1374 = vmatpush.bf16.msra.mxu0 %v1024
    %1375 = vmatpush.bf16.msra.mxu0 %v1016
    %1376 = vmatpush.bf16.msra.mxu0 %v1008
    %1377 = vmatpush.bf16.msra.mxu0 %v1000
    %1378 = vmatpush.bf16.msra.mxu0 %v992
    %1379 = vmatpush.bf16.msra.mxu0 %v984
    %1380 = vmatpush.bf16.msra.mxu0 %v976
    %1381 = vmatpush.bf16.msra.mxu0 %v968
    %1382 = vmatmul.bf16.gmra.mxu0 0
    %v1383 = vpop.f32.mrf.mxu0
    %v1384 = vadd.f32 0.0, %v1383
    %v1385 = vpop.f32.mrf.mxu0
    %1386 = vdwg.mxu0
    %1387 = vmatpush.bf16.msra.mxu0 %v1088
    %1388 = vmatpush.bf16.msra.mxu0 %v1080
    %1389 = vmatpush.bf16.msra.mxu0 %v1072
    %1390 = vmatpush.bf16.msra.mxu0 %v1064
    %1391 = vmatpush.bf16.msra.mxu0 %v1056
    %1392 = vmatpush.bf16.msra.mxu0 %v1048
    %1393 = vmatpush.bf16.msra.mxu0 %v1040
    %1394 = vmatpush.bf16.msra.mxu0 %v1032
    %1395 = vmatmul.bf16.gmra.mxu0 0
    %v1396 = vpop.f32.mrf.mxu0
    %v1397 = vadd.f32 %v1384, %v1396
    %v1398 = vpop.f32.mrf.mxu0
    %1399 = vdwg.mxu0
    %1400 = vmatpush.bf16.msra.mxu0 %v1025
    %1401 = vmatpush.bf16.msra.mxu0 %v1017
    %1402 = vmatpush.bf16.msra.mxu0 %v1009
    %1403 = vmatpush.bf16.msra.mxu0 %v1001
    %1404 = vmatpush.bf16.msra.mxu0 %v993
    %1405 = vmatpush.bf16.msra.mxu0 %v985
    %1406 = vmatpush.bf16.msra.mxu0 %v977
    %1407 = vmatpush.bf16.msra.mxu0 %v969
    %1408 = vmatmul.bf16.gmra.mxu0 0
    %v1409 = vpop.f32.mrf.mxu0
    %v1410 = vadd.f32 0.0, %v1409
    %v1411 = vpop.f32.mrf.mxu0
    %1412 = vdwg.mxu0
    %1413 = vmatpush.bf16.msra.mxu0 %v1089
    %1414 = vmatpush.bf16.msra.mxu0 %v1081
    %1415 = vmatpush.bf16.msra.mxu0 %v1073
    %1416 = vmatpush.bf16.msra.mxu0 %v1065
    %1417 = vmatpush.bf16.msra.mxu0 %v1057
    %1418 = vmatpush.bf16.msra.mxu0 %v1049
    %1419 = vmatpush.bf16.msra.mxu0 %v1041
    %1420 = vmatpush.bf16.msra.mxu0 %v1033
    %1421 = vmatmul.bf16.gmra.mxu0 0
    %v1422 = vpop.f32.mrf.mxu0
    %v1423 = vadd.f32 %v1410, %v1422
    %v1424 = vpop.f32.mrf.mxu0
    %1425 = vdwg.mxu0
    %v1426 = vadd.f32 %v227, %v1241
    %v1427 = vadd.f32 %v256, %v1267
    %v1428 = vadd.f32 %v285, %v1293
    %v1429 = vadd.f32 %v314, %v1319
    %v1430 = vadd.f32 %v343, %v1345
    %v1431 = vadd.f32 %v372, %v1371
    %v1432 = vadd.f32 %v401, %v1397
    %v1433 = vadd.f32 %v430, %v1423
    %v1434 = vxor.u32 %v1426, 2147483648
    %v1435 = vxor.u32 %v1427, 2147483648
    %v1436 = vmul.f32 %v1434, 1.442695
    %v1437 = vpow.pop %v1436
    %v1438 = vmul.f32 %v1435, 1.442695
    %v1439 = vpow.pop %v1438
    %v1440 = vadd.f32 %v1437, 1.0
    %v1441 = vadd.f32 %v1439, 1.0
    %v1442 = vrcp.pop %v1440
    %v1443 = vmul.f32 %v1440, %v1442
    %v1444 = vsub.f32 1.0, %v1443
    %v1445 = vmul.f32 %v1442, %v1444
    %v1446 = vadd.f32 %v1442, %v1445
    %vm1447 = vweird.f32 %v1440
    %vm1448 = vweird.f32 %v1442
    %vm1449 = vmor %vm1447, %vm1448
    %v1450 = vsel %vm1449, %v1442, %v1446
    %v1451 = vand.u32 2147483647, %v1440
    %vm1452 = vcmp.eq.f32.partialorder %v1451, 8.507059e+37
    %v1453 = vand.u32 %v1440, 2147483648
    %v1454 = vor.u32 1.1754944e-38, %v1453
    %v1455 = vsel %vm1452, %v1454, %v1450
    %v1456 = vmul.f32 1.0, %v1455
    %v1457 = vrcp.pop %v1441
    %v1458 = vmul.f32 %v1441, %v1457
    %v1459 = vsub.f32 1.0, %v1458
    %v1460 = vmul.f32 %v1457, %v1459
    %v1461 = vadd.f32 %v1457, %v1460
    %vm1462 = vweird.f32 %v1441
    %vm1463 = vweird.f32 %v1457
    %vm1464 = vmor %vm1462, %vm1463
    %v1465 = vsel %vm1464, %v1457, %v1461
    %v1466 = vand.u32 2147483647, %v1441
    %vm1467 = vcmp.eq.f32.partialorder %v1466, 8.507059e+37
    %v1468 = vand.u32 %v1441, 2147483648
    %v1469 = vor.u32 1.1754944e-38, %v1468
    %v1470 = vsel %vm1467, %v1469, %v1465
    %v1471 = vmul.f32 1.0, %v1470
    %v1472 = vxor.u32 %v1428, 2147483648
    %v1473 = vxor.u32 %v1429, 2147483648
    %v1474 = vmul.f32 %v1472, 1.442695
    %v1475 = vpow.pop %v1474
    %v1476 = vmul.f32 %v1473, 1.442695
    %v1477 = vpow.pop %v1476
    %v1478 = vadd.f32 %v1475, 1.0
    %v1479 = vadd.f32 %v1477, 1.0
    %v1480 = vrcp.pop %v1478
    %v1481 = vmul.f32 %v1478, %v1480
    %v1482 = vsub.f32 1.0, %v1481
    %v1483 = vmul.f32 %v1480, %v1482
    %v1484 = vadd.f32 %v1480, %v1483
    %vm1485 = vweird.f32 %v1478
    %vm1486 = vweird.f32 %v1480
    %vm1487 = vmor %vm1485, %vm1486
    %v1488 = vsel %vm1487, %v1480, %v1484
    %v1489 = vand.u32 2147483647, %v1478
    %vm1490 = vcmp.eq.f32.partialorder %v1489, 8.507059e+37
    %v1491 = vand.u32 %v1478, 2147483648
    %v1492 = vor.u32 1.1754944e-38, %v1491
    %v1493 = vsel %vm1490, %v1492, %v1488
    %v1494 = vmul.f32 1.0, %v1493
    %v1495 = vrcp.pop %v1479
    %v1496 = vmul.f32 %v1479, %v1495
    %v1497 = vsub.f32 1.0, %v1496
    %v1498 = vmul.f32 %v1495, %v1497
    %v1499 = vadd.f32 %v1495, %v1498
    %vm1500 = vweird.f32 %v1479
    %vm1501 = vweird.f32 %v1495
    %vm1502 = vmor %vm1500, %vm1501
    %v1503 = vsel %vm1502, %v1495, %v1499
    %v1504 = vand.u32 2147483647, %v1479
    %vm1505 = vcmp.eq.f32.partialorder %v1504, 8.507059e+37
    %v1506 = vand.u32 %v1479, 2147483648
    %v1507 = vor.u32 1.1754944e-38, %v1506
    %v1508 = vsel %vm1505, %v1507, %v1503
    %v1509 = vmul.f32 1.0, %v1508
    %v1510 = vtanh.pop %v1430
    %v1511 = vtanh.pop %v1431
    %v1512 = vxor.u32 %v1432, 2147483648
    %v1513 = vxor.u32 %v1433, 2147483648
    %v1514 = vmul.f32 %v1512, 1.442695
    %v1515 = vpow.pop %v1514
    %v1516 = vmul.f32 %v1513, 1.442695
    %v1517 = vpow.pop %v1516
    %v1518 = vadd.f32 %v1515, 1.0
    %v1519 = vadd.f32 %v1517, 1.0
    %v1520 = vrcp.pop %v1518
    %v1521 = vmul.f32 %v1518, %v1520
    %v1522 = vsub.f32 1.0, %v1521
    %v1523 = vmul.f32 %v1520, %v1522
    %v1524 = vadd.f32 %v1520, %v1523
    %vm1525 = vweird.f32 %v1518
    %vm1526 = vweird.f32 %v1520
    %vm1527 = vmor %vm1525, %vm1526
    %v1528 = vsel %vm1527, %v1520, %v1524
    %v1529 = vand.u32 2147483647, %v1518
    %vm1530 = vcmp.eq.f32.partialorder %v1529, 8.507059e+37
    %v1531 = vand.u32 %v1518, 2147483648
    %v1532 = vor.u32 1.1754944e-38, %v1531
    %v1533 = vsel %vm1530, %v1532, %v1528
    %v1534 = vmul.f32 1.0, %v1533
    %v1535 = vrcp.pop %v1519
    %v1536 = vmul.f32 %v1519, %v1535
    %v1537 = vsub.f32 1.0, %v1536
    %v1538 = vmul.f32 %v1535, %v1537
    %v1539 = vadd.f32 %v1535, %v1538
    %vm1540 = vweird.f32 %v1519
    %vm1541 = vweird.f32 %v1535
    %vm1542 = vmor %vm1540, %vm1541
    %v1543 = vsel %vm1542, %v1535, %v1539
    %v1544 = vand.u32 2147483647, %v1519
    %vm1545 = vcmp.eq.f32.partialorder %v1544, 8.507059e+37
    %v1546 = vand.u32 %v1519, 2147483648
    %v1547 = vor.u32 1.1754944e-38, %v1546
    %v1548 = vsel %vm1545, %v1547, %v1543
    %v1549 = vmul.f32 1.0, %v1548
    %v1550 = vmul.f32 %v1494, 0.0
    %v1551 = vmul.f32 %v1509, 0.0
    %v1552 = vmul.f32 %v1456, %v1510
    %v1553 = vmul.f32 %v1471, %v1511
    %v1554 = vadd.f32 %v1550, %v1552
    %v1555 = vadd.f32 %v1551, %v1553
    %v1556 = vtanh.pop %v1554
    %v1557 = vtanh.pop %v1555
    %v1558 = vmul.f32 %v1534, %v1556
    %v1559 = vmul.f32 %v1549, %v1557
    %v1560 = vpack.c.bf16 %v1559, %v1558
    %v1562 = vunpack.c.l.b16 %v1560
    %v1563 = vunpack.c.h.b16 %v1560
    %v1564 = vpack.c.b16 %v1562, %v1562
    %v1565 = vpack.c.b16 %v1563, %v1563
    %v1568 = vld [vmem:[#allocation4] sm:$0xff]
    %v1569 = vld [vmem:[#allocation4 + $0x8] sm:$0xff]
    %v1570 = vld [vmem:[#allocation4 + $0x10] sm:$0xff]
    %v1571 = vld [vmem:[#allocation4 + $0x18] sm:$0xff]
    %v1572 = vld [vmem:[#allocation4 + $0x20] sm:$0xff]
    %v1573 = vld [vmem:[#allocation4 + $0x28] sm:$0xff]
    %v1574 = vld [vmem:[#allocation4 + $0x30] sm:$0xff]
    %v1575 = vld [vmem:[#allocation4 + $0x38] sm:$0xff]
    %v1576 = vld [vmem:[#allocation4 + $0x40] sm:$0xff]
    %v1577 = vld [vmem:[#allocation4 + $0x48] sm:$0xff]
    %v1578 = vld [vmem:[#allocation4 + $0x50] sm:$0xff]
    %v1579 = vld [vmem:[#allocation4 + $0x58] sm:$0xff]
    %v1580 = vld [vmem:[#allocation4 + $0x60] sm:$0xff]
    %v1581 = vld [vmem:[#allocation4 + $0x68] sm:$0xff]
    %v1582 = vld [vmem:[#allocation4 + $0x70] sm:$0xff]
    %v1583 = vld [vmem:[#allocation4 + $0x78] sm:$0xff]
    %v1584 = vld [vmem:[#allocation4 + $0x80] sm:$0xff]
    %v1585 = vld [vmem:[#allocation4 + $0x88] sm:$0xff]
    %v1586 = vld [vmem:[#allocation4 + $0x90] sm:$0xff]
    %v1587 = vld [vmem:[#allocation4 + $0x98] sm:$0xff]
    %v1588 = vld [vmem:[#allocation4 + $0xa0] sm:$0xff]
    %v1589 = vld [vmem:[#allocation4 + $0xa8] sm:$0xff]
    %v1590 = vld [vmem:[#allocation4 + $0xb0] sm:$0xff]
    %v1591 = vld [vmem:[#allocation4 + $0xb8] sm:$0xff]
    %v1592 = vld [vmem:[#allocation4 + $0xc0] sm:$0xff]
    %v1593 = vld [vmem:[#allocation4 + $0xc8] sm:$0xff]
    %v1594 = vld [vmem:[#allocation4 + $0xd0] sm:$0xff]
    %v1595 = vld [vmem:[#allocation4 + $0xd8] sm:$0xff]
    %v1596 = vld [vmem:[#allocation4 + $0xe0] sm:$0xff]
    %v1597 = vld [vmem:[#allocation4 + $0xe8] sm:$0xff]
    %v1598 = vld [vmem:[#allocation4 + $0xf0] sm:$0xff]
    %v1599 = vld [vmem:[#allocation4 + $0xf8] sm:$0xff]
    %v1600 = vld [vmem:[#allocation4 + $0x100] sm:$0xff]
    %v1601 = vld [vmem:[#allocation4 + $0x108] sm:$0xff]
    %v1602 = vld [vmem:[#allocation4 + $0x110] sm:$0xff]
    %v1603 = vld [vmem:[#allocation4 + $0x118] sm:$0xff]
    %v1604 = vld [vmem:[#allocation4 + $0x120] sm:$0xff]
    %v1605 = vld [vmem:[#allocation4 + $0x128] sm:$0xff]
    %v1606 = vld [vmem:[#allocation4 + $0x130] sm:$0xff]
    %v1607 = vld [vmem:[#allocation4 + $0x138] sm:$0xff]
    %v1608 = vld [vmem:[#allocation4 + $0x140] sm:$0xff]
    %v1609 = vld [vmem:[#allocation4 + $0x148] sm:$0xff]
    %v1610 = vld [vmem:[#allocation4 + $0x150] sm:$0xff]
    %v1611 = vld [vmem:[#allocation4 + $0x158] sm:$0xff]
    %v1612 = vld [vmem:[#allocation4 + $0x160] sm:$0xff]
    %v1613 = vld [vmem:[#allocation4 + $0x168] sm:$0xff]
    %v1614 = vld [vmem:[#allocation4 + $0x170] sm:$0xff]
    %v1615 = vld [vmem:[#allocation4 + $0x178] sm:$0xff]
    %v1616 = vld [vmem:[#allocation4 + $0x180] sm:$0xff]
    %v1617 = vld [vmem:[#allocation4 + $0x188] sm:$0xff]
    %v1618 = vld [vmem:[#allocation4 + $0x190] sm:$0xff]
    %v1619 = vld [vmem:[#allocation4 + $0x198] sm:$0xff]
    %v1620 = vld [vmem:[#allocation4 + $0x1a0] sm:$0xff]
    %v1621 = vld [vmem:[#allocation4 + $0x1a8] sm:$0xff]
    %v1622 = vld [vmem:[#allocation4 + $0x1b0] sm:$0xff]
    %v1623 = vld [vmem:[#allocation4 + $0x1b8] sm:$0xff]
    %v1624 = vld [vmem:[#allocation4 + $0x1c0] sm:$0xff]
    %v1625 = vld [vmem:[#allocation4 + $0x1c8] sm:$0xff]
    %v1626 = vld [vmem:[#allocation4 + $0x1d0] sm:$0xff]
    %v1627 = vld [vmem:[#allocation4 + $0x1d8] sm:$0xff]
    %v1628 = vld [vmem:[#allocation4 + $0x1e0] sm:$0xff]
    %v1629 = vld [vmem:[#allocation4 + $0x1e8] sm:$0xff]
    %v1630 = vld [vmem:[#allocation4 + $0x1f0] sm:$0xff]
    %v1631 = vld [vmem:[#allocation4 + $0x1f8] sm:$0xff]
    %v1632 = vld [vmem:[#allocation4 + $0x200] sm:$0xff]
    %v1633 = vld [vmem:[#allocation4 + $0x208] sm:$0xff]
    %v1634 = vld [vmem:[#allocation4 + $0x210] sm:$0xff]
    %v1635 = vld [vmem:[#allocation4 + $0x218] sm:$0xff]
    %v1636 = vld [vmem:[#allocation4 + $0x220] sm:$0xff]
    %v1637 = vld [vmem:[#allocation4 + $0x228] sm:$0xff]
    %v1638 = vld [vmem:[#allocation4 + $0x230] sm:$0xff]
    %v1639 = vld [vmem:[#allocation4 + $0x238] sm:$0xff]
    %v1640 = vld [vmem:[#allocation4 + $0x240] sm:$0xff]
    %v1641 = vld [vmem:[#allocation4 + $0x248] sm:$0xff]
    %v1642 = vld [vmem:[#allocation4 + $0x250] sm:$0xff]
    %v1643 = vld [vmem:[#allocation4 + $0x258] sm:$0xff]
    %v1644 = vld [vmem:[#allocation4 + $0x260] sm:$0xff]
    %v1645 = vld [vmem:[#allocation4 + $0x268] sm:$0xff]
    %v1646 = vld [vmem:[#allocation4 + $0x270] sm:$0xff]
    %v1647 = vld [vmem:[#allocation4 + $0x278] sm:$0xff]
    %v1648 = vld [vmem:[#allocation4 + $0x280] sm:$0xff]
    %v1649 = vld [vmem:[#allocation4 + $0x288] sm:$0xff]
    %v1650 = vld [vmem:[#allocation4 + $0x290] sm:$0xff]
    %v1651 = vld [vmem:[#allocation4 + $0x298] sm:$0xff]
    %v1652 = vld [vmem:[#allocation4 + $0x2a0] sm:$0xff]
    %v1653 = vld [vmem:[#allocation4 + $0x2a8] sm:$0xff]
    %v1654 = vld [vmem:[#allocation4 + $0x2b0] sm:$0xff]
    %v1655 = vld [vmem:[#allocation4 + $0x2b8] sm:$0xff]
    %v1656 = vld [vmem:[#allocation4 + $0x2c0] sm:$0xff]
    %v1657 = vld [vmem:[#allocation4 + $0x2c8] sm:$0xff]
    %v1658 = vld [vmem:[#allocation4 + $0x2d0] sm:$0xff]
    %v1659 = vld [vmem:[#allocation4 + $0x2d8] sm:$0xff]
    %v1660 = vld [vmem:[#allocation4 + $0x2e0] sm:$0xff]
    %v1661 = vld [vmem:[#allocation4 + $0x2e8] sm:$0xff]
    %v1662 = vld [vmem:[#allocation4 + $0x2f0] sm:$0xff]
    %v1663 = vld [vmem:[#allocation4 + $0x2f8] sm:$0xff]
    %v1664 = vld [vmem:[#allocation4 + $0x300] sm:$0xff]
    %v1665 = vld [vmem:[#allocation4 + $0x308] sm:$0xff]
    %v1666 = vld [vmem:[#allocation4 + $0x310] sm:$0xff]
    %v1667 = vld [vmem:[#allocation4 + $0x318] sm:$0xff]
    %v1668 = vld [vmem:[#allocation4 + $0x320] sm:$0xff]
    %v1669 = vld [vmem:[#allocation4 + $0x328] sm:$0xff]
    %v1670 = vld [vmem:[#allocation4 + $0x330] sm:$0xff]
    %v1671 = vld [vmem:[#allocation4 + $0x338] sm:$0xff]
    %v1672 = vld [vmem:[#allocation4 + $0x340] sm:$0xff]
    %v1673 = vld [vmem:[#allocation4 + $0x348] sm:$0xff]
    %v1674 = vld [vmem:[#allocation4 + $0x350] sm:$0xff]
    %v1675 = vld [vmem:[#allocation4 + $0x358] sm:$0xff]
    %v1676 = vld [vmem:[#allocation4 + $0x360] sm:$0xff]
    %v1677 = vld [vmem:[#allocation4 + $0x368] sm:$0xff]
    %v1678 = vld [vmem:[#allocation4 + $0x370] sm:$0xff]
    %v1679 = vld [vmem:[#allocation4 + $0x378] sm:$0xff]
    %v1680 = vld [vmem:[#allocation4 + $0x380] sm:$0xff]
    %v1681 = vld [vmem:[#allocation4 + $0x388] sm:$0xff]
    %v1682 = vld [vmem:[#allocation4 + $0x390] sm:$0xff]
    %v1683 = vld [vmem:[#allocation4 + $0x398] sm:$0xff]
    %v1684 = vld [vmem:[#allocation4 + $0x3a0] sm:$0xff]
    %v1685 = vld [vmem:[#allocation4 + $0x3a8] sm:$0xff]
    %v1686 = vld [vmem:[#allocation4 + $0x3b0] sm:$0xff]
    %v1687 = vld [vmem:[#allocation4 + $0x3b8] sm:$0xff]
    %v1688 = vld [vmem:[#allocation4 + $0x3c0] sm:$0xff]
    %v1689 = vld [vmem:[#allocation4 + $0x3c8] sm:$0xff]
    %v1690 = vld [vmem:[#allocation4 + $0x3d0] sm:$0xff]
    %v1691 = vld [vmem:[#allocation4 + $0x3d8] sm:$0xff]
    %v1692 = vld [vmem:[#allocation4 + $0x3e0] sm:$0xff]
    %v1693 = vld [vmem:[#allocation4 + $0x3e8] sm:$0xff]
    %v1694 = vld [vmem:[#allocation4 + $0x3f0] sm:$0xff]
    %v1695 = vld [vmem:[#allocation4 + $0x3f8] sm:$0xff]
    %v1696 = vld [vmem:[#allocation4 + $0x400] sm:$0xff]
    %v1697 = vld [vmem:[#allocation4 + $0x408] sm:$0xff]
    %v1698 = vld [vmem:[#allocation4 + $0x410] sm:$0xff]
    %v1699 = vld [vmem:[#allocation4 + $0x418] sm:$0xff]
    %v1700 = vld [vmem:[#allocation4 + $0x420] sm:$0xff]
    %v1701 = vld [vmem:[#allocation4 + $0x428] sm:$0xff]
    %v1702 = vld [vmem:[#allocation4 + $0x430] sm:$0xff]
    %v1703 = vld [vmem:[#allocation4 + $0x438] sm:$0xff]
    %v1704 = vld [vmem:[#allocation4 + $0x440] sm:$0xff]
    %v1705 = vld [vmem:[#allocation4 + $0x448] sm:$0xff]
    %v1706 = vld [vmem:[#allocation4 + $0x450] sm:$0xff]
    %v1707 = vld [vmem:[#allocation4 + $0x458] sm:$0xff]
    %v1708 = vld [vmem:[#allocation4 + $0x460] sm:$0xff]
    %v1709 = vld [vmem:[#allocation4 + $0x468] sm:$0xff]
    %v1710 = vld [vmem:[#allocation4 + $0x470] sm:$0xff]
    %v1711 = vld [vmem:[#allocation4 + $0x478] sm:$0xff]
    %v1712 = vld [vmem:[#allocation4 + $0x480] sm:$0xff]
    %v1713 = vld [vmem:[#allocation4 + $0x488] sm:$0xff]
    %v1714 = vld [vmem:[#allocation4 + $0x490] sm:$0xff]
    %v1715 = vld [vmem:[#allocation4 + $0x498] sm:$0xff]
    %v1716 = vld [vmem:[#allocation4 + $0x4a0] sm:$0xff]
    %v1717 = vld [vmem:[#allocation4 + $0x4a8] sm:$0xff]
    %v1718 = vld [vmem:[#allocation4 + $0x4b0] sm:$0xff]
    %v1719 = vld [vmem:[#allocation4 + $0x4b8] sm:$0xff]
    %v1720 = vld [vmem:[#allocation4 + $0x4c0] sm:$0xff]
    %v1721 = vld [vmem:[#allocation4 + $0x4c8] sm:$0xff]
    %v1722 = vld [vmem:[#allocation4 + $0x4d0] sm:$0xff]
    %v1723 = vld [vmem:[#allocation4 + $0x4d8] sm:$0xff]
    %v1724 = vld [vmem:[#allocation4 + $0x4e0] sm:$0xff]
    %v1725 = vld [vmem:[#allocation4 + $0x4e8] sm:$0xff]
    %v1726 = vld [vmem:[#allocation4 + $0x4f0] sm:$0xff]
    %v1727 = vld [vmem:[#allocation4 + $0x4f8] sm:$0xff]
    %v1728 = vld [vmem:[#allocation4 + $0x500] sm:$0xff]
    %v1729 = vld [vmem:[#allocation4 + $0x508] sm:$0xff]
    %v1730 = vld [vmem:[#allocation4 + $0x510] sm:$0xff]
    %v1731 = vld [vmem:[#allocation4 + $0x518] sm:$0xff]
    %v1732 = vld [vmem:[#allocation4 + $0x520] sm:$0xff]
    %v1733 = vld [vmem:[#allocation4 + $0x528] sm:$0xff]
    %v1734 = vld [vmem:[#allocation4 + $0x530] sm:$0xff]
    %v1735 = vld [vmem:[#allocation4 + $0x538] sm:$0xff]
    %v1736 = vld [vmem:[#allocation4 + $0x540] sm:$0xff]
    %v1737 = vld [vmem:[#allocation4 + $0x548] sm:$0xff]
    %v1738 = vld [vmem:[#allocation4 + $0x550] sm:$0xff]
    %v1739 = vld [vmem:[#allocation4 + $0x558] sm:$0xff]
    %v1740 = vld [vmem:[#allocation4 + $0x560] sm:$0xff]
    %v1741 = vld [vmem:[#allocation4 + $0x568] sm:$0xff]
    %v1742 = vld [vmem:[#allocation4 + $0x570] sm:$0xff]
    %v1743 = vld [vmem:[#allocation4 + $0x578] sm:$0xff]
    %v1744 = vld [vmem:[#allocation4 + $0x580] sm:$0xff]
    %v1745 = vld [vmem:[#allocation4 + $0x588] sm:$0xff]
    %v1746 = vld [vmem:[#allocation4 + $0x590] sm:$0xff]
    %v1747 = vld [vmem:[#allocation4 + $0x598] sm:$0xff]
    %v1748 = vld [vmem:[#allocation4 + $0x5a0] sm:$0xff]
    %v1749 = vld [vmem:[#allocation4 + $0x5a8] sm:$0xff]
    %v1750 = vld [vmem:[#allocation4 + $0x5b0] sm:$0xff]
    %v1751 = vld [vmem:[#allocation4 + $0x5b8] sm:$0xff]
    %v1752 = vld [vmem:[#allocation4 + $0x5c0] sm:$0xff]
    %v1753 = vld [vmem:[#allocation4 + $0x5c8] sm:$0xff]
    %v1754 = vld [vmem:[#allocation4 + $0x5d0] sm:$0xff]
    %v1755 = vld [vmem:[#allocation4 + $0x5d8] sm:$0xff]
    %v1756 = vld [vmem:[#allocation4 + $0x5e0] sm:$0xff]
    %v1757 = vld [vmem:[#allocation4 + $0x5e8] sm:$0xff]
    %v1758 = vld [vmem:[#allocation4 + $0x5f0] sm:$0xff]
    %v1759 = vld [vmem:[#allocation4 + $0x5f8] sm:$0xff]
    %v1760 = vld [vmem:[#allocation4 + $0x600] sm:$0xff]
    %v1761 = vld [vmem:[#allocation4 + $0x608] sm:$0xff]
    %v1762 = vld [vmem:[#allocation4 + $0x610] sm:$0xff]
    %v1763 = vld [vmem:[#allocation4 + $0x618] sm:$0xff]
    %v1764 = vld [vmem:[#allocation4 + $0x620] sm:$0xff]
    %v1765 = vld [vmem:[#allocation4 + $0x628] sm:$0xff]
    %v1766 = vld [vmem:[#allocation4 + $0x630] sm:$0xff]
    %v1767 = vld [vmem:[#allocation4 + $0x638] sm:$0xff]
    %v1768 = vld [vmem:[#allocation4 + $0x640] sm:$0xff]
    %v1769 = vld [vmem:[#allocation4 + $0x648] sm:$0xff]
    %v1770 = vld [vmem:[#allocation4 + $0x650] sm:$0xff]
    %v1771 = vld [vmem:[#allocation4 + $0x658] sm:$0xff]
    %v1772 = vld [vmem:[#allocation4 + $0x660] sm:$0xff]
    %v1773 = vld [vmem:[#allocation4 + $0x668] sm:$0xff]
    %v1774 = vld [vmem:[#allocation4 + $0x670] sm:$0xff]
    %v1775 = vld [vmem:[#allocation4 + $0x678] sm:$0xff]
    %v1776 = vld [vmem:[#allocation4 + $0x680] sm:$0xff]
    %v1777 = vld [vmem:[#allocation4 + $0x688] sm:$0xff]
    %v1778 = vld [vmem:[#allocation4 + $0x690] sm:$0xff]
    %v1779 = vld [vmem:[#allocation4 + $0x698] sm:$0xff]
    %v1780 = vld [vmem:[#allocation4 + $0x6a0] sm:$0xff]
    %v1781 = vld [vmem:[#allocation4 + $0x6a8] sm:$0xff]
    %v1782 = vld [vmem:[#allocation4 + $0x6b0] sm:$0xff]
    %v1783 = vld [vmem:[#allocation4 + $0x6b8] sm:$0xff]
    %v1784 = vld [vmem:[#allocation4 + $0x6c0] sm:$0xff]
    %v1785 = vld [vmem:[#allocation4 + $0x6c8] sm:$0xff]
    %v1786 = vld [vmem:[#allocation4 + $0x6d0] sm:$0xff]
    %v1787 = vld [vmem:[#allocation4 + $0x6d8] sm:$0xff]
    %v1788 = vld [vmem:[#allocation4 + $0x6e0] sm:$0xff]
    %v1789 = vld [vmem:[#allocation4 + $0x6e8] sm:$0xff]
    %v1790 = vld [vmem:[#allocation4 + $0x6f0] sm:$0xff]
    %v1791 = vld [vmem:[#allocation4 + $0x6f8] sm:$0xff]
    %v1792 = vld [vmem:[#allocation4 + $0x700] sm:$0xff]
    %v1793 = vld [vmem:[#allocation4 + $0x708] sm:$0xff]
    %v1794 = vld [vmem:[#allocation4 + $0x710] sm:$0xff]
    %v1795 = vld [vmem:[#allocation4 + $0x718] sm:$0xff]
    %v1796 = vld [vmem:[#allocation4 + $0x720] sm:$0xff]
    %v1797 = vld [vmem:[#allocation4 + $0x728] sm:$0xff]
    %v1798 = vld [vmem:[#allocation4 + $0x730] sm:$0xff]
    %v1799 = vld [vmem:[#allocation4 + $0x738] sm:$0xff]
    %v1800 = vld [vmem:[#allocation4 + $0x740] sm:$0xff]
    %v1801 = vld [vmem:[#allocation4 + $0x748] sm:$0xff]
    %v1802 = vld [vmem:[#allocation4 + $0x750] sm:$0xff]
    %v1803 = vld [vmem:[#allocation4 + $0x758] sm:$0xff]
    %v1804 = vld [vmem:[#allocation4 + $0x760] sm:$0xff]
    %v1805 = vld [vmem:[#allocation4 + $0x768] sm:$0xff]
    %v1806 = vld [vmem:[#allocation4 + $0x770] sm:$0xff]
    %v1807 = vld [vmem:[#allocation4 + $0x778] sm:$0xff]
    %v1808 = vld [vmem:[#allocation4 + $0x780] sm:$0xff]
    %v1809 = vld [vmem:[#allocation4 + $0x788] sm:$0xff]
    %v1810 = vld [vmem:[#allocation4 + $0x790] sm:$0xff]
    %v1811 = vld [vmem:[#allocation4 + $0x798] sm:$0xff]
    %v1812 = vld [vmem:[#allocation4 + $0x7a0] sm:$0xff]
    %v1813 = vld [vmem:[#allocation4 + $0x7a8] sm:$0xff]
    %v1814 = vld [vmem:[#allocation4 + $0x7b0] sm:$0xff]
    %v1815 = vld [vmem:[#allocation4 + $0x7b8] sm:$0xff]
    %v1816 = vld [vmem:[#allocation4 + $0x7c0] sm:$0xff]
    %v1817 = vld [vmem:[#allocation4 + $0x7c8] sm:$0xff]
    %v1818 = vld [vmem:[#allocation4 + $0x7d0] sm:$0xff]
    %v1819 = vld [vmem:[#allocation4 + $0x7d8] sm:$0xff]
    %v1820 = vld [vmem:[#allocation4 + $0x7e0] sm:$0xff]
    %v1821 = vld [vmem:[#allocation4 + $0x7e8] sm:$0xff]
    %v1822 = vld [vmem:[#allocation4 + $0x7f0] sm:$0xff]
    %v1823 = vld [vmem:[#allocation4 + $0x7f8] sm:$0xff]
    %v1825 = vperm.slane %v449, 0
    %v1826 = vperm.slane %v449, 1
    %v1827 = vperm.slane %v449, 2
    %v1828 = vperm.slane %v449, 3
    %v1829 = vperm.slane %v449, 4
    %v1830 = vperm.slane %v449, 5
    %v1831 = vperm.slane %v449, 6
    %v1832 = vperm.slane %v449, 7
    %v2097 = vunpack.c.l.b16 %v1568
    %v2098 = vunpack.c.h.b16 %v1568
    %v2099 = vunpack.c.l.b16 %v1569
    %v2100 = vunpack.c.h.b16 %v1569
    %v2101 = vunpack.c.l.b16 %v1570
    %v2102 = vunpack.c.h.b16 %v1570
    %v2103 = vunpack.c.l.b16 %v1571
    %v2104 = vunpack.c.h.b16 %v1571
    %v2105 = vunpack.c.l.b16 %v1572
    %v2106 = vunpack.c.h.b16 %v1572
    %v2107 = vunpack.c.l.b16 %v1573
    %v2108 = vunpack.c.h.b16 %v1573
    %v2109 = vunpack.c.l.b16 %v1574
    %v2110 = vunpack.c.h.b16 %v1574
    %v2111 = vunpack.c.l.b16 %v1575
    %v2112 = vunpack.c.h.b16 %v1575
    %v2113 = vunpack.c.l.b16 %v1576
    %v2114 = vunpack.c.h.b16 %v1576
    %v2115 = vunpack.c.l.b16 %v1577
    %v2116 = vunpack.c.h.b16 %v1577
    %v2117 = vunpack.c.l.b16 %v1578
    %v2118 = vunpack.c.h.b16 %v1578
    %v2119 = vunpack.c.l.b16 %v1579
    %v2120 = vunpack.c.h.b16 %v1579
    %v2121 = vunpack.c.l.b16 %v1580
    %v2122 = vunpack.c.h.b16 %v1580
    %v2123 = vunpack.c.l.b16 %v1581
    %v2124 = vunpack.c.h.b16 %v1581
    %v2125 = vunpack.c.l.b16 %v1582
    %v2126 = vunpack.c.h.b16 %v1582
    %v2127 = vunpack.c.l.b16 %v1583
    %v2128 = vunpack.c.h.b16 %v1583
    %v2129 = vunpack.c.l.b16 %v1584
    %v2130 = vunpack.c.h.b16 %v1584
    %v2131 = vunpack.c.l.b16 %v1585
    %v2132 = vunpack.c.h.b16 %v1585
    %v2133 = vunpack.c.l.b16 %v1586
    %v2134 = vunpack.c.h.b16 %v1586
    %v2135 = vunpack.c.l.b16 %v1587
    %v2136 = vunpack.c.h.b16 %v1587
    %v2137 = vunpack.c.l.b16 %v1588
    %v2138 = vunpack.c.h.b16 %v1588
    %v2139 = vunpack.c.l.b16 %v1589
    %v2140 = vunpack.c.h.b16 %v1589
    %v2141 = vunpack.c.l.b16 %v1590
    %v2142 = vunpack.c.h.b16 %v1590
    %v2143 = vunpack.c.l.b16 %v1591
    %v2144 = vunpack.c.h.b16 %v1591
    %v2145 = vunpack.c.l.b16 %v1592
    %v2146 = vunpack.c.h.b16 %v1592
    %v2147 = vunpack.c.l.b16 %v1593
    %v2148 = vunpack.c.h.b16 %v1593
    %v2149 = vunpack.c.l.b16 %v1594
    %v2150 = vunpack.c.h.b16 %v1594
    %v2151 = vunpack.c.l.b16 %v1595
    %v2152 = vunpack.c.h.b16 %v1595
    %v2153 = vunpack.c.l.b16 %v1596
    %v2154 = vunpack.c.h.b16 %v1596
    %v2155 = vunpack.c.l.b16 %v1597
    %v2156 = vunpack.c.h.b16 %v1597
    %v2157 = vunpack.c.l.b16 %v1598
    %v2158 = vunpack.c.h.b16 %v1598
    %v2159 = vunpack.c.l.b16 %v1599
    %v2160 = vunpack.c.h.b16 %v1599
    %v2161 = vunpack.c.l.b16 %v1600
    %v2162 = vunpack.c.h.b16 %v1600
    %v2163 = vunpack.c.l.b16 %v1601
    %v2164 = vunpack.c.h.b16 %v1601
    %v2165 = vunpack.c.l.b16 %v1602
    %v2166 = vunpack.c.h.b16 %v1602
    %v2167 = vunpack.c.l.b16 %v1603
    %v2168 = vunpack.c.h.b16 %v1603
    %v2169 = vunpack.c.l.b16 %v1604
    %v2170 = vunpack.c.h.b16 %v1604
    %v2171 = vunpack.c.l.b16 %v1605
    %v2172 = vunpack.c.h.b16 %v1605
    %v2173 = vunpack.c.l.b16 %v1606
    %v2174 = vunpack.c.h.b16 %v1606
    %v2175 = vunpack.c.l.b16 %v1607
    %v2176 = vunpack.c.h.b16 %v1607
    %v2177 = vunpack.c.l.b16 %v1608
    %v2178 = vunpack.c.h.b16 %v1608
    %v2179 = vunpack.c.l.b16 %v1609
    %v2180 = vunpack.c.h.b16 %v1609
    %v2181 = vunpack.c.l.b16 %v1610
    %v2182 = vunpack.c.h.b16 %v1610
    %v2183 = vunpack.c.l.b16 %v1611
    %v2184 = vunpack.c.h.b16 %v1611
    %v2185 = vunpack.c.l.b16 %v1612
    %v2186 = vunpack.c.h.b16 %v1612
    %v2187 = vunpack.c.l.b16 %v1613
    %v2188 = vunpack.c.h.b16 %v1613
    %v2189 = vunpack.c.l.b16 %v1614
    %v2190 = vunpack.c.h.b16 %v1614
    %v2191 = vunpack.c.l.b16 %v1615
    %v2192 = vunpack.c.h.b16 %v1615
    %v2193 = vunpack.c.l.b16 %v1616
    %v2194 = vunpack.c.h.b16 %v1616
    %v2195 = vunpack.c.l.b16 %v1617
    %v2196 = vunpack.c.h.b16 %v1617
    %v2197 = vunpack.c.l.b16 %v1618
    %v2198 = vunpack.c.h.b16 %v1618
    %v2199 = vunpack.c.l.b16 %v1619
    %v2200 = vunpack.c.h.b16 %v1619
    %v2201 = vunpack.c.l.b16 %v1620
    %v2202 = vunpack.c.h.b16 %v1620
    %v2203 = vunpack.c.l.b16 %v1621
    %v2204 = vunpack.c.h.b16 %v1621
    %v2205 = vunpack.c.l.b16 %v1622
    %v2206 = vunpack.c.h.b16 %v1622
    %v2207 = vunpack.c.l.b16 %v1623
    %v2208 = vunpack.c.h.b16 %v1623
    %v2209 = vunpack.c.l.b16 %v1624
    %v2210 = vunpack.c.h.b16 %v1624
    %v2211 = vunpack.c.l.b16 %v1625
    %v2212 = vunpack.c.h.b16 %v1625
    %v2213 = vunpack.c.l.b16 %v1626
    %v2214 = vunpack.c.h.b16 %v1626
    %v2215 = vunpack.c.l.b16 %v1627
    %v2216 = vunpack.c.h.b16 %v1627
    %v2217 = vunpack.c.l.b16 %v1628
    %v2218 = vunpack.c.h.b16 %v1628
    %v2219 = vunpack.c.l.b16 %v1629
    %v2220 = vunpack.c.h.b16 %v1629
    %v2221 = vunpack.c.l.b16 %v1630
    %v2222 = vunpack.c.h.b16 %v1630
    %v2223 = vunpack.c.l.b16 %v1631
    %v2224 = vunpack.c.h.b16 %v1631
    %v2225 = vunpack.c.l.b16 %v1632
    %v2226 = vunpack.c.h.b16 %v1632
    %v2227 = vunpack.c.l.b16 %v1633
    %v2228 = vunpack.c.h.b16 %v1633
    %v2229 = vunpack.c.l.b16 %v1634
    %v2230 = vunpack.c.h.b16 %v1634
    %v2231 = vunpack.c.l.b16 %v1635
    %v2232 = vunpack.c.h.b16 %v1635
    %v2233 = vunpack.c.l.b16 %v1636
    %v2234 = vunpack.c.h.b16 %v1636
    %v2235 = vunpack.c.l.b16 %v1637
    %v2236 = vunpack.c.h.b16 %v1637
    %v2237 = vunpack.c.l.b16 %v1638
    %v2238 = vunpack.c.h.b16 %v1638
    %v2239 = vunpack.c.l.b16 %v1639
    %v2240 = vunpack.c.h.b16 %v1639
    %v2241 = vunpack.c.l.b16 %v1640
    %v2242 = vunpack.c.h.b16 %v1640
    %v2243 = vunpack.c.l.b16 %v1641
    %v2244 = vunpack.c.h.b16 %v1641
    %v2245 = vunpack.c.l.b16 %v1642
    %v2246 = vunpack.c.h.b16 %v1642
    %v2247 = vunpack.c.l.b16 %v1643
    %v2248 = vunpack.c.h.b16 %v1643
    %v2249 = vunpack.c.l.b16 %v1644
    %v2250 = vunpack.c.h.b16 %v1644
    %v2251 = vunpack.c.l.b16 %v1645
    %v2252 = vunpack.c.h.b16 %v1645
    %v2253 = vunpack.c.l.b16 %v1646
    %v2254 = vunpack.c.h.b16 %v1646
    %v2255 = vunpack.c.l.b16 %v1647
    %v2256 = vunpack.c.h.b16 %v1647
    %v2257 = vunpack.c.l.b16 %v1648
    %v2258 = vunpack.c.h.b16 %v1648
    %v2259 = vunpack.c.l.b16 %v1649
    %v2260 = vunpack.c.h.b16 %v1649
    %v2261 = vunpack.c.l.b16 %v1650
    %v2262 = vunpack.c.h.b16 %v1650
    %v2263 = vunpack.c.l.b16 %v1651
    %v2264 = vunpack.c.h.b16 %v1651
    %v2265 = vunpack.c.l.b16 %v1652
    %v2266 = vunpack.c.h.b16 %v1652
    %v2267 = vunpack.c.l.b16 %v1653
    %v2268 = vunpack.c.h.b16 %v1653
    %v2269 = vunpack.c.l.b16 %v1654
    %v2270 = vunpack.c.h.b16 %v1654
    %v2271 = vunpack.c.l.b16 %v1655
    %v2272 = vunpack.c.h.b16 %v1655
    %v2273 = vunpack.c.l.b16 %v1656
    %v2274 = vunpack.c.h.b16 %v1656
    %v2275 = vunpack.c.l.b16 %v1657
    %v2276 = vunpack.c.h.b16 %v1657
    %v2277 = vunpack.c.l.b16 %v1658
    %v2278 = vunpack.c.h.b16 %v1658
    %v2279 = vunpack.c.l.b16 %v1659
    %v2280 = vunpack.c.h.b16 %v1659
    %v2281 = vunpack.c.l.b16 %v1660
    %v2282 = vunpack.c.h.b16 %v1660
    %v2283 = vunpack.c.l.b16 %v1661
    %v2284 = vunpack.c.h.b16 %v1661
    %v2285 = vunpack.c.l.b16 %v1662
    %v2286 = vunpack.c.h.b16 %v1662
    %v2287 = vunpack.c.l.b16 %v1663
    %v2288 = vunpack.c.h.b16 %v1663
    %v2289 = vunpack.c.l.b16 %v1664
    %v2290 = vunpack.c.h.b16 %v1664
    %v2291 = vunpack.c.l.b16 %v1665
    %v2292 = vunpack.c.h.b16 %v1665
    %v2293 = vunpack.c.l.b16 %v1666
    %v2294 = vunpack.c.h.b16 %v1666
    %v2295 = vunpack.c.l.b16 %v1667
    %v2296 = vunpack.c.h.b16 %v1667
    %v2297 = vunpack.c.l.b16 %v1668
    %v2298 = vunpack.c.h.b16 %v1668
    %v2299 = vunpack.c.l.b16 %v1669
    %v2300 = vunpack.c.h.b16 %v1669
    %v2301 = vunpack.c.l.b16 %v1670
    %v2302 = vunpack.c.h.b16 %v1670
    %v2303 = vunpack.c.l.b16 %v1671
    %v2304 = vunpack.c.h.b16 %v1671
    %v2305 = vunpack.c.l.b16 %v1672
    %v2306 = vunpack.c.h.b16 %v1672
    %v2307 = vunpack.c.l.b16 %v1673
    %v2308 = vunpack.c.h.b16 %v1673
    %v2309 = vunpack.c.l.b16 %v1674
    %v2310 = vunpack.c.h.b16 %v1674
    %v2311 = vunpack.c.l.b16 %v1675
    %v2312 = vunpack.c.h.b16 %v1675
    %v2313 = vunpack.c.l.b16 %v1676
    %v2314 = vunpack.c.h.b16 %v1676
    %v2315 = vunpack.c.l.b16 %v1677
    %v2316 = vunpack.c.h.b16 %v1677
    %v2317 = vunpack.c.l.b16 %v1678
    %v2318 = vunpack.c.h.b16 %v1678
    %v2319 = vunpack.c.l.b16 %v1679
    %v2320 = vunpack.c.h.b16 %v1679
    %v2321 = vunpack.c.l.b16 %v1680
    %v2322 = vunpack.c.h.b16 %v1680
    %v2323 = vunpack.c.l.b16 %v1681
    %v2324 = vunpack.c.h.b16 %v1681
    %v2325 = vunpack.c.l.b16 %v1682
    %v2326 = vunpack.c.h.b16 %v1682
    %v2327 = vunpack.c.l.b16 %v1683
    %v2328 = vunpack.c.h.b16 %v1683
    %v2329 = vunpack.c.l.b16 %v1684
    %v2330 = vunpack.c.h.b16 %v1684
    %v2331 = vunpack.c.l.b16 %v1685
    %v2332 = vunpack.c.h.b16 %v1685
    %v2333 = vunpack.c.l.b16 %v1686
    %v2334 = vunpack.c.h.b16 %v1686
    %v2335 = vunpack.c.l.b16 %v1687
    %v2336 = vunpack.c.h.b16 %v1687
    %v2337 = vunpack.c.l.b16 %v1688
    %v2338 = vunpack.c.h.b16 %v1688
    %v2339 = vunpack.c.l.b16 %v1689
    %v2340 = vunpack.c.h.b16 %v1689
    %v2341 = vunpack.c.l.b16 %v1690
    %v2342 = vunpack.c.h.b16 %v1690
    %v2343 = vunpack.c.l.b16 %v1691
    %v2344 = vunpack.c.h.b16 %v1691
    %v2345 = vunpack.c.l.b16 %v1692
    %v2346 = vunpack.c.h.b16 %v1692
    %v2347 = vunpack.c.l.b16 %v1693
    %v2348 = vunpack.c.h.b16 %v1693
    %v2349 = vunpack.c.l.b16 %v1694
    %v2350 = vunpack.c.h.b16 %v1694
    %v2351 = vunpack.c.l.b16 %v1695
    %v2352 = vunpack.c.h.b16 %v1695
    %v2353 = vunpack.c.l.b16 %v1696
    %v2354 = vunpack.c.h.b16 %v1696
    %v2355 = vunpack.c.l.b16 %v1697
    %v2356 = vunpack.c.h.b16 %v1697
    %v2357 = vunpack.c.l.b16 %v1698
    %v2358 = vunpack.c.h.b16 %v1698
    %v2359 = vunpack.c.l.b16 %v1699
    %v2360 = vunpack.c.h.b16 %v1699
    %v2361 = vunpack.c.l.b16 %v1700
    %v2362 = vunpack.c.h.b16 %v1700
    %v2363 = vunpack.c.l.b16 %v1701
    %v2364 = vunpack.c.h.b16 %v1701
    %v2365 = vunpack.c.l.b16 %v1702
    %v2366 = vunpack.c.h.b16 %v1702
    %v2367 = vunpack.c.l.b16 %v1703
    %v2368 = vunpack.c.h.b16 %v1703
    %v2369 = vunpack.c.l.b16 %v1704
    %v2370 = vunpack.c.h.b16 %v1704
    %v2371 = vunpack.c.l.b16 %v1705
    %v2372 = vunpack.c.h.b16 %v1705
    %v2373 = vunpack.c.l.b16 %v1706
    %v2374 = vunpack.c.h.b16 %v1706
    %v2375 = vunpack.c.l.b16 %v1707
    %v2376 = vunpack.c.h.b16 %v1707
    %v2377 = vunpack.c.l.b16 %v1708
    %v2378 = vunpack.c.h.b16 %v1708
    %v2379 = vunpack.c.l.b16 %v1709
    %v2380 = vunpack.c.h.b16 %v1709
    %v2381 = vunpack.c.l.b16 %v1710
    %v2382 = vunpack.c.h.b16 %v1710
    %v2383 = vunpack.c.l.b16 %v1711
    %v2384 = vunpack.c.h.b16 %v1711
    %v2385 = vunpack.c.l.b16 %v1712
    %v2386 = vunpack.c.h.b16 %v1712
    %v2387 = vunpack.c.l.b16 %v1713
    %v2388 = vunpack.c.h.b16 %v1713
    %v2389 = vunpack.c.l.b16 %v1714
    %v2390 = vunpack.c.h.b16 %v1714
    %v2391 = vunpack.c.l.b16 %v1715
    %v2392 = vunpack.c.h.b16 %v1715
    %v2393 = vunpack.c.l.b16 %v1716
    %v2394 = vunpack.c.h.b16 %v1716
    %v2395 = vunpack.c.l.b16 %v1717
    %v2396 = vunpack.c.h.b16 %v1717
    %v2397 = vunpack.c.l.b16 %v1718
    %v2398 = vunpack.c.h.b16 %v1718
    %v2399 = vunpack.c.l.b16 %v1719
    %v2400 = vunpack.c.h.b16 %v1719
    %v2401 = vunpack.c.l.b16 %v1720
    %v2402 = vunpack.c.h.b16 %v1720
    %v2403 = vunpack.c.l.b16 %v1721
    %v2404 = vunpack.c.h.b16 %v1721
    %v2405 = vunpack.c.l.b16 %v1722
    %v2406 = vunpack.c.h.b16 %v1722
    %v2407 = vunpack.c.l.b16 %v1723
    %v2408 = vunpack.c.h.b16 %v1723
    %v2409 = vunpack.c.l.b16 %v1724
    %v2410 = vunpack.c.h.b16 %v1724
    %v2411 = vunpack.c.l.b16 %v1725
    %v2412 = vunpack.c.h.b16 %v1725
    %v2413 = vunpack.c.l.b16 %v1726
    %v2414 = vunpack.c.h.b16 %v1726
    %v2415 = vunpack.c.l.b16 %v1727
    %v2416 = vunpack.c.h.b16 %v1727
    %v2417 = vunpack.c.l.b16 %v1728
    %v2418 = vunpack.c.h.b16 %v1728
    %v2419 = vunpack.c.l.b16 %v1729
    %v2420 = vunpack.c.h.b16 %v1729
    %v2421 = vunpack.c.l.b16 %v1730
    %v2422 = vunpack.c.h.b16 %v1730
    %v2423 = vunpack.c.l.b16 %v1731
    %v2424 = vunpack.c.h.b16 %v1731
    %v2425 = vunpack.c.l.b16 %v1732
    %v2426 = vunpack.c.h.b16 %v1732
    %v2427 = vunpack.c.l.b16 %v1733
    %v2428 = vunpack.c.h.b16 %v1733
    %v2429 = vunpack.c.l.b16 %v1734
    %v2430 = vunpack.c.h.b16 %v1734
    %v2431 = vunpack.c.l.b16 %v1735
    %v2432 = vunpack.c.h.b16 %v1735
    %v2433 = vunpack.c.l.b16 %v1736
    %v2434 = vunpack.c.h.b16 %v1736
    %v2435 = vunpack.c.l.b16 %v1737
    %v2436 = vunpack.c.h.b16 %v1737
    %v2437 = vunpack.c.l.b16 %v1738
    %v2438 = vunpack.c.h.b16 %v1738
    %v2439 = vunpack.c.l.b16 %v1739
    %v2440 = vunpack.c.h.b16 %v1739
    %v2441 = vunpack.c.l.b16 %v1740
    %v2442 = vunpack.c.h.b16 %v1740
    %v2443 = vunpack.c.l.b16 %v1741
    %v2444 = vunpack.c.h.b16 %v1741
    %v2445 = vunpack.c.l.b16 %v1742
    %v2446 = vunpack.c.h.b16 %v1742
    %v2447 = vunpack.c.l.b16 %v1743
    %v2448 = vunpack.c.h.b16 %v1743
    %v2449 = vunpack.c.l.b16 %v1744
    %v2450 = vunpack.c.h.b16 %v1744
    %v2451 = vunpack.c.l.b16 %v1745
    %v2452 = vunpack.c.h.b16 %v1745
    %v2453 = vunpack.c.l.b16 %v1746
    %v2454 = vunpack.c.h.b16 %v1746
    %v2455 = vunpack.c.l.b16 %v1747
    %v2456 = vunpack.c.h.b16 %v1747
    %v2457 = vunpack.c.l.b16 %v1748
    %v2458 = vunpack.c.h.b16 %v1748
    %v2459 = vunpack.c.l.b16 %v1749
    %v2460 = vunpack.c.h.b16 %v1749
    %v2461 = vunpack.c.l.b16 %v1750
    %v2462 = vunpack.c.h.b16 %v1750
    %v2463 = vunpack.c.l.b16 %v1751
    %v2464 = vunpack.c.h.b16 %v1751
    %v2465 = vunpack.c.l.b16 %v1752
    %v2466 = vunpack.c.h.b16 %v1752
    %v2467 = vunpack.c.l.b16 %v1753
    %v2468 = vunpack.c.h.b16 %v1753
    %v2469 = vunpack.c.l.b16 %v1754
    %v2470 = vunpack.c.h.b16 %v1754
    %v2471 = vunpack.c.l.b16 %v1755
    %v2472 = vunpack.c.h.b16 %v1755
    %v2473 = vunpack.c.l.b16 %v1756
    %v2474 = vunpack.c.h.b16 %v1756
    %v2475 = vunpack.c.l.b16 %v1757
    %v2476 = vunpack.c.h.b16 %v1757
    %v2477 = vunpack.c.l.b16 %v1758
    %v2478 = vunpack.c.h.b16 %v1758
    %v2479 = vunpack.c.l.b16 %v1759
    %v2480 = vunpack.c.h.b16 %v1759
    %v2481 = vunpack.c.l.b16 %v1760
    %v2482 = vunpack.c.h.b16 %v1760
    %v2483 = vunpack.c.l.b16 %v1761
    %v2484 = vunpack.c.h.b16 %v1761
    %v2485 = vunpack.c.l.b16 %v1762
    %v2486 = vunpack.c.h.b16 %v1762
    %v2487 = vunpack.c.l.b16 %v1763
    %v2488 = vunpack.c.h.b16 %v1763
    %v2489 = vunpack.c.l.b16 %v1764
    %v2490 = vunpack.c.h.b16 %v1764
    %v2491 = vunpack.c.l.b16 %v1765
    %v2492 = vunpack.c.h.b16 %v1765
    %v2493 = vunpack.c.l.b16 %v1766
    %v2494 = vunpack.c.h.b16 %v1766
    %v2495 = vunpack.c.l.b16 %v1767
    %v2496 = vunpack.c.h.b16 %v1767
    %v2497 = vunpack.c.l.b16 %v1768
    %v2498 = vunpack.c.h.b16 %v1768
    %v2499 = vunpack.c.l.b16 %v1769
    %v2500 = vunpack.c.h.b16 %v1769
    %v2501 = vunpack.c.l.b16 %v1770
    %v2502 = vunpack.c.h.b16 %v1770
    %v2503 = vunpack.c.l.b16 %v1771
    %v2504 = vunpack.c.h.b16 %v1771
    %v2505 = vunpack.c.l.b16 %v1772
    %v2506 = vunpack.c.h.b16 %v1772
    %v2507 = vunpack.c.l.b16 %v1773
    %v2508 = vunpack.c.h.b16 %v1773
    %v2509 = vunpack.c.l.b16 %v1774
    %v2510 = vunpack.c.h.b16 %v1774
    %v2511 = vunpack.c.l.b16 %v1775
    %v2512 = vunpack.c.h.b16 %v1775
    %v2513 = vunpack.c.l.b16 %v1776
    %v2514 = vunpack.c.h.b16 %v1776
    %v2515 = vunpack.c.l.b16 %v1777
    %v2516 = vunpack.c.h.b16 %v1777
    %v2517 = vunpack.c.l.b16 %v1778
    %v2518 = vunpack.c.h.b16 %v1778
    %v2519 = vunpack.c.l.b16 %v1779
    %v2520 = vunpack.c.h.b16 %v1779
    %v2521 = vunpack.c.l.b16 %v1780
    %v2522 = vunpack.c.h.b16 %v1780
    %v2523 = vunpack.c.l.b16 %v1781
    %v2524 = vunpack.c.h.b16 %v1781
    %v2525 = vunpack.c.l.b16 %v1782
    %v2526 = vunpack.c.h.b16 %v1782
    %v2527 = vunpack.c.l.b16 %v1783
    %v2528 = vunpack.c.h.b16 %v1783
    %v2529 = vunpack.c.l.b16 %v1784
    %v2530 = vunpack.c.h.b16 %v1784
    %v2531 = vunpack.c.l.b16 %v1785
    %v2532 = vunpack.c.h.b16 %v1785
    %v2533 = vunpack.c.l.b16 %v1786
    %v2534 = vunpack.c.h.b16 %v1786
    %v2535 = vunpack.c.l.b16 %v1787
    %v2536 = vunpack.c.h.b16 %v1787
    %v2537 = vunpack.c.l.b16 %v1788
    %v2538 = vunpack.c.h.b16 %v1788
    %v2539 = vunpack.c.l.b16 %v1789
    %v2540 = vunpack.c.h.b16 %v1789
    %v2541 = vunpack.c.l.b16 %v1790
    %v2542 = vunpack.c.h.b16 %v1790
    %v2543 = vunpack.c.l.b16 %v1791
    %v2544 = vunpack.c.h.b16 %v1791
    %v2545 = vunpack.c.l.b16 %v1792
    %v2546 = vunpack.c.h.b16 %v1792
    %v2547 = vunpack.c.l.b16 %v1793
    %v2548 = vunpack.c.h.b16 %v1793
    %v2549 = vunpack.c.l.b16 %v1794
    %v2550 = vunpack.c.h.b16 %v1794
    %v2551 = vunpack.c.l.b16 %v1795
    %v2552 = vunpack.c.h.b16 %v1795
    %v2553 = vunpack.c.l.b16 %v1796
    %v2554 = vunpack.c.h.b16 %v1796
    %v2555 = vunpack.c.l.b16 %v1797
    %v2556 = vunpack.c.h.b16 %v1797
    %v2557 = vunpack.c.l.b16 %v1798
    %v2558 = vunpack.c.h.b16 %v1798
    %v2559 = vunpack.c.l.b16 %v1799
    %v2560 = vunpack.c.h.b16 %v1799
    %v2561 = vunpack.c.l.b16 %v1800
    %v2562 = vunpack.c.h.b16 %v1800
    %v2563 = vunpack.c.l.b16 %v1801
    %v2564 = vunpack.c.h.b16 %v1801
    %v2565 = vunpack.c.l.b16 %v1802
    %v2566 = vunpack.c.h.b16 %v1802
    %v2567 = vunpack.c.l.b16 %v1803
    %v2568 = vunpack.c.h.b16 %v1803
    %v2569 = vunpack.c.l.b16 %v1804
    %v2570 = vunpack.c.h.b16 %v1804
    %v2571 = vunpack.c.l.b16 %v1805
    %v2572 = vunpack.c.h.b16 %v1805
    %v2573 = vunpack.c.l.b16 %v1806
    %v2574 = vunpack.c.h.b16 %v1806
    %v2575 = vunpack.c.l.b16 %v1807
    %v2576 = vunpack.c.h.b16 %v1807
    %v2577 = vunpack.c.l.b16 %v1808
    %v2578 = vunpack.c.h.b16 %v1808
    %v2579 = vunpack.c.l.b16 %v1809
    %v2580 = vunpack.c.h.b16 %v1809
    %v2581 = vunpack.c.l.b16 %v1810
    %v2582 = vunpack.c.h.b16 %v1810
    %v2583 = vunpack.c.l.b16 %v1811
    %v2584 = vunpack.c.h.b16 %v1811
    %v2585 = vunpack.c.l.b16 %v1812
    %v2586 = vunpack.c.h.b16 %v1812
    %v2587 = vunpack.c.l.b16 %v1813
    %v2588 = vunpack.c.h.b16 %v1813
    %v2589 = vunpack.c.l.b16 %v1814
    %v2590 = vunpack.c.h.b16 %v1814
    %v2591 = vunpack.c.l.b16 %v1815
    %v2592 = vunpack.c.h.b16 %v1815
    %v2593 = vunpack.c.l.b16 %v1816
    %v2594 = vunpack.c.h.b16 %v1816
    %v2595 = vunpack.c.l.b16 %v1817
    %v2596 = vunpack.c.h.b16 %v1817
    %v2597 = vunpack.c.l.b16 %v1818
    %v2598 = vunpack.c.h.b16 %v1818
    %v2599 = vunpack.c.l.b16 %v1819
    %v2600 = vunpack.c.h.b16 %v1819
    %v2601 = vunpack.c.l.b16 %v1820
    %v2602 = vunpack.c.h.b16 %v1820
    %v2603 = vunpack.c.l.b16 %v1821
    %v2604 = vunpack.c.h.b16 %v1821
    %v2605 = vunpack.c.l.b16 %v1822
    %v2606 = vunpack.c.h.b16 %v1822
    %v2607 = vunpack.c.l.b16 %v1823
    %v2608 = vunpack.c.h.b16 %v1823
    %v2609 = vpack.c.b16 %v2105, %v2097
    %v2610 = vpack.c.b16 %v2106, %v2098
    %v2611 = vpack.c.b16 %v2107, %v2099
    %v2612 = vpack.c.b16 %v2108, %v2100
    %v2613 = vpack.c.b16 %v2109, %v2101
    %v2614 = vpack.c.b16 %v2110, %v2102
    %v2615 = vpack.c.b16 %v2111, %v2103
    %v2616 = vpack.c.b16 %v2112, %v2104
    %v2617 = vpack.c.b16 %v2121, %v2113
    %v2618 = vpack.c.b16 %v2122, %v2114
    %v2619 = vpack.c.b16 %v2123, %v2115
    %v2620 = vpack.c.b16 %v2124, %v2116
    %v2621 = vpack.c.b16 %v2125, %v2117
    %v2622 = vpack.c.b16 %v2126, %v2118
    %v2623 = vpack.c.b16 %v2127, %v2119
    %v2624 = vpack.c.b16 %v2128, %v2120
    %v2625 = vpack.c.b16 %v2137, %v2129
    %v2626 = vpack.c.b16 %v2138, %v2130
    %v2627 = vpack.c.b16 %v2139, %v2131
    %v2628 = vpack.c.b16 %v2140, %v2132
    %v2629 = vpack.c.b16 %v2141, %v2133
    %v2630 = vpack.c.b16 %v2142, %v2134
    %v2631 = vpack.c.b16 %v2143, %v2135
    %v2632 = vpack.c.b16 %v2144, %v2136
    %v2633 = vpack.c.b16 %v2153, %v2145
    %v2634 = vpack.c.b16 %v2154, %v2146
    %v2635 = vpack.c.b16 %v2155, %v2147
    %v2636 = vpack.c.b16 %v2156, %v2148
    %v2637 = vpack.c.b16 %v2157, %v2149
    %v2638 = vpack.c.b16 %v2158, %v2150
    %v2639 = vpack.c.b16 %v2159, %v2151
    %v2640 = vpack.c.b16 %v2160, %v2152
    %v2641 = vpack.c.b16 %v2169, %v2161
    %v2642 = vpack.c.b16 %v2170, %v2162
    %v2643 = vpack.c.b16 %v2171, %v2163
    %v2644 = vpack.c.b16 %v2172, %v2164
    %v2645 = vpack.c.b16 %v2173, %v2165
    %v2646 = vpack.c.b16 %v2174, %v2166
    %v2647 = vpack.c.b16 %v2175, %v2167
    %v2648 = vpack.c.b16 %v2176, %v2168
    %v2649 = vpack.c.b16 %v2185, %v2177
    %v2650 = vpack.c.b16 %v2186, %v2178
    %v2651 = vpack.c.b16 %v2187, %v2179
    %v2652 = vpack.c.b16 %v2188, %v2180
    %v2653 = vpack.c.b16 %v2189, %v2181
    %v2654 = vpack.c.b16 %v2190, %v2182
    %v2655 = vpack.c.b16 %v2191, %v2183
    %v2656 = vpack.c.b16 %v2192, %v2184
    %v2657 = vpack.c.b16 %v2201, %v2193
    %v2658 = vpack.c.b16 %v2202, %v2194
    %v2659 = vpack.c.b16 %v2203, %v2195
    %v2660 = vpack.c.b16 %v2204, %v2196
    %v2661 = vpack.c.b16 %v2205, %v2197
    %v2662 = vpack.c.b16 %v2206, %v2198
    %v2663 = vpack.c.b16 %v2207, %v2199
    %v2664 = vpack.c.b16 %v2208, %v2200
    %v2665 = vpack.c.b16 %v2217, %v2209
    %v2666 = vpack.c.b16 %v2218, %v2210
    %v2667 = vpack.c.b16 %v2219, %v2211
    %v2668 = vpack.c.b16 %v2220, %v2212
    %v2669 = vpack.c.b16 %v2221, %v2213
    %v2670 = vpack.c.b16 %v2222, %v2214
    %v2671 = vpack.c.b16 %v2223, %v2215
    %v2672 = vpack.c.b16 %v2224, %v2216
    %v2673 = vpack.c.b16 %v2233, %v2225
    %v2674 = vpack.c.b16 %v2234, %v2226
    %v2675 = vpack.c.b16 %v2235, %v2227
    %v2676 = vpack.c.b16 %v2236, %v2228
    %v2677 = vpack.c.b16 %v2237, %v2229
    %v2678 = vpack.c.b16 %v2238, %v2230
    %v2679 = vpack.c.b16 %v2239, %v2231
    %v2680 = vpack.c.b16 %v2240, %v2232
    %v2681 = vpack.c.b16 %v2249, %v2241
    %v2682 = vpack.c.b16 %v2250, %v2242
    %v2683 = vpack.c.b16 %v2251, %v2243
    %v2684 = vpack.c.b16 %v2252, %v2244
    %v2685 = vpack.c.b16 %v2253, %v2245
    %v2686 = vpack.c.b16 %v2254, %v2246
    %v2687 = vpack.c.b16 %v2255, %v2247
    %v2688 = vpack.c.b16 %v2256, %v2248
    %v2689 = vpack.c.b16 %v2265, %v2257
    %v2690 = vpack.c.b16 %v2266, %v2258
    %v2691 = vpack.c.b16 %v2267, %v2259
    %v2692 = vpack.c.b16 %v2268, %v2260
    %v2693 = vpack.c.b16 %v2269, %v2261
    %v2694 = vpack.c.b16 %v2270, %v2262
    %v2695 = vpack.c.b16 %v2271, %v2263
    %v2696 = vpack.c.b16 %v2272, %v2264
    %v2697 = vpack.c.b16 %v2281, %v2273
    %v2698 = vpack.c.b16 %v2282, %v2274
    %v2699 = vpack.c.b16 %v2283, %v2275
    %v2700 = vpack.c.b16 %v2284, %v2276
    %v2701 = vpack.c.b16 %v2285, %v2277
    %v2702 = vpack.c.b16 %v2286, %v2278
    %v2703 = vpack.c.b16 %v2287, %v2279
    %v2704 = vpack.c.b16 %v2288, %v2280
    %v2705 = vpack.c.b16 %v2297, %v2289
    %v2706 = vpack.c.b16 %v2298, %v2290
    %v2707 = vpack.c.b16 %v2299, %v2291
    %v2708 = vpack.c.b16 %v2300, %v2292
    %v2709 = vpack.c.b16 %v2301, %v2293
    %v2710 = vpack.c.b16 %v2302, %v2294
    %v2711 = vpack.c.b16 %v2303, %v2295
    %v2712 = vpack.c.b16 %v2304, %v2296
    %v2713 = vpack.c.b16 %v2313, %v2305
    %v2714 = vpack.c.b16 %v2314, %v2306
    %v2715 = vpack.c.b16 %v2315, %v2307
    %v2716 = vpack.c.b16 %v2316, %v2308
    %v2717 = vpack.c.b16 %v2317, %v2309
    %v2718 = vpack.c.b16 %v2318, %v2310
    %v2719 = vpack.c.b16 %v2319, %v2311
    %v2720 = vpack.c.b16 %v2320, %v2312
    %v2721 = vpack.c.b16 %v2329, %v2321
    %v2722 = vpack.c.b16 %v2330, %v2322
    %v2723 = vpack.c.b16 %v2331, %v2323
    %v2724 = vpack.c.b16 %v2332, %v2324
    %v2725 = vpack.c.b16 %v2333, %v2325
    %v2726 = vpack.c.b16 %v2334, %v2326
    %v2727 = vpack.c.b16 %v2335, %v2327
    %v2728 = vpack.c.b16 %v2336, %v2328
    %v2729 = vpack.c.b16 %v2345, %v2337
    %v2730 = vpack.c.b16 %v2346, %v2338
    %v2731 = vpack.c.b16 %v2347, %v2339
    %v2732 = vpack.c.b16 %v2348, %v2340
    %v2733 = vpack.c.b16 %v2349, %v2341
    %v2734 = vpack.c.b16 %v2350, %v2342
    %v2735 = vpack.c.b16 %v2351, %v2343
    %v2736 = vpack.c.b16 %v2352, %v2344
    %v2737 = vpack.c.b16 %v2361, %v2353
    %v2738 = vpack.c.b16 %v2362, %v2354
    %v2739 = vpack.c.b16 %v2363, %v2355
    %v2740 = vpack.c.b16 %v2364, %v2356
    %v2741 = vpack.c.b16 %v2365, %v2357
    %v2742 = vpack.c.b16 %v2366, %v2358
    %v2743 = vpack.c.b16 %v2367, %v2359
    %v2744 = vpack.c.b16 %v2368, %v2360
    %v2745 = vpack.c.b16 %v2377, %v2369
    %v2746 = vpack.c.b16 %v2378, %v2370
    %v2747 = vpack.c.b16 %v2379, %v2371
    %v2748 = vpack.c.b16 %v2380, %v2372
    %v2749 = vpack.c.b16 %v2381, %v2373
    %v2750 = vpack.c.b16 %v2382, %v2374
    %v2751 = vpack.c.b16 %v2383, %v2375
    %v2752 = vpack.c.b16 %v2384, %v2376
    %v2753 = vpack.c.b16 %v2393, %v2385
    %v2754 = vpack.c.b16 %v2394, %v2386
    %v2755 = vpack.c.b16 %v2395, %v2387
    %v2756 = vpack.c.b16 %v2396, %v2388
    %v2757 = vpack.c.b16 %v2397, %v2389
    %v2758 = vpack.c.b16 %v2398, %v2390
    %v2759 = vpack.c.b16 %v2399, %v2391
    %v2760 = vpack.c.b16 %v2400, %v2392
    %v2761 = vpack.c.b16 %v2409, %v2401
    %v2762 = vpack.c.b16 %v2410, %v2402
    %v2763 = vpack.c.b16 %v2411, %v2403
    %v2764 = vpack.c.b16 %v2412, %v2404
    %v2765 = vpack.c.b16 %v2413, %v2405
    %v2766 = vpack.c.b16 %v2414, %v2406
    %v2767 = vpack.c.b16 %v2415, %v2407
    %v2768 = vpack.c.b16 %v2416, %v2408
    %v2769 = vpack.c.b16 %v2425, %v2417
    %v2770 = vpack.c.b16 %v2426, %v2418
    %v2771 = vpack.c.b16 %v2427, %v2419
    %v2772 = vpack.c.b16 %v2428, %v2420
    %v2773 = vpack.c.b16 %v2429, %v2421
    %v2774 = vpack.c.b16 %v2430, %v2422
    %v2775 = vpack.c.b16 %v2431, %v2423
    %v2776 = vpack.c.b16 %v2432, %v2424
    %v2777 = vpack.c.b16 %v2441, %v2433
    %v2778 = vpack.c.b16 %v2442, %v2434
    %v2779 = vpack.c.b16 %v2443, %v2435
    %v2780 = vpack.c.b16 %v2444, %v2436
    %v2781 = vpack.c.b16 %v2445, %v2437
    %v2782 = vpack.c.b16 %v2446, %v2438
    %v2783 = vpack.c.b16 %v2447, %v2439
    %v2784 = vpack.c.b16 %v2448, %v2440
    %v2785 = vpack.c.b16 %v2457, %v2449
    %v2786 = vpack.c.b16 %v2458, %v2450
    %v2787 = vpack.c.b16 %v2459, %v2451
    %v2788 = vpack.c.b16 %v2460, %v2452
    %v2789 = vpack.c.b16 %v2461, %v2453
    %v2790 = vpack.c.b16 %v2462, %v2454
    %v2791 = vpack.c.b16 %v2463, %v2455
    %v2792 = vpack.c.b16 %v2464, %v2456
    %v2793 = vpack.c.b16 %v2473, %v2465
    %v2794 = vpack.c.b16 %v2474, %v2466
    %v2795 = vpack.c.b16 %v2475, %v2467
    %v2796 = vpack.c.b16 %v2476, %v2468
    %v2797 = vpack.c.b16 %v2477, %v2469
    %v2798 = vpack.c.b16 %v2478, %v2470
    %v2799 = vpack.c.b16 %v2479, %v2471
    %v2800 = vpack.c.b16 %v2480, %v2472
    %v2801 = vpack.c.b16 %v2489, %v2481
    %v2802 = vpack.c.b16 %v2490, %v2482
    %v2803 = vpack.c.b16 %v2491, %v2483
    %v2804 = vpack.c.b16 %v2492, %v2484
    %v2805 = vpack.c.b16 %v2493, %v2485
    %v2806 = vpack.c.b16 %v2494, %v2486
    %v2807 = vpack.c.b16 %v2495, %v2487
    %v2808 = vpack.c.b16 %v2496, %v2488
    %v2809 = vpack.c.b16 %v2505, %v2497
    %v2810 = vpack.c.b16 %v2506, %v2498
    %v2811 = vpack.c.b16 %v2507, %v2499
    %v2812 = vpack.c.b16 %v2508, %v2500
    %v2813 = vpack.c.b16 %v2509, %v2501
    %v2814 = vpack.c.b16 %v2510, %v2502
    %v2815 = vpack.c.b16 %v2511, %v2503
    %v2816 = vpack.c.b16 %v2512, %v2504
    %v2817 = vpack.c.b16 %v2521, %v2513
    %v2818 = vpack.c.b16 %v2522, %v2514
    %v2819 = vpack.c.b16 %v2523, %v2515
    %v2820 = vpack.c.b16 %v2524, %v2516
    %v2821 = vpack.c.b16 %v2525, %v2517
    %v2822 = vpack.c.b16 %v2526, %v2518
    %v2823 = vpack.c.b16 %v2527, %v2519
    %v2824 = vpack.c.b16 %v2528, %v2520
    %v2825 = vpack.c.b16 %v2537, %v2529
    %v2826 = vpack.c.b16 %v2538, %v2530
    %v2827 = vpack.c.b16 %v2539, %v2531
    %v2828 = vpack.c.b16 %v2540, %v2532
    %v2829 = vpack.c.b16 %v2541, %v2533
    %v2830 = vpack.c.b16 %v2542, %v2534
    %v2831 = vpack.c.b16 %v2543, %v2535
    %v2832 = vpack.c.b16 %v2544, %v2536
    %v2833 = vpack.c.b16 %v2553, %v2545
    %v2834 = vpack.c.b16 %v2554, %v2546
    %v2835 = vpack.c.b16 %v2555, %v2547
    %v2836 = vpack.c.b16 %v2556, %v2548
    %v2837 = vpack.c.b16 %v2557, %v2549
    %v2838 = vpack.c.b16 %v2558, %v2550
    %v2839 = vpack.c.b16 %v2559, %v2551
    %v2840 = vpack.c.b16 %v2560, %v2552
    %v2841 = vpack.c.b16 %v2569, %v2561
    %v2842 = vpack.c.b16 %v2570, %v2562
    %v2843 = vpack.c.b16 %v2571, %v2563
    %v2844 = vpack.c.b16 %v2572, %v2564
    %v2845 = vpack.c.b16 %v2573, %v2565
    %v2846 = vpack.c.b16 %v2574, %v2566
    %v2847 = vpack.c.b16 %v2575, %v2567
    %v2848 = vpack.c.b16 %v2576, %v2568
    %v2849 = vpack.c.b16 %v2585, %v2577
    %v2850 = vpack.c.b16 %v2586, %v2578
    %v2851 = vpack.c.b16 %v2587, %v2579
    %v2852 = vpack.c.b16 %v2588, %v2580
    %v2853 = vpack.c.b16 %v2589, %v2581
    %v2854 = vpack.c.b16 %v2590, %v2582
    %v2855 = vpack.c.b16 %v2591, %v2583
    %v2856 = vpack.c.b16 %v2592, %v2584
    %v2857 = vpack.c.b16 %v2601, %v2593
    %v2858 = vpack.c.b16 %v2602, %v2594
    %v2859 = vpack.c.b16 %v2603, %v2595
    %v2860 = vpack.c.b16 %v2604, %v2596
    %v2861 = vpack.c.b16 %v2605, %v2597
    %v2862 = vpack.c.b16 %v2606, %v2598
    %v2863 = vpack.c.b16 %v2607, %v2599
    %v2864 = vpack.c.b16 %v2608, %v2600
    %3121 = vmatpush.bf16.msra.mxu0 %v2665
    %3122 = vmatpush.bf16.msra.mxu0 %v2657
    %3123 = vmatpush.bf16.msra.mxu0 %v2649
    %3124 = vmatpush.bf16.msra.mxu0 %v2641
    %3125 = vmatpush.bf16.msra.mxu0 %v2633
    %3126 = vmatpush.bf16.msra.mxu0 %v2625
    %3127 = vmatpush.bf16.msra.mxu0 %v2617
    %3128 = vmatpush.bf16.msra.mxu0 %v2609
    %3129 = vmatmul.bf16.gmra.mxu0 %v1564
    %v3130 = vpop.f32.mrf.mxu0
    %v3131 = vadd.f32 %v1825, %v3130
    %v3132 = vpop.f32.mrf.mxu0
    %3133 = vdwg.mxu0
    %3134 = vmatpush.bf16.msra.mxu0 %v2729
    %3135 = vmatpush.bf16.msra.mxu0 %v2721
    %3136 = vmatpush.bf16.msra.mxu0 %v2713
    %3137 = vmatpush.bf16.msra.mxu0 %v2705
    %3138 = vmatpush.bf16.msra.mxu0 %v2697
    %3139 = vmatpush.bf16.msra.mxu0 %v2689
    %3140 = vmatpush.bf16.msra.mxu0 %v2681
    %3141 = vmatpush.bf16.msra.mxu0 %v2673
    %3142 = vmatmul.bf16.gmra.mxu0 %v1565
    %v3143 = vpop.f32.mrf.mxu0
    %v3144 = vadd.f32 %v3131, %v3143
    %v3145 = vpop.f32.mrf.mxu0
    %3146 = vdwg.mxu0
    %3147 = vmatpush.bf16.msra.mxu0 %v2793
    %3148 = vmatpush.bf16.msra.mxu0 %v2785
    %3149 = vmatpush.bf16.msra.mxu0 %v2777
    %3150 = vmatpush.bf16.msra.mxu0 %v2769
    %3151 = vmatpush.bf16.msra.mxu0 %v2761
    %3152 = vmatpush.bf16.msra.mxu0 %v2753
    %3153 = vmatpush.bf16.msra.mxu0 %v2745
    %3154 = vmatpush.bf16.msra.mxu0 %v2737
    %3155 = vmatmul.bf16.gmra.mxu0 0
    %v3156 = vpop.f32.mrf.mxu0
    %v3157 = vadd.f32 %v3144, %v3156
    %v3158 = vpop.f32.mrf.mxu0
    %3159 = vdwg.mxu0
    %3160 = vmatpush.bf16.msra.mxu0 %v2857
    %3161 = vmatpush.bf16.msra.mxu0 %v2849
    %3162 = vmatpush.bf16.msra.mxu0 %v2841
    %3163 = vmatpush.bf16.msra.mxu0 %v2833
    %3164 = vmatpush.bf16.msra.mxu0 %v2825
    %3165 = vmatpush.bf16.msra.mxu0 %v2817
    %3166 = vmatpush.bf16.msra.mxu0 %v2809
    %3167 = vmatpush.bf16.msra.mxu0 %v2801
    %3168 = vmatmul.bf16.gmra.mxu0 0
    %v3169 = vpop.f32.mrf.mxu0
    %v3170 = vadd.f32 %v3157, %v3169
    %v3171 = vpop.f32.mrf.mxu0
    %3172 = vdwg.mxu0
    %3173 = vmatpush.bf16.msra.mxu0 %v2666
    %3174 = vmatpush.bf16.msra.mxu0 %v2658
    %3175 = vmatpush.bf16.msra.mxu0 %v2650
    %3176 = vmatpush.bf16.msra.mxu0 %v2642
    %3177 = vmatpush.bf16.msra.mxu0 %v2634
    %3178 = vmatpush.bf16.msra.mxu0 %v2626
    %3179 = vmatpush.bf16.msra.mxu0 %v2618
    %3180 = vmatpush.bf16.msra.mxu0 %v2610
    %3181 = vmatmul.bf16.gmra.mxu0 %v1564
    %v3182 = vpop.f32.mrf.mxu0
    %v3183 = vadd.f32 %v1826, %v3182
    %v3184 = vpop.f32.mrf.mxu0
    %3185 = vdwg.mxu0
    %3186 = vmatpush.bf16.msra.mxu0 %v2730
    %3187 = vmatpush.bf16.msra.mxu0 %v2722
    %3188 = vmatpush.bf16.msra.mxu0 %v2714
    %3189 = vmatpush.bf16.msra.mxu0 %v2706
    %3190 = vmatpush.bf16.msra.mxu0 %v2698
    %3191 = vmatpush.bf16.msra.mxu0 %v2690
    %3192 = vmatpush.bf16.msra.mxu0 %v2682
    %3193 = vmatpush.bf16.msra.mxu0 %v2674
    %3194 = vmatmul.bf16.gmra.mxu0 %v1565
    %v3195 = vpop.f32.mrf.mxu0
    %v3196 = vadd.f32 %v3183, %v3195
    %v3197 = vpop.f32.mrf.mxu0
    %3198 = vdwg.mxu0
    %3199 = vmatpush.bf16.msra.mxu0 %v2794
    %3200 = vmatpush.bf16.msra.mxu0 %v2786
    %3201 = vmatpush.bf16.msra.mxu0 %v2778
    %3202 = vmatpush.bf16.msra.mxu0 %v2770
    %3203 = vmatpush.bf16.msra.mxu0 %v2762
    %3204 = vmatpush.bf16.msra.mxu0 %v2754
    %3205 = vmatpush.bf16.msra.mxu0 %v2746
    %3206 = vmatpush.bf16.msra.mxu0 %v2738
    %3207 = vmatmul.bf16.gmra.mxu0 0
    %v3208 = vpop.f32.mrf.mxu0
    %v3209 = vadd.f32 %v3196, %v3208
    %v3210 = vpop.f32.mrf.mxu0
    %3211 = vdwg.mxu0
    %3212 = vmatpush.bf16.msra.mxu0 %v2858
    %3213 = vmatpush.bf16.msra.mxu0 %v2850
    %3214 = vmatpush.bf16.msra.mxu0 %v2842
    %3215 = vmatpush.bf16.msra.mxu0 %v2834
    %3216 = vmatpush.bf16.msra.mxu0 %v2826
    %3217 = vmatpush.bf16.msra.mxu0 %v2818
    %3218 = vmatpush.bf16.msra.mxu0 %v2810
    %3219 = vmatpush.bf16.msra.mxu0 %v2802
    %3220 = vmatmul.bf16.gmra.mxu0 0
    %v3221 = vpop.f32.mrf.mxu0
    %v3222 = vadd.f32 %v3209, %v3221
    %v3223 = vpop.f32.mrf.mxu0
    %3224 = vdwg.mxu0
    %3225 = vmatpush.bf16.msra.mxu0 %v2667
    %3226 = vmatpush.bf16.msra.mxu0 %v2659
    %3227 = vmatpush.bf16.msra.mxu0 %v2651
    %3228 = vmatpush.bf16.msra.mxu0 %v2643
    %3229 = vmatpush.bf16.msra.mxu0 %v2635
    %3230 = vmatpush.bf16.msra.mxu0 %v2627
    %3231 = vmatpush.bf16.msra.mxu0 %v2619
    %3232 = vmatpush.bf16.msra.mxu0 %v2611
    %3233 = vmatmul.bf16.gmra.mxu0 %v1564
    %v3234 = vpop.f32.mrf.mxu0
    %v3235 = vadd.f32 %v1827, %v3234
    %v3236 = vpop.f32.mrf.mxu0
    %3237 = vdwg.mxu0
    %3238 = vmatpush.bf16.msra.mxu0 %v2731
    %3239 = vmatpush.bf16.msra.mxu0 %v2723
    %3240 = vmatpush.bf16.msra.mxu0 %v2715
    %3241 = vmatpush.bf16.msra.mxu0 %v2707
    %3242 = vmatpush.bf16.msra.mxu0 %v2699
    %3243 = vmatpush.bf16.msra.mxu0 %v2691
    %3244 = vmatpush.bf16.msra.mxu0 %v2683
    %3245 = vmatpush.bf16.msra.mxu0 %v2675
    %3246 = vmatmul.bf16.gmra.mxu0 %v1565
    %v3247 = vpop.f32.mrf.mxu0
    %v3248 = vadd.f32 %v3235, %v3247
    %v3249 = vpop.f32.mrf.mxu0
    %3250 = vdwg.mxu0
    %3251 = vmatpush.bf16.msra.mxu0 %v2795
    %3252 = vmatpush.bf16.msra.mxu0 %v2787
    %3253 = vmatpush.bf16.msra.mxu0 %v2779
    %3254 = vmatpush.bf16.msra.mxu0 %v2771
    %3255 = vmatpush.bf16.msra.mxu0 %v2763
    %3256 = vmatpush.bf16.msra.mxu0 %v2755
    %3257 = vmatpush.bf16.msra.mxu0 %v2747
    %3258 = vmatpush.bf16.msra.mxu0 %v2739
    %3259 = vmatmul.bf16.gmra.mxu0 0
    %v3260 = vpop.f32.mrf.mxu0
    %v3261 = vadd.f32 %v3248, %v3260
    %v3262 = vpop.f32.mrf.mxu0
    %3263 = vdwg.mxu0
    %3264 = vmatpush.bf16.msra.mxu0 %v2859
    %3265 = vmatpush.bf16.msra.mxu0 %v2851
    %3266 = vmatpush.bf16.msra.mxu0 %v2843
    %3267 = vmatpush.bf16.msra.mxu0 %v2835
    %3268 = vmatpush.bf16.msra.mxu0 %v2827
    %3269 = vmatpush.bf16.msra.mxu0 %v2819
    %3270 = vmatpush.bf16.msra.mxu0 %v2811
    %3271 = vmatpush.bf16.msra.mxu0 %v2803
    %3272 = vmatmul.bf16.gmra.mxu0 0
    %v3273 = vpop.f32.mrf.mxu0
    %v3274 = vadd.f32 %v3261, %v3273
    %v3275 = vpop.f32.mrf.mxu0
    %3276 = vdwg.mxu0
    %3277 = vmatpush.bf16.msra.mxu0 %v2668
    %3278 = vmatpush.bf16.msra.mxu0 %v2660
    %3279 = vmatpush.bf16.msra.mxu0 %v2652
    %3280 = vmatpush.bf16.msra.mxu0 %v2644
    %3281 = vmatpush.bf16.msra.mxu0 %v2636
    %3282 = vmatpush.bf16.msra.mxu0 %v2628
    %3283 = vmatpush.bf16.msra.mxu0 %v2620
    %3284 = vmatpush.bf16.msra.mxu0 %v2612
    %3285 = vmatmul.bf16.gmra.mxu0 %v1564
    %v3286 = vpop.f32.mrf.mxu0
    %v3287 = vadd.f32 %v1828, %v3286
    %v3288 = vpop.f32.mrf.mxu0
    %3289 = vdwg.mxu0
    %3290 = vmatpush.bf16.msra.mxu0 %v2732
    %3291 = vmatpush.bf16.msra.mxu0 %v2724
    %3292 = vmatpush.bf16.msra.mxu0 %v2716
    %3293 = vmatpush.bf16.msra.mxu0 %v2708
    %3294 = vmatpush.bf16.msra.mxu0 %v2700
    %3295 = vmatpush.bf16.msra.mxu0 %v2692
    %3296 = vmatpush.bf16.msra.mxu0 %v2684
    %3297 = vmatpush.bf16.msra.mxu0 %v2676
    %3298 = vmatmul.bf16.gmra.mxu0 %v1565
    %v3299 = vpop.f32.mrf.mxu0
    %v3300 = vadd.f32 %v3287, %v3299
    %v3301 = vpop.f32.mrf.mxu0
    %3302 = vdwg.mxu0
    %3303 = vmatpush.bf16.msra.mxu0 %v2796
    %3304 = vmatpush.bf16.msra.mxu0 %v2788
    %3305 = vmatpush.bf16.msra.mxu0 %v2780
    %3306 = vmatpush.bf16.msra.mxu0 %v2772
    %3307 = vmatpush.bf16.msra.mxu0 %v2764
    %3308 = vmatpush.bf16.msra.mxu0 %v2756
    %3309 = vmatpush.bf16.msra.mxu0 %v2748
    %3310 = vmatpush.bf16.msra.mxu0 %v2740
    %3311 = vmatmul.bf16.gmra.mxu0 0
    %v3312 = vpop.f32.mrf.mxu0
    %v3313 = vadd.f32 %v3300, %v3312
    %v3314 = vpop.f32.mrf.mxu0
    %3315 = vdwg.mxu0
    %3316 = vmatpush.bf16.msra.mxu0 %v2860
    %3317 = vmatpush.bf16.msra.mxu0 %v2852
    %3318 = vmatpush.bf16.msra.mxu0 %v2844
    %3319 = vmatpush.bf16.msra.mxu0 %v2836
    %3320 = vmatpush.bf16.msra.mxu0 %v2828
    %3321 = vmatpush.bf16.msra.mxu0 %v2820
    %3322 = vmatpush.bf16.msra.mxu0 %v2812
    %3323 = vmatpush.bf16.msra.mxu0 %v2804
    %3324 = vmatmul.bf16.gmra.mxu0 0
    %v3325 = vpop.f32.mrf.mxu0
    %v3326 = vadd.f32 %v3313, %v3325
    %v3327 = vpop.f32.mrf.mxu0
    %3328 = vdwg.mxu0
    %3329 = vmatpush.bf16.msra.mxu0 %v2669
    %3330 = vmatpush.bf16.msra.mxu0 %v2661
    %3331 = vmatpush.bf16.msra.mxu0 %v2653
    %3332 = vmatpush.bf16.msra.mxu0 %v2645
    %3333 = vmatpush.bf16.msra.mxu0 %v2637
    %3334 = vmatpush.bf16.msra.mxu0 %v2629
    %3335 = vmatpush.bf16.msra.mxu0 %v2621
    %3336 = vmatpush.bf16.msra.mxu0 %v2613
    %3337 = vmatmul.bf16.gmra.mxu0 %v1564
    %v3338 = vpop.f32.mrf.mxu0
    %v3339 = vadd.f32 %v1829, %v3338
    %v3340 = vpop.f32.mrf.mxu0
    %3341 = vdwg.mxu0
    %3342 = vmatpush.bf16.msra.mxu0 %v2733
    %3343 = vmatpush.bf16.msra.mxu0 %v2725
    %3344 = vmatpush.bf16.msra.mxu0 %v2717
    %3345 = vmatpush.bf16.msra.mxu0 %v2709
    %3346 = vmatpush.bf16.msra.mxu0 %v2701
    %3347 = vmatpush.bf16.msra.mxu0 %v2693
    %3348 = vmatpush.bf16.msra.mxu0 %v2685
    %3349 = vmatpush.bf16.msra.mxu0 %v2677
    %3350 = vmatmul.bf16.gmra.mxu0 %v1565
    %v3351 = vpop.f32.mrf.mxu0
    %v3352 = vadd.f32 %v3339, %v3351
    %v3353 = vpop.f32.mrf.mxu0
    %3354 = vdwg.mxu0
    %3355 = vmatpush.bf16.msra.mxu0 %v2797
    %3356 = vmatpush.bf16.msra.mxu0 %v2789
    %3357 = vmatpush.bf16.msra.mxu0 %v2781
    %3358 = vmatpush.bf16.msra.mxu0 %v2773
    %3359 = vmatpush.bf16.msra.mxu0 %v2765
    %3360 = vmatpush.bf16.msra.mxu0 %v2757
    %3361 = vmatpush.bf16.msra.mxu0 %v2749
    %3362 = vmatpush.bf16.msra.mxu0 %v2741
    %3363 = vmatmul.bf16.gmra.mxu0 0
    %v3364 = vpop.f32.mrf.mxu0
    %v3365 = vadd.f32 %v3352, %v3364
    %v3366 = vpop.f32.mrf.mxu0
    %3367 = vdwg.mxu0
    %3368 = vmatpush.bf16.msra.mxu0 %v2861
    %3369 = vmatpush.bf16.msra.mxu0 %v2853
    %3370 = vmatpush.bf16.msra.mxu0 %v2845
    %3371 = vmatpush.bf16.msra.mxu0 %v2837
    %3372 = vmatpush.bf16.msra.mxu0 %v2829
    %3373 = vmatpush.bf16.msra.mxu0 %v2821
    %3374 = vmatpush.bf16.msra.mxu0 %v2813
    %3375 = vmatpush.bf16.msra.mxu0 %v2805
    %3376 = vmatmul.bf16.gmra.mxu0 0
    %v3377 = vpop.f32.mrf.mxu0
    %v3378 = vadd.f32 %v3365, %v3377
    %v3379 = vpop.f32.mrf.mxu0
    %3380 = vdwg.mxu0
    %3381 = vmatpush.bf16.msra.mxu0 %v2670
    %3382 = vmatpush.bf16.msra.mxu0 %v2662
    %3383 = vmatpush.bf16.msra.mxu0 %v2654
    %3384 = vmatpush.bf16.msra.mxu0 %v2646
    %3385 = vmatpush.bf16.msra.mxu0 %v2638
    %3386 = vmatpush.bf16.msra.mxu0 %v2630
    %3387 = vmatpush.bf16.msra.mxu0 %v2622
    %3388 = vmatpush.bf16.msra.mxu0 %v2614
    %3389 = vmatmul.bf16.gmra.mxu0 %v1564
    %v3390 = vpop.f32.mrf.mxu0
    %v3391 = vadd.f32 %v1830, %v3390
    %v3392 = vpop.f32.mrf.mxu0
    %3393 = vdwg.mxu0
    %3394 = vmatpush.bf16.msra.mxu0 %v2734
    %3395 = vmatpush.bf16.msra.mxu0 %v2726
    %3396 = vmatpush.bf16.msra.mxu0 %v2718
    %3397 = vmatpush.bf16.msra.mxu0 %v2710
    %3398 = vmatpush.bf16.msra.mxu0 %v2702
    %3399 = vmatpush.bf16.msra.mxu0 %v2694
    %3400 = vmatpush.bf16.msra.mxu0 %v2686
    %3401 = vmatpush.bf16.msra.mxu0 %v2678
    %3402 = vmatmul.bf16.gmra.mxu0 %v1565
    %v3403 = vpop.f32.mrf.mxu0
    %v3404 = vadd.f32 %v3391, %v3403
    %v3405 = vpop.f32.mrf.mxu0
    %3406 = vdwg.mxu0
    %3407 = vmatpush.bf16.msra.mxu0 %v2798
    %3408 = vmatpush.bf16.msra.mxu0 %v2790
    %3409 = vmatpush.bf16.msra.mxu0 %v2782
    %3410 = vmatpush.bf16.msra.mxu0 %v2774
    %3411 = vmatpush.bf16.msra.mxu0 %v2766
    %3412 = vmatpush.bf16.msra.mxu0 %v2758
    %3413 = vmatpush.bf16.msra.mxu0 %v2750
    %3414 = vmatpush.bf16.msra.mxu0 %v2742
    %3415 = vmatmul.bf16.gmra.mxu0 0
    %v3416 = vpop.f32.mrf.mxu0
    %v3417 = vadd.f32 %v3404, %v3416
    %v3418 = vpop.f32.mrf.mxu0
    %3419 = vdwg.mxu0
    %3420 = vmatpush.bf16.msra.mxu0 %v2862
    %3421 = vmatpush.bf16.msra.mxu0 %v2854
    %3422 = vmatpush.bf16.msra.mxu0 %v2846
    %3423 = vmatpush.bf16.msra.mxu0 %v2838
    %3424 = vmatpush.bf16.msra.mxu0 %v2830
    %3425 = vmatpush.bf16.msra.mxu0 %v2822
    %3426 = vmatpush.bf16.msra.mxu0 %v2814
    %3427 = vmatpush.bf16.msra.mxu0 %v2806
    %3428 = vmatmul.bf16.gmra.mxu0 0
    %v3429 = vpop.f32.mrf.mxu0
    %v3430 = vadd.f32 %v3417, %v3429
    %v3431 = vpop.f32.mrf.mxu0
    %3432 = vdwg.mxu0
    %3433 = vmatpush.bf16.msra.mxu0 %v2671
    %3434 = vmatpush.bf16.msra.mxu0 %v2663
    %3435 = vmatpush.bf16.msra.mxu0 %v2655
    %3436 = vmatpush.bf16.msra.mxu0 %v2647
    %3437 = vmatpush.bf16.msra.mxu0 %v2639
    %3438 = vmatpush.bf16.msra.mxu0 %v2631
    %3439 = vmatpush.bf16.msra.mxu0 %v2623
    %3440 = vmatpush.bf16.msra.mxu0 %v2615
    %3441 = vmatmul.bf16.gmra.mxu0 %v1564
    %v3442 = vpop.f32.mrf.mxu0
    %v3443 = vadd.f32 %v1831, %v3442
    %v3444 = vpop.f32.mrf.mxu0
    %3445 = vdwg.mxu0
    %3446 = vmatpush.bf16.msra.mxu0 %v2735
    %3447 = vmatpush.bf16.msra.mxu0 %v2727
    %3448 = vmatpush.bf16.msra.mxu0 %v2719
    %3449 = vmatpush.bf16.msra.mxu0 %v2711
    %3450 = vmatpush.bf16.msra.mxu0 %v2703
    %3451 = vmatpush.bf16.msra.mxu0 %v2695
    %3452 = vmatpush.bf16.msra.mxu0 %v2687
    %3453 = vmatpush.bf16.msra.mxu0 %v2679
    %3454 = vmatmul.bf16.gmra.mxu0 %v1565
    %v3455 = vpop.f32.mrf.mxu0
    %v3456 = vadd.f32 %v3443, %v3455
    %v3457 = vpop.f32.mrf.mxu0
    %3458 = vdwg.mxu0
    %3459 = vmatpush.bf16.msra.mxu0 %v2799
    %3460 = vmatpush.bf16.msra.mxu0 %v2791
    %3461 = vmatpush.bf16.msra.mxu0 %v2783
    %3462 = vmatpush.bf16.msra.mxu0 %v2775
    %3463 = vmatpush.bf16.msra.mxu0 %v2767
    %3464 = vmatpush.bf16.msra.mxu0 %v2759
    %3465 = vmatpush.bf16.msra.mxu0 %v2751
    %3466 = vmatpush.bf16.msra.mxu0 %v2743
    %3467 = vmatmul.bf16.gmra.mxu0 0
    %v3468 = vpop.f32.mrf.mxu0
    %v3469 = vadd.f32 %v3456, %v3468
    %v3470 = vpop.f32.mrf.mxu0
    %3471 = vdwg.mxu0
    %3472 = vmatpush.bf16.msra.mxu0 %v2863
    %3473 = vmatpush.bf16.msra.mxu0 %v2855
    %3474 = vmatpush.bf16.msra.mxu0 %v2847
    %3475 = vmatpush.bf16.msra.mxu0 %v2839
    %3476 = vmatpush.bf16.msra.mxu0 %v2831
    %3477 = vmatpush.bf16.msra.mxu0 %v2823
    %3478 = vmatpush.bf16.msra.mxu0 %v2815
    %3479 = vmatpush.bf16.msra.mxu0 %v2807
    %3480 = vmatmul.bf16.gmra.mxu0 0
    %v3481 = vpop.f32.mrf.mxu0
    %v3482 = vadd.f32 %v3469, %v3481
    %v3483 = vpop.f32.mrf.mxu0
    %3484 = vdwg.mxu0
    %3485 = vmatpush.bf16.msra.mxu0 %v2672
    %3486 = vmatpush.bf16.msra.mxu0 %v2664
    %3487 = vmatpush.bf16.msra.mxu0 %v2656
    %3488 = vmatpush.bf16.msra.mxu0 %v2648
    %3489 = vmatpush.bf16.msra.mxu0 %v2640
    %3490 = vmatpush.bf16.msra.mxu0 %v2632
    %3491 = vmatpush.bf16.msra.mxu0 %v2624
    %3492 = vmatpush.bf16.msra.mxu0 %v2616
    %3493 = vmatmul.bf16.gmra.mxu0 %v1564
    %v3494 = vpop.f32.mrf.mxu0
    %v3495 = vadd.f32 %v1832, %v3494
    %v3496 = vpop.f32.mrf.mxu0
    %3497 = vdwg.mxu0
    %3498 = vmatpush.bf16.msra.mxu0 %v2736
    %3499 = vmatpush.bf16.msra.mxu0 %v2728
    %3500 = vmatpush.bf16.msra.mxu0 %v2720
    %3501 = vmatpush.bf16.msra.mxu0 %v2712
    %3502 = vmatpush.bf16.msra.mxu0 %v2704
    %3503 = vmatpush.bf16.msra.mxu0 %v2696
    %3504 = vmatpush.bf16.msra.mxu0 %v2688
    %3505 = vmatpush.bf16.msra.mxu0 %v2680
    %3506 = vmatmul.bf16.gmra.mxu0 %v1565
    %v3507 = vpop.f32.mrf.mxu0
    %v3508 = vadd.f32 %v3495, %v3507
    %v3509 = vpop.f32.mrf.mxu0
    %3510 = vdwg.mxu0
    %3511 = vmatpush.bf16.msra.mxu0 %v2800
    %3512 = vmatpush.bf16.msra.mxu0 %v2792
    %3513 = vmatpush.bf16.msra.mxu0 %v2784
    %3514 = vmatpush.bf16.msra.mxu0 %v2776
    %3515 = vmatpush.bf16.msra.mxu0 %v2768
    %3516 = vmatpush.bf16.msra.mxu0 %v2760
    %3517 = vmatpush.bf16.msra.mxu0 %v2752
    %3518 = vmatpush.bf16.msra.mxu0 %v2744
    %3519 = vmatmul.bf16.gmra.mxu0 0
    %v3520 = vpop.f32.mrf.mxu0
    %v3521 = vadd.f32 %v3508, %v3520
    %v3522 = vpop.f32.mrf.mxu0
    %3523 = vdwg.mxu0
    %3524 = vmatpush.bf16.msra.mxu0 %v2864
    %3525 = vmatpush.bf16.msra.mxu0 %v2856
    %3526 = vmatpush.bf16.msra.mxu0 %v2848
    %3527 = vmatpush.bf16.msra.mxu0 %v2840
    %3528 = vmatpush.bf16.msra.mxu0 %v2832
    %3529 = vmatpush.bf16.msra.mxu0 %v2824
    %3530 = vmatpush.bf16.msra.mxu0 %v2816
    %3531 = vmatpush.bf16.msra.mxu0 %v2808
    %3532 = vmatmul.bf16.gmra.mxu0 0
    %v3533 = vpop.f32.mrf.mxu0
    %v3534 = vadd.f32 %v3521, %v3533
    %v3535 = vpop.f32.mrf.mxu0
    %3536 = vdwg.mxu0
    %v3537 = vxor.u32 %v3170, 2147483648
    %v3538 = vxor.u32 %v3222, 2147483648
    %v3539 = vmul.f32 %v3537, 1.442695
    %v3540 = vpow.pop %v3539
    %v3541 = vmul.f32 %v3538, 1.442695
    %v3542 = vpow.pop %v3541
    %v3543 = vadd.f32 %v3540, 1.0
    %v3544 = vadd.f32 %v3542, 1.0
    %v3545 = vrcp.pop %v3543
    %v3546 = vmul.f32 %v3543, %v3545
    %v3547 = vsub.f32 1.0, %v3546
    %v3548 = vmul.f32 %v3545, %v3547
    %v3549 = vadd.f32 %v3545, %v3548
    %vm3550 = vweird.f32 %v3543
    %vm3551 = vweird.f32 %v3545
    %vm3552 = vmor %vm3550, %vm3551
    %v3553 = vsel %vm3552, %v3545, %v3549
    %v3554 = vand.u32 2147483647, %v3543
    %vm3555 = vcmp.eq.f32.partialorder %v3554, 8.507059e+37
    %v3556 = vand.u32 %v3543, 2147483648
    %v3557 = vor.u32 1.1754944e-38, %v3556
    %v3558 = vsel %vm3555, %v3557, %v3553
    %v3559 = vmul.f32 1.0, %v3558
    %v3560 = vrcp.pop %v3544
    %v3561 = vmul.f32 %v3544, %v3560
    %v3562 = vsub.f32 1.0, %v3561
    %v3563 = vmul.f32 %v3560, %v3562
    %v3564 = vadd.f32 %v3560, %v3563
    %vm3565 = vweird.f32 %v3544
    %vm3566 = vweird.f32 %v3560
    %vm3567 = vmor %vm3565, %vm3566
    %v3568 = vsel %vm3567, %v3560, %v3564
    %v3569 = vand.u32 2147483647, %v3544
    %vm3570 = vcmp.eq.f32.partialorder %v3569, 8.507059e+37
    %v3571 = vand.u32 %v3544, 2147483648
    %v3572 = vor.u32 1.1754944e-38, %v3571
    %v3573 = vsel %vm3570, %v3572, %v3568
    %v3574 = vmul.f32 1.0, %v3573
    %v3575 = vxor.u32 %v3274, 2147483648
    %v3576 = vxor.u32 %v3326, 2147483648
    %v3577 = vmul.f32 %v3575, 1.442695
    %v3578 = vpow.pop %v3577
    %v3579 = vmul.f32 %v3576, 1.442695
    %v3580 = vpow.pop %v3579
    %v3581 = vadd.f32 %v3578, 1.0
    %v3582 = vadd.f32 %v3580, 1.0
    %v3583 = vrcp.pop %v3581
    %v3584 = vmul.f32 %v3581, %v3583
    %v3585 = vsub.f32 1.0, %v3584
    %v3586 = vmul.f32 %v3583, %v3585
    %v3587 = vadd.f32 %v3583, %v3586
    %vm3588 = vweird.f32 %v3581
    %vm3589 = vweird.f32 %v3583
    %vm3590 = vmor %vm3588, %vm3589
    %v3591 = vsel %vm3590, %v3583, %v3587
    %v3592 = vand.u32 2147483647, %v3581
    %vm3593 = vcmp.eq.f32.partialorder %v3592, 8.507059e+37
    %v3594 = vand.u32 %v3581, 2147483648
    %v3595 = vor.u32 1.1754944e-38, %v3594
    %v3596 = vsel %vm3593, %v3595, %v3591
    %v3597 = vmul.f32 1.0, %v3596
    %v3598 = vrcp.pop %v3582
    %v3599 = vmul.f32 %v3582, %v3598
    %v3600 = vsub.f32 1.0, %v3599
    %v3601 = vmul.f32 %v3598, %v3600
    %v3602 = vadd.f32 %v3598, %v3601
    %vm3603 = vweird.f32 %v3582
    %vm3604 = vweird.f32 %v3598
    %vm3605 = vmor %vm3603, %vm3604
    %v3606 = vsel %vm3605, %v3598, %v3602
    %v3607 = vand.u32 2147483647, %v3582
    %vm3608 = vcmp.eq.f32.partialorder %v3607, 8.507059e+37
    %v3609 = vand.u32 %v3582, 2147483648
    %v3610 = vor.u32 1.1754944e-38, %v3609
    %v3611 = vsel %vm3608, %v3610, %v3606
    %v3612 = vmul.f32 1.0, %v3611
    %v3613 = vtanh.pop %v3378
    %v3614 = vtanh.pop %v3430
    %v3615 = vxor.u32 %v3482, 2147483648
    %v3616 = vxor.u32 %v3534, 2147483648
    %v3617 = vmul.f32 %v3615, 1.442695
    %v3618 = vpow.pop %v3617
    %v3619 = vmul.f32 %v3616, 1.442695
    %v3620 = vpow.pop %v3619
    %v3621 = vadd.f32 %v3618, 1.0
    %v3622 = vadd.f32 %v3620, 1.0
    %v3623 = vrcp.pop %v3621
    %v3624 = vmul.f32 %v3621, %v3623
    %v3625 = vsub.f32 1.0, %v3624
    %v3626 = vmul.f32 %v3623, %v3625
    %v3627 = vadd.f32 %v3623, %v3626
    %vm3628 = vweird.f32 %v3621
    %vm3629 = vweird.f32 %v3623
    %vm3630 = vmor %vm3628, %vm3629
    %v3631 = vsel %vm3630, %v3623, %v3627
    %v3632 = vand.u32 2147483647, %v3621
    %vm3633 = vcmp.eq.f32.partialorder %v3632, 8.507059e+37
    %v3634 = vand.u32 %v3621, 2147483648
    %v3635 = vor.u32 1.1754944e-38, %v3634
    %v3636 = vsel %vm3633, %v3635, %v3631
    %v3637 = vmul.f32 1.0, %v3636
    %v3638 = vrcp.pop %v3622
    %v3639 = vmul.f32 %v3622, %v3638
    %v3640 = vsub.f32 1.0, %v3639
    %v3641 = vmul.f32 %v3638, %v3640
    %v3642 = vadd.f32 %v3638, %v3641
    %vm3643 = vweird.f32 %v3622
    %vm3644 = vweird.f32 %v3638
    %vm3645 = vmor %vm3643, %vm3644
    %v3646 = vsel %vm3645, %v3638, %v3642
    %v3647 = vand.u32 2147483647, %v3622
    %vm3648 = vcmp.eq.f32.partialorder %v3647, 8.507059e+37
    %v3649 = vand.u32 %v3622, 2147483648
    %v3650 = vor.u32 1.1754944e-38, %v3649
    %v3651 = vsel %vm3648, %v3650, %v3646
    %v3652 = vmul.f32 1.0, %v3651
    %v3653 = vmul.f32 %v3597, 0.0
    %v3654 = vmul.f32 %v3612, 0.0
    %v3655 = vmul.f32 %v3559, %v3613
    %v3656 = vmul.f32 %v3574, %v3614
    %v3657 = vadd.f32 %v3653, %v3655
    %v3658 = vadd.f32 %v3654, %v3656
    %v3659 = vtanh.pop %v3657
    %v3660 = vtanh.pop %v3658
    %v3661 = vmul.f32 %v3637, %v3659
    %v3662 = vmul.f32 %v3652, %v3660
    %3663 = vmatpush.bf16.msra.mxu0 %v1018
    %3664 = vmatpush.bf16.msra.mxu0 %v1010
    %3665 = vmatpush.bf16.msra.mxu0 %v1002
    %3666 = vmatpush.bf16.msra.mxu0 %v994
    %3667 = vmatpush.bf16.msra.mxu0 %v986
    %3668 = vmatpush.bf16.msra.mxu0 %v978
    %3669 = vmatpush.bf16.msra.mxu0 %v970
    %3670 = vmatpush.bf16.msra.mxu0 %v962
    %3671 = vmatmul.bf16.gmra.mxu0 %v1564
    %v3672 = vpop.f32.mrf.mxu0
    %v3673 = vadd.f32 0.0, %v3672
    %v3674 = vpop.f32.mrf.mxu0
    %3675 = vdwg.mxu0
    %3676 = vmatpush.bf16.msra.mxu0 %v1082
    %3677 = vmatpush.bf16.msra.mxu0 %v1074
    %3678 = vmatpush.bf16.msra.mxu0 %v1066
    %3679 = vmatpush.bf16.msra.mxu0 %v1058
    %3680 = vmatpush.bf16.msra.mxu0 %v1050
    %3681 = vmatpush.bf16.msra.mxu0 %v1042
    %3682 = vmatpush.bf16.msra.mxu0 %v1034
    %3683 = vmatpush.bf16.msra.mxu0 %v1026
    %3684 = vmatmul.bf16.gmra.mxu0 %v1565
    %v3685 = vpop.f32.mrf.mxu0
    %v3686 = vadd.f32 %v3673, %v3685
    %v3687 = vpop.f32.mrf.mxu0
    %3688 = vdwg.mxu0
    %3689 = vmatpush.bf16.msra.mxu0 %v1019
    %3690 = vmatpush.bf16.msra.mxu0 %v1011
    %3691 = vmatpush.bf16.msra.mxu0 %v1003
    %3692 = vmatpush.bf16.msra.mxu0 %v995
    %3693 = vmatpush.bf16.msra.mxu0 %v987
    %3694 = vmatpush.bf16.msra.mxu0 %v979
    %3695 = vmatpush.bf16.msra.mxu0 %v971
    %3696 = vmatpush.bf16.msra.mxu0 %v963
    %3697 = vmatmul.bf16.gmra.mxu0 %v1564
    %v3698 = vpop.f32.mrf.mxu0
    %v3699 = vadd.f32 0.0, %v3698
    %v3700 = vpop.f32.mrf.mxu0
    %3701 = vdwg.mxu0
    %3702 = vmatpush.bf16.msra.mxu0 %v1083
    %3703 = vmatpush.bf16.msra.mxu0 %v1075
    %3704 = vmatpush.bf16.msra.mxu0 %v1067
    %3705 = vmatpush.bf16.msra.mxu0 %v1059
    %3706 = vmatpush.bf16.msra.mxu0 %v1051
    %3707 = vmatpush.bf16.msra.mxu0 %v1043
    %3708 = vmatpush.bf16.msra.mxu0 %v1035
    %3709 = vmatpush.bf16.msra.mxu0 %v1027
    %3710 = vmatmul.bf16.gmra.mxu0 %v1565
    %v3711 = vpop.f32.mrf.mxu0
    %v3712 = vadd.f32 %v3699, %v3711
    %v3713 = vpop.f32.mrf.mxu0
    %3714 = vdwg.mxu0
    %3715 = vmatpush.bf16.msra.mxu0 %v1020
    %3716 = vmatpush.bf16.msra.mxu0 %v1012
    %3717 = vmatpush.bf16.msra.mxu0 %v1004
    %3718 = vmatpush.bf16.msra.mxu0 %v996
    %3719 = vmatpush.bf16.msra.mxu0 %v988
    %3720 = vmatpush.bf16.msra.mxu0 %v980
    %3721 = vmatpush.bf16.msra.mxu0 %v972
    %3722 = vmatpush.bf16.msra.mxu0 %v964
    %3723 = vmatmul.bf16.gmra.mxu0 %v1564
    %v3724 = vpop.f32.mrf.mxu0
    %v3725 = vadd.f32 0.0, %v3724
    %v3726 = vpop.f32.mrf.mxu0
    %3727 = vdwg.mxu0
    %3728 = vmatpush.bf16.msra.mxu0 %v1084
    %3729 = vmatpush.bf16.msra.mxu0 %v1076
    %3730 = vmatpush.bf16.msra.mxu0 %v1068
    %3731 = vmatpush.bf16.msra.mxu0 %v1060
    %3732 = vmatpush.bf16.msra.mxu0 %v1052
    %3733 = vmatpush.bf16.msra.mxu0 %v1044
    %3734 = vmatpush.bf16.msra.mxu0 %v1036
    %3735 = vmatpush.bf16.msra.mxu0 %v1028
    %3736 = vmatmul.bf16.gmra.mxu0 %v1565
    %v3737 = vpop.f32.mrf.mxu0
    %v3738 = vadd.f32 %v3725, %v3737
    %v3739 = vpop.f32.mrf.mxu0
    %3740 = vdwg.mxu0
    %3741 = vmatpush.bf16.msra.mxu0 %v1021
    %3742 = vmatpush.bf16.msra.mxu0 %v1013
    %3743 = vmatpush.bf16.msra.mxu0 %v1005
    %3744 = vmatpush.bf16.msra.mxu0 %v997
    %3745 = vmatpush.bf16.msra.mxu0 %v989
    %3746 = vmatpush.bf16.msra.mxu0 %v981
    %3747 = vmatpush.bf16.msra.mxu0 %v973
    %3748 = vmatpush.bf16.msra.mxu0 %v965
    %3749 = vmatmul.bf16.gmra.mxu0 %v1564
    %v3750 = vpop.f32.mrf.mxu0
    %v3751 = vadd.f32 0.0, %v3750
    %v3752 = vpop.f32.mrf.mxu0
    %3753 = vdwg.mxu0
    %3754 = vmatpush.bf16.msra.mxu0 %v1085
    %3755 = vmatpush.bf16.msra.mxu0 %v1077
    %3756 = vmatpush.bf16.msra.mxu0 %v1069
    %3757 = vmatpush.bf16.msra.mxu0 %v1061
    %3758 = vmatpush.bf16.msra.mxu0 %v1053
    %3759 = vmatpush.bf16.msra.mxu0 %v1045
    %3760 = vmatpush.bf16.msra.mxu0 %v1037
    %3761 = vmatpush.bf16.msra.mxu0 %v1029
    %3762 = vmatmul.bf16.gmra.mxu0 %v1565
    %v3763 = vpop.f32.mrf.mxu0
    %v3764 = vadd.f32 %v3751, %v3763
    %v3765 = vpop.f32.mrf.mxu0
    %3766 = vdwg.mxu0
    %3767 = vmatpush.bf16.msra.mxu0 %v1022
    %3768 = vmatpush.bf16.msra.mxu0 %v1014
    %3769 = vmatpush.bf16.msra.mxu0 %v1006
    %3770 = vmatpush.bf16.msra.mxu0 %v998
    %3771 = vmatpush.bf16.msra.mxu0 %v990
    %3772 = vmatpush.bf16.msra.mxu0 %v982
    %3773 = vmatpush.bf16.msra.mxu0 %v974
    %3774 = vmatpush.bf16.msra.mxu0 %v966
    %3775 = vmatmul.bf16.gmra.mxu0 %v1564
    %v3776 = vpop.f32.mrf.mxu0
    %v3777 = vadd.f32 0.0, %v3776
    %v3778 = vpop.f32.mrf.mxu0
    %3779 = vdwg.mxu0
    %3780 = vmatpush.bf16.msra.mxu0 %v1086
    %3781 = vmatpush.bf16.msra.mxu0 %v1078
    %3782 = vmatpush.bf16.msra.mxu0 %v1070
    %3783 = vmatpush.bf16.msra.mxu0 %v1062
    %3784 = vmatpush.bf16.msra.mxu0 %v1054
    %3785 = vmatpush.bf16.msra.mxu0 %v1046
    %3786 = vmatpush.bf16.msra.mxu0 %v1038
    %3787 = vmatpush.bf16.msra.mxu0 %v1030
    %3788 = vmatmul.bf16.gmra.mxu0 %v1565
    %v3789 = vpop.f32.mrf.mxu0
    %v3790 = vadd.f32 %v3777, %v3789
    %v3791 = vpop.f32.mrf.mxu0
    %3792 = vdwg.mxu0
    %3793 = vmatpush.bf16.msra.mxu0 %v1023
    %3794 = vmatpush.bf16.msra.mxu0 %v1015
    %3795 = vmatpush.bf16.msra.mxu0 %v1007
    %3796 = vmatpush.bf16.msra.mxu0 %v999
    %3797 = vmatpush.bf16.msra.mxu0 %v991
    %3798 = vmatpush.bf16.msra.mxu0 %v983
    %3799 = vmatpush.bf16.msra.mxu0 %v975
    %3800 = vmatpush.bf16.msra.mxu0 %v967
    %3801 = vmatmul.bf16.gmra.mxu0 %v1564
    %v3802 = vpop.f32.mrf.mxu0
    %v3803 = vadd.f32 0.0, %v3802
    %v3804 = vpop.f32.mrf.mxu0
    %3805 = vdwg.mxu0
    %3806 = vmatpush.bf16.msra.mxu0 %v1087
    %3807 = vmatpush.bf16.msra.mxu0 %v1079
    %3808 = vmatpush.bf16.msra.mxu0 %v1071
    %3809 = vmatpush.bf16.msra.mxu0 %v1063
    %3810 = vmatpush.bf16.msra.mxu0 %v1055
    %3811 = vmatpush.bf16.msra.mxu0 %v1047
    %3812 = vmatpush.bf16.msra.mxu0 %v1039
    %3813 = vmatpush.bf16.msra.mxu0 %v1031
    %3814 = vmatmul.bf16.gmra.mxu0 %v1565
    %v3815 = vpop.f32.mrf.mxu0
    %v3816 = vadd.f32 %v3803, %v3815
    %v3817 = vpop.f32.mrf.mxu0
    %3818 = vdwg.mxu0
    %3819 = vmatpush.bf16.msra.mxu0 %v1024
    %3820 = vmatpush.bf16.msra.mxu0 %v1016
    %3821 = vmatpush.bf16.msra.mxu0 %v1008
    %3822 = vmatpush.bf16.msra.mxu0 %v1000
    %3823 = vmatpush.bf16.msra.mxu0 %v992
    %3824 = vmatpush.bf16.msra.mxu0 %v984
    %3825 = vmatpush.bf16.msra.mxu0 %v976
    %3826 = vmatpush.bf16.msra.mxu0 %v968
    %3827 = vmatmul.bf16.gmra.mxu0 %v1564
    %v3828 = vpop.f32.mrf.mxu0
    %v3829 = vadd.f32 0.0, %v3828
    %v3830 = vpop.f32.mrf.mxu0
    %3831 = vdwg.mxu0
    %3832 = vmatpush.bf16.msra.mxu0 %v1088
    %3833 = vmatpush.bf16.msra.mxu0 %v1080
    %3834 = vmatpush.bf16.msra.mxu0 %v1072
    %3835 = vmatpush.bf16.msra.mxu0 %v1064
    %3836 = vmatpush.bf16.msra.mxu0 %v1056
    %3837 = vmatpush.bf16.msra.mxu0 %v1048
    %3838 = vmatpush.bf16.msra.mxu0 %v1040
    %3839 = vmatpush.bf16.msra.mxu0 %v1032
    %3840 = vmatmul.bf16.gmra.mxu0 %v1565
    %v3841 = vpop.f32.mrf.mxu0
    %v3842 = vadd.f32 %v3829, %v3841
    %v3843 = vpop.f32.mrf.mxu0
    %3844 = vdwg.mxu0
    %3845 = vmatpush.bf16.msra.mxu0 %v1025
    %3846 = vmatpush.bf16.msra.mxu0 %v1017
    %3847 = vmatpush.bf16.msra.mxu0 %v1009
    %3848 = vmatpush.bf16.msra.mxu0 %v1001
    %3849 = vmatpush.bf16.msra.mxu0 %v993
    %3850 = vmatpush.bf16.msra.mxu0 %v985
    %3851 = vmatpush.bf16.msra.mxu0 %v977
    %3852 = vmatpush.bf16.msra.mxu0 %v969
    %3853 = vmatmul.bf16.gmra.mxu0 %v1564
    %v3854 = vpop.f32.mrf.mxu0
    %v3855 = vadd.f32 0.0, %v3854
    %v3856 = vpop.f32.mrf.mxu0
    %3857 = vdwg.mxu0
    %3858 = vmatpush.bf16.msra.mxu0 %v1089
    %3859 = vmatpush.bf16.msra.mxu0 %v1081
    %3860 = vmatpush.bf16.msra.mxu0 %v1073
    %3861 = vmatpush.bf16.msra.mxu0 %v1065
    %3862 = vmatpush.bf16.msra.mxu0 %v1057
    %3863 = vmatpush.bf16.msra.mxu0 %v1049
    %3864 = vmatpush.bf16.msra.mxu0 %v1041
    %3865 = vmatpush.bf16.msra.mxu0 %v1033
    %3866 = vmatmul.bf16.gmra.mxu0 %v1565
    %v3867 = vpop.f32.mrf.mxu0
    %v3868 = vadd.f32 %v3855, %v3867
    %v3869 = vpop.f32.mrf.mxu0
    %3870 = vdwg.mxu0
    %v3871 = vadd.f32 %v229, %v3686
    %v3872 = vadd.f32 %v258, %v3712
    %v3873 = vadd.f32 %v287, %v3738
    %v3874 = vadd.f32 %v316, %v3764
    %v3875 = vadd.f32 %v345, %v3790
    %v3876 = vadd.f32 %v374, %v3816
    %v3877 = vadd.f32 %v403, %v3842
    %v3878 = vadd.f32 %v432, %v3868
    %v3879 = vxor.u32 %v3871, 2147483648
    %v3880 = vxor.u32 %v3872, 2147483648
    %v3881 = vmul.f32 %v3879, 1.442695
    %v3882 = vpow.pop %v3881
    %v3883 = vmul.f32 %v3880, 1.442695
    %v3884 = vpow.pop %v3883
    %v3885 = vadd.f32 %v3882, 1.0
    %v3886 = vadd.f32 %v3884, 1.0
    %v3887 = vrcp.pop %v3885
    %v3888 = vmul.f32 %v3885, %v3887
    %v3889 = vsub.f32 1.0, %v3888
    %v3890 = vmul.f32 %v3887, %v3889
    %v3891 = vadd.f32 %v3887, %v3890
    %vm3892 = vweird.f32 %v3885
    %vm3893 = vweird.f32 %v3887
    %vm3894 = vmor %vm3892, %vm3893
    %v3895 = vsel %vm3894, %v3887, %v3891
    %v3896 = vand.u32 2147483647, %v3885
    %vm3897 = vcmp.eq.f32.partialorder %v3896, 8.507059e+37
    %v3898 = vand.u32 %v3885, 2147483648
    %v3899 = vor.u32 1.1754944e-38, %v3898
    %v3900 = vsel %vm3897, %v3899, %v3895
    %v3901 = vmul.f32 1.0, %v3900
    %v3902 = vrcp.pop %v3886
    %v3903 = vmul.f32 %v3886, %v3902
    %v3904 = vsub.f32 1.0, %v3903
    %v3905 = vmul.f32 %v3902, %v3904
    %v3906 = vadd.f32 %v3902, %v3905
    %vm3907 = vweird.f32 %v3886
    %vm3908 = vweird.f32 %v3902
    %vm3909 = vmor %vm3907, %vm3908
    %v3910 = vsel %vm3909, %v3902, %v3906
    %v3911 = vand.u32 2147483647, %v3886
    %vm3912 = vcmp.eq.f32.partialorder %v3911, 8.507059e+37
    %v3913 = vand.u32 %v3886, 2147483648
    %v3914 = vor.u32 1.1754944e-38, %v3913
    %v3915 = vsel %vm3912, %v3914, %v3910
    %v3916 = vmul.f32 1.0, %v3915
    %v3917 = vxor.u32 %v3873, 2147483648
    %v3918 = vxor.u32 %v3874, 2147483648
    %v3919 = vmul.f32 %v3917, 1.442695
    %v3920 = vpow.pop %v3919
    %v3921 = vmul.f32 %v3918, 1.442695
    %v3922 = vpow.pop %v3921
    %v3923 = vadd.f32 %v3920, 1.0
    %v3924 = vadd.f32 %v3922, 1.0
    %v3925 = vrcp.pop %v3923
    %v3926 = vmul.f32 %v3923, %v3925
    %v3927 = vsub.f32 1.0, %v3926
    %v3928 = vmul.f32 %v3925, %v3927
    %v3929 = vadd.f32 %v3925, %v3928
    %vm3930 = vweird.f32 %v3923
    %vm3931 = vweird.f32 %v3925
    %vm3932 = vmor %vm3930, %vm3931
    %v3933 = vsel %vm3932, %v3925, %v3929
    %v3934 = vand.u32 2147483647, %v3923
    %vm3935 = vcmp.eq.f32.partialorder %v3934, 8.507059e+37
    %v3936 = vand.u32 %v3923, 2147483648
    %v3937 = vor.u32 1.1754944e-38, %v3936
    %v3938 = vsel %vm3935, %v3937, %v3933
    %v3939 = vmul.f32 1.0, %v3938
    %v3940 = vrcp.pop %v3924
    %v3941 = vmul.f32 %v3924, %v3940
    %v3942 = vsub.f32 1.0, %v3941
    %v3943 = vmul.f32 %v3940, %v3942
    %v3944 = vadd.f32 %v3940, %v3943
    %vm3945 = vweird.f32 %v3924
    %vm3946 = vweird.f32 %v3940
    %vm3947 = vmor %vm3945, %vm3946
    %v3948 = vsel %vm3947, %v3940, %v3944
    %v3949 = vand.u32 2147483647, %v3924
    %vm3950 = vcmp.eq.f32.partialorder %v3949, 8.507059e+37
    %v3951 = vand.u32 %v3924, 2147483648
    %v3952 = vor.u32 1.1754944e-38, %v3951
    %v3953 = vsel %vm3950, %v3952, %v3948
    %v3954 = vmul.f32 1.0, %v3953
    %v3955 = vtanh.pop %v3875
    %v3956 = vtanh.pop %v3876
    %v3957 = vxor.u32 %v3877, 2147483648
    %v3958 = vxor.u32 %v3878, 2147483648
    %v3959 = vmul.f32 %v3957, 1.442695
    %v3960 = vpow.pop %v3959
    %v3961 = vmul.f32 %v3958, 1.442695
    %v3962 = vpow.pop %v3961
    %v3963 = vadd.f32 %v3960, 1.0
    %v3964 = vadd.f32 %v3962, 1.0
    %v3965 = vrcp.pop %v3963
    %v3966 = vmul.f32 %v3963, %v3965
    %v3967 = vsub.f32 1.0, %v3966
    %v3968 = vmul.f32 %v3965, %v3967
    %v3969 = vadd.f32 %v3965, %v3968
    %vm3970 = vweird.f32 %v3963
    %vm3971 = vweird.f32 %v3965
    %vm3972 = vmor %vm3970, %vm3971
    %v3973 = vsel %vm3972, %v3965, %v3969
    %v3974 = vand.u32 2147483647, %v3963
    %vm3975 = vcmp.eq.f32.partialorder %v3974, 8.507059e+37
    %v3976 = vand.u32 %v3963, 2147483648
    %v3977 = vor.u32 1.1754944e-38, %v3976
    %v3978 = vsel %vm3975, %v3977, %v3973
    %v3979 = vmul.f32 1.0, %v3978
    %v3980 = vrcp.pop %v3964
    %v3981 = vmul.f32 %v3964, %v3980
    %v3982 = vsub.f32 1.0, %v3981
    %v3983 = vmul.f32 %v3980, %v3982
    %v3984 = vadd.f32 %v3980, %v3983
    %vm3985 = vweird.f32 %v3964
    %vm3986 = vweird.f32 %v3980
    %vm3987 = vmor %vm3985, %vm3986
    %v3988 = vsel %vm3987, %v3980, %v3984
    %v3989 = vand.u32 2147483647, %v3964
    %vm3990 = vcmp.eq.f32.partialorder %v3989, 8.507059e+37
    %v3991 = vand.u32 %v3964, 2147483648
    %v3992 = vor.u32 1.1754944e-38, %v3991
    %v3993 = vsel %vm3990, %v3992, %v3988
    %v3994 = vmul.f32 1.0, %v3993
    %v3995 = vmul.f32 %v3939, %v1554
    %v3996 = vmul.f32 %v3954, %v1555
    %v3997 = vmul.f32 %v3901, %v3955
    %v3998 = vmul.f32 %v3916, %v3956
    %v3999 = vadd.f32 %v3995, %v3997
    %v4000 = vadd.f32 %v3996, %v3998
    %v4001 = vtanh.pop %v3999
    %v4002 = vtanh.pop %v4000
    %v4003 = vmul.f32 %v3979, %v4001
    %v4004 = vmul.f32 %v3994, %v4002
    %v4005 = vpack.c.bf16 %v4004, %v4003
    %v4006 = vpack.c.bf16 %v3662, %v3661
    %v4008 = vunpack.c.l.b16 %v4005
    %v4009 = vunpack.c.h.b16 %v4005
    %v4010 = vpack.c.b16 %v4008, %v4008
    %v4011 = vpack.c.b16 %v4009, %v4009
    %v4015 = vunpack.c.l.b16 %v4006
    %v4016 = vunpack.c.h.b16 %v4006
    %v4017 = vpack.c.b16 %v4015, %v4015
    %v4018 = vpack.c.b16 %v4016, %v4016
    %4021 = vmatpush.bf16.msra.mxu0 %v2665
    %4022 = vmatpush.bf16.msra.mxu0 %v2657
    %4023 = vmatpush.bf16.msra.mxu0 %v2649
    %4024 = vmatpush.bf16.msra.mxu0 %v2641
    %4025 = vmatpush.bf16.msra.mxu0 %v2633
    %4026 = vmatpush.bf16.msra.mxu0 %v2625
    %4027 = vmatpush.bf16.msra.mxu0 %v2617
    %4028 = vmatpush.bf16.msra.mxu0 %v2609
    %4029 = vmatmul.bf16.gmra.mxu0 %v4010
    %v4030 = vpop.f32.mrf.mxu0
    %v4031 = vadd.f32 %v1825, %v4030
    %v4032 = vpop.f32.mrf.mxu0
    %4033 = vdwg.mxu0
    %4034 = vmatpush.bf16.msra.mxu0 %v2729
    %4035 = vmatpush.bf16.msra.mxu0 %v2721
    %4036 = vmatpush.bf16.msra.mxu0 %v2713
    %4037 = vmatpush.bf16.msra.mxu0 %v2705
    %4038 = vmatpush.bf16.msra.mxu0 %v2697
    %4039 = vmatpush.bf16.msra.mxu0 %v2689
    %4040 = vmatpush.bf16.msra.mxu0 %v2681
    %4041 = vmatpush.bf16.msra.mxu0 %v2673
    %4042 = vmatmul.bf16.gmra.mxu0 %v4011
    %v4043 = vpop.f32.mrf.mxu0
    %v4044 = vadd.f32 %v4031, %v4043
    %v4045 = vpop.f32.mrf.mxu0
    %4046 = vdwg.mxu0
    %4047 = vmatpush.bf16.msra.mxu0 %v2793
    %4048 = vmatpush.bf16.msra.mxu0 %v2785
    %4049 = vmatpush.bf16.msra.mxu0 %v2777
    %4050 = vmatpush.bf16.msra.mxu0 %v2769
    %4051 = vmatpush.bf16.msra.mxu0 %v2761
    %4052 = vmatpush.bf16.msra.mxu0 %v2753
    %4053 = vmatpush.bf16.msra.mxu0 %v2745
    %4054 = vmatpush.bf16.msra.mxu0 %v2737
    %4055 = vmatmul.bf16.gmra.mxu0 %v4017
    %v4056 = vpop.f32.mrf.mxu0
    %v4057 = vadd.f32 %v4044, %v4056
    %v4058 = vpop.f32.mrf.mxu0
    %4059 = vdwg.mxu0
    %4060 = vmatpush.bf16.msra.mxu0 %v2857
    %4061 = vmatpush.bf16.msra.mxu0 %v2849
    %4062 = vmatpush.bf16.msra.mxu0 %v2841
    %4063 = vmatpush.bf16.msra.mxu0 %v2833
    %4064 = vmatpush.bf16.msra.mxu0 %v2825
    %4065 = vmatpush.bf16.msra.mxu0 %v2817
    %4066 = vmatpush.bf16.msra.mxu0 %v2809
    %4067 = vmatpush.bf16.msra.mxu0 %v2801
    %4068 = vmatmul.bf16.gmra.mxu0 %v4018
    %v4069 = vpop.f32.mrf.mxu0
    %v4070 = vadd.f32 %v4057, %v4069
    %v4071 = vpop.f32.mrf.mxu0
    %4072 = vdwg.mxu0
    %4073 = vmatpush.bf16.msra.mxu0 %v2666
    %4074 = vmatpush.bf16.msra.mxu0 %v2658
    %4075 = vmatpush.bf16.msra.mxu0 %v2650
    %4076 = vmatpush.bf16.msra.mxu0 %v2642
    %4077 = vmatpush.bf16.msra.mxu0 %v2634
    %4078 = vmatpush.bf16.msra.mxu0 %v2626
    %4079 = vmatpush.bf16.msra.mxu0 %v2618
    %4080 = vmatpush.bf16.msra.mxu0 %v2610
    %4081 = vmatmul.bf16.gmra.mxu0 %v4010
    %v4082 = vpop.f32.mrf.mxu0
    %v4083 = vadd.f32 %v1826, %v4082
    %v4084 = vpop.f32.mrf.mxu0
    %4085 = vdwg.mxu0
    %4086 = vmatpush.bf16.msra.mxu0 %v2730
    %4087 = vmatpush.bf16.msra.mxu0 %v2722
    %4088 = vmatpush.bf16.msra.mxu0 %v2714
    %4089 = vmatpush.bf16.msra.mxu0 %v2706
    %4090 = vmatpush.bf16.msra.mxu0 %v2698
    %4091 = vmatpush.bf16.msra.mxu0 %v2690
    %4092 = vmatpush.bf16.msra.mxu0 %v2682
    %4093 = vmatpush.bf16.msra.mxu0 %v2674
    %4094 = vmatmul.bf16.gmra.mxu0 %v4011
    %v4095 = vpop.f32.mrf.mxu0
    %v4096 = vadd.f32 %v4083, %v4095
    %v4097 = vpop.f32.mrf.mxu0
    %4098 = vdwg.mxu0
    %4099 = vmatpush.bf16.msra.mxu0 %v2794
    %4100 = vmatpush.bf16.msra.mxu0 %v2786
    %4101 = vmatpush.bf16.msra.mxu0 %v2778
    %4102 = vmatpush.bf16.msra.mxu0 %v2770
    %4103 = vmatpush.bf16.msra.mxu0 %v2762
    %4104 = vmatpush.bf16.msra.mxu0 %v2754
    %4105 = vmatpush.bf16.msra.mxu0 %v2746
    %4106 = vmatpush.bf16.msra.mxu0 %v2738
    %4107 = vmatmul.bf16.gmra.mxu0 %v4017
    %v4108 = vpop.f32.mrf.mxu0
    %v4109 = vadd.f32 %v4096, %v4108
    %v4110 = vpop.f32.mrf.mxu0
    %4111 = vdwg.mxu0
    %4112 = vmatpush.bf16.msra.mxu0 %v2858
    %4113 = vmatpush.bf16.msra.mxu0 %v2850
    %4114 = vmatpush.bf16.msra.mxu0 %v2842
    %4115 = vmatpush.bf16.msra.mxu0 %v2834
    %4116 = vmatpush.bf16.msra.mxu0 %v2826
    %4117 = vmatpush.bf16.msra.mxu0 %v2818
    %4118 = vmatpush.bf16.msra.mxu0 %v2810
    %4119 = vmatpush.bf16.msra.mxu0 %v2802
    %4120 = vmatmul.bf16.gmra.mxu0 %v4018
    %v4121 = vpop.f32.mrf.mxu0
    %v4122 = vadd.f32 %v4109, %v4121
    %v4123 = vpop.f32.mrf.mxu0
    %4124 = vdwg.mxu0
    %4125 = vmatpush.bf16.msra.mxu0 %v2667
    %4126 = vmatpush.bf16.msra.mxu0 %v2659
    %4127 = vmatpush.bf16.msra.mxu0 %v2651
    %4128 = vmatpush.bf16.msra.mxu0 %v2643
    %4129 = vmatpush.bf16.msra.mxu0 %v2635
    %4130 = vmatpush.bf16.msra.mxu0 %v2627
    %4131 = vmatpush.bf16.msra.mxu0 %v2619
    %4132 = vmatpush.bf16.msra.mxu0 %v2611
    %4133 = vmatmul.bf16.gmra.mxu0 %v4010
    %v4134 = vpop.f32.mrf.mxu0
    %v4135 = vadd.f32 %v1827, %v4134
    %v4136 = vpop.f32.mrf.mxu0
    %4137 = vdwg.mxu0
    %4138 = vmatpush.bf16.msra.mxu0 %v2731
    %4139 = vmatpush.bf16.msra.mxu0 %v2723
    %4140 = vmatpush.bf16.msra.mxu0 %v2715
    %4141 = vmatpush.bf16.msra.mxu0 %v2707
    %4142 = vmatpush.bf16.msra.mxu0 %v2699
    %4143 = vmatpush.bf16.msra.mxu0 %v2691
    %4144 = vmatpush.bf16.msra.mxu0 %v2683
    %4145 = vmatpush.bf16.msra.mxu0 %v2675
    %4146 = vmatmul.bf16.gmra.mxu0 %v4011
    %v4147 = vpop.f32.mrf.mxu0
    %v4148 = vadd.f32 %v4135, %v4147
    %v4149 = vpop.f32.mrf.mxu0
    %4150 = vdwg.mxu0
    %4151 = vmatpush.bf16.msra.mxu0 %v2795
    %4152 = vmatpush.bf16.msra.mxu0 %v2787
    %4153 = vmatpush.bf16.msra.mxu0 %v2779
    %4154 = vmatpush.bf16.msra.mxu0 %v2771
    %4155 = vmatpush.bf16.msra.mxu0 %v2763
    %4156 = vmatpush.bf16.msra.mxu0 %v2755
    %4157 = vmatpush.bf16.msra.mxu0 %v2747
    %4158 = vmatpush.bf16.msra.mxu0 %v2739
    %4159 = vmatmul.bf16.gmra.mxu0 %v4017
    %v4160 = vpop.f32.mrf.mxu0
    %v4161 = vadd.f32 %v4148, %v4160
    %v4162 = vpop.f32.mrf.mxu0
    %4163 = vdwg.mxu0
    %4164 = vmatpush.bf16.msra.mxu0 %v2859
    %4165 = vmatpush.bf16.msra.mxu0 %v2851
    %4166 = vmatpush.bf16.msra.mxu0 %v2843
    %4167 = vmatpush.bf16.msra.mxu0 %v2835
    %4168 = vmatpush.bf16.msra.mxu0 %v2827
    %4169 = vmatpush.bf16.msra.mxu0 %v2819
    %4170 = vmatpush.bf16.msra.mxu0 %v2811
    %4171 = vmatpush.bf16.msra.mxu0 %v2803
    %4172 = vmatmul.bf16.gmra.mxu0 %v4018
    %v4173 = vpop.f32.mrf.mxu0
    %v4174 = vadd.f32 %v4161, %v4173
    %v4175 = vpop.f32.mrf.mxu0
    %4176 = vdwg.mxu0
    %4177 = vmatpush.bf16.msra.mxu0 %v2668
    %4178 = vmatpush.bf16.msra.mxu0 %v2660
    %4179 = vmatpush.bf16.msra.mxu0 %v2652
    %4180 = vmatpush.bf16.msra.mxu0 %v2644
    %4181 = vmatpush.bf16.msra.mxu0 %v2636
    %4182 = vmatpush.bf16.msra.mxu0 %v2628
    %4183 = vmatpush.bf16.msra.mxu0 %v2620
    %4184 = vmatpush.bf16.msra.mxu0 %v2612
    %4185 = vmatmul.bf16.gmra.mxu0 %v4010
    %v4186 = vpop.f32.mrf.mxu0
    %v4187 = vadd.f32 %v1828, %v4186
    %v4188 = vpop.f32.mrf.mxu0
    %4189 = vdwg.mxu0
    %4190 = vmatpush.bf16.msra.mxu0 %v2732
    %4191 = vmatpush.bf16.msra.mxu0 %v2724
    %4192 = vmatpush.bf16.msra.mxu0 %v2716
    %4193 = vmatpush.bf16.msra.mxu0 %v2708
    %4194 = vmatpush.bf16.msra.mxu0 %v2700
    %4195 = vmatpush.bf16.msra.mxu0 %v2692
    %4196 = vmatpush.bf16.msra.mxu0 %v2684
    %4197 = vmatpush.bf16.msra.mxu0 %v2676
    %4198 = vmatmul.bf16.gmra.mxu0 %v4011
    %v4199 = vpop.f32.mrf.mxu0
    %v4200 = vadd.f32 %v4187, %v4199
    %v4201 = vpop.f32.mrf.mxu0
    %4202 = vdwg.mxu0
    %4203 = vmatpush.bf16.msra.mxu0 %v2796
    %4204 = vmatpush.bf16.msra.mxu0 %v2788
    %4205 = vmatpush.bf16.msra.mxu0 %v2780
    %4206 = vmatpush.bf16.msra.mxu0 %v2772
    %4207 = vmatpush.bf16.msra.mxu0 %v2764
    %4208 = vmatpush.bf16.msra.mxu0 %v2756
    %4209 = vmatpush.bf16.msra.mxu0 %v2748
    %4210 = vmatpush.bf16.msra.mxu0 %v2740
    %4211 = vmatmul.bf16.gmra.mxu0 %v4017
    %v4212 = vpop.f32.mrf.mxu0
    %v4213 = vadd.f32 %v4200, %v4212
    %v4214 = vpop.f32.mrf.mxu0
    %4215 = vdwg.mxu0
    %4216 = vmatpush.bf16.msra.mxu0 %v2860
    %4217 = vmatpush.bf16.msra.mxu0 %v2852
    %4218 = vmatpush.bf16.msra.mxu0 %v2844
    %4219 = vmatpush.bf16.msra.mxu0 %v2836
    %4220 = vmatpush.bf16.msra.mxu0 %v2828
    %4221 = vmatpush.bf16.msra.mxu0 %v2820
    %4222 = vmatpush.bf16.msra.mxu0 %v2812
    %4223 = vmatpush.bf16.msra.mxu0 %v2804
    %4224 = vmatmul.bf16.gmra.mxu0 %v4018
    %v4225 = vpop.f32.mrf.mxu0
    %v4226 = vadd.f32 %v4213, %v4225
    %v4227 = vpop.f32.mrf.mxu0
    %4228 = vdwg.mxu0
    %4229 = vmatpush.bf16.msra.mxu0 %v2669
    %4230 = vmatpush.bf16.msra.mxu0 %v2661
    %4231 = vmatpush.bf16.msra.mxu0 %v2653
    %4232 = vmatpush.bf16.msra.mxu0 %v2645
    %4233 = vmatpush.bf16.msra.mxu0 %v2637
    %4234 = vmatpush.bf16.msra.mxu0 %v2629
    %4235 = vmatpush.bf16.msra.mxu0 %v2621
    %4236 = vmatpush.bf16.msra.mxu0 %v2613
    %4237 = vmatmul.bf16.gmra.mxu0 %v4010
    %v4238 = vpop.f32.mrf.mxu0
    %v4239 = vadd.f32 %v1829, %v4238
    %v4240 = vpop.f32.mrf.mxu0
    %4241 = vdwg.mxu0
    %4242 = vmatpush.bf16.msra.mxu0 %v2733
    %4243 = vmatpush.bf16.msra.mxu0 %v2725
    %4244 = vmatpush.bf16.msra.mxu0 %v2717
    %4245 = vmatpush.bf16.msra.mxu0 %v2709
    %4246 = vmatpush.bf16.msra.mxu0 %v2701
    %4247 = vmatpush.bf16.msra.mxu0 %v2693
    %4248 = vmatpush.bf16.msra.mxu0 %v2685
    %4249 = vmatpush.bf16.msra.mxu0 %v2677
    %4250 = vmatmul.bf16.gmra.mxu0 %v4011
    %v4251 = vpop.f32.mrf.mxu0
    %v4252 = vadd.f32 %v4239, %v4251
    %v4253 = vpop.f32.mrf.mxu0
    %4254 = vdwg.mxu0
    %4255 = vmatpush.bf16.msra.mxu0 %v2797
    %4256 = vmatpush.bf16.msra.mxu0 %v2789
    %4257 = vmatpush.bf16.msra.mxu0 %v2781
    %4258 = vmatpush.bf16.msra.mxu0 %v2773
    %4259 = vmatpush.bf16.msra.mxu0 %v2765
    %4260 = vmatpush.bf16.msra.mxu0 %v2757
    %4261 = vmatpush.bf16.msra.mxu0 %v2749
    %4262 = vmatpush.bf16.msra.mxu0 %v2741
    %4263 = vmatmul.bf16.gmra.mxu0 %v4017
    %v4264 = vpop.f32.mrf.mxu0
    %v4265 = vadd.f32 %v4252, %v4264
    %v4266 = vpop.f32.mrf.mxu0
    %4267 = vdwg.mxu0
    %4268 = vmatpush.bf16.msra.mxu0 %v2861
    %4269 = vmatpush.bf16.msra.mxu0 %v2853
    %4270 = vmatpush.bf16.msra.mxu0 %v2845
    %4271 = vmatpush.bf16.msra.mxu0 %v2837
    %4272 = vmatpush.bf16.msra.mxu0 %v2829
    %4273 = vmatpush.bf16.msra.mxu0 %v2821
    %4274 = vmatpush.bf16.msra.mxu0 %v2813
    %4275 = vmatpush.bf16.msra.mxu0 %v2805
    %4276 = vmatmul.bf16.gmra.mxu0 %v4018
    %v4277 = vpop.f32.mrf.mxu0
    %v4278 = vadd.f32 %v4265, %v4277
    %v4279 = vpop.f32.mrf.mxu0
    %4280 = vdwg.mxu0
    %4281 = vmatpush.bf16.msra.mxu0 %v2670
    %4282 = vmatpush.bf16.msra.mxu0 %v2662
    %4283 = vmatpush.bf16.msra.mxu0 %v2654
    %4284 = vmatpush.bf16.msra.mxu0 %v2646
    %4285 = vmatpush.bf16.msra.mxu0 %v2638
    %4286 = vmatpush.bf16.msra.mxu0 %v2630
    %4287 = vmatpush.bf16.msra.mxu0 %v2622
    %4288 = vmatpush.bf16.msra.mxu0 %v2614
    %4289 = vmatmul.bf16.gmra.mxu0 %v4010
    %v4290 = vpop.f32.mrf.mxu0
    %v4291 = vadd.f32 %v1830, %v4290
    %v4292 = vpop.f32.mrf.mxu0
    %4293 = vdwg.mxu0
    %4294 = vmatpush.bf16.msra.mxu0 %v2734
    %4295 = vmatpush.bf16.msra.mxu0 %v2726
    %4296 = vmatpush.bf16.msra.mxu0 %v2718
    %4297 = vmatpush.bf16.msra.mxu0 %v2710
    %4298 = vmatpush.bf16.msra.mxu0 %v2702
    %4299 = vmatpush.bf16.msra.mxu0 %v2694
    %4300 = vmatpush.bf16.msra.mxu0 %v2686
    %4301 = vmatpush.bf16.msra.mxu0 %v2678
    %4302 = vmatmul.bf16.gmra.mxu0 %v4011
    %v4303 = vpop.f32.mrf.mxu0
    %v4304 = vadd.f32 %v4291, %v4303
    %v4305 = vpop.f32.mrf.mxu0
    %4306 = vdwg.mxu0
    %4307 = vmatpush.bf16.msra.mxu0 %v2798
    %4308 = vmatpush.bf16.msra.mxu0 %v2790
    %4309 = vmatpush.bf16.msra.mxu0 %v2782
    %4310 = vmatpush.bf16.msra.mxu0 %v2774
    %4311 = vmatpush.bf16.msra.mxu0 %v2766
    %4312 = vmatpush.bf16.msra.mxu0 %v2758
    %4313 = vmatpush.bf16.msra.mxu0 %v2750
    %4314 = vmatpush.bf16.msra.mxu0 %v2742
    %4315 = vmatmul.bf16.gmra.mxu0 %v4017
    %v4316 = vpop.f32.mrf.mxu0
    %v4317 = vadd.f32 %v4304, %v4316
    %v4318 = vpop.f32.mrf.mxu0
    %4319 = vdwg.mxu0
    %4320 = vmatpush.bf16.msra.mxu0 %v2862
    %4321 = vmatpush.bf16.msra.mxu0 %v2854
    %4322 = vmatpush.bf16.msra.mxu0 %v2846
    %4323 = vmatpush.bf16.msra.mxu0 %v2838
    %4324 = vmatpush.bf16.msra.mxu0 %v2830
    %4325 = vmatpush.bf16.msra.mxu0 %v2822
    %4326 = vmatpush.bf16.msra.mxu0 %v2814
    %4327 = vmatpush.bf16.msra.mxu0 %v2806
    %4328 = vmatmul.bf16.gmra.mxu0 %v4018
    %v4329 = vpop.f32.mrf.mxu0
    %v4330 = vadd.f32 %v4317, %v4329
    %v4331 = vpop.f32.mrf.mxu0
    %4332 = vdwg.mxu0
    %4333 = vmatpush.bf16.msra.mxu0 %v2671
    %4334 = vmatpush.bf16.msra.mxu0 %v2663
    %4335 = vmatpush.bf16.msra.mxu0 %v2655
    %4336 = vmatpush.bf16.msra.mxu0 %v2647
    %4337 = vmatpush.bf16.msra.mxu0 %v2639
    %4338 = vmatpush.bf16.msra.mxu0 %v2631
    %4339 = vmatpush.bf16.msra.mxu0 %v2623
    %4340 = vmatpush.bf16.msra.mxu0 %v2615
    %4341 = vmatmul.bf16.gmra.mxu0 %v4010
    %v4342 = vpop.f32.mrf.mxu0
    %v4343 = vadd.f32 %v1831, %v4342
    %v4344 = vpop.f32.mrf.mxu0
    %4345 = vdwg.mxu0
    %4346 = vmatpush.bf16.msra.mxu0 %v2735
    %4347 = vmatpush.bf16.msra.mxu0 %v2727
    %4348 = vmatpush.bf16.msra.mxu0 %v2719
    %4349 = vmatpush.bf16.msra.mxu0 %v2711
    %4350 = vmatpush.bf16.msra.mxu0 %v2703
    %4351 = vmatpush.bf16.msra.mxu0 %v2695
    %4352 = vmatpush.bf16.msra.mxu0 %v2687
    %4353 = vmatpush.bf16.msra.mxu0 %v2679
    %4354 = vmatmul.bf16.gmra.mxu0 %v4011
    %v4355 = vpop.f32.mrf.mxu0
    %v4356 = vadd.f32 %v4343, %v4355
    %v4357 = vpop.f32.mrf.mxu0
    %4358 = vdwg.mxu0
    %4359 = vmatpush.bf16.msra.mxu0 %v2799
    %4360 = vmatpush.bf16.msra.mxu0 %v2791
    %4361 = vmatpush.bf16.msra.mxu0 %v2783
    %4362 = vmatpush.bf16.msra.mxu0 %v2775
    %4363 = vmatpush.bf16.msra.mxu0 %v2767
    %4364 = vmatpush.bf16.msra.mxu0 %v2759
    %4365 = vmatpush.bf16.msra.mxu0 %v2751
    %4366 = vmatpush.bf16.msra.mxu0 %v2743
    %4367 = vmatmul.bf16.gmra.mxu0 %v4017
    %v4368 = vpop.f32.mrf.mxu0
    %v4369 = vadd.f32 %v4356, %v4368
    %v4370 = vpop.f32.mrf.mxu0
    %4371 = vdwg.mxu0
    %4372 = vmatpush.bf16.msra.mxu0 %v2863
    %4373 = vmatpush.bf16.msra.mxu0 %v2855
    %4374 = vmatpush.bf16.msra.mxu0 %v2847
    %4375 = vmatpush.bf16.msra.mxu0 %v2839
    %4376 = vmatpush.bf16.msra.mxu0 %v2831
    %4377 = vmatpush.bf16.msra.mxu0 %v2823
    %4378 = vmatpush.bf16.msra.mxu0 %v2815
    %4379 = vmatpush.bf16.msra.mxu0 %v2807
    %4380 = vmatmul.bf16.gmra.mxu0 %v4018
    %v4381 = vpop.f32.mrf.mxu0
    %v4382 = vadd.f32 %v4369, %v4381
    %v4383 = vpop.f32.mrf.mxu0
    %4384 = vdwg.mxu0
    %4385 = vmatpush.bf16.msra.mxu0 %v2672
    %4386 = vmatpush.bf16.msra.mxu0 %v2664
    %4387 = vmatpush.bf16.msra.mxu0 %v2656
    %4388 = vmatpush.bf16.msra.mxu0 %v2648
    %4389 = vmatpush.bf16.msra.mxu0 %v2640
    %4390 = vmatpush.bf16.msra.mxu0 %v2632
    %4391 = vmatpush.bf16.msra.mxu0 %v2624
    %4392 = vmatpush.bf16.msra.mxu0 %v2616
    %4393 = vmatmul.bf16.gmra.mxu0 %v4010
    %v4394 = vpop.f32.mrf.mxu0
    %v4395 = vadd.f32 %v1832, %v4394
    %v4396 = vpop.f32.mrf.mxu0
    %4397 = vdwg.mxu0
    %4398 = vmatpush.bf16.msra.mxu0 %v2736
    %4399 = vmatpush.bf16.msra.mxu0 %v2728
    %4400 = vmatpush.bf16.msra.mxu0 %v2720
    %4401 = vmatpush.bf16.msra.mxu0 %v2712
    %4402 = vmatpush.bf16.msra.mxu0 %v2704
    %4403 = vmatpush.bf16.msra.mxu0 %v2696
    %4404 = vmatpush.bf16.msra.mxu0 %v2688
    %4405 = vmatpush.bf16.msra.mxu0 %v2680
    %4406 = vmatmul.bf16.gmra.mxu0 %v4011
    %v4407 = vpop.f32.mrf.mxu0
    %v4408 = vadd.f32 %v4395, %v4407
    %v4409 = vpop.f32.mrf.mxu0
    %4410 = vdwg.mxu0
    %4411 = vmatpush.bf16.msra.mxu0 %v2800
    %4412 = vmatpush.bf16.msra.mxu0 %v2792
    %4413 = vmatpush.bf16.msra.mxu0 %v2784
    %4414 = vmatpush.bf16.msra.mxu0 %v2776
    %4415 = vmatpush.bf16.msra.mxu0 %v2768
    %4416 = vmatpush.bf16.msra.mxu0 %v2760
    %4417 = vmatpush.bf16.msra.mxu0 %v2752
    %4418 = vmatpush.bf16.msra.mxu0 %v2744
    %4419 = vmatmul.bf16.gmra.mxu0 %v4017
    %v4420 = vpop.f32.mrf.mxu0
    %v4421 = vadd.f32 %v4408, %v4420
    %v4422 = vpop.f32.mrf.mxu0
    %4423 = vdwg.mxu0
    %4424 = vmatpush.bf16.msra.mxu0 %v2864
    %4425 = vmatpush.bf16.msra.mxu0 %v2856
    %4426 = vmatpush.bf16.msra.mxu0 %v2848
    %4427 = vmatpush.bf16.msra.mxu0 %v2840
    %4428 = vmatpush.bf16.msra.mxu0 %v2832
    %4429 = vmatpush.bf16.msra.mxu0 %v2824
    %4430 = vmatpush.bf16.msra.mxu0 %v2816
    %4431 = vmatpush.bf16.msra.mxu0 %v2808
    %4432 = vmatmul.bf16.gmra.mxu0 %v4018
    %v4433 = vpop.f32.mrf.mxu0
    %v4434 = vadd.f32 %v4421, %v4433
    %v4435 = vpop.f32.mrf.mxu0
    %4436 = vdwg.mxu0
    %v4437 = vxor.u32 %v4070, 2147483648
    %v4438 = vxor.u32 %v4122, 2147483648
    %v4439 = vmul.f32 %v4437, 1.442695
    %v4440 = vpow.pop %v4439
    %v4441 = vmul.f32 %v4438, 1.442695
    %v4442 = vpow.pop %v4441
    %v4443 = vadd.f32 %v4440, 1.0
    %v4444 = vadd.f32 %v4442, 1.0
    %v4445 = vrcp.pop %v4443
    %v4446 = vmul.f32 %v4443, %v4445
    %v4447 = vsub.f32 1.0, %v4446
    %v4448 = vmul.f32 %v4445, %v4447
    %v4449 = vadd.f32 %v4445, %v4448
    %vm4450 = vweird.f32 %v4443
    %vm4451 = vweird.f32 %v4445
    %vm4452 = vmor %vm4450, %vm4451
    %v4453 = vsel %vm4452, %v4445, %v4449
    %v4454 = vand.u32 2147483647, %v4443
    %vm4455 = vcmp.eq.f32.partialorder %v4454, 8.507059e+37
    %v4456 = vand.u32 %v4443, 2147483648
    %v4457 = vor.u32 1.1754944e-38, %v4456
    %v4458 = vsel %vm4455, %v4457, %v4453
    %v4459 = vmul.f32 1.0, %v4458
    %v4460 = vrcp.pop %v4444
    %v4461 = vmul.f32 %v4444, %v4460
    %v4462 = vsub.f32 1.0, %v4461
    %v4463 = vmul.f32 %v4460, %v4462
    %v4464 = vadd.f32 %v4460, %v4463
    %vm4465 = vweird.f32 %v4444
    %vm4466 = vweird.f32 %v4460
    %vm4467 = vmor %vm4465, %vm4466
    %v4468 = vsel %vm4467, %v4460, %v4464
    %v4469 = vand.u32 2147483647, %v4444
    %vm4470 = vcmp.eq.f32.partialorder %v4469, 8.507059e+37
    %v4471 = vand.u32 %v4444, 2147483648
    %v4472 = vor.u32 1.1754944e-38, %v4471
    %v4473 = vsel %vm4470, %v4472, %v4468
    %v4474 = vmul.f32 1.0, %v4473
    %v4475 = vxor.u32 %v4174, 2147483648
    %v4476 = vxor.u32 %v4226, 2147483648
    %v4477 = vmul.f32 %v4475, 1.442695
    %v4478 = vpow.pop %v4477
    %v4479 = vmul.f32 %v4476, 1.442695
    %v4480 = vpow.pop %v4479
    %v4481 = vadd.f32 %v4478, 1.0
    %v4482 = vadd.f32 %v4480, 1.0
    %v4483 = vrcp.pop %v4481
    %v4484 = vmul.f32 %v4481, %v4483
    %v4485 = vsub.f32 1.0, %v4484
    %v4486 = vmul.f32 %v4483, %v4485
    %v4487 = vadd.f32 %v4483, %v4486
    %vm4488 = vweird.f32 %v4481
    %vm4489 = vweird.f32 %v4483
    %vm4490 = vmor %vm4488, %vm4489
    %v4491 = vsel %vm4490, %v4483, %v4487
    %v4492 = vand.u32 2147483647, %v4481
    %vm4493 = vcmp.eq.f32.partialorder %v4492, 8.507059e+37
    %v4494 = vand.u32 %v4481, 2147483648
    %v4495 = vor.u32 1.1754944e-38, %v4494
    %v4496 = vsel %vm4493, %v4495, %v4491
    %v4497 = vmul.f32 1.0, %v4496
    %v4498 = vrcp.pop %v4482
    %v4499 = vmul.f32 %v4482, %v4498
    %v4500 = vsub.f32 1.0, %v4499
    %v4501 = vmul.f32 %v4498, %v4500
    %v4502 = vadd.f32 %v4498, %v4501
    %vm4503 = vweird.f32 %v4482
    %vm4504 = vweird.f32 %v4498
    %vm4505 = vmor %vm4503, %vm4504
    %v4506 = vsel %vm4505, %v4498, %v4502
    %v4507 = vand.u32 2147483647, %v4482
    %vm4508 = vcmp.eq.f32.partialorder %v4507, 8.507059e+37
    %v4509 = vand.u32 %v4482, 2147483648
    %v4510 = vor.u32 1.1754944e-38, %v4509
    %v4511 = vsel %vm4508, %v4510, %v4506
    %v4512 = vmul.f32 1.0, %v4511
    %v4513 = vtanh.pop %v4278
    %v4514 = vtanh.pop %v4330
    %v4515 = vxor.u32 %v4382, 2147483648
    %v4516 = vxor.u32 %v4434, 2147483648
    %v4517 = vmul.f32 %v4515, 1.442695
    %v4518 = vpow.pop %v4517
    %v4519 = vmul.f32 %v4516, 1.442695
    %v4520 = vpow.pop %v4519
    %v4521 = vadd.f32 %v4518, 1.0
    %v4522 = vadd.f32 %v4520, 1.0
    %v4523 = vrcp.pop %v4521
    %v4524 = vmul.f32 %v4521, %v4523
    %v4525 = vsub.f32 1.0, %v4524
    %v4526 = vmul.f32 %v4523, %v4525
    %v4527 = vadd.f32 %v4523, %v4526
    %vm4528 = vweird.f32 %v4521
    %vm4529 = vweird.f32 %v4523
    %vm4530 = vmor %vm4528, %vm4529
    %v4531 = vsel %vm4530, %v4523, %v4527
    %v4532 = vand.u32 2147483647, %v4521
    %vm4533 = vcmp.eq.f32.partialorder %v4532, 8.507059e+37
    %v4534 = vand.u32 %v4521, 2147483648
    %v4535 = vor.u32 1.1754944e-38, %v4534
    %v4536 = vsel %vm4533, %v4535, %v4531
    %v4537 = vmul.f32 1.0, %v4536
    %v4538 = vrcp.pop %v4522
    %v4539 = vmul.f32 %v4522, %v4538
    %v4540 = vsub.f32 1.0, %v4539
    %v4541 = vmul.f32 %v4538, %v4540
    %v4542 = vadd.f32 %v4538, %v4541
    %vm4543 = vweird.f32 %v4522
    %vm4544 = vweird.f32 %v4538
    %vm4545 = vmor %vm4543, %vm4544
    %v4546 = vsel %vm4545, %v4538, %v4542
    %v4547 = vand.u32 2147483647, %v4522
    %vm4548 = vcmp.eq.f32.partialorder %v4547, 8.507059e+37
    %v4549 = vand.u32 %v4522, 2147483648
    %v4550 = vor.u32 1.1754944e-38, %v4549
    %v4551 = vsel %vm4548, %v4550, %v4546
    %v4552 = vmul.f32 1.0, %v4551
    %v4553 = vmul.f32 %v4497, %v3657
    %v4554 = vmul.f32 %v4512, %v3658
    %v4555 = vmul.f32 %v4459, %v4513
    %v4556 = vmul.f32 %v4474, %v4514
    %v4557 = vadd.f32 %v4553, %v4555
    %v4558 = vadd.f32 %v4554, %v4556
    %v4559 = vtanh.pop %v4557
    %v4560 = vtanh.pop %v4558
    %v4561 = vmul.f32 %v4537, %v4559
    %v4562 = vmul.f32 %v4552, %v4560
    %4563 = vmatpush.bf16.msra.mxu0 %v1018
    %4564 = vmatpush.bf16.msra.mxu0 %v1010
    %4565 = vmatpush.bf16.msra.mxu0 %v1002
    %4566 = vmatpush.bf16.msra.mxu0 %v994
    %4567 = vmatpush.bf16.msra.mxu0 %v986
    %4568 = vmatpush.bf16.msra.mxu0 %v978
    %4569 = vmatpush.bf16.msra.mxu0 %v970
    %4570 = vmatpush.bf16.msra.mxu0 %v962
    %4571 = vmatmul.bf16.gmra.mxu0 %v4010
    %v4572 = vpop.f32.mrf.mxu0
    %v4573 = vadd.f32 0.0, %v4572
    %v4574 = vpop.f32.mrf.mxu0
    %4575 = vdwg.mxu0
    %4576 = vmatpush.bf16.msra.mxu0 %v1082
    %4577 = vmatpush.bf16.msra.mxu0 %v1074
    %4578 = vmatpush.bf16.msra.mxu0 %v1066
    %4579 = vmatpush.bf16.msra.mxu0 %v1058
    %4580 = vmatpush.bf16.msra.mxu0 %v1050
    %4581 = vmatpush.bf16.msra.mxu0 %v1042
    %4582 = vmatpush.bf16.msra.mxu0 %v1034
    %4583 = vmatpush.bf16.msra.mxu0 %v1026
    %4584 = vmatmul.bf16.gmra.mxu0 %v4011
    %v4585 = vpop.f32.mrf.mxu0
    %v4586 = vadd.f32 %v4573, %v4585
    %v4587 = vpop.f32.mrf.mxu0
    %4588 = vdwg.mxu0
    %4589 = vmatpush.bf16.msra.mxu0 %v1019
    %4590 = vmatpush.bf16.msra.mxu0 %v1011
    %4591 = vmatpush.bf16.msra.mxu0 %v1003
    %4592 = vmatpush.bf16.msra.mxu0 %v995
    %4593 = vmatpush.bf16.msra.mxu0 %v987
    %4594 = vmatpush.bf16.msra.mxu0 %v979
    %4595 = vmatpush.bf16.msra.mxu0 %v971
    %4596 = vmatpush.bf16.msra.mxu0 %v963
    %4597 = vmatmul.bf16.gmra.mxu0 %v4010
    %v4598 = vpop.f32.mrf.mxu0
    %v4599 = vadd.f32 0.0, %v4598
    %v4600 = vpop.f32.mrf.mxu0
    %4601 = vdwg.mxu0
    %4602 = vmatpush.bf16.msra.mxu0 %v1083
    %4603 = vmatpush.bf16.msra.mxu0 %v1075
    %4604 = vmatpush.bf16.msra.mxu0 %v1067
    %4605 = vmatpush.bf16.msra.mxu0 %v1059
    %4606 = vmatpush.bf16.msra.mxu0 %v1051
    %4607 = vmatpush.bf16.msra.mxu0 %v1043
    %4608 = vmatpush.bf16.msra.mxu0 %v1035
    %4609 = vmatpush.bf16.msra.mxu0 %v1027
    %4610 = vmatmul.bf16.gmra.mxu0 %v4011
    %v4611 = vpop.f32.mrf.mxu0
    %v4612 = vadd.f32 %v4599, %v4611
    %v4613 = vpop.f32.mrf.mxu0
    %4614 = vdwg.mxu0
    %4615 = vmatpush.bf16.msra.mxu0 %v1020
    %4616 = vmatpush.bf16.msra.mxu0 %v1012
    %4617 = vmatpush.bf16.msra.mxu0 %v1004
    %4618 = vmatpush.bf16.msra.mxu0 %v996
    %4619 = vmatpush.bf16.msra.mxu0 %v988
    %4620 = vmatpush.bf16.msra.mxu0 %v980
    %4621 = vmatpush.bf16.msra.mxu0 %v972
    %4622 = vmatpush.bf16.msra.mxu0 %v964
    %4623 = vmatmul.bf16.gmra.mxu0 %v4010
    %v4624 = vpop.f32.mrf.mxu0
    %v4625 = vadd.f32 0.0, %v4624
    %v4626 = vpop.f32.mrf.mxu0
    %4627 = vdwg.mxu0
    %4628 = vmatpush.bf16.msra.mxu0 %v1084
    %4629 = vmatpush.bf16.msra.mxu0 %v1076
    %4630 = vmatpush.bf16.msra.mxu0 %v1068
    %4631 = vmatpush.bf16.msra.mxu0 %v1060
    %4632 = vmatpush.bf16.msra.mxu0 %v1052
    %4633 = vmatpush.bf16.msra.mxu0 %v1044
    %4634 = vmatpush.bf16.msra.mxu0 %v1036
    %4635 = vmatpush.bf16.msra.mxu0 %v1028
    %4636 = vmatmul.bf16.gmra.mxu0 %v4011
    %v4637 = vpop.f32.mrf.mxu0
    %v4638 = vadd.f32 %v4625, %v4637
    %v4639 = vpop.f32.mrf.mxu0
    %4640 = vdwg.mxu0
    %4641 = vmatpush.bf16.msra.mxu0 %v1021
    %4642 = vmatpush.bf16.msra.mxu0 %v1013
    %4643 = vmatpush.bf16.msra.mxu0 %v1005
    %4644 = vmatpush.bf16.msra.mxu0 %v997
    %4645 = vmatpush.bf16.msra.mxu0 %v989
    %4646 = vmatpush.bf16.msra.mxu0 %v981
    %4647 = vmatpush.bf16.msra.mxu0 %v973
    %4648 = vmatpush.bf16.msra.mxu0 %v965
    %4649 = vmatmul.bf16.gmra.mxu0 %v4010
    %v4650 = vpop.f32.mrf.mxu0
    %v4651 = vadd.f32 0.0, %v4650
    %v4652 = vpop.f32.mrf.mxu0
    %4653 = vdwg.mxu0
    %4654 = vmatpush.bf16.msra.mxu0 %v1085
    %4655 = vmatpush.bf16.msra.mxu0 %v1077
    %4656 = vmatpush.bf16.msra.mxu0 %v1069
    %4657 = vmatpush.bf16.msra.mxu0 %v1061
    %4658 = vmatpush.bf16.msra.mxu0 %v1053
    %4659 = vmatpush.bf16.msra.mxu0 %v1045
    %4660 = vmatpush.bf16.msra.mxu0 %v1037
    %4661 = vmatpush.bf16.msra.mxu0 %v1029
    %4662 = vmatmul.bf16.gmra.mxu0 %v4011
    %v4663 = vpop.f32.mrf.mxu0
    %v4664 = vadd.f32 %v4651, %v4663
    %v4665 = vpop.f32.mrf.mxu0
    %4666 = vdwg.mxu0
    %4667 = vmatpush.bf16.msra.mxu0 %v1022
    %4668 = vmatpush.bf16.msra.mxu0 %v1014
    %4669 = vmatpush.bf16.msra.mxu0 %v1006
    %4670 = vmatpush.bf16.msra.mxu0 %v998
    %4671 = vmatpush.bf16.msra.mxu0 %v990
    %4672 = vmatpush.bf16.msra.mxu0 %v982
    %4673 = vmatpush.bf16.msra.mxu0 %v974
    %4674 = vmatpush.bf16.msra.mxu0 %v966
    %4675 = vmatmul.bf16.gmra.mxu0 %v4010
    %v4676 = vpop.f32.mrf.mxu0
    %v4677 = vadd.f32 0.0, %v4676
    %v4678 = vpop.f32.mrf.mxu0
    %4679 = vdwg.mxu0
    %4680 = vmatpush.bf16.msra.mxu0 %v1086
    %4681 = vmatpush.bf16.msra.mxu0 %v1078
    %4682 = vmatpush.bf16.msra.mxu0 %v1070
    %4683 = vmatpush.bf16.msra.mxu0 %v1062
    %4684 = vmatpush.bf16.msra.mxu0 %v1054
    %4685 = vmatpush.bf16.msra.mxu0 %v1046
    %4686 = vmatpush.bf16.msra.mxu0 %v1038
    %4687 = vmatpush.bf16.msra.mxu0 %v1030
    %4688 = vmatmul.bf16.gmra.mxu0 %v4011
    %v4689 = vpop.f32.mrf.mxu0
    %v4690 = vadd.f32 %v4677, %v4689
    %v4691 = vpop.f32.mrf.mxu0
    %4692 = vdwg.mxu0
    %4693 = vmatpush.bf16.msra.mxu0 %v1023
    %4694 = vmatpush.bf16.msra.mxu0 %v1015
    %4695 = vmatpush.bf16.msra.mxu0 %v1007
    %4696 = vmatpush.bf16.msra.mxu0 %v999
    %4697 = vmatpush.bf16.msra.mxu0 %v991
    %4698 = vmatpush.bf16.msra.mxu0 %v983
    %4699 = vmatpush.bf16.msra.mxu0 %v975
    %4700 = vmatpush.bf16.msra.mxu0 %v967
    %4701 = vmatmul.bf16.gmra.mxu0 %v4010
    %v4702 = vpop.f32.mrf.mxu0
    %v4703 = vadd.f32 0.0, %v4702
    %v4704 = vpop.f32.mrf.mxu0
    %4705 = vdwg.mxu0
    %4706 = vmatpush.bf16.msra.mxu0 %v1087
    %4707 = vmatpush.bf16.msra.mxu0 %v1079
    %4708 = vmatpush.bf16.msra.mxu0 %v1071
    %4709 = vmatpush.bf16.msra.mxu0 %v1063
    %4710 = vmatpush.bf16.msra.mxu0 %v1055
    %4711 = vmatpush.bf16.msra.mxu0 %v1047
    %4712 = vmatpush.bf16.msra.mxu0 %v1039
    %4713 = vmatpush.bf16.msra.mxu0 %v1031
    %4714 = vmatmul.bf16.gmra.mxu0 %v4011
    %v4715 = vpop.f32.mrf.mxu0
    %v4716 = vadd.f32 %v4703, %v4715
    %v4717 = vpop.f32.mrf.mxu0
    %4718 = vdwg.mxu0
    %4719 = vmatpush.bf16.msra.mxu0 %v1024
    %4720 = vmatpush.bf16.msra.mxu0 %v1016
    %4721 = vmatpush.bf16.msra.mxu0 %v1008
    %4722 = vmatpush.bf16.msra.mxu0 %v1000
    %4723 = vmatpush.bf16.msra.mxu0 %v992
    %4724 = vmatpush.bf16.msra.mxu0 %v984
    %4725 = vmatpush.bf16.msra.mxu0 %v976
    %4726 = vmatpush.bf16.msra.mxu0 %v968
    %4727 = vmatmul.bf16.gmra.mxu0 %v4010
    %v4728 = vpop.f32.mrf.mxu0
    %v4729 = vadd.f32 0.0, %v4728
    %v4730 = vpop.f32.mrf.mxu0
    %4731 = vdwg.mxu0
    %4732 = vmatpush.bf16.msra.mxu0 %v1088
    %4733 = vmatpush.bf16.msra.mxu0 %v1080
    %4734 = vmatpush.bf16.msra.mxu0 %v1072
    %4735 = vmatpush.bf16.msra.mxu0 %v1064
    %4736 = vmatpush.bf16.msra.mxu0 %v1056
    %4737 = vmatpush.bf16.msra.mxu0 %v1048
    %4738 = vmatpush.bf16.msra.mxu0 %v1040
    %4739 = vmatpush.bf16.msra.mxu0 %v1032
    %4740 = vmatmul.bf16.gmra.mxu0 %v4011
    %v4741 = vpop.f32.mrf.mxu0
    %v4742 = vadd.f32 %v4729, %v4741
    %v4743 = vpop.f32.mrf.mxu0
    %4744 = vdwg.mxu0
    %4745 = vmatpush.bf16.msra.mxu0 %v1025
    %4746 = vmatpush.bf16.msra.mxu0 %v1017
    %4747 = vmatpush.bf16.msra.mxu0 %v1009
    %4748 = vmatpush.bf16.msra.mxu0 %v1001
    %4749 = vmatpush.bf16.msra.mxu0 %v993
    %4750 = vmatpush.bf16.msra.mxu0 %v985
    %4751 = vmatpush.bf16.msra.mxu0 %v977
    %4752 = vmatpush.bf16.msra.mxu0 %v969
    %4753 = vmatmul.bf16.gmra.mxu0 %v4010
    %v4754 = vpop.f32.mrf.mxu0
    %v4755 = vadd.f32 0.0, %v4754
    %v4756 = vpop.f32.mrf.mxu0
    %4757 = vdwg.mxu0
    %4758 = vmatpush.bf16.msra.mxu0 %v1089
    %4759 = vmatpush.bf16.msra.mxu0 %v1081
    %4760 = vmatpush.bf16.msra.mxu0 %v1073
    %4761 = vmatpush.bf16.msra.mxu0 %v1065
    %4762 = vmatpush.bf16.msra.mxu0 %v1057
    %4763 = vmatpush.bf16.msra.mxu0 %v1049
    %4764 = vmatpush.bf16.msra.mxu0 %v1041
    %4765 = vmatpush.bf16.msra.mxu0 %v1033
    %4766 = vmatmul.bf16.gmra.mxu0 %v4011
    %v4767 = vpop.f32.mrf.mxu0
    %v4768 = vadd.f32 %v4755, %v4767
    %v4769 = vpop.f32.mrf.mxu0
    %4770 = vdwg.mxu0
    %v4771 = vadd.f32 %v232, %v4586
    %v4772 = vadd.f32 %v261, %v4612
    %v4773 = vadd.f32 %v290, %v4638
    %v4774 = vadd.f32 %v319, %v4664
    %v4775 = vadd.f32 %v348, %v4690
    %v4776 = vadd.f32 %v377, %v4716
    %v4777 = vadd.f32 %v406, %v4742
    %v4778 = vadd.f32 %v435, %v4768
    %v4779 = vxor.u32 %v4771, 2147483648
    %v4780 = vxor.u32 %v4772, 2147483648
    %v4781 = vmul.f32 %v4779, 1.442695
    %v4782 = vpow.pop %v4781
    %v4783 = vmul.f32 %v4780, 1.442695
    %v4784 = vpow.pop %v4783
    %v4785 = vadd.f32 %v4782, 1.0
    %v4786 = vadd.f32 %v4784, 1.0
    %v4787 = vrcp.pop %v4785
    %v4788 = vmul.f32 %v4785, %v4787
    %v4789 = vsub.f32 1.0, %v4788
    %v4790 = vmul.f32 %v4787, %v4789
    %v4791 = vadd.f32 %v4787, %v4790
    %vm4792 = vweird.f32 %v4785
    %vm4793 = vweird.f32 %v4787
    %vm4794 = vmor %vm4792, %vm4793
    %v4795 = vsel %vm4794, %v4787, %v4791
    %v4796 = vand.u32 2147483647, %v4785
    %vm4797 = vcmp.eq.f32.partialorder %v4796, 8.507059e+37
    %v4798 = vand.u32 %v4785, 2147483648
    %v4799 = vor.u32 1.1754944e-38, %v4798
    %v4800 = vsel %vm4797, %v4799, %v4795
    %v4801 = vmul.f32 1.0, %v4800
    %v4802 = vrcp.pop %v4786
    %v4803 = vmul.f32 %v4786, %v4802
    %v4804 = vsub.f32 1.0, %v4803
    %v4805 = vmul.f32 %v4802, %v4804
    %v4806 = vadd.f32 %v4802, %v4805
    %vm4807 = vweird.f32 %v4786
    %vm4808 = vweird.f32 %v4802
    %vm4809 = vmor %vm4807, %vm4808
    %v4810 = vsel %vm4809, %v4802, %v4806
    %v4811 = vand.u32 2147483647, %v4786
    %vm4812 = vcmp.eq.f32.partialorder %v4811, 8.507059e+37
    %v4813 = vand.u32 %v4786, 2147483648
    %v4814 = vor.u32 1.1754944e-38, %v4813
    %v4815 = vsel %vm4812, %v4814, %v4810
    %v4816 = vmul.f32 1.0, %v4815
    %v4817 = vxor.u32 %v4773, 2147483648
    %v4818 = vxor.u32 %v4774, 2147483648
    %v4819 = vmul.f32 %v4817, 1.442695
    %v4820 = vpow.pop %v4819
    %v4821 = vmul.f32 %v4818, 1.442695
    %v4822 = vpow.pop %v4821
    %v4823 = vadd.f32 %v4820, 1.0
    %v4824 = vadd.f32 %v4822, 1.0
    %v4825 = vrcp.pop %v4823
    %v4826 = vmul.f32 %v4823, %v4825
    %v4827 = vsub.f32 1.0, %v4826
    %v4828 = vmul.f32 %v4825, %v4827
    %v4829 = vadd.f32 %v4825, %v4828
    %vm4830 = vweird.f32 %v4823
    %vm4831 = vweird.f32 %v4825
    %vm4832 = vmor %vm4830, %vm4831
    %v4833 = vsel %vm4832, %v4825, %v4829
    %v4834 = vand.u32 2147483647, %v4823
    %vm4835 = vcmp.eq.f32.partialorder %v4834, 8.507059e+37
    %v4836 = vand.u32 %v4823, 2147483648
    %v4837 = vor.u32 1.1754944e-38, %v4836
    %v4838 = vsel %vm4835, %v4837, %v4833
    %v4839 = vmul.f32 1.0, %v4838
    %v4840 = vrcp.pop %v4824
    %v4841 = vmul.f32 %v4824, %v4840
    %v4842 = vsub.f32 1.0, %v4841
    %v4843 = vmul.f32 %v4840, %v4842
    %v4844 = vadd.f32 %v4840, %v4843
    %vm4845 = vweird.f32 %v4824
    %vm4846 = vweird.f32 %v4840
    %vm4847 = vmor %vm4845, %vm4846
    %v4848 = vsel %vm4847, %v4840, %v4844
    %v4849 = vand.u32 2147483647, %v4824
    %vm4850 = vcmp.eq.f32.partialorder %v4849, 8.507059e+37
    %v4851 = vand.u32 %v4824, 2147483648
    %v4852 = vor.u32 1.1754944e-38, %v4851
    %v4853 = vsel %vm4850, %v4852, %v4848
    %v4854 = vmul.f32 1.0, %v4853
    %v4855 = vtanh.pop %v4775
    %v4856 = vtanh.pop %v4776
    %v4857 = vxor.u32 %v4777, 2147483648
    %v4858 = vxor.u32 %v4778, 2147483648
    %v4859 = vmul.f32 %v4857, 1.442695
    %v4860 = vpow.pop %v4859
    %v4861 = vmul.f32 %v4858, 1.442695
    %v4862 = vpow.pop %v4861
    %v4863 = vadd.f32 %v4860, 1.0
    %v4864 = vadd.f32 %v4862, 1.0
    %v4865 = vrcp.pop %v4863
    %v4866 = vmul.f32 %v4863, %v4865
    %v4867 = vsub.f32 1.0, %v4866
    %v4868 = vmul.f32 %v4865, %v4867
    %v4869 = vadd.f32 %v4865, %v4868
    %vm4870 = vweird.f32 %v4863
    %vm4871 = vweird.f32 %v4865
    %vm4872 = vmor %vm4870, %vm4871
    %v4873 = vsel %vm4872, %v4865, %v4869
    %v4874 = vand.u32 2147483647, %v4863
    %vm4875 = vcmp.eq.f32.partialorder %v4874, 8.507059e+37
    %v4876 = vand.u32 %v4863, 2147483648
    %v4877 = vor.u32 1.1754944e-38, %v4876
    %v4878 = vsel %vm4875, %v4877, %v4873
    %v4879 = vmul.f32 1.0, %v4878
    %v4880 = vrcp.pop %v4864
    %v4881 = vmul.f32 %v4864, %v4880
    %v4882 = vsub.f32 1.0, %v4881
    %v4883 = vmul.f32 %v4880, %v4882
    %v4884 = vadd.f32 %v4880, %v4883
    %vm4885 = vweird.f32 %v4864
    %vm4886 = vweird.f32 %v4880
    %vm4887 = vmor %vm4885, %vm4886
    %v4888 = vsel %vm4887, %v4880, %v4884
    %v4889 = vand.u32 2147483647, %v4864
    %vm4890 = vcmp.eq.f32.partialorder %v4889, 8.507059e+37
    %v4891 = vand.u32 %v4864, 2147483648
    %v4892 = vor.u32 1.1754944e-38, %v4891
    %v4893 = vsel %vm4890, %v4892, %v4888
    %v4894 = vmul.f32 1.0, %v4893
    %v4895 = vmul.f32 %v4839, %v3999
    %v4896 = vmul.f32 %v4854, %v4000
    %v4897 = vmul.f32 %v4801, %v4855
    %v4898 = vmul.f32 %v4816, %v4856
    %v4899 = vadd.f32 %v4895, %v4897
    %v4900 = vadd.f32 %v4896, %v4898
    %v4901 = vtanh.pop %v4899
    %v4902 = vtanh.pop %v4900
    %v4903 = vmul.f32 %v4879, %v4901
    %v4904 = vmul.f32 %v4894, %v4902
    %v4905 = vpack.c.bf16 %v4904, %v4903
    %v4906 = vpack.c.bf16 %v4562, %v4561
    %v4908 = vunpack.c.l.b16 %v4905
    %v4909 = vunpack.c.h.b16 %v4905
    %v4910 = vpack.c.b16 %v4908, %v4908
    %v4911 = vpack.c.b16 %v4909, %v4909
    %v4915 = vunpack.c.l.b16 %v4906
    %v4916 = vunpack.c.h.b16 %v4906
    %v4917 = vpack.c.b16 %v4915, %v4915
    %v4918 = vpack.c.b16 %v4916, %v4916
    %4921 = vmatpush.bf16.msra.mxu0 %v2665
    %4922 = vmatpush.bf16.msra.mxu0 %v2657
    %4923 = vmatpush.bf16.msra.mxu0 %v2649
    %4924 = vmatpush.bf16.msra.mxu0 %v2641
    %4925 = vmatpush.bf16.msra.mxu0 %v2633
    %4926 = vmatpush.bf16.msra.mxu0 %v2625
    %4927 = vmatpush.bf16.msra.mxu0 %v2617
    %4928 = vmatpush.bf16.msra.mxu0 %v2609
    %4929 = vmatmul.bf16.gmra.mxu0 %v4910
    %v4930 = vpop.f32.mrf.mxu0
    %v4931 = vadd.f32 %v1825, %v4930
    %v4932 = vpop.f32.mrf.mxu0
    %4933 = vdwg.mxu0
    %4934 = vmatpush.bf16.msra.mxu0 %v2729
    %4935 = vmatpush.bf16.msra.mxu0 %v2721
    %4936 = vmatpush.bf16.msra.mxu0 %v2713
    %4937 = vmatpush.bf16.msra.mxu0 %v2705
    %4938 = vmatpush.bf16.msra.mxu0 %v2697
    %4939 = vmatpush.bf16.msra.mxu0 %v2689
    %4940 = vmatpush.bf16.msra.mxu0 %v2681
    %4941 = vmatpush.bf16.msra.mxu0 %v2673
    %4942 = vmatmul.bf16.gmra.mxu0 %v4911
    %v4943 = vpop.f32.mrf.mxu0
    %v4944 = vadd.f32 %v4931, %v4943
    %v4945 = vpop.f32.mrf.mxu0
    %4946 = vdwg.mxu0
    %4947 = vmatpush.bf16.msra.mxu0 %v2793
    %4948 = vmatpush.bf16.msra.mxu0 %v2785
    %4949 = vmatpush.bf16.msra.mxu0 %v2777
    %4950 = vmatpush.bf16.msra.mxu0 %v2769
    %4951 = vmatpush.bf16.msra.mxu0 %v2761
    %4952 = vmatpush.bf16.msra.mxu0 %v2753
    %4953 = vmatpush.bf16.msra.mxu0 %v2745
    %4954 = vmatpush.bf16.msra.mxu0 %v2737
    %4955 = vmatmul.bf16.gmra.mxu0 %v4917
    %v4956 = vpop.f32.mrf.mxu0
    %v4957 = vadd.f32 %v4944, %v4956
    %v4958 = vpop.f32.mrf.mxu0
    %4959 = vdwg.mxu0
    %4960 = vmatpush.bf16.msra.mxu0 %v2857
    %4961 = vmatpush.bf16.msra.mxu0 %v2849
    %4962 = vmatpush.bf16.msra.mxu0 %v2841
    %4963 = vmatpush.bf16.msra.mxu0 %v2833
    %4964 = vmatpush.bf16.msra.mxu0 %v2825
    %4965 = vmatpush.bf16.msra.mxu0 %v2817
    %4966 = vmatpush.bf16.msra.mxu0 %v2809
    %4967 = vmatpush.bf16.msra.mxu0 %v2801
    %4968 = vmatmul.bf16.gmra.mxu0 %v4918
    %v4969 = vpop.f32.mrf.mxu0
    %v4970 = vadd.f32 %v4957, %v4969
    %v4971 = vpop.f32.mrf.mxu0
    %4972 = vdwg.mxu0
    %4973 = vmatpush.bf16.msra.mxu0 %v2666
    %4974 = vmatpush.bf16.msra.mxu0 %v2658
    %4975 = vmatpush.bf16.msra.mxu0 %v2650
    %4976 = vmatpush.bf16.msra.mxu0 %v2642
    %4977 = vmatpush.bf16.msra.mxu0 %v2634
    %4978 = vmatpush.bf16.msra.mxu0 %v2626
    %4979 = vmatpush.bf16.msra.mxu0 %v2618
    %4980 = vmatpush.bf16.msra.mxu0 %v2610
    %4981 = vmatmul.bf16.gmra.mxu0 %v4910
    %v4982 = vpop.f32.mrf.mxu0
    %v4983 = vadd.f32 %v1826, %v4982
    %v4984 = vpop.f32.mrf.mxu0
    %4985 = vdwg.mxu0
    %4986 = vmatpush.bf16.msra.mxu0 %v2730
    %4987 = vmatpush.bf16.msra.mxu0 %v2722
    %4988 = vmatpush.bf16.msra.mxu0 %v2714
    %4989 = vmatpush.bf16.msra.mxu0 %v2706
    %4990 = vmatpush.bf16.msra.mxu0 %v2698
    %4991 = vmatpush.bf16.msra.mxu0 %v2690
    %4992 = vmatpush.bf16.msra.mxu0 %v2682
    %4993 = vmatpush.bf16.msra.mxu0 %v2674
    %4994 = vmatmul.bf16.gmra.mxu0 %v4911
    %v4995 = vpop.f32.mrf.mxu0
    %v4996 = vadd.f32 %v4983, %v4995
    %v4997 = vpop.f32.mrf.mxu0
    %4998 = vdwg.mxu0
    %4999 = vmatpush.bf16.msra.mxu0 %v2794
    %5000 = vmatpush.bf16.msra.mxu0 %v2786
    %5001 = vmatpush.bf16.msra.mxu0 %v2778
    %5002 = vmatpush.bf16.msra.mxu0 %v2770
    %5003 = vmatpush.bf16.msra.mxu0 %v2762
    %5004 = vmatpush.bf16.msra.mxu0 %v2754
    %5005 = vmatpush.bf16.msra.mxu0 %v2746
    %5006 = vmatpush.bf16.msra.mxu0 %v2738
    %5007 = vmatmul.bf16.gmra.mxu0 %v4917
    %v5008 = vpop.f32.mrf.mxu0
    %v5009 = vadd.f32 %v4996, %v5008
    %v5010 = vpop.f32.mrf.mxu0
    %5011 = vdwg.mxu0
    %5012 = vmatpush.bf16.msra.mxu0 %v2858
    %5013 = vmatpush.bf16.msra.mxu0 %v2850
    %5014 = vmatpush.bf16.msra.mxu0 %v2842
    %5015 = vmatpush.bf16.msra.mxu0 %v2834
    %5016 = vmatpush.bf16.msra.mxu0 %v2826
    %5017 = vmatpush.bf16.msra.mxu0 %v2818
    %5018 = vmatpush.bf16.msra.mxu0 %v2810
    %5019 = vmatpush.bf16.msra.mxu0 %v2802
    %5020 = vmatmul.bf16.gmra.mxu0 %v4918
    %v5021 = vpop.f32.mrf.mxu0
    %v5022 = vadd.f32 %v5009, %v5021
    %v5023 = vpop.f32.mrf.mxu0
    %5024 = vdwg.mxu0
    %5025 = vmatpush.bf16.msra.mxu0 %v2667
    %5026 = vmatpush.bf16.msra.mxu0 %v2659
    %5027 = vmatpush.bf16.msra.mxu0 %v2651
    %5028 = vmatpush.bf16.msra.mxu0 %v2643
    %5029 = vmatpush.bf16.msra.mxu0 %v2635
    %5030 = vmatpush.bf16.msra.mxu0 %v2627
    %5031 = vmatpush.bf16.msra.mxu0 %v2619
    %5032 = vmatpush.bf16.msra.mxu0 %v2611
    %5033 = vmatmul.bf16.gmra.mxu0 %v4910
    %v5034 = vpop.f32.mrf.mxu0
    %v5035 = vadd.f32 %v1827, %v5034
    %v5036 = vpop.f32.mrf.mxu0
    %5037 = vdwg.mxu0
    %5038 = vmatpush.bf16.msra.mxu0 %v2731
    %5039 = vmatpush.bf16.msra.mxu0 %v2723
    %5040 = vmatpush.bf16.msra.mxu0 %v2715
    %5041 = vmatpush.bf16.msra.mxu0 %v2707
    %5042 = vmatpush.bf16.msra.mxu0 %v2699
    %5043 = vmatpush.bf16.msra.mxu0 %v2691
    %5044 = vmatpush.bf16.msra.mxu0 %v2683
    %5045 = vmatpush.bf16.msra.mxu0 %v2675
    %5046 = vmatmul.bf16.gmra.mxu0 %v4911
    %v5047 = vpop.f32.mrf.mxu0
    %v5048 = vadd.f32 %v5035, %v5047
    %v5049 = vpop.f32.mrf.mxu0
    %5050 = vdwg.mxu0
    %5051 = vmatpush.bf16.msra.mxu0 %v2795
    %5052 = vmatpush.bf16.msra.mxu0 %v2787
    %5053 = vmatpush.bf16.msra.mxu0 %v2779
    %5054 = vmatpush.bf16.msra.mxu0 %v2771
    %5055 = vmatpush.bf16.msra.mxu0 %v2763
    %5056 = vmatpush.bf16.msra.mxu0 %v2755
    %5057 = vmatpush.bf16.msra.mxu0 %v2747
    %5058 = vmatpush.bf16.msra.mxu0 %v2739
    %5059 = vmatmul.bf16.gmra.mxu0 %v4917
    %v5060 = vpop.f32.mrf.mxu0
    %v5061 = vadd.f32 %v5048, %v5060
    %v5062 = vpop.f32.mrf.mxu0
    %5063 = vdwg.mxu0
    %5064 = vmatpush.bf16.msra.mxu0 %v2859
    %5065 = vmatpush.bf16.msra.mxu0 %v2851
    %5066 = vmatpush.bf16.msra.mxu0 %v2843
    %5067 = vmatpush.bf16.msra.mxu0 %v2835
    %5068 = vmatpush.bf16.msra.mxu0 %v2827
    %5069 = vmatpush.bf16.msra.mxu0 %v2819
    %5070 = vmatpush.bf16.msra.mxu0 %v2811
    %5071 = vmatpush.bf16.msra.mxu0 %v2803
    %5072 = vmatmul.bf16.gmra.mxu0 %v4918
    %v5073 = vpop.f32.mrf.mxu0
    %v5074 = vadd.f32 %v5061, %v5073
    %v5075 = vpop.f32.mrf.mxu0
    %5076 = vdwg.mxu0
    %5077 = vmatpush.bf16.msra.mxu0 %v2668
    %5078 = vmatpush.bf16.msra.mxu0 %v2660
    %5079 = vmatpush.bf16.msra.mxu0 %v2652
    %5080 = vmatpush.bf16.msra.mxu0 %v2644
    %5081 = vmatpush.bf16.msra.mxu0 %v2636
    %5082 = vmatpush.bf16.msra.mxu0 %v2628
    %5083 = vmatpush.bf16.msra.mxu0 %v2620
    %5084 = vmatpush.bf16.msra.mxu0 %v2612
    %5085 = vmatmul.bf16.gmra.mxu0 %v4910
    %v5086 = vpop.f32.mrf.mxu0
    %v5087 = vadd.f32 %v1828, %v5086
    %v5088 = vpop.f32.mrf.mxu0
    %5089 = vdwg.mxu0
    %5090 = vmatpush.bf16.msra.mxu0 %v2732
    %5091 = vmatpush.bf16.msra.mxu0 %v2724
    %5092 = vmatpush.bf16.msra.mxu0 %v2716
    %5093 = vmatpush.bf16.msra.mxu0 %v2708
    %5094 = vmatpush.bf16.msra.mxu0 %v2700
    %5095 = vmatpush.bf16.msra.mxu0 %v2692
    %5096 = vmatpush.bf16.msra.mxu0 %v2684
    %5097 = vmatpush.bf16.msra.mxu0 %v2676
    %5098 = vmatmul.bf16.gmra.mxu0 %v4911
    %v5099 = vpop.f32.mrf.mxu0
    %v5100 = vadd.f32 %v5087, %v5099
    %v5101 = vpop.f32.mrf.mxu0
    %5102 = vdwg.mxu0
    %5103 = vmatpush.bf16.msra.mxu0 %v2796
    %5104 = vmatpush.bf16.msra.mxu0 %v2788
    %5105 = vmatpush.bf16.msra.mxu0 %v2780
    %5106 = vmatpush.bf16.msra.mxu0 %v2772
    %5107 = vmatpush.bf16.msra.mxu0 %v2764
    %5108 = vmatpush.bf16.msra.mxu0 %v2756
    %5109 = vmatpush.bf16.msra.mxu0 %v2748
    %5110 = vmatpush.bf16.msra.mxu0 %v2740
    %5111 = vmatmul.bf16.gmra.mxu0 %v4917
    %v5112 = vpop.f32.mrf.mxu0
    %v5113 = vadd.f32 %v5100, %v5112
    %v5114 = vpop.f32.mrf.mxu0
    %5115 = vdwg.mxu0
    %5116 = vmatpush.bf16.msra.mxu0 %v2860
    %5117 = vmatpush.bf16.msra.mxu0 %v2852
    %5118 = vmatpush.bf16.msra.mxu0 %v2844
    %5119 = vmatpush.bf16.msra.mxu0 %v2836
    %5120 = vmatpush.bf16.msra.mxu0 %v2828
    %5121 = vmatpush.bf16.msra.mxu0 %v2820
    %5122 = vmatpush.bf16.msra.mxu0 %v2812
    %5123 = vmatpush.bf16.msra.mxu0 %v2804
    %5124 = vmatmul.bf16.gmra.mxu0 %v4918
    %v5125 = vpop.f32.mrf.mxu0
    %v5126 = vadd.f32 %v5113, %v5125
    %v5127 = vpop.f32.mrf.mxu0
    %5128 = vdwg.mxu0
    %5129 = vmatpush.bf16.msra.mxu0 %v2669
    %5130 = vmatpush.bf16.msra.mxu0 %v2661
    %5131 = vmatpush.bf16.msra.mxu0 %v2653
    %5132 = vmatpush.bf16.msra.mxu0 %v2645
    %5133 = vmatpush.bf16.msra.mxu0 %v2637
    %5134 = vmatpush.bf16.msra.mxu0 %v2629
    %5135 = vmatpush.bf16.msra.mxu0 %v2621
    %5136 = vmatpush.bf16.msra.mxu0 %v2613
    %5137 = vmatmul.bf16.gmra.mxu0 %v4910
    %v5138 = vpop.f32.mrf.mxu0
    %v5139 = vadd.f32 %v1829, %v5138
    %v5140 = vpop.f32.mrf.mxu0
    %5141 = vdwg.mxu0
    %5142 = vmatpush.bf16.msra.mxu0 %v2733
    %5143 = vmatpush.bf16.msra.mxu0 %v2725
    %5144 = vmatpush.bf16.msra.mxu0 %v2717
    %5145 = vmatpush.bf16.msra.mxu0 %v2709
    %5146 = vmatpush.bf16.msra.mxu0 %v2701
    %5147 = vmatpush.bf16.msra.mxu0 %v2693
    %5148 = vmatpush.bf16.msra.mxu0 %v2685
    %5149 = vmatpush.bf16.msra.mxu0 %v2677
    %5150 = vmatmul.bf16.gmra.mxu0 %v4911
    %v5151 = vpop.f32.mrf.mxu0
    %v5152 = vadd.f32 %v5139, %v5151
    %v5153 = vpop.f32.mrf.mxu0
    %5154 = vdwg.mxu0
    %5155 = vmatpush.bf16.msra.mxu0 %v2797
    %5156 = vmatpush.bf16.msra.mxu0 %v2789
    %5157 = vmatpush.bf16.msra.mxu0 %v2781
    %5158 = vmatpush.bf16.msra.mxu0 %v2773
    %5159 = vmatpush.bf16.msra.mxu0 %v2765
    %5160 = vmatpush.bf16.msra.mxu0 %v2757
    %5161 = vmatpush.bf16.msra.mxu0 %v2749
    %5162 = vmatpush.bf16.msra.mxu0 %v2741
    %5163 = vmatmul.bf16.gmra.mxu0 %v4917
    %v5164 = vpop.f32.mrf.mxu0
    %v5165 = vadd.f32 %v5152, %v5164
    %v5166 = vpop.f32.mrf.mxu0
    %5167 = vdwg.mxu0
    %5168 = vmatpush.bf16.msra.mxu0 %v2861
    %5169 = vmatpush.bf16.msra.mxu0 %v2853
    %5170 = vmatpush.bf16.msra.mxu0 %v2845
    %5171 = vmatpush.bf16.msra.mxu0 %v2837
    %5172 = vmatpush.bf16.msra.mxu0 %v2829
    %5173 = vmatpush.bf16.msra.mxu0 %v2821
    %5174 = vmatpush.bf16.msra.mxu0 %v2813
    %5175 = vmatpush.bf16.msra.mxu0 %v2805
    %5176 = vmatmul.bf16.gmra.mxu0 %v4918
    %v5177 = vpop.f32.mrf.mxu0
    %v5178 = vadd.f32 %v5165, %v5177
    %v5179 = vpop.f32.mrf.mxu0
    %5180 = vdwg.mxu0
    %5181 = vmatpush.bf16.msra.mxu0 %v2670
    %5182 = vmatpush.bf16.msra.mxu0 %v2662
    %5183 = vmatpush.bf16.msra.mxu0 %v2654
    %5184 = vmatpush.bf16.msra.mxu0 %v2646
    %5185 = vmatpush.bf16.msra.mxu0 %v2638
    %5186 = vmatpush.bf16.msra.mxu0 %v2630
    %5187 = vmatpush.bf16.msra.mxu0 %v2622
    %5188 = vmatpush.bf16.msra.mxu0 %v2614
    %5189 = vmatmul.bf16.gmra.mxu0 %v4910
    %v5190 = vpop.f32.mrf.mxu0
    %v5191 = vadd.f32 %v1830, %v5190
    %v5192 = vpop.f32.mrf.mxu0
    %5193 = vdwg.mxu0
    %5194 = vmatpush.bf16.msra.mxu0 %v2734
    %5195 = vmatpush.bf16.msra.mxu0 %v2726
    %5196 = vmatpush.bf16.msra.mxu0 %v2718
    %5197 = vmatpush.bf16.msra.mxu0 %v2710
    %5198 = vmatpush.bf16.msra.mxu0 %v2702
    %5199 = vmatpush.bf16.msra.mxu0 %v2694
    %5200 = vmatpush.bf16.msra.mxu0 %v2686
    %5201 = vmatpush.bf16.msra.mxu0 %v2678
    %5202 = vmatmul.bf16.gmra.mxu0 %v4911
    %v5203 = vpop.f32.mrf.mxu0
    %v5204 = vadd.f32 %v5191, %v5203
    %v5205 = vpop.f32.mrf.mxu0
    %5206 = vdwg.mxu0
    %5207 = vmatpush.bf16.msra.mxu0 %v2798
    %5208 = vmatpush.bf16.msra.mxu0 %v2790
    %5209 = vmatpush.bf16.msra.mxu0 %v2782
    %5210 = vmatpush.bf16.msra.mxu0 %v2774
    %5211 = vmatpush.bf16.msra.mxu0 %v2766
    %5212 = vmatpush.bf16.msra.mxu0 %v2758
    %5213 = vmatpush.bf16.msra.mxu0 %v2750
    %5214 = vmatpush.bf16.msra.mxu0 %v2742
    %5215 = vmatmul.bf16.gmra.mxu0 %v4917
    %v5216 = vpop.f32.mrf.mxu0
    %v5217 = vadd.f32 %v5204, %v5216
    %v5218 = vpop.f32.mrf.mxu0
    %5219 = vdwg.mxu0
    %5220 = vmatpush.bf16.msra.mxu0 %v2862
    %5221 = vmatpush.bf16.msra.mxu0 %v2854
    %5222 = vmatpush.bf16.msra.mxu0 %v2846
    %5223 = vmatpush.bf16.msra.mxu0 %v2838
    %5224 = vmatpush.bf16.msra.mxu0 %v2830
    %5225 = vmatpush.bf16.msra.mxu0 %v2822
    %5226 = vmatpush.bf16.msra.mxu0 %v2814
    %5227 = vmatpush.bf16.msra.mxu0 %v2806
    %5228 = vmatmul.bf16.gmra.mxu0 %v4918
    %v5229 = vpop.f32.mrf.mxu0
    %v5230 = vadd.f32 %v5217, %v5229
    %v5231 = vpop.f32.mrf.mxu0
    %5232 = vdwg.mxu0
    %5233 = vmatpush.bf16.msra.mxu0 %v2671
    %5234 = vmatpush.bf16.msra.mxu0 %v2663
    %5235 = vmatpush.bf16.msra.mxu0 %v2655
    %5236 = vmatpush.bf16.msra.mxu0 %v2647
    %5237 = vmatpush.bf16.msra.mxu0 %v2639
    %5238 = vmatpush.bf16.msra.mxu0 %v2631
    %5239 = vmatpush.bf16.msra.mxu0 %v2623
    %5240 = vmatpush.bf16.msra.mxu0 %v2615
    %5241 = vmatmul.bf16.gmra.mxu0 %v4910
    %v5242 = vpop.f32.mrf.mxu0
    %v5243 = vadd.f32 %v1831, %v5242
    %v5244 = vpop.f32.mrf.mxu0
    %5245 = vdwg.mxu0
    %5246 = vmatpush.bf16.msra.mxu0 %v2735
    %5247 = vmatpush.bf16.msra.mxu0 %v2727
    %5248 = vmatpush.bf16.msra.mxu0 %v2719
    %5249 = vmatpush.bf16.msra.mxu0 %v2711
    %5250 = vmatpush.bf16.msra.mxu0 %v2703
    %5251 = vmatpush.bf16.msra.mxu0 %v2695
    %5252 = vmatpush.bf16.msra.mxu0 %v2687
    %5253 = vmatpush.bf16.msra.mxu0 %v2679
    %5254 = vmatmul.bf16.gmra.mxu0 %v4911
    %v5255 = vpop.f32.mrf.mxu0
    %v5256 = vadd.f32 %v5243, %v5255
    %v5257 = vpop.f32.mrf.mxu0
    %5258 = vdwg.mxu0
    %5259 = vmatpush.bf16.msra.mxu0 %v2799
    %5260 = vmatpush.bf16.msra.mxu0 %v2791
    %5261 = vmatpush.bf16.msra.mxu0 %v2783
    %5262 = vmatpush.bf16.msra.mxu0 %v2775
    %5263 = vmatpush.bf16.msra.mxu0 %v2767
    %5264 = vmatpush.bf16.msra.mxu0 %v2759
    %5265 = vmatpush.bf16.msra.mxu0 %v2751
    %5266 = vmatpush.bf16.msra.mxu0 %v2743
    %5267 = vmatmul.bf16.gmra.mxu0 %v4917
    %v5268 = vpop.f32.mrf.mxu0
    %v5269 = vadd.f32 %v5256, %v5268
    %v5270 = vpop.f32.mrf.mxu0
    %5271 = vdwg.mxu0
    %5272 = vmatpush.bf16.msra.mxu0 %v2863
    %5273 = vmatpush.bf16.msra.mxu0 %v2855
    %5274 = vmatpush.bf16.msra.mxu0 %v2847
    %5275 = vmatpush.bf16.msra.mxu0 %v2839
    %5276 = vmatpush.bf16.msra.mxu0 %v2831
    %5277 = vmatpush.bf16.msra.mxu0 %v2823
    %5278 = vmatpush.bf16.msra.mxu0 %v2815
    %5279 = vmatpush.bf16.msra.mxu0 %v2807
    %5280 = vmatmul.bf16.gmra.mxu0 %v4918
    %v5281 = vpop.f32.mrf.mxu0
    %v5282 = vadd.f32 %v5269, %v5281
    %v5283 = vpop.f32.mrf.mxu0
    %5284 = vdwg.mxu0
    %5285 = vmatpush.bf16.msra.mxu0 %v2672
    %5286 = vmatpush.bf16.msra.mxu0 %v2664
    %5287 = vmatpush.bf16.msra.mxu0 %v2656
    %5288 = vmatpush.bf16.msra.mxu0 %v2648
    %5289 = vmatpush.bf16.msra.mxu0 %v2640
    %5290 = vmatpush.bf16.msra.mxu0 %v2632
    %5291 = vmatpush.bf16.msra.mxu0 %v2624
    %5292 = vmatpush.bf16.msra.mxu0 %v2616
    %5293 = vmatmul.bf16.gmra.mxu0 %v4910
    %v5294 = vpop.f32.mrf.mxu0
    %v5295 = vadd.f32 %v1832, %v5294
    %v5296 = vpop.f32.mrf.mxu0
    %5297 = vdwg.mxu0
    %5298 = vmatpush.bf16.msra.mxu0 %v2736
    %5299 = vmatpush.bf16.msra.mxu0 %v2728
    %5300 = vmatpush.bf16.msra.mxu0 %v2720
    %5301 = vmatpush.bf16.msra.mxu0 %v2712
    %5302 = vmatpush.bf16.msra.mxu0 %v2704
    %5303 = vmatpush.bf16.msra.mxu0 %v2696
    %5304 = vmatpush.bf16.msra.mxu0 %v2688
    %5305 = vmatpush.bf16.msra.mxu0 %v2680
    %5306 = vmatmul.bf16.gmra.mxu0 %v4911
    %v5307 = vpop.f32.mrf.mxu0
    %v5308 = vadd.f32 %v5295, %v5307
    %v5309 = vpop.f32.mrf.mxu0
    %5310 = vdwg.mxu0
    %5311 = vmatpush.bf16.msra.mxu0 %v2800
    %5312 = vmatpush.bf16.msra.mxu0 %v2792
    %5313 = vmatpush.bf16.msra.mxu0 %v2784
    %5314 = vmatpush.bf16.msra.mxu0 %v2776
    %5315 = vmatpush.bf16.msra.mxu0 %v2768
    %5316 = vmatpush.bf16.msra.mxu0 %v2760
    %5317 = vmatpush.bf16.msra.mxu0 %v2752
    %5318 = vmatpush.bf16.msra.mxu0 %v2744
    %5319 = vmatmul.bf16.gmra.mxu0 %v4917
    %v5320 = vpop.f32.mrf.mxu0
    %v5321 = vadd.f32 %v5308, %v5320
    %v5322 = vpop.f32.mrf.mxu0
    %5323 = vdwg.mxu0
    %5324 = vmatpush.bf16.msra.mxu0 %v2864
    %5325 = vmatpush.bf16.msra.mxu0 %v2856
    %5326 = vmatpush.bf16.msra.mxu0 %v2848
    %5327 = vmatpush.bf16.msra.mxu0 %v2840
    %5328 = vmatpush.bf16.msra.mxu0 %v2832
    %5329 = vmatpush.bf16.msra.mxu0 %v2824
    %5330 = vmatpush.bf16.msra.mxu0 %v2816
    %5331 = vmatpush.bf16.msra.mxu0 %v2808
    %5332 = vmatmul.bf16.gmra.mxu0 %v4918
    %v5333 = vpop.f32.mrf.mxu0
    %v5334 = vadd.f32 %v5321, %v5333
    %v5335 = vpop.f32.mrf.mxu0
    %5336 = vdwg.mxu0
    %v5337 = vxor.u32 %v4970, 2147483648
    %v5338 = vxor.u32 %v5022, 2147483648
    %v5339 = vmul.f32 %v5337, 1.442695
    %v5340 = vpow.pop %v5339
    %v5341 = vmul.f32 %v5338, 1.442695
    %v5342 = vpow.pop %v5341
    %v5343 = vadd.f32 %v5340, 1.0
    %v5344 = vadd.f32 %v5342, 1.0
    %v5345 = vrcp.pop %v5343
    %v5346 = vmul.f32 %v5343, %v5345
    %v5347 = vsub.f32 1.0, %v5346
    %v5348 = vmul.f32 %v5345, %v5347
    %v5349 = vadd.f32 %v5345, %v5348
    %vm5350 = vweird.f32 %v5343
    %vm5351 = vweird.f32 %v5345
    %vm5352 = vmor %vm5350, %vm5351
    %v5353 = vsel %vm5352, %v5345, %v5349
    %v5354 = vand.u32 2147483647, %v5343
    %vm5355 = vcmp.eq.f32.partialorder %v5354, 8.507059e+37
    %v5356 = vand.u32 %v5343, 2147483648
    %v5357 = vor.u32 1.1754944e-38, %v5356
    %v5358 = vsel %vm5355, %v5357, %v5353
    %v5359 = vmul.f32 1.0, %v5358
    %v5360 = vrcp.pop %v5344
    %v5361 = vmul.f32 %v5344, %v5360
    %v5362 = vsub.f32 1.0, %v5361
    %v5363 = vmul.f32 %v5360, %v5362
    %v5364 = vadd.f32 %v5360, %v5363
    %vm5365 = vweird.f32 %v5344
    %vm5366 = vweird.f32 %v5360
    %vm5367 = vmor %vm5365, %vm5366
    %v5368 = vsel %vm5367, %v5360, %v5364
    %v5369 = vand.u32 2147483647, %v5344
    %vm5370 = vcmp.eq.f32.partialorder %v5369, 8.507059e+37
    %v5371 = vand.u32 %v5344, 2147483648
    %v5372 = vor.u32 1.1754944e-38, %v5371
    %v5373 = vsel %vm5370, %v5372, %v5368
    %v5374 = vmul.f32 1.0, %v5373
    %v5375 = vxor.u32 %v5074, 2147483648
    %v5376 = vxor.u32 %v5126, 2147483648
    %v5377 = vmul.f32 %v5375, 1.442695
    %v5378 = vpow.pop %v5377
    %v5379 = vmul.f32 %v5376, 1.442695
    %v5380 = vpow.pop %v5379
    %v5381 = vadd.f32 %v5378, 1.0
    %v5382 = vadd.f32 %v5380, 1.0
    %v5383 = vrcp.pop %v5381
    %v5384 = vmul.f32 %v5381, %v5383
    %v5385 = vsub.f32 1.0, %v5384
    %v5386 = vmul.f32 %v5383, %v5385
    %v5387 = vadd.f32 %v5383, %v5386
    %vm5388 = vweird.f32 %v5381
    %vm5389 = vweird.f32 %v5383
    %vm5390 = vmor %vm5388, %vm5389
    %v5391 = vsel %vm5390, %v5383, %v5387
    %v5392 = vand.u32 2147483647, %v5381
    %vm5393 = vcmp.eq.f32.partialorder %v5392, 8.507059e+37
    %v5394 = vand.u32 %v5381, 2147483648
    %v5395 = vor.u32 1.1754944e-38, %v5394
    %v5396 = vsel %vm5393, %v5395, %v5391
    %v5397 = vmul.f32 1.0, %v5396
    %v5398 = vrcp.pop %v5382
    %v5399 = vmul.f32 %v5382, %v5398
    %v5400 = vsub.f32 1.0, %v5399
    %v5401 = vmul.f32 %v5398, %v5400
    %v5402 = vadd.f32 %v5398, %v5401
    %vm5403 = vweird.f32 %v5382
    %vm5404 = vweird.f32 %v5398
    %vm5405 = vmor %vm5403, %vm5404
    %v5406 = vsel %vm5405, %v5398, %v5402
    %v5407 = vand.u32 2147483647, %v5382
    %vm5408 = vcmp.eq.f32.partialorder %v5407, 8.507059e+37
    %v5409 = vand.u32 %v5382, 2147483648
    %v5410 = vor.u32 1.1754944e-38, %v5409
    %v5411 = vsel %vm5408, %v5410, %v5406
    %v5412 = vmul.f32 1.0, %v5411
    %v5413 = vtanh.pop %v5178
    %v5414 = vtanh.pop %v5230
    %v5415 = vxor.u32 %v5282, 2147483648
    %v5416 = vxor.u32 %v5334, 2147483648
    %v5417 = vmul.f32 %v5415, 1.442695
    %v5418 = vpow.pop %v5417
    %v5419 = vmul.f32 %v5416, 1.442695
    %v5420 = vpow.pop %v5419
    %v5421 = vadd.f32 %v5418, 1.0
    %v5422 = vadd.f32 %v5420, 1.0
    %v5423 = vrcp.pop %v5421
    %v5424 = vmul.f32 %v5421, %v5423
    %v5425 = vsub.f32 1.0, %v5424
    %v5426 = vmul.f32 %v5423, %v5425
    %v5427 = vadd.f32 %v5423, %v5426
    %vm5428 = vweird.f32 %v5421
    %vm5429 = vweird.f32 %v5423
    %vm5430 = vmor %vm5428, %vm5429
    %v5431 = vsel %vm5430, %v5423, %v5427
    %v5432 = vand.u32 2147483647, %v5421
    %vm5433 = vcmp.eq.f32.partialorder %v5432, 8.507059e+37
    %v5434 = vand.u32 %v5421, 2147483648
    %v5435 = vor.u32 1.1754944e-38, %v5434
    %v5436 = vsel %vm5433, %v5435, %v5431
    %v5437 = vmul.f32 1.0, %v5436
    %v5438 = vrcp.pop %v5422
    %v5439 = vmul.f32 %v5422, %v5438
    %v5440 = vsub.f32 1.0, %v5439
    %v5441 = vmul.f32 %v5438, %v5440
    %v5442 = vadd.f32 %v5438, %v5441
    %vm5443 = vweird.f32 %v5422
    %vm5444 = vweird.f32 %v5438
    %vm5445 = vmor %vm5443, %vm5444
    %v5446 = vsel %vm5445, %v5438, %v5442
    %v5447 = vand.u32 2147483647, %v5422
    %vm5448 = vcmp.eq.f32.partialorder %v5447, 8.507059e+37
    %v5449 = vand.u32 %v5422, 2147483648
    %v5450 = vor.u32 1.1754944e-38, %v5449
    %v5451 = vsel %vm5448, %v5450, %v5446
    %v5452 = vmul.f32 1.0, %v5451
    %v5453 = vmul.f32 %v5397, %v4557
    %v5454 = vmul.f32 %v5412, %v4558
    %v5455 = vmul.f32 %v5359, %v5413
    %v5456 = vmul.f32 %v5374, %v5414
    %v5457 = vadd.f32 %v5453, %v5455
    %v5458 = vadd.f32 %v5454, %v5456
    %v5459 = vtanh.pop %v5457
    %v5460 = vtanh.pop %v5458
    %v5461 = vmul.f32 %v5437, %v5459
    %v5462 = vmul.f32 %v5452, %v5460
    %5463 = vmatpush.bf16.msra.mxu0 %v1018
    %5464 = vmatpush.bf16.msra.mxu0 %v1010
    %5465 = vmatpush.bf16.msra.mxu0 %v1002
    %5466 = vmatpush.bf16.msra.mxu0 %v994
    %5467 = vmatpush.bf16.msra.mxu0 %v986
    %5468 = vmatpush.bf16.msra.mxu0 %v978
    %5469 = vmatpush.bf16.msra.mxu0 %v970
    %5470 = vmatpush.bf16.msra.mxu0 %v962
    %5471 = vmatmul.bf16.gmra.mxu0 %v4910
    %v5472 = vpop.f32.mrf.mxu0
    %v5473 = vadd.f32 0.0, %v5472
    %v5474 = vpop.f32.mrf.mxu0
    %5475 = vdwg.mxu0
    %5476 = vmatpush.bf16.msra.mxu0 %v1082
    %5477 = vmatpush.bf16.msra.mxu0 %v1074
    %5478 = vmatpush.bf16.msra.mxu0 %v1066
    %5479 = vmatpush.bf16.msra.mxu0 %v1058
    %5480 = vmatpush.bf16.msra.mxu0 %v1050
    %5481 = vmatpush.bf16.msra.mxu0 %v1042
    %5482 = vmatpush.bf16.msra.mxu0 %v1034
    %5483 = vmatpush.bf16.msra.mxu0 %v1026
    %5484 = vmatmul.bf16.gmra.mxu0 %v4911
    %v5485 = vpop.f32.mrf.mxu0
    %v5486 = vadd.f32 %v5473, %v5485
    %v5487 = vpop.f32.mrf.mxu0
    %5488 = vdwg.mxu0
    %5489 = vmatpush.bf16.msra.mxu0 %v1019
    %5490 = vmatpush.bf16.msra.mxu0 %v1011
    %5491 = vmatpush.bf16.msra.mxu0 %v1003
    %5492 = vmatpush.bf16.msra.mxu0 %v995
    %5493 = vmatpush.bf16.msra.mxu0 %v987
    %5494 = vmatpush.bf16.msra.mxu0 %v979
    %5495 = vmatpush.bf16.msra.mxu0 %v971
    %5496 = vmatpush.bf16.msra.mxu0 %v963
    %5497 = vmatmul.bf16.gmra.mxu0 %v4910
    %v5498 = vpop.f32.mrf.mxu0
    %v5499 = vadd.f32 0.0, %v5498
    %v5500 = vpop.f32.mrf.mxu0
    %5501 = vdwg.mxu0
    %5502 = vmatpush.bf16.msra.mxu0 %v1083
    %5503 = vmatpush.bf16.msra.mxu0 %v1075
    %5504 = vmatpush.bf16.msra.mxu0 %v1067
    %5505 = vmatpush.bf16.msra.mxu0 %v1059
    %5506 = vmatpush.bf16.msra.mxu0 %v1051
    %5507 = vmatpush.bf16.msra.mxu0 %v1043
    %5508 = vmatpush.bf16.msra.mxu0 %v1035
    %5509 = vmatpush.bf16.msra.mxu0 %v1027
    %5510 = vmatmul.bf16.gmra.mxu0 %v4911
    %v5511 = vpop.f32.mrf.mxu0
    %v5512 = vadd.f32 %v5499, %v5511
    %v5513 = vpop.f32.mrf.mxu0
    %5514 = vdwg.mxu0
    %5515 = vmatpush.bf16.msra.mxu0 %v1020
    %5516 = vmatpush.bf16.msra.mxu0 %v1012
    %5517 = vmatpush.bf16.msra.mxu0 %v1004
    %5518 = vmatpush.bf16.msra.mxu0 %v996
    %5519 = vmatpush.bf16.msra.mxu0 %v988
    %5520 = vmatpush.bf16.msra.mxu0 %v980
    %5521 = vmatpush.bf16.msra.mxu0 %v972
    %5522 = vmatpush.bf16.msra.mxu0 %v964
    %5523 = vmatmul.bf16.gmra.mxu0 %v4910
    %v5524 = vpop.f32.mrf.mxu0
    %v5525 = vadd.f32 0.0, %v5524
    %v5526 = vpop.f32.mrf.mxu0
    %5527 = vdwg.mxu0
    %5528 = vmatpush.bf16.msra.mxu0 %v1084
    %5529 = vmatpush.bf16.msra.mxu0 %v1076
    %5530 = vmatpush.bf16.msra.mxu0 %v1068
    %5531 = vmatpush.bf16.msra.mxu0 %v1060
    %5532 = vmatpush.bf16.msra.mxu0 %v1052
    %5533 = vmatpush.bf16.msra.mxu0 %v1044
    %5534 = vmatpush.bf16.msra.mxu0 %v1036
    %5535 = vmatpush.bf16.msra.mxu0 %v1028
    %5536 = vmatmul.bf16.gmra.mxu0 %v4911
    %v5537 = vpop.f32.mrf.mxu0
    %v5538 = vadd.f32 %v5525, %v5537
    %v5539 = vpop.f32.mrf.mxu0
    %5540 = vdwg.mxu0
    %5541 = vmatpush.bf16.msra.mxu0 %v1021
    %5542 = vmatpush.bf16.msra.mxu0 %v1013
    %5543 = vmatpush.bf16.msra.mxu0 %v1005
    %5544 = vmatpush.bf16.msra.mxu0 %v997
    %5545 = vmatpush.bf16.msra.mxu0 %v989
    %5546 = vmatpush.bf16.msra.mxu0 %v981
    %5547 = vmatpush.bf16.msra.mxu0 %v973
    %5548 = vmatpush.bf16.msra.mxu0 %v965
    %5549 = vmatmul.bf16.gmra.mxu0 %v4910
    %v5550 = vpop.f32.mrf.mxu0
    %v5551 = vadd.f32 0.0, %v5550
    %v5552 = vpop.f32.mrf.mxu0
    %5553 = vdwg.mxu0
    %5554 = vmatpush.bf16.msra.mxu0 %v1085
    %5555 = vmatpush.bf16.msra.mxu0 %v1077
    %5556 = vmatpush.bf16.msra.mxu0 %v1069
    %5557 = vmatpush.bf16.msra.mxu0 %v1061
    %5558 = vmatpush.bf16.msra.mxu0 %v1053
    %5559 = vmatpush.bf16.msra.mxu0 %v1045
    %5560 = vmatpush.bf16.msra.mxu0 %v1037
    %5561 = vmatpush.bf16.msra.mxu0 %v1029
    %5562 = vmatmul.bf16.gmra.mxu0 %v4911
    %v5563 = vpop.f32.mrf.mxu0
    %v5564 = vadd.f32 %v5551, %v5563
    %v5565 = vpop.f32.mrf.mxu0
    %5566 = vdwg.mxu0
    %5567 = vmatpush.bf16.msra.mxu0 %v1022
    %5568 = vmatpush.bf16.msra.mxu0 %v1014
    %5569 = vmatpush.bf16.msra.mxu0 %v1006
    %5570 = vmatpush.bf16.msra.mxu0 %v998
    %5571 = vmatpush.bf16.msra.mxu0 %v990
    %5572 = vmatpush.bf16.msra.mxu0 %v982
    %5573 = vmatpush.bf16.msra.mxu0 %v974
    %5574 = vmatpush.bf16.msra.mxu0 %v966
    %5575 = vmatmul.bf16.gmra.mxu0 %v4910
    %v5576 = vpop.f32.mrf.mxu0
    %v5577 = vadd.f32 0.0, %v5576
    %v5578 = vpop.f32.mrf.mxu0
    %5579 = vdwg.mxu0
    %5580 = vmatpush.bf16.msra.mxu0 %v1086
    %5581 = vmatpush.bf16.msra.mxu0 %v1078
    %5582 = vmatpush.bf16.msra.mxu0 %v1070
    %5583 = vmatpush.bf16.msra.mxu0 %v1062
    %5584 = vmatpush.bf16.msra.mxu0 %v1054
    %5585 = vmatpush.bf16.msra.mxu0 %v1046
    %5586 = vmatpush.bf16.msra.mxu0 %v1038
    %5587 = vmatpush.bf16.msra.mxu0 %v1030
    %5588 = vmatmul.bf16.gmra.mxu0 %v4911
    %v5589 = vpop.f32.mrf.mxu0
    %v5590 = vadd.f32 %v5577, %v5589
    %v5591 = vpop.f32.mrf.mxu0
    %5592 = vdwg.mxu0
    %5593 = vmatpush.bf16.msra.mxu0 %v1023
    %5594 = vmatpush.bf16.msra.mxu0 %v1015
    %5595 = vmatpush.bf16.msra.mxu0 %v1007
    %5596 = vmatpush.bf16.msra.mxu0 %v999
    %5597 = vmatpush.bf16.msra.mxu0 %v991
    %5598 = vmatpush.bf16.msra.mxu0 %v983
    %5599 = vmatpush.bf16.msra.mxu0 %v975
    %5600 = vmatpush.bf16.msra.mxu0 %v967
    %5601 = vmatmul.bf16.gmra.mxu0 %v4910
    %v5602 = vpop.f32.mrf.mxu0
    %v5603 = vadd.f32 0.0, %v5602
    %v5604 = vpop.f32.mrf.mxu0
    %5605 = vdwg.mxu0
    %5606 = vmatpush.bf16.msra.mxu0 %v1087
    %5607 = vmatpush.bf16.msra.mxu0 %v1079
    %5608 = vmatpush.bf16.msra.mxu0 %v1071
    %5609 = vmatpush.bf16.msra.mxu0 %v1063
    %5610 = vmatpush.bf16.msra.mxu0 %v1055
    %5611 = vmatpush.bf16.msra.mxu0 %v1047
    %5612 = vmatpush.bf16.msra.mxu0 %v1039
    %5613 = vmatpush.bf16.msra.mxu0 %v1031
    %5614 = vmatmul.bf16.gmra.mxu0 %v4911
    %v5615 = vpop.f32.mrf.mxu0
    %v5616 = vadd.f32 %v5603, %v5615
    %v5617 = vpop.f32.mrf.mxu0
    %5618 = vdwg.mxu0
    %5619 = vmatpush.bf16.msra.mxu0 %v1024
    %5620 = vmatpush.bf16.msra.mxu0 %v1016
    %5621 = vmatpush.bf16.msra.mxu0 %v1008
    %5622 = vmatpush.bf16.msra.mxu0 %v1000
    %5623 = vmatpush.bf16.msra.mxu0 %v992
    %5624 = vmatpush.bf16.msra.mxu0 %v984
    %5625 = vmatpush.bf16.msra.mxu0 %v976
    %5626 = vmatpush.bf16.msra.mxu0 %v968
    %5627 = vmatmul.bf16.gmra.mxu0 %v4910
    %v5628 = vpop.f32.mrf.mxu0
    %v5629 = vadd.f32 0.0, %v5628
    %v5630 = vpop.f32.mrf.mxu0
    %5631 = vdwg.mxu0
    %5632 = vmatpush.bf16.msra.mxu0 %v1088
    %5633 = vmatpush.bf16.msra.mxu0 %v1080
    %5634 = vmatpush.bf16.msra.mxu0 %v1072
    %5635 = vmatpush.bf16.msra.mxu0 %v1064
    %5636 = vmatpush.bf16.msra.mxu0 %v1056
    %5637 = vmatpush.bf16.msra.mxu0 %v1048
    %5638 = vmatpush.bf16.msra.mxu0 %v1040
    %5639 = vmatpush.bf16.msra.mxu0 %v1032
    %5640 = vmatmul.bf16.gmra.mxu0 %v4911
    %v5641 = vpop.f32.mrf.mxu0
    %v5642 = vadd.f32 %v5629, %v5641
    %v5643 = vpop.f32.mrf.mxu0
    %5644 = vdwg.mxu0
    %5645 = vmatpush.bf16.msra.mxu0 %v1025
    %5646 = vmatpush.bf16.msra.mxu0 %v1017
    %5647 = vmatpush.bf16.msra.mxu0 %v1009
    %5648 = vmatpush.bf16.msra.mxu0 %v1001
    %5649 = vmatpush.bf16.msra.mxu0 %v993
    %5650 = vmatpush.bf16.msra.mxu0 %v985
    %5651 = vmatpush.bf16.msra.mxu0 %v977
    %5652 = vmatpush.bf16.msra.mxu0 %v969
    %5653 = vmatmul.bf16.gmra.mxu0 %v4910
    %v5654 = vpop.f32.mrf.mxu0
    %v5655 = vadd.f32 0.0, %v5654
    %v5656 = vpop.f32.mrf.mxu0
    %5657 = vdwg.mxu0
    %5658 = vmatpush.bf16.msra.mxu0 %v1089
    %5659 = vmatpush.bf16.msra.mxu0 %v1081
    %5660 = vmatpush.bf16.msra.mxu0 %v1073
    %5661 = vmatpush.bf16.msra.mxu0 %v1065
    %5662 = vmatpush.bf16.msra.mxu0 %v1057
    %5663 = vmatpush.bf16.msra.mxu0 %v1049
    %5664 = vmatpush.bf16.msra.mxu0 %v1041
    %5665 = vmatpush.bf16.msra.mxu0 %v1033
    %5666 = vmatmul.bf16.gmra.mxu0 %v4911
    %v5667 = vpop.f32.mrf.mxu0
    %v5668 = vadd.f32 %v5655, %v5667
    %v5669 = vpop.f32.mrf.mxu0
    %5670 = vdwg.mxu0
    %v5671 = vadd.f32 %v234, %v5486
    %v5672 = vadd.f32 %v263, %v5512
    %v5673 = vadd.f32 %v292, %v5538
    %v5674 = vadd.f32 %v321, %v5564
    %v5675 = vadd.f32 %v350, %v5590
    %v5676 = vadd.f32 %v379, %v5616
    %v5677 = vadd.f32 %v408, %v5642
    %v5678 = vadd.f32 %v437, %v5668
    %v5679 = vxor.u32 %v5671, 2147483648
    %v5680 = vxor.u32 %v5672, 2147483648
    %v5681 = vmul.f32 %v5679, 1.442695
    %v5682 = vpow.pop %v5681
    %v5683 = vmul.f32 %v5680, 1.442695
    %v5684 = vpow.pop %v5683
    %v5685 = vadd.f32 %v5682, 1.0
    %v5686 = vadd.f32 %v5684, 1.0
    %v5687 = vrcp.pop %v5685
    %v5688 = vmul.f32 %v5685, %v5687
    %v5689 = vsub.f32 1.0, %v5688
    %v5690 = vmul.f32 %v5687, %v5689
    %v5691 = vadd.f32 %v5687, %v5690
    %vm5692 = vweird.f32 %v5685
    %vm5693 = vweird.f32 %v5687
    %vm5694 = vmor %vm5692, %vm5693
    %v5695 = vsel %vm5694, %v5687, %v5691
    %v5696 = vand.u32 2147483647, %v5685
    %vm5697 = vcmp.eq.f32.partialorder %v5696, 8.507059e+37
    %v5698 = vand.u32 %v5685, 2147483648
    %v5699 = vor.u32 1.1754944e-38, %v5698
    %v5700 = vsel %vm5697, %v5699, %v5695
    %v5701 = vmul.f32 1.0, %v5700
    %v5702 = vrcp.pop %v5686
    %v5703 = vmul.f32 %v5686, %v5702
    %v5704 = vsub.f32 1.0, %v5703
    %v5705 = vmul.f32 %v5702, %v5704
    %v5706 = vadd.f32 %v5702, %v5705
    %vm5707 = vweird.f32 %v5686
    %vm5708 = vweird.f32 %v5702
    %vm5709 = vmor %vm5707, %vm5708
    %v5710 = vsel %vm5709, %v5702, %v5706
    %v5711 = vand.u32 2147483647, %v5686
    %vm5712 = vcmp.eq.f32.partialorder %v5711, 8.507059e+37
    %v5713 = vand.u32 %v5686, 2147483648
    %v5714 = vor.u32 1.1754944e-38, %v5713
    %v5715 = vsel %vm5712, %v5714, %v5710
    %v5716 = vmul.f32 1.0, %v5715
    %v5717 = vxor.u32 %v5673, 2147483648
    %v5718 = vxor.u32 %v5674, 2147483648
    %v5719 = vmul.f32 %v5717, 1.442695
    %v5720 = vpow.pop %v5719
    %v5721 = vmul.f32 %v5718, 1.442695
    %v5722 = vpow.pop %v5721
    %v5723 = vadd.f32 %v5720, 1.0
    %v5724 = vadd.f32 %v5722, 1.0
    %v5725 = vrcp.pop %v5723
    %v5726 = vmul.f32 %v5723, %v5725
    %v5727 = vsub.f32 1.0, %v5726
    %v5728 = vmul.f32 %v5725, %v5727
    %v5729 = vadd.f32 %v5725, %v5728
    %vm5730 = vweird.f32 %v5723
    %vm5731 = vweird.f32 %v5725
    %vm5732 = vmor %vm5730, %vm5731
    %v5733 = vsel %vm5732, %v5725, %v5729
    %v5734 = vand.u32 2147483647, %v5723
    %vm5735 = vcmp.eq.f32.partialorder %v5734, 8.507059e+37
    %v5736 = vand.u32 %v5723, 2147483648
    %v5737 = vor.u32 1.1754944e-38, %v5736
    %v5738 = vsel %vm5735, %v5737, %v5733
    %v5739 = vmul.f32 1.0, %v5738
    %v5740 = vrcp.pop %v5724
    %v5741 = vmul.f32 %v5724, %v5740
    %v5742 = vsub.f32 1.0, %v5741
    %v5743 = vmul.f32 %v5740, %v5742
    %v5744 = vadd.f32 %v5740, %v5743
    %vm5745 = vweird.f32 %v5724
    %vm5746 = vweird.f32 %v5740
    %vm5747 = vmor %vm5745, %vm5746
    %v5748 = vsel %vm5747, %v5740, %v5744
    %v5749 = vand.u32 2147483647, %v5724
    %vm5750 = vcmp.eq.f32.partialorder %v5749, 8.507059e+37
    %v5751 = vand.u32 %v5724, 2147483648
    %v5752 = vor.u32 1.1754944e-38, %v5751
    %v5753 = vsel %vm5750, %v5752, %v5748
    %v5754 = vmul.f32 1.0, %v5753
    %v5755 = vtanh.pop %v5675
    %v5756 = vtanh.pop %v5676
    %v5757 = vxor.u32 %v5677, 2147483648
    %v5758 = vxor.u32 %v5678, 2147483648
    %v5759 = vmul.f32 %v5757, 1.442695
    %v5760 = vpow.pop %v5759
    %v5761 = vmul.f32 %v5758, 1.442695
    %v5762 = vpow.pop %v5761
    %v5763 = vadd.f32 %v5760, 1.0
    %v5764 = vadd.f32 %v5762, 1.0
    %v5765 = vrcp.pop %v5763
    %v5766 = vmul.f32 %v5763, %v5765
    %v5767 = vsub.f32 1.0, %v5766
    %v5768 = vmul.f32 %v5765, %v5767
    %v5769 = vadd.f32 %v5765, %v5768
    %vm5770 = vweird.f32 %v5763
    %vm5771 = vweird.f32 %v5765
    %vm5772 = vmor %vm5770, %vm5771
    %v5773 = vsel %vm5772, %v5765, %v5769
    %v5774 = vand.u32 2147483647, %v5763
    %vm5775 = vcmp.eq.f32.partialorder %v5774, 8.507059e+37
    %v5776 = vand.u32 %v5763, 2147483648
    %v5777 = vor.u32 1.1754944e-38, %v5776
    %v5778 = vsel %vm5775, %v5777, %v5773
    %v5779 = vmul.f32 1.0, %v5778
    %v5780 = vrcp.pop %v5764
    %v5781 = vmul.f32 %v5764, %v5780
    %v5782 = vsub.f32 1.0, %v5781
    %v5783 = vmul.f32 %v5780, %v5782
    %v5784 = vadd.f32 %v5780, %v5783
    %vm5785 = vweird.f32 %v5764
    %vm5786 = vweird.f32 %v5780
    %vm5787 = vmor %vm5785, %vm5786
    %v5788 = vsel %vm5787, %v5780, %v5784
    %v5789 = vand.u32 2147483647, %v5764
    %vm5790 = vcmp.eq.f32.partialorder %v5789, 8.507059e+37
    %v5791 = vand.u32 %v5764, 2147483648
    %v5792 = vor.u32 1.1754944e-38, %v5791
    %v5793 = vsel %vm5790, %v5792, %v5788
    %v5794 = vmul.f32 1.0, %v5793
    %v5795 = vmul.f32 %v5739, %v4899
    %v5796 = vmul.f32 %v5754, %v4900
    %v5797 = vmul.f32 %v5701, %v5755
    %v5798 = vmul.f32 %v5716, %v5756
    %v5799 = vadd.f32 %v5795, %v5797
    %v5800 = vadd.f32 %v5796, %v5798
    %v5801 = vtanh.pop %v5799
    %v5802 = vtanh.pop %v5800
    %v5803 = vmul.f32 %v5779, %v5801
    %v5804 = vmul.f32 %v5794, %v5802
    %v5805 = vpack.c.bf16 %v5804, %v5803
    %v5806 = vpack.c.bf16 %v5462, %v5461
    %v5808 = vunpack.c.l.b16 %v5805
    %v5809 = vunpack.c.h.b16 %v5805
    %v5810 = vpack.c.b16 %v5808, %v5808
    %v5811 = vpack.c.b16 %v5809, %v5809
    %v5815 = vunpack.c.l.b16 %v5806
    %v5816 = vunpack.c.h.b16 %v5806
    %v5817 = vpack.c.b16 %v5815, %v5815
    %v5818 = vpack.c.b16 %v5816, %v5816
    %5821 = vmatpush.bf16.msra.mxu0 %v2665
    %5822 = vmatpush.bf16.msra.mxu0 %v2657
    %5823 = vmatpush.bf16.msra.mxu0 %v2649
    %5824 = vmatpush.bf16.msra.mxu0 %v2641
    %5825 = vmatpush.bf16.msra.mxu0 %v2633
    %5826 = vmatpush.bf16.msra.mxu0 %v2625
    %5827 = vmatpush.bf16.msra.mxu0 %v2617
    %5828 = vmatpush.bf16.msra.mxu0 %v2609
    %5829 = vmatmul.bf16.gmra.mxu0 %v5810
    %v5830 = vpop.f32.mrf.mxu0
    %v5831 = vadd.f32 %v1825, %v5830
    %v5832 = vpop.f32.mrf.mxu0
    %5833 = vdwg.mxu0
    %5834 = vmatpush.bf16.msra.mxu0 %v2729
    %5835 = vmatpush.bf16.msra.mxu0 %v2721
    %5836 = vmatpush.bf16.msra.mxu0 %v2713
    %5837 = vmatpush.bf16.msra.mxu0 %v2705
    %5838 = vmatpush.bf16.msra.mxu0 %v2697
    %5839 = vmatpush.bf16.msra.mxu0 %v2689
    %5840 = vmatpush.bf16.msra.mxu0 %v2681
    %5841 = vmatpush.bf16.msra.mxu0 %v2673
    %5842 = vmatmul.bf16.gmra.mxu0 %v5811
    %v5843 = vpop.f32.mrf.mxu0
    %v5844 = vadd.f32 %v5831, %v5843
    %v5845 = vpop.f32.mrf.mxu0
    %5846 = vdwg.mxu0
    %5847 = vmatpush.bf16.msra.mxu0 %v2793
    %5848 = vmatpush.bf16.msra.mxu0 %v2785
    %5849 = vmatpush.bf16.msra.mxu0 %v2777
    %5850 = vmatpush.bf16.msra.mxu0 %v2769
    %5851 = vmatpush.bf16.msra.mxu0 %v2761
    %5852 = vmatpush.bf16.msra.mxu0 %v2753
    %5853 = vmatpush.bf16.msra.mxu0 %v2745
    %5854 = vmatpush.bf16.msra.mxu0 %v2737
    %5855 = vmatmul.bf16.gmra.mxu0 %v5817
    %v5856 = vpop.f32.mrf.mxu0
    %v5857 = vadd.f32 %v5844, %v5856
    %v5858 = vpop.f32.mrf.mxu0
    %5859 = vdwg.mxu0
    %5860 = vmatpush.bf16.msra.mxu0 %v2857
    %5861 = vmatpush.bf16.msra.mxu0 %v2849
    %5862 = vmatpush.bf16.msra.mxu0 %v2841
    %5863 = vmatpush.bf16.msra.mxu0 %v2833
    %5864 = vmatpush.bf16.msra.mxu0 %v2825
    %5865 = vmatpush.bf16.msra.mxu0 %v2817
    %5866 = vmatpush.bf16.msra.mxu0 %v2809
    %5867 = vmatpush.bf16.msra.mxu0 %v2801
    %5868 = vmatmul.bf16.gmra.mxu0 %v5818
    %v5869 = vpop.f32.mrf.mxu0
    %v5870 = vadd.f32 %v5857, %v5869
    %v5871 = vpop.f32.mrf.mxu0
    %5872 = vdwg.mxu0
    %5873 = vmatpush.bf16.msra.mxu0 %v2666
    %5874 = vmatpush.bf16.msra.mxu0 %v2658
    %5875 = vmatpush.bf16.msra.mxu0 %v2650
    %5876 = vmatpush.bf16.msra.mxu0 %v2642
    %5877 = vmatpush.bf16.msra.mxu0 %v2634
    %5878 = vmatpush.bf16.msra.mxu0 %v2626
    %5879 = vmatpush.bf16.msra.mxu0 %v2618
    %5880 = vmatpush.bf16.msra.mxu0 %v2610
    %5881 = vmatmul.bf16.gmra.mxu0 %v5810
    %v5882 = vpop.f32.mrf.mxu0
    %v5883 = vadd.f32 %v1826, %v5882
    %v5884 = vpop.f32.mrf.mxu0
    %5885 = vdwg.mxu0
    %5886 = vmatpush.bf16.msra.mxu0 %v2730
    %5887 = vmatpush.bf16.msra.mxu0 %v2722
    %5888 = vmatpush.bf16.msra.mxu0 %v2714
    %5889 = vmatpush.bf16.msra.mxu0 %v2706
    %5890 = vmatpush.bf16.msra.mxu0 %v2698
    %5891 = vmatpush.bf16.msra.mxu0 %v2690
    %5892 = vmatpush.bf16.msra.mxu0 %v2682
    %5893 = vmatpush.bf16.msra.mxu0 %v2674
    %5894 = vmatmul.bf16.gmra.mxu0 %v5811
    %v5895 = vpop.f32.mrf.mxu0
    %v5896 = vadd.f32 %v5883, %v5895
    %v5897 = vpop.f32.mrf.mxu0
    %5898 = vdwg.mxu0
    %5899 = vmatpush.bf16.msra.mxu0 %v2794
    %5900 = vmatpush.bf16.msra.mxu0 %v2786
    %5901 = vmatpush.bf16.msra.mxu0 %v2778
    %5902 = vmatpush.bf16.msra.mxu0 %v2770
    %5903 = vmatpush.bf16.msra.mxu0 %v2762
    %5904 = vmatpush.bf16.msra.mxu0 %v2754
    %5905 = vmatpush.bf16.msra.mxu0 %v2746
    %5906 = vmatpush.bf16.msra.mxu0 %v2738
    %5907 = vmatmul.bf16.gmra.mxu0 %v5817
    %v5908 = vpop.f32.mrf.mxu0
    %v5909 = vadd.f32 %v5896, %v5908
    %v5910 = vpop.f32.mrf.mxu0
    %5911 = vdwg.mxu0
    %5912 = vmatpush.bf16.msra.mxu0 %v2858
    %5913 = vmatpush.bf16.msra.mxu0 %v2850
    %5914 = vmatpush.bf16.msra.mxu0 %v2842
    %5915 = vmatpush.bf16.msra.mxu0 %v2834
    %5916 = vmatpush.bf16.msra.mxu0 %v2826
    %5917 = vmatpush.bf16.msra.mxu0 %v2818
    %5918 = vmatpush.bf16.msra.mxu0 %v2810
    %5919 = vmatpush.bf16.msra.mxu0 %v2802
    %5920 = vmatmul.bf16.gmra.mxu0 %v5818
    %v5921 = vpop.f32.mrf.mxu0
    %v5922 = vadd.f32 %v5909, %v5921
    %v5923 = vpop.f32.mrf.mxu0
    %5924 = vdwg.mxu0
    %5925 = vmatpush.bf16.msra.mxu0 %v2667
    %5926 = vmatpush.bf16.msra.mxu0 %v2659
    %5927 = vmatpush.bf16.msra.mxu0 %v2651
    %5928 = vmatpush.bf16.msra.mxu0 %v2643
    %5929 = vmatpush.bf16.msra.mxu0 %v2635
    %5930 = vmatpush.bf16.msra.mxu0 %v2627
    %5931 = vmatpush.bf16.msra.mxu0 %v2619
    %5932 = vmatpush.bf16.msra.mxu0 %v2611
    %5933 = vmatmul.bf16.gmra.mxu0 %v5810
    %v5934 = vpop.f32.mrf.mxu0
    %v5935 = vadd.f32 %v1827, %v5934
    %v5936 = vpop.f32.mrf.mxu0
    %5937 = vdwg.mxu0
    %5938 = vmatpush.bf16.msra.mxu0 %v2731
    %5939 = vmatpush.bf16.msra.mxu0 %v2723
    %5940 = vmatpush.bf16.msra.mxu0 %v2715
    %5941 = vmatpush.bf16.msra.mxu0 %v2707
    %5942 = vmatpush.bf16.msra.mxu0 %v2699
    %5943 = vmatpush.bf16.msra.mxu0 %v2691
    %5944 = vmatpush.bf16.msra.mxu0 %v2683
    %5945 = vmatpush.bf16.msra.mxu0 %v2675
    %5946 = vmatmul.bf16.gmra.mxu0 %v5811
    %v5947 = vpop.f32.mrf.mxu0
    %v5948 = vadd.f32 %v5935, %v5947
    %v5949 = vpop.f32.mrf.mxu0
    %5950 = vdwg.mxu0
    %5951 = vmatpush.bf16.msra.mxu0 %v2795
    %5952 = vmatpush.bf16.msra.mxu0 %v2787
    %5953 = vmatpush.bf16.msra.mxu0 %v2779
    %5954 = vmatpush.bf16.msra.mxu0 %v2771
    %5955 = vmatpush.bf16.msra.mxu0 %v2763
    %5956 = vmatpush.bf16.msra.mxu0 %v2755
    %5957 = vmatpush.bf16.msra.mxu0 %v2747
    %5958 = vmatpush.bf16.msra.mxu0 %v2739
    %5959 = vmatmul.bf16.gmra.mxu0 %v5817
    %v5960 = vpop.f32.mrf.mxu0
    %v5961 = vadd.f32 %v5948, %v5960
    %v5962 = vpop.f32.mrf.mxu0
    %5963 = vdwg.mxu0
    %5964 = vmatpush.bf16.msra.mxu0 %v2859
    %5965 = vmatpush.bf16.msra.mxu0 %v2851
    %5966 = vmatpush.bf16.msra.mxu0 %v2843
    %5967 = vmatpush.bf16.msra.mxu0 %v2835
    %5968 = vmatpush.bf16.msra.mxu0 %v2827
    %5969 = vmatpush.bf16.msra.mxu0 %v2819
    %5970 = vmatpush.bf16.msra.mxu0 %v2811
    %5971 = vmatpush.bf16.msra.mxu0 %v2803
    %5972 = vmatmul.bf16.gmra.mxu0 %v5818
    %v5973 = vpop.f32.mrf.mxu0
    %v5974 = vadd.f32 %v5961, %v5973
    %v5975 = vpop.f32.mrf.mxu0
    %5976 = vdwg.mxu0
    %5977 = vmatpush.bf16.msra.mxu0 %v2668
    %5978 = vmatpush.bf16.msra.mxu0 %v2660
    %5979 = vmatpush.bf16.msra.mxu0 %v2652
    %5980 = vmatpush.bf16.msra.mxu0 %v2644
    %5981 = vmatpush.bf16.msra.mxu0 %v2636
    %5982 = vmatpush.bf16.msra.mxu0 %v2628
    %5983 = vmatpush.bf16.msra.mxu0 %v2620
    %5984 = vmatpush.bf16.msra.mxu0 %v2612
    %5985 = vmatmul.bf16.gmra.mxu0 %v5810
    %v5986 = vpop.f32.mrf.mxu0
    %v5987 = vadd.f32 %v1828, %v5986
    %v5988 = vpop.f32.mrf.mxu0
    %5989 = vdwg.mxu0
    %5990 = vmatpush.bf16.msra.mxu0 %v2732
    %5991 = vmatpush.bf16.msra.mxu0 %v2724
    %5992 = vmatpush.bf16.msra.mxu0 %v2716
    %5993 = vmatpush.bf16.msra.mxu0 %v2708
    %5994 = vmatpush.bf16.msra.mxu0 %v2700
    %5995 = vmatpush.bf16.msra.mxu0 %v2692
    %5996 = vmatpush.bf16.msra.mxu0 %v2684
    %5997 = vmatpush.bf16.msra.mxu0 %v2676
    %5998 = vmatmul.bf16.gmra.mxu0 %v5811
    %v5999 = vpop.f32.mrf.mxu0
    %v6000 = vadd.f32 %v5987, %v5999
    %v6001 = vpop.f32.mrf.mxu0
    %6002 = vdwg.mxu0
    %6003 = vmatpush.bf16.msra.mxu0 %v2796
    %6004 = vmatpush.bf16.msra.mxu0 %v2788
    %6005 = vmatpush.bf16.msra.mxu0 %v2780
    %6006 = vmatpush.bf16.msra.mxu0 %v2772
    %6007 = vmatpush.bf16.msra.mxu0 %v2764
    %6008 = vmatpush.bf16.msra.mxu0 %v2756
    %6009 = vmatpush.bf16.msra.mxu0 %v2748
    %6010 = vmatpush.bf16.msra.mxu0 %v2740
    %6011 = vmatmul.bf16.gmra.mxu0 %v5817
    %v6012 = vpop.f32.mrf.mxu0
    %v6013 = vadd.f32 %v6000, %v6012
    %v6014 = vpop.f32.mrf.mxu0
    %6015 = vdwg.mxu0
    %6016 = vmatpush.bf16.msra.mxu0 %v2860
    %6017 = vmatpush.bf16.msra.mxu0 %v2852
    %6018 = vmatpush.bf16.msra.mxu0 %v2844
    %6019 = vmatpush.bf16.msra.mxu0 %v2836
    %6020 = vmatpush.bf16.msra.mxu0 %v2828
    %6021 = vmatpush.bf16.msra.mxu0 %v2820
    %6022 = vmatpush.bf16.msra.mxu0 %v2812
    %6023 = vmatpush.bf16.msra.mxu0 %v2804
    %6024 = vmatmul.bf16.gmra.mxu0 %v5818
    %v6025 = vpop.f32.mrf.mxu0
    %v6026 = vadd.f32 %v6013, %v6025
    %v6027 = vpop.f32.mrf.mxu0
    %6028 = vdwg.mxu0
    %6029 = vmatpush.bf16.msra.mxu0 %v2669
    %6030 = vmatpush.bf16.msra.mxu0 %v2661
    %6031 = vmatpush.bf16.msra.mxu0 %v2653
    %6032 = vmatpush.bf16.msra.mxu0 %v2645
    %6033 = vmatpush.bf16.msra.mxu0 %v2637
    %6034 = vmatpush.bf16.msra.mxu0 %v2629
    %6035 = vmatpush.bf16.msra.mxu0 %v2621
    %6036 = vmatpush.bf16.msra.mxu0 %v2613
    %6037 = vmatmul.bf16.gmra.mxu0 %v5810
    %v6038 = vpop.f32.mrf.mxu0
    %v6039 = vadd.f32 %v1829, %v6038
    %v6040 = vpop.f32.mrf.mxu0
    %6041 = vdwg.mxu0
    %6042 = vmatpush.bf16.msra.mxu0 %v2733
    %6043 = vmatpush.bf16.msra.mxu0 %v2725
    %6044 = vmatpush.bf16.msra.mxu0 %v2717
    %6045 = vmatpush.bf16.msra.mxu0 %v2709
    %6046 = vmatpush.bf16.msra.mxu0 %v2701
    %6047 = vmatpush.bf16.msra.mxu0 %v2693
    %6048 = vmatpush.bf16.msra.mxu0 %v2685
    %6049 = vmatpush.bf16.msra.mxu0 %v2677
    %6050 = vmatmul.bf16.gmra.mxu0 %v5811
    %v6051 = vpop.f32.mrf.mxu0
    %v6052 = vadd.f32 %v6039, %v6051
    %v6053 = vpop.f32.mrf.mxu0
    %6054 = vdwg.mxu0
    %6055 = vmatpush.bf16.msra.mxu0 %v2797
    %6056 = vmatpush.bf16.msra.mxu0 %v2789
    %6057 = vmatpush.bf16.msra.mxu0 %v2781
    %6058 = vmatpush.bf16.msra.mxu0 %v2773
    %6059 = vmatpush.bf16.msra.mxu0 %v2765
    %6060 = vmatpush.bf16.msra.mxu0 %v2757
    %6061 = vmatpush.bf16.msra.mxu0 %v2749
    %6062 = vmatpush.bf16.msra.mxu0 %v2741
    %6063 = vmatmul.bf16.gmra.mxu0 %v5817
    %v6064 = vpop.f32.mrf.mxu0
    %v6065 = vadd.f32 %v6052, %v6064
    %v6066 = vpop.f32.mrf.mxu0
    %6067 = vdwg.mxu0
    %6068 = vmatpush.bf16.msra.mxu0 %v2861
    %6069 = vmatpush.bf16.msra.mxu0 %v2853
    %6070 = vmatpush.bf16.msra.mxu0 %v2845
    %6071 = vmatpush.bf16.msra.mxu0 %v2837
    %6072 = vmatpush.bf16.msra.mxu0 %v2829
    %6073 = vmatpush.bf16.msra.mxu0 %v2821
    %6074 = vmatpush.bf16.msra.mxu0 %v2813
    %6075 = vmatpush.bf16.msra.mxu0 %v2805
    %6076 = vmatmul.bf16.gmra.mxu0 %v5818
    %v6077 = vpop.f32.mrf.mxu0
    %v6078 = vadd.f32 %v6065, %v6077
    %v6079 = vpop.f32.mrf.mxu0
    %6080 = vdwg.mxu0
    %6081 = vmatpush.bf16.msra.mxu0 %v2670
    %6082 = vmatpush.bf16.msra.mxu0 %v2662
    %6083 = vmatpush.bf16.msra.mxu0 %v2654
    %6084 = vmatpush.bf16.msra.mxu0 %v2646
    %6085 = vmatpush.bf16.msra.mxu0 %v2638
    %6086 = vmatpush.bf16.msra.mxu0 %v2630
    %6087 = vmatpush.bf16.msra.mxu0 %v2622
    %6088 = vmatpush.bf16.msra.mxu0 %v2614
    %6089 = vmatmul.bf16.gmra.mxu0 %v5810
    %v6090 = vpop.f32.mrf.mxu0
    %v6091 = vadd.f32 %v1830, %v6090
    %v6092 = vpop.f32.mrf.mxu0
    %6093 = vdwg.mxu0
    %6094 = vmatpush.bf16.msra.mxu0 %v2734
    %6095 = vmatpush.bf16.msra.mxu0 %v2726
    %6096 = vmatpush.bf16.msra.mxu0 %v2718
    %6097 = vmatpush.bf16.msra.mxu0 %v2710
    %6098 = vmatpush.bf16.msra.mxu0 %v2702
    %6099 = vmatpush.bf16.msra.mxu0 %v2694
    %6100 = vmatpush.bf16.msra.mxu0 %v2686
    %6101 = vmatpush.bf16.msra.mxu0 %v2678
    %6102 = vmatmul.bf16.gmra.mxu0 %v5811
    %v6103 = vpop.f32.mrf.mxu0
    %v6104 = vadd.f32 %v6091, %v6103
    %v6105 = vpop.f32.mrf.mxu0
    %6106 = vdwg.mxu0
    %6107 = vmatpush.bf16.msra.mxu0 %v2798
    %6108 = vmatpush.bf16.msra.mxu0 %v2790
    %6109 = vmatpush.bf16.msra.mxu0 %v2782
    %6110 = vmatpush.bf16.msra.mxu0 %v2774
    %6111 = vmatpush.bf16.msra.mxu0 %v2766
    %6112 = vmatpush.bf16.msra.mxu0 %v2758
    %6113 = vmatpush.bf16.msra.mxu0 %v2750
    %6114 = vmatpush.bf16.msra.mxu0 %v2742
    %6115 = vmatmul.bf16.gmra.mxu0 %v5817
    %v6116 = vpop.f32.mrf.mxu0
    %v6117 = vadd.f32 %v6104, %v6116
    %v6118 = vpop.f32.mrf.mxu0
    %6119 = vdwg.mxu0
    %6120 = vmatpush.bf16.msra.mxu0 %v2862
    %6121 = vmatpush.bf16.msra.mxu0 %v2854
    %6122 = vmatpush.bf16.msra.mxu0 %v2846
    %6123 = vmatpush.bf16.msra.mxu0 %v2838
    %6124 = vmatpush.bf16.msra.mxu0 %v2830
    %6125 = vmatpush.bf16.msra.mxu0 %v2822
    %6126 = vmatpush.bf16.msra.mxu0 %v2814
    %6127 = vmatpush.bf16.msra.mxu0 %v2806
    %6128 = vmatmul.bf16.gmra.mxu0 %v5818
    %v6129 = vpop.f32.mrf.mxu0
    %v6130 = vadd.f32 %v6117, %v6129
    %v6131 = vpop.f32.mrf.mxu0
    %6132 = vdwg.mxu0
    %6133 = vmatpush.bf16.msra.mxu0 %v2671
    %6134 = vmatpush.bf16.msra.mxu0 %v2663
    %6135 = vmatpush.bf16.msra.mxu0 %v2655
    %6136 = vmatpush.bf16.msra.mxu0 %v2647
    %6137 = vmatpush.bf16.msra.mxu0 %v2639
    %6138 = vmatpush.bf16.msra.mxu0 %v2631
    %6139 = vmatpush.bf16.msra.mxu0 %v2623
    %6140 = vmatpush.bf16.msra.mxu0 %v2615
    %6141 = vmatmul.bf16.gmra.mxu0 %v5810
    %v6142 = vpop.f32.mrf.mxu0
    %v6143 = vadd.f32 %v1831, %v6142
    %v6144 = vpop.f32.mrf.mxu0
    %6145 = vdwg.mxu0
    %6146 = vmatpush.bf16.msra.mxu0 %v2735
    %6147 = vmatpush.bf16.msra.mxu0 %v2727
    %6148 = vmatpush.bf16.msra.mxu0 %v2719
    %6149 = vmatpush.bf16.msra.mxu0 %v2711
    %6150 = vmatpush.bf16.msra.mxu0 %v2703
    %6151 = vmatpush.bf16.msra.mxu0 %v2695
    %6152 = vmatpush.bf16.msra.mxu0 %v2687
    %6153 = vmatpush.bf16.msra.mxu0 %v2679
    %6154 = vmatmul.bf16.gmra.mxu0 %v5811
    %v6155 = vpop.f32.mrf.mxu0
    %v6156 = vadd.f32 %v6143, %v6155
    %v6157 = vpop.f32.mrf.mxu0
    %6158 = vdwg.mxu0
    %6159 = vmatpush.bf16.msra.mxu0 %v2799
    %6160 = vmatpush.bf16.msra.mxu0 %v2791
    %6161 = vmatpush.bf16.msra.mxu0 %v2783
    %6162 = vmatpush.bf16.msra.mxu0 %v2775
    %6163 = vmatpush.bf16.msra.mxu0 %v2767
    %6164 = vmatpush.bf16.msra.mxu0 %v2759
    %6165 = vmatpush.bf16.msra.mxu0 %v2751
    %6166 = vmatpush.bf16.msra.mxu0 %v2743
    %6167 = vmatmul.bf16.gmra.mxu0 %v5817
    %v6168 = vpop.f32.mrf.mxu0
    %v6169 = vadd.f32 %v6156, %v6168
    %v6170 = vpop.f32.mrf.mxu0
    %6171 = vdwg.mxu0
    %6172 = vmatpush.bf16.msra.mxu0 %v2863
    %6173 = vmatpush.bf16.msra.mxu0 %v2855
    %6174 = vmatpush.bf16.msra.mxu0 %v2847
    %6175 = vmatpush.bf16.msra.mxu0 %v2839
    %6176 = vmatpush.bf16.msra.mxu0 %v2831
    %6177 = vmatpush.bf16.msra.mxu0 %v2823
    %6178 = vmatpush.bf16.msra.mxu0 %v2815
    %6179 = vmatpush.bf16.msra.mxu0 %v2807
    %6180 = vmatmul.bf16.gmra.mxu0 %v5818
    %v6181 = vpop.f32.mrf.mxu0
    %v6182 = vadd.f32 %v6169, %v6181
    %v6183 = vpop.f32.mrf.mxu0
    %6184 = vdwg.mxu0
    %6185 = vmatpush.bf16.msra.mxu0 %v2672
    %6186 = vmatpush.bf16.msra.mxu0 %v2664
    %6187 = vmatpush.bf16.msra.mxu0 %v2656
    %6188 = vmatpush.bf16.msra.mxu0 %v2648
    %6189 = vmatpush.bf16.msra.mxu0 %v2640
    %6190 = vmatpush.bf16.msra.mxu0 %v2632
    %6191 = vmatpush.bf16.msra.mxu0 %v2624
    %6192 = vmatpush.bf16.msra.mxu0 %v2616
    %6193 = vmatmul.bf16.gmra.mxu0 %v5810
    %v6194 = vpop.f32.mrf.mxu0
    %v6195 = vadd.f32 %v1832, %v6194
    %v6196 = vpop.f32.mrf.mxu0
    %6197 = vdwg.mxu0
    %6198 = vmatpush.bf16.msra.mxu0 %v2736
    %6199 = vmatpush.bf16.msra.mxu0 %v2728
    %6200 = vmatpush.bf16.msra.mxu0 %v2720
    %6201 = vmatpush.bf16.msra.mxu0 %v2712
    %6202 = vmatpush.bf16.msra.mxu0 %v2704
    %6203 = vmatpush.bf16.msra.mxu0 %v2696
    %6204 = vmatpush.bf16.msra.mxu0 %v2688
    %6205 = vmatpush.bf16.msra.mxu0 %v2680
    %6206 = vmatmul.bf16.gmra.mxu0 %v5811
    %v6207 = vpop.f32.mrf.mxu0
    %v6208 = vadd.f32 %v6195, %v6207
    %v6209 = vpop.f32.mrf.mxu0
    %6210 = vdwg.mxu0
    %6211 = vmatpush.bf16.msra.mxu0 %v2800
    %6212 = vmatpush.bf16.msra.mxu0 %v2792
    %6213 = vmatpush.bf16.msra.mxu0 %v2784
    %6214 = vmatpush.bf16.msra.mxu0 %v2776
    %6215 = vmatpush.bf16.msra.mxu0 %v2768
    %6216 = vmatpush.bf16.msra.mxu0 %v2760
    %6217 = vmatpush.bf16.msra.mxu0 %v2752
    %6218 = vmatpush.bf16.msra.mxu0 %v2744
    %6219 = vmatmul.bf16.gmra.mxu0 %v5817
    %v6220 = vpop.f32.mrf.mxu0
    %v6221 = vadd.f32 %v6208, %v6220
    %v6222 = vpop.f32.mrf.mxu0
    %6223 = vdwg.mxu0
    %6224 = vmatpush.bf16.msra.mxu0 %v2864
    %6225 = vmatpush.bf16.msra.mxu0 %v2856
    %6226 = vmatpush.bf16.msra.mxu0 %v2848
    %6227 = vmatpush.bf16.msra.mxu0 %v2840
    %6228 = vmatpush.bf16.msra.mxu0 %v2832
    %6229 = vmatpush.bf16.msra.mxu0 %v2824
    %6230 = vmatpush.bf16.msra.mxu0 %v2816
    %6231 = vmatpush.bf16.msra.mxu0 %v2808
    %6232 = vmatmul.bf16.gmra.mxu0 %v5818
    %v6233 = vpop.f32.mrf.mxu0
    %v6234 = vadd.f32 %v6221, %v6233
    %v6235 = vpop.f32.mrf.mxu0
    %6236 = vdwg.mxu0
    %v6237 = vxor.u32 %v5870, 2147483648
    %v6238 = vxor.u32 %v5922, 2147483648
    %v6239 = vmul.f32 %v6237, 1.442695
    %v6240 = vpow.pop %v6239
    %v6241 = vmul.f32 %v6238, 1.442695
    %v6242 = vpow.pop %v6241
    %v6243 = vadd.f32 %v6240, 1.0
    %v6244 = vadd.f32 %v6242, 1.0
    %v6245 = vrcp.pop %v6243
    %v6246 = vmul.f32 %v6243, %v6245
    %v6247 = vsub.f32 1.0, %v6246
    %v6248 = vmul.f32 %v6245, %v6247
    %v6249 = vadd.f32 %v6245, %v6248
    %vm6250 = vweird.f32 %v6243
    %vm6251 = vweird.f32 %v6245
    %vm6252 = vmor %vm6250, %vm6251
    %v6253 = vsel %vm6252, %v6245, %v6249
    %v6254 = vand.u32 2147483647, %v6243
    %vm6255 = vcmp.eq.f32.partialorder %v6254, 8.507059e+37
    %v6256 = vand.u32 %v6243, 2147483648
    %v6257 = vor.u32 1.1754944e-38, %v6256
    %v6258 = vsel %vm6255, %v6257, %v6253
    %v6259 = vmul.f32 1.0, %v6258
    %v6260 = vrcp.pop %v6244
    %v6261 = vmul.f32 %v6244, %v6260
    %v6262 = vsub.f32 1.0, %v6261
    %v6263 = vmul.f32 %v6260, %v6262
    %v6264 = vadd.f32 %v6260, %v6263
    %vm6265 = vweird.f32 %v6244
    %vm6266 = vweird.f32 %v6260
    %vm6267 = vmor %vm6265, %vm6266
    %v6268 = vsel %vm6267, %v6260, %v6264
    %v6269 = vand.u32 2147483647, %v6244
    %vm6270 = vcmp.eq.f32.partialorder %v6269, 8.507059e+37
    %v6271 = vand.u32 %v6244, 2147483648
    %v6272 = vor.u32 1.1754944e-38, %v6271
    %v6273 = vsel %vm6270, %v6272, %v6268
    %v6274 = vmul.f32 1.0, %v6273
    %v6275 = vxor.u32 %v5974, 2147483648
    %v6276 = vxor.u32 %v6026, 2147483648
    %v6277 = vmul.f32 %v6275, 1.442695
    %v6278 = vpow.pop %v6277
    %v6279 = vmul.f32 %v6276, 1.442695
    %v6280 = vpow.pop %v6279
    %v6281 = vadd.f32 %v6278, 1.0
    %v6282 = vadd.f32 %v6280, 1.0
    %v6283 = vrcp.pop %v6281
    %v6284 = vmul.f32 %v6281, %v6283
    %v6285 = vsub.f32 1.0, %v6284
    %v6286 = vmul.f32 %v6283, %v6285
    %v6287 = vadd.f32 %v6283, %v6286
    %vm6288 = vweird.f32 %v6281
    %vm6289 = vweird.f32 %v6283
    %vm6290 = vmor %vm6288, %vm6289
    %v6291 = vsel %vm6290, %v6283, %v6287
    %v6292 = vand.u32 2147483647, %v6281
    %vm6293 = vcmp.eq.f32.partialorder %v6292, 8.507059e+37
    %v6294 = vand.u32 %v6281, 2147483648
    %v6295 = vor.u32 1.1754944e-38, %v6294
    %v6296 = vsel %vm6293, %v6295, %v6291
    %v6297 = vmul.f32 1.0, %v6296
    %v6298 = vrcp.pop %v6282
    %v6299 = vmul.f32 %v6282, %v6298
    %v6300 = vsub.f32 1.0, %v6299
    %v6301 = vmul.f32 %v6298, %v6300
    %v6302 = vadd.f32 %v6298, %v6301
    %vm6303 = vweird.f32 %v6282
    %vm6304 = vweird.f32 %v6298
    %vm6305 = vmor %vm6303, %vm6304
    %v6306 = vsel %vm6305, %v6298, %v6302
    %v6307 = vand.u32 2147483647, %v6282
    %vm6308 = vcmp.eq.f32.partialorder %v6307, 8.507059e+37
    %v6309 = vand.u32 %v6282, 2147483648
    %v6310 = vor.u32 1.1754944e-38, %v6309
    %v6311 = vsel %vm6308, %v6310, %v6306
    %v6312 = vmul.f32 1.0, %v6311
    %v6313 = vtanh.pop %v6078
    %v6314 = vtanh.pop %v6130
    %v6315 = vxor.u32 %v6182, 2147483648
    %v6316 = vxor.u32 %v6234, 2147483648
    %v6317 = vmul.f32 %v6315, 1.442695
    %v6318 = vpow.pop %v6317
    %v6319 = vmul.f32 %v6316, 1.442695
    %v6320 = vpow.pop %v6319
    %v6321 = vadd.f32 %v6318, 1.0
    %v6322 = vadd.f32 %v6320, 1.0
    %v6323 = vrcp.pop %v6321
    %v6324 = vmul.f32 %v6321, %v6323
    %v6325 = vsub.f32 1.0, %v6324
    %v6326 = vmul.f32 %v6323, %v6325
    %v6327 = vadd.f32 %v6323, %v6326
    %vm6328 = vweird.f32 %v6321
    %vm6329 = vweird.f32 %v6323
    %vm6330 = vmor %vm6328, %vm6329
    %v6331 = vsel %vm6330, %v6323, %v6327
    %v6332 = vand.u32 2147483647, %v6321
    %vm6333 = vcmp.eq.f32.partialorder %v6332, 8.507059e+37
    %v6334 = vand.u32 %v6321, 2147483648
    %v6335 = vor.u32 1.1754944e-38, %v6334
    %v6336 = vsel %vm6333, %v6335, %v6331
    %v6337 = vmul.f32 1.0, %v6336
    %v6338 = vrcp.pop %v6322
    %v6339 = vmul.f32 %v6322, %v6338
    %v6340 = vsub.f32 1.0, %v6339
    %v6341 = vmul.f32 %v6338, %v6340
    %v6342 = vadd.f32 %v6338, %v6341
    %vm6343 = vweird.f32 %v6322
    %vm6344 = vweird.f32 %v6338
    %vm6345 = vmor %vm6343, %vm6344
    %v6346 = vsel %vm6345, %v6338, %v6342
    %v6347 = vand.u32 2147483647, %v6322
    %vm6348 = vcmp.eq.f32.partialorder %v6347, 8.507059e+37
    %v6349 = vand.u32 %v6322, 2147483648
    %v6350 = vor.u32 1.1754944e-38, %v6349
    %v6351 = vsel %vm6348, %v6350, %v6346
    %v6352 = vmul.f32 1.0, %v6351
    %v6353 = vmul.f32 %v6297, %v5457
    %v6354 = vmul.f32 %v6312, %v5458
    %v6355 = vmul.f32 %v6259, %v6313
    %v6356 = vmul.f32 %v6274, %v6314
    %v6357 = vadd.f32 %v6353, %v6355
    %v6358 = vadd.f32 %v6354, %v6356
    %v6359 = vtanh.pop %v6357
    %v6360 = vtanh.pop %v6358
    %v6361 = vmul.f32 %v6337, %v6359
    %v6362 = vmul.f32 %v6352, %v6360
    %6363 = vmatpush.bf16.msra.mxu0 %v1018
    %6364 = vmatpush.bf16.msra.mxu0 %v1010
    %6365 = vmatpush.bf16.msra.mxu0 %v1002
    %6366 = vmatpush.bf16.msra.mxu0 %v994
    %6367 = vmatpush.bf16.msra.mxu0 %v986
    %6368 = vmatpush.bf16.msra.mxu0 %v978
    %6369 = vmatpush.bf16.msra.mxu0 %v970
    %6370 = vmatpush.bf16.msra.mxu0 %v962
    %6371 = vmatmul.bf16.gmra.mxu0 %v5810
    %v6372 = vpop.f32.mrf.mxu0
    %v6373 = vadd.f32 0.0, %v6372
    %v6374 = vpop.f32.mrf.mxu0
    %6375 = vdwg.mxu0
    %6376 = vmatpush.bf16.msra.mxu0 %v1082
    %6377 = vmatpush.bf16.msra.mxu0 %v1074
    %6378 = vmatpush.bf16.msra.mxu0 %v1066
    %6379 = vmatpush.bf16.msra.mxu0 %v1058
    %6380 = vmatpush.bf16.msra.mxu0 %v1050
    %6381 = vmatpush.bf16.msra.mxu0 %v1042
    %6382 = vmatpush.bf16.msra.mxu0 %v1034
    %6383 = vmatpush.bf16.msra.mxu0 %v1026
    %6384 = vmatmul.bf16.gmra.mxu0 %v5811
    %v6385 = vpop.f32.mrf.mxu0
    %v6386 = vadd.f32 %v6373, %v6385
    %v6387 = vpop.f32.mrf.mxu0
    %6388 = vdwg.mxu0
    %6389 = vmatpush.bf16.msra.mxu0 %v1019
    %6390 = vmatpush.bf16.msra.mxu0 %v1011
    %6391 = vmatpush.bf16.msra.mxu0 %v1003
    %6392 = vmatpush.bf16.msra.mxu0 %v995
    %6393 = vmatpush.bf16.msra.mxu0 %v987
    %6394 = vmatpush.bf16.msra.mxu0 %v979
    %6395 = vmatpush.bf16.msra.mxu0 %v971
    %6396 = vmatpush.bf16.msra.mxu0 %v963
    %6397 = vmatmul.bf16.gmra.mxu0 %v5810
    %v6398 = vpop.f32.mrf.mxu0
    %v6399 = vadd.f32 0.0, %v6398
    %v6400 = vpop.f32.mrf.mxu0
    %6401 = vdwg.mxu0
    %6402 = vmatpush.bf16.msra.mxu0 %v1083
    %6403 = vmatpush.bf16.msra.mxu0 %v1075
    %6404 = vmatpush.bf16.msra.mxu0 %v1067
    %6405 = vmatpush.bf16.msra.mxu0 %v1059
    %6406 = vmatpush.bf16.msra.mxu0 %v1051
    %6407 = vmatpush.bf16.msra.mxu0 %v1043
    %6408 = vmatpush.bf16.msra.mxu0 %v1035
    %6409 = vmatpush.bf16.msra.mxu0 %v1027
    %6410 = vmatmul.bf16.gmra.mxu0 %v5811
    %v6411 = vpop.f32.mrf.mxu0
    %v6412 = vadd.f32 %v6399, %v6411
    %v6413 = vpop.f32.mrf.mxu0
    %6414 = vdwg.mxu0
    %6415 = vmatpush.bf16.msra.mxu0 %v1020
    %6416 = vmatpush.bf16.msra.mxu0 %v1012
    %6417 = vmatpush.bf16.msra.mxu0 %v1004
    %6418 = vmatpush.bf16.msra.mxu0 %v996
    %6419 = vmatpush.bf16.msra.mxu0 %v988
    %6420 = vmatpush.bf16.msra.mxu0 %v980
    %6421 = vmatpush.bf16.msra.mxu0 %v972
    %6422 = vmatpush.bf16.msra.mxu0 %v964
    %6423 = vmatmul.bf16.gmra.mxu0 %v5810
    %v6424 = vpop.f32.mrf.mxu0
    %v6425 = vadd.f32 0.0, %v6424
    %v6426 = vpop.f32.mrf.mxu0
    %6427 = vdwg.mxu0
    %6428 = vmatpush.bf16.msra.mxu0 %v1084
    %6429 = vmatpush.bf16.msra.mxu0 %v1076
    %6430 = vmatpush.bf16.msra.mxu0 %v1068
    %6431 = vmatpush.bf16.msra.mxu0 %v1060
    %6432 = vmatpush.bf16.msra.mxu0 %v1052
    %6433 = vmatpush.bf16.msra.mxu0 %v1044
    %6434 = vmatpush.bf16.msra.mxu0 %v1036
    %6435 = vmatpush.bf16.msra.mxu0 %v1028
    %6436 = vmatmul.bf16.gmra.mxu0 %v5811
    %v6437 = vpop.f32.mrf.mxu0
    %v6438 = vadd.f32 %v6425, %v6437
    %v6439 = vpop.f32.mrf.mxu0
    %6440 = vdwg.mxu0
    %6441 = vmatpush.bf16.msra.mxu0 %v1021
    %6442 = vmatpush.bf16.msra.mxu0 %v1013
    %6443 = vmatpush.bf16.msra.mxu0 %v1005
    %6444 = vmatpush.bf16.msra.mxu0 %v997
    %6445 = vmatpush.bf16.msra.mxu0 %v989
    %6446 = vmatpush.bf16.msra.mxu0 %v981
    %6447 = vmatpush.bf16.msra.mxu0 %v973
    %6448 = vmatpush.bf16.msra.mxu0 %v965
    %6449 = vmatmul.bf16.gmra.mxu0 %v5810
    %v6450 = vpop.f32.mrf.mxu0
    %v6451 = vadd.f32 0.0, %v6450
    %v6452 = vpop.f32.mrf.mxu0
    %6453 = vdwg.mxu0
    %6454 = vmatpush.bf16.msra.mxu0 %v1085
    %6455 = vmatpush.bf16.msra.mxu0 %v1077
    %6456 = vmatpush.bf16.msra.mxu0 %v1069
    %6457 = vmatpush.bf16.msra.mxu0 %v1061
    %6458 = vmatpush.bf16.msra.mxu0 %v1053
    %6459 = vmatpush.bf16.msra.mxu0 %v1045
    %6460 = vmatpush.bf16.msra.mxu0 %v1037
    %6461 = vmatpush.bf16.msra.mxu0 %v1029
    %6462 = vmatmul.bf16.gmra.mxu0 %v5811
    %v6463 = vpop.f32.mrf.mxu0
    %v6464 = vadd.f32 %v6451, %v6463
    %v6465 = vpop.f32.mrf.mxu0
    %6466 = vdwg.mxu0
    %6467 = vmatpush.bf16.msra.mxu0 %v1022
    %6468 = vmatpush.bf16.msra.mxu0 %v1014
    %6469 = vmatpush.bf16.msra.mxu0 %v1006
    %6470 = vmatpush.bf16.msra.mxu0 %v998
    %6471 = vmatpush.bf16.msra.mxu0 %v990
    %6472 = vmatpush.bf16.msra.mxu0 %v982
    %6473 = vmatpush.bf16.msra.mxu0 %v974
    %6474 = vmatpush.bf16.msra.mxu0 %v966
    %6475 = vmatmul.bf16.gmra.mxu0 %v5810
    %v6476 = vpop.f32.mrf.mxu0
    %v6477 = vadd.f32 0.0, %v6476
    %v6478 = vpop.f32.mrf.mxu0
    %6479 = vdwg.mxu0
    %6480 = vmatpush.bf16.msra.mxu0 %v1086
    %6481 = vmatpush.bf16.msra.mxu0 %v1078
    %6482 = vmatpush.bf16.msra.mxu0 %v1070
    %6483 = vmatpush.bf16.msra.mxu0 %v1062
    %6484 = vmatpush.bf16.msra.mxu0 %v1054
    %6485 = vmatpush.bf16.msra.mxu0 %v1046
    %6486 = vmatpush.bf16.msra.mxu0 %v1038
    %6487 = vmatpush.bf16.msra.mxu0 %v1030
    %6488 = vmatmul.bf16.gmra.mxu0 %v5811
    %v6489 = vpop.f32.mrf.mxu0
    %v6490 = vadd.f32 %v6477, %v6489
    %v6491 = vpop.f32.mrf.mxu0
    %6492 = vdwg.mxu0
    %6493 = vmatpush.bf16.msra.mxu0 %v1023
    %6494 = vmatpush.bf16.msra.mxu0 %v1015
    %6495 = vmatpush.bf16.msra.mxu0 %v1007
    %6496 = vmatpush.bf16.msra.mxu0 %v999
    %6497 = vmatpush.bf16.msra.mxu0 %v991
    %6498 = vmatpush.bf16.msra.mxu0 %v983
    %6499 = vmatpush.bf16.msra.mxu0 %v975
    %6500 = vmatpush.bf16.msra.mxu0 %v967
    %6501 = vmatmul.bf16.gmra.mxu0 %v5810
    %v6502 = vpop.f32.mrf.mxu0
    %v6503 = vadd.f32 0.0, %v6502
    %v6504 = vpop.f32.mrf.mxu0
    %6505 = vdwg.mxu0
    %6506 = vmatpush.bf16.msra.mxu0 %v1087
    %6507 = vmatpush.bf16.msra.mxu0 %v1079
    %6508 = vmatpush.bf16.msra.mxu0 %v1071
    %6509 = vmatpush.bf16.msra.mxu0 %v1063
    %6510 = vmatpush.bf16.msra.mxu0 %v1055
    %6511 = vmatpush.bf16.msra.mxu0 %v1047
    %6512 = vmatpush.bf16.msra.mxu0 %v1039
    %6513 = vmatpush.bf16.msra.mxu0 %v1031
    %6514 = vmatmul.bf16.gmra.mxu0 %v5811
    %v6515 = vpop.f32.mrf.mxu0
    %v6516 = vadd.f32 %v6503, %v6515
    %v6517 = vpop.f32.mrf.mxu0
    %6518 = vdwg.mxu0
    %6519 = vmatpush.bf16.msra.mxu0 %v1024
    %6520 = vmatpush.bf16.msra.mxu0 %v1016
    %6521 = vmatpush.bf16.msra.mxu0 %v1008
    %6522 = vmatpush.bf16.msra.mxu0 %v1000
    %6523 = vmatpush.bf16.msra.mxu0 %v992
    %6524 = vmatpush.bf16.msra.mxu0 %v984
    %6525 = vmatpush.bf16.msra.mxu0 %v976
    %6526 = vmatpush.bf16.msra.mxu0 %v968
    %6527 = vmatmul.bf16.gmra.mxu0 %v5810
    %v6528 = vpop.f32.mrf.mxu0
    %v6529 = vadd.f32 0.0, %v6528
    %v6530 = vpop.f32.mrf.mxu0
    %6531 = vdwg.mxu0
    %6532 = vmatpush.bf16.msra.mxu0 %v1088
    %6533 = vmatpush.bf16.msra.mxu0 %v1080
    %6534 = vmatpush.bf16.msra.mxu0 %v1072
    %6535 = vmatpush.bf16.msra.mxu0 %v1064
    %6536 = vmatpush.bf16.msra.mxu0 %v1056
    %6537 = vmatpush.bf16.msra.mxu0 %v1048
    %6538 = vmatpush.bf16.msra.mxu0 %v1040
    %6539 = vmatpush.bf16.msra.mxu0 %v1032
    %6540 = vmatmul.bf16.gmra.mxu0 %v5811
    %v6541 = vpop.f32.mrf.mxu0
    %v6542 = vadd.f32 %v6529, %v6541
    %v6543 = vpop.f32.mrf.mxu0
    %6544 = vdwg.mxu0
    %6545 = vmatpush.bf16.msra.mxu0 %v1025
    %6546 = vmatpush.bf16.msra.mxu0 %v1017
    %6547 = vmatpush.bf16.msra.mxu0 %v1009
    %6548 = vmatpush.bf16.msra.mxu0 %v1001
    %6549 = vmatpush.bf16.msra.mxu0 %v993
    %6550 = vmatpush.bf16.msra.mxu0 %v985
    %6551 = vmatpush.bf16.msra.mxu0 %v977
    %6552 = vmatpush.bf16.msra.mxu0 %v969
    %6553 = vmatmul.bf16.gmra.mxu0 %v5810
    %v6554 = vpop.f32.mrf.mxu0
    %v6555 = vadd.f32 0.0, %v6554
    %v6556 = vpop.f32.mrf.mxu0
    %6557 = vdwg.mxu0
    %6558 = vmatpush.bf16.msra.mxu0 %v1089
    %6559 = vmatpush.bf16.msra.mxu0 %v1081
    %6560 = vmatpush.bf16.msra.mxu0 %v1073
    %6561 = vmatpush.bf16.msra.mxu0 %v1065
    %6562 = vmatpush.bf16.msra.mxu0 %v1057
    %6563 = vmatpush.bf16.msra.mxu0 %v1049
    %6564 = vmatpush.bf16.msra.mxu0 %v1041
    %6565 = vmatpush.bf16.msra.mxu0 %v1033
    %6566 = vmatmul.bf16.gmra.mxu0 %v5811
    %v6567 = vpop.f32.mrf.mxu0
    %v6568 = vadd.f32 %v6555, %v6567
    %v6569 = vpop.f32.mrf.mxu0
    %6570 = vdwg.mxu0
    %v6571 = vadd.f32 %v237, %v6386
    %v6572 = vadd.f32 %v266, %v6412
    %v6573 = vadd.f32 %v295, %v6438
    %v6574 = vadd.f32 %v324, %v6464
    %v6575 = vadd.f32 %v353, %v6490
    %v6576 = vadd.f32 %v382, %v6516
    %v6577 = vadd.f32 %v411, %v6542
    %v6578 = vadd.f32 %v440, %v6568
    %v6579 = vxor.u32 %v6571, 2147483648
    %v6580 = vxor.u32 %v6572, 2147483648
    %v6581 = vmul.f32 %v6579, 1.442695
    %v6582 = vpow.pop %v6581
    %v6583 = vmul.f32 %v6580, 1.442695
    %v6584 = vpow.pop %v6583
    %v6585 = vadd.f32 %v6582, 1.0
    %v6586 = vadd.f32 %v6584, 1.0
    %v6587 = vrcp.pop %v6585
    %v6588 = vmul.f32 %v6585, %v6587
    %v6589 = vsub.f32 1.0, %v6588
    %v6590 = vmul.f32 %v6587, %v6589
    %v6591 = vadd.f32 %v6587, %v6590
    %vm6592 = vweird.f32 %v6585
    %vm6593 = vweird.f32 %v6587
    %vm6594 = vmor %vm6592, %vm6593
    %v6595 = vsel %vm6594, %v6587, %v6591
    %v6596 = vand.u32 2147483647, %v6585
    %vm6597 = vcmp.eq.f32.partialorder %v6596, 8.507059e+37
    %v6598 = vand.u32 %v6585, 2147483648
    %v6599 = vor.u32 1.1754944e-38, %v6598
    %v6600 = vsel %vm6597, %v6599, %v6595
    %v6601 = vmul.f32 1.0, %v6600
    %v6602 = vrcp.pop %v6586
    %v6603 = vmul.f32 %v6586, %v6602
    %v6604 = vsub.f32 1.0, %v6603
    %v6605 = vmul.f32 %v6602, %v6604
    %v6606 = vadd.f32 %v6602, %v6605
    %vm6607 = vweird.f32 %v6586
    %vm6608 = vweird.f32 %v6602
    %vm6609 = vmor %vm6607, %vm6608
    %v6610 = vsel %vm6609, %v6602, %v6606
    %v6611 = vand.u32 2147483647, %v6586
    %vm6612 = vcmp.eq.f32.partialorder %v6611, 8.507059e+37
    %v6613 = vand.u32 %v6586, 2147483648
    %v6614 = vor.u32 1.1754944e-38, %v6613
    %v6615 = vsel %vm6612, %v6614, %v6610
    %v6616 = vmul.f32 1.0, %v6615
    %v6617 = vxor.u32 %v6573, 2147483648
    %v6618 = vxor.u32 %v6574, 2147483648
    %v6619 = vmul.f32 %v6617, 1.442695
    %v6620 = vpow.pop %v6619
    %v6621 = vmul.f32 %v6618, 1.442695
    %v6622 = vpow.pop %v6621
    %v6623 = vadd.f32 %v6620, 1.0
    %v6624 = vadd.f32 %v6622, 1.0
    %v6625 = vrcp.pop %v6623
    %v6626 = vmul.f32 %v6623, %v6625
    %v6627 = vsub.f32 1.0, %v6626
    %v6628 = vmul.f32 %v6625, %v6627
    %v6629 = vadd.f32 %v6625, %v6628
    %vm6630 = vweird.f32 %v6623
    %vm6631 = vweird.f32 %v6625
    %vm6632 = vmor %vm6630, %vm6631
    %v6633 = vsel %vm6632, %v6625, %v6629
    %v6634 = vand.u32 2147483647, %v6623
    %vm6635 = vcmp.eq.f32.partialorder %v6634, 8.507059e+37
    %v6636 = vand.u32 %v6623, 2147483648
    %v6637 = vor.u32 1.1754944e-38, %v6636
    %v6638 = vsel %vm6635, %v6637, %v6633
    %v6639 = vmul.f32 1.0, %v6638
    %v6640 = vrcp.pop %v6624
    %v6641 = vmul.f32 %v6624, %v6640
    %v6642 = vsub.f32 1.0, %v6641
    %v6643 = vmul.f32 %v6640, %v6642
    %v6644 = vadd.f32 %v6640, %v6643
    %vm6645 = vweird.f32 %v6624
    %vm6646 = vweird.f32 %v6640
    %vm6647 = vmor %vm6645, %vm6646
    %v6648 = vsel %vm6647, %v6640, %v6644
    %v6649 = vand.u32 2147483647, %v6624
    %vm6650 = vcmp.eq.f32.partialorder %v6649, 8.507059e+37
    %v6651 = vand.u32 %v6624, 2147483648
    %v6652 = vor.u32 1.1754944e-38, %v6651
    %v6653 = vsel %vm6650, %v6652, %v6648
    %v6654 = vmul.f32 1.0, %v6653
    %v6655 = vtanh.pop %v6575
    %v6656 = vtanh.pop %v6576
    %v6657 = vxor.u32 %v6577, 2147483648
    %v6658 = vxor.u32 %v6578, 2147483648
    %v6659 = vmul.f32 %v6657, 1.442695
    %v6660 = vpow.pop %v6659
    %v6661 = vmul.f32 %v6658, 1.442695
    %v6662 = vpow.pop %v6661
    %v6663 = vadd.f32 %v6660, 1.0
    %v6664 = vadd.f32 %v6662, 1.0
    %v6665 = vrcp.pop %v6663
    %v6666 = vmul.f32 %v6663, %v6665
    %v6667 = vsub.f32 1.0, %v6666
    %v6668 = vmul.f32 %v6665, %v6667
    %v6669 = vadd.f32 %v6665, %v6668
    %vm6670 = vweird.f32 %v6663
    %vm6671 = vweird.f32 %v6665
    %vm6672 = vmor %vm6670, %vm6671
    %v6673 = vsel %vm6672, %v6665, %v6669
    %v6674 = vand.u32 2147483647, %v6663
    %vm6675 = vcmp.eq.f32.partialorder %v6674, 8.507059e+37
    %v6676 = vand.u32 %v6663, 2147483648
    %v6677 = vor.u32 1.1754944e-38, %v6676
    %v6678 = vsel %vm6675, %v6677, %v6673
    %v6679 = vmul.f32 1.0, %v6678
    %v6680 = vrcp.pop %v6664
    %v6681 = vmul.f32 %v6664, %v6680
    %v6682 = vsub.f32 1.0, %v6681
    %v6683 = vmul.f32 %v6680, %v6682
    %v6684 = vadd.f32 %v6680, %v6683
    %vm6685 = vweird.f32 %v6664
    %vm6686 = vweird.f32 %v6680
    %vm6687 = vmor %vm6685, %vm6686
    %v6688 = vsel %vm6687, %v6680, %v6684
    %v6689 = vand.u32 2147483647, %v6664
    %vm6690 = vcmp.eq.f32.partialorder %v6689, 8.507059e+37
    %v6691 = vand.u32 %v6664, 2147483648
    %v6692 = vor.u32 1.1754944e-38, %v6691
    %v6693 = vsel %vm6690, %v6692, %v6688
    %v6694 = vmul.f32 1.0, %v6693
    %v6695 = vmul.f32 %v6639, %v5799
    %v6696 = vmul.f32 %v6654, %v5800
    %v6697 = vmul.f32 %v6601, %v6655
    %v6698 = vmul.f32 %v6616, %v6656
    %v6699 = vadd.f32 %v6695, %v6697
    %v6700 = vadd.f32 %v6696, %v6698
    %v6701 = vtanh.pop %v6699
    %v6702 = vtanh.pop %v6700
    %v6703 = vmul.f32 %v6679, %v6701
    %v6704 = vmul.f32 %v6694, %v6702
    %v6705 = vpack.c.bf16 %v6704, %v6703
    %v6706 = vpack.c.bf16 %v6362, %v6361
    %v6708 = vunpack.c.l.b16 %v6705
    %v6709 = vunpack.c.h.b16 %v6705
    %v6710 = vpack.c.b16 %v6708, %v6708
    %v6711 = vpack.c.b16 %v6709, %v6709
    %v6715 = vunpack.c.l.b16 %v6706
    %v6716 = vunpack.c.h.b16 %v6706
    %v6717 = vpack.c.b16 %v6715, %v6715
    %v6718 = vpack.c.b16 %v6716, %v6716
    %6721 = vmatpush.bf16.msra.mxu0 %v2665
    %6722 = vmatpush.bf16.msra.mxu0 %v2657
    %6723 = vmatpush.bf16.msra.mxu0 %v2649
    %6724 = vmatpush.bf16.msra.mxu0 %v2641
    %6725 = vmatpush.bf16.msra.mxu0 %v2633
    %6726 = vmatpush.bf16.msra.mxu0 %v2625
    %6727 = vmatpush.bf16.msra.mxu0 %v2617
    %6728 = vmatpush.bf16.msra.mxu0 %v2609
    %6729 = vmatmul.bf16.gmra.mxu0 %v6710
    %v6730 = vpop.f32.mrf.mxu0
    %v6731 = vadd.f32 %v1825, %v6730
    %v6732 = vpop.f32.mrf.mxu0
    %6733 = vdwg.mxu0
    %6734 = vmatpush.bf16.msra.mxu0 %v2729
    %6735 = vmatpush.bf16.msra.mxu0 %v2721
    %6736 = vmatpush.bf16.msra.mxu0 %v2713
    %6737 = vmatpush.bf16.msra.mxu0 %v2705
    %6738 = vmatpush.bf16.msra.mxu0 %v2697
    %6739 = vmatpush.bf16.msra.mxu0 %v2689
    %6740 = vmatpush.bf16.msra.mxu0 %v2681
    %6741 = vmatpush.bf16.msra.mxu0 %v2673
    %6742 = vmatmul.bf16.gmra.mxu0 %v6711
    %v6743 = vpop.f32.mrf.mxu0
    %v6744 = vadd.f32 %v6731, %v6743
    %v6745 = vpop.f32.mrf.mxu0
    %6746 = vdwg.mxu0
    %6747 = vmatpush.bf16.msra.mxu0 %v2793
    %6748 = vmatpush.bf16.msra.mxu0 %v2785
    %6749 = vmatpush.bf16.msra.mxu0 %v2777
    %6750 = vmatpush.bf16.msra.mxu0 %v2769
    %6751 = vmatpush.bf16.msra.mxu0 %v2761
    %6752 = vmatpush.bf16.msra.mxu0 %v2753
    %6753 = vmatpush.bf16.msra.mxu0 %v2745
    %6754 = vmatpush.bf16.msra.mxu0 %v2737
    %6755 = vmatmul.bf16.gmra.mxu0 %v6717
    %v6756 = vpop.f32.mrf.mxu0
    %v6757 = vadd.f32 %v6744, %v6756
    %v6758 = vpop.f32.mrf.mxu0
    %6759 = vdwg.mxu0
    %6760 = vmatpush.bf16.msra.mxu0 %v2857
    %6761 = vmatpush.bf16.msra.mxu0 %v2849
    %6762 = vmatpush.bf16.msra.mxu0 %v2841
    %6763 = vmatpush.bf16.msra.mxu0 %v2833
    %6764 = vmatpush.bf16.msra.mxu0 %v2825
    %6765 = vmatpush.bf16.msra.mxu0 %v2817
    %6766 = vmatpush.bf16.msra.mxu0 %v2809
    %6767 = vmatpush.bf16.msra.mxu0 %v2801
    %6768 = vmatmul.bf16.gmra.mxu0 %v6718
    %v6769 = vpop.f32.mrf.mxu0
    %v6770 = vadd.f32 %v6757, %v6769
    %v6771 = vpop.f32.mrf.mxu0
    %6772 = vdwg.mxu0
    %6773 = vmatpush.bf16.msra.mxu0 %v2666
    %6774 = vmatpush.bf16.msra.mxu0 %v2658
    %6775 = vmatpush.bf16.msra.mxu0 %v2650
    %6776 = vmatpush.bf16.msra.mxu0 %v2642
    %6777 = vmatpush.bf16.msra.mxu0 %v2634
    %6778 = vmatpush.bf16.msra.mxu0 %v2626
    %6779 = vmatpush.bf16.msra.mxu0 %v2618
    %6780 = vmatpush.bf16.msra.mxu0 %v2610
    %6781 = vmatmul.bf16.gmra.mxu0 %v6710
    %v6782 = vpop.f32.mrf.mxu0
    %v6783 = vadd.f32 %v1826, %v6782
    %v6784 = vpop.f32.mrf.mxu0
    %6785 = vdwg.mxu0
    %6786 = vmatpush.bf16.msra.mxu0 %v2730
    %6787 = vmatpush.bf16.msra.mxu0 %v2722
    %6788 = vmatpush.bf16.msra.mxu0 %v2714
    %6789 = vmatpush.bf16.msra.mxu0 %v2706
    %6790 = vmatpush.bf16.msra.mxu0 %v2698
    %6791 = vmatpush.bf16.msra.mxu0 %v2690
    %6792 = vmatpush.bf16.msra.mxu0 %v2682
    %6793 = vmatpush.bf16.msra.mxu0 %v2674
    %6794 = vmatmul.bf16.gmra.mxu0 %v6711
    %v6795 = vpop.f32.mrf.mxu0
    %v6796 = vadd.f32 %v6783, %v6795
    %v6797 = vpop.f32.mrf.mxu0
    %6798 = vdwg.mxu0
    %6799 = vmatpush.bf16.msra.mxu0 %v2794
    %6800 = vmatpush.bf16.msra.mxu0 %v2786
    %6801 = vmatpush.bf16.msra.mxu0 %v2778
    %6802 = vmatpush.bf16.msra.mxu0 %v2770
    %6803 = vmatpush.bf16.msra.mxu0 %v2762
    %6804 = vmatpush.bf16.msra.mxu0 %v2754
    %6805 = vmatpush.bf16.msra.mxu0 %v2746
    %6806 = vmatpush.bf16.msra.mxu0 %v2738
    %6807 = vmatmul.bf16.gmra.mxu0 %v6717
    %v6808 = vpop.f32.mrf.mxu0
    %v6809 = vadd.f32 %v6796, %v6808
    %v6810 = vpop.f32.mrf.mxu0
    %6811 = vdwg.mxu0
    %6812 = vmatpush.bf16.msra.mxu0 %v2858
    %6813 = vmatpush.bf16.msra.mxu0 %v2850
    %6814 = vmatpush.bf16.msra.mxu0 %v2842
    %6815 = vmatpush.bf16.msra.mxu0 %v2834
    %6816 = vmatpush.bf16.msra.mxu0 %v2826
    %6817 = vmatpush.bf16.msra.mxu0 %v2818
    %6818 = vmatpush.bf16.msra.mxu0 %v2810
    %6819 = vmatpush.bf16.msra.mxu0 %v2802
    %6820 = vmatmul.bf16.gmra.mxu0 %v6718
    %v6821 = vpop.f32.mrf.mxu0
    %v6822 = vadd.f32 %v6809, %v6821
    %v6823 = vpop.f32.mrf.mxu0
    %6824 = vdwg.mxu0
    %6825 = vmatpush.bf16.msra.mxu0 %v2667
    %6826 = vmatpush.bf16.msra.mxu0 %v2659
    %6827 = vmatpush.bf16.msra.mxu0 %v2651
    %6828 = vmatpush.bf16.msra.mxu0 %v2643
    %6829 = vmatpush.bf16.msra.mxu0 %v2635
    %6830 = vmatpush.bf16.msra.mxu0 %v2627
    %6831 = vmatpush.bf16.msra.mxu0 %v2619
    %6832 = vmatpush.bf16.msra.mxu0 %v2611
    %6833 = vmatmul.bf16.gmra.mxu0 %v6710
    %v6834 = vpop.f32.mrf.mxu0
    %v6835 = vadd.f32 %v1827, %v6834
    %v6836 = vpop.f32.mrf.mxu0
    %6837 = vdwg.mxu0
    %6838 = vmatpush.bf16.msra.mxu0 %v2731
    %6839 = vmatpush.bf16.msra.mxu0 %v2723
    %6840 = vmatpush.bf16.msra.mxu0 %v2715
    %6841 = vmatpush.bf16.msra.mxu0 %v2707
    %6842 = vmatpush.bf16.msra.mxu0 %v2699
    %6843 = vmatpush.bf16.msra.mxu0 %v2691
    %6844 = vmatpush.bf16.msra.mxu0 %v2683
    %6845 = vmatpush.bf16.msra.mxu0 %v2675
    %6846 = vmatmul.bf16.gmra.mxu0 %v6711
    %v6847 = vpop.f32.mrf.mxu0
    %v6848 = vadd.f32 %v6835, %v6847
    %v6849 = vpop.f32.mrf.mxu0
    %6850 = vdwg.mxu0
    %6851 = vmatpush.bf16.msra.mxu0 %v2795
    %6852 = vmatpush.bf16.msra.mxu0 %v2787
    %6853 = vmatpush.bf16.msra.mxu0 %v2779
    %6854 = vmatpush.bf16.msra.mxu0 %v2771
    %6855 = vmatpush.bf16.msra.mxu0 %v2763
    %6856 = vmatpush.bf16.msra.mxu0 %v2755
    %6857 = vmatpush.bf16.msra.mxu0 %v2747
    %6858 = vmatpush.bf16.msra.mxu0 %v2739
    %6859 = vmatmul.bf16.gmra.mxu0 %v6717
    %v6860 = vpop.f32.mrf.mxu0
    %v6861 = vadd.f32 %v6848, %v6860
    %v6862 = vpop.f32.mrf.mxu0
    %6863 = vdwg.mxu0
    %6864 = vmatpush.bf16.msra.mxu0 %v2859
    %6865 = vmatpush.bf16.msra.mxu0 %v2851
    %6866 = vmatpush.bf16.msra.mxu0 %v2843
    %6867 = vmatpush.bf16.msra.mxu0 %v2835
    %6868 = vmatpush.bf16.msra.mxu0 %v2827
    %6869 = vmatpush.bf16.msra.mxu0 %v2819
    %6870 = vmatpush.bf16.msra.mxu0 %v2811
    %6871 = vmatpush.bf16.msra.mxu0 %v2803
    %6872 = vmatmul.bf16.gmra.mxu0 %v6718
    %v6873 = vpop.f32.mrf.mxu0
    %v6874 = vadd.f32 %v6861, %v6873
    %v6875 = vpop.f32.mrf.mxu0
    %6876 = vdwg.mxu0
    %6877 = vmatpush.bf16.msra.mxu0 %v2668
    %6878 = vmatpush.bf16.msra.mxu0 %v2660
    %6879 = vmatpush.bf16.msra.mxu0 %v2652
    %6880 = vmatpush.bf16.msra.mxu0 %v2644
    %6881 = vmatpush.bf16.msra.mxu0 %v2636
    %6882 = vmatpush.bf16.msra.mxu0 %v2628
    %6883 = vmatpush.bf16.msra.mxu0 %v2620
    %6884 = vmatpush.bf16.msra.mxu0 %v2612
    %6885 = vmatmul.bf16.gmra.mxu0 %v6710
    %v6886 = vpop.f32.mrf.mxu0
    %v6887 = vadd.f32 %v1828, %v6886
    %v6888 = vpop.f32.mrf.mxu0
    %6889 = vdwg.mxu0
    %6890 = vmatpush.bf16.msra.mxu0 %v2732
    %6891 = vmatpush.bf16.msra.mxu0 %v2724
    %6892 = vmatpush.bf16.msra.mxu0 %v2716
    %6893 = vmatpush.bf16.msra.mxu0 %v2708
    %6894 = vmatpush.bf16.msra.mxu0 %v2700
    %6895 = vmatpush.bf16.msra.mxu0 %v2692
    %6896 = vmatpush.bf16.msra.mxu0 %v2684
    %6897 = vmatpush.bf16.msra.mxu0 %v2676
    %6898 = vmatmul.bf16.gmra.mxu0 %v6711
    %v6899 = vpop.f32.mrf.mxu0
    %v6900 = vadd.f32 %v6887, %v6899
    %v6901 = vpop.f32.mrf.mxu0
    %6902 = vdwg.mxu0
    %6903 = vmatpush.bf16.msra.mxu0 %v2796
    %6904 = vmatpush.bf16.msra.mxu0 %v2788
    %6905 = vmatpush.bf16.msra.mxu0 %v2780
    %6906 = vmatpush.bf16.msra.mxu0 %v2772
    %6907 = vmatpush.bf16.msra.mxu0 %v2764
    %6908 = vmatpush.bf16.msra.mxu0 %v2756
    %6909 = vmatpush.bf16.msra.mxu0 %v2748
    %6910 = vmatpush.bf16.msra.mxu0 %v2740
    %6911 = vmatmul.bf16.gmra.mxu0 %v6717
    %v6912 = vpop.f32.mrf.mxu0
    %v6913 = vadd.f32 %v6900, %v6912
    %v6914 = vpop.f32.mrf.mxu0
    %6915 = vdwg.mxu0
    %6916 = vmatpush.bf16.msra.mxu0 %v2860
    %6917 = vmatpush.bf16.msra.mxu0 %v2852
    %6918 = vmatpush.bf16.msra.mxu0 %v2844
    %6919 = vmatpush.bf16.msra.mxu0 %v2836
    %6920 = vmatpush.bf16.msra.mxu0 %v2828
    %6921 = vmatpush.bf16.msra.mxu0 %v2820
    %6922 = vmatpush.bf16.msra.mxu0 %v2812
    %6923 = vmatpush.bf16.msra.mxu0 %v2804
    %6924 = vmatmul.bf16.gmra.mxu0 %v6718
    %v6925 = vpop.f32.mrf.mxu0
    %v6926 = vadd.f32 %v6913, %v6925
    %v6927 = vpop.f32.mrf.mxu0
    %6928 = vdwg.mxu0
    %6929 = vmatpush.bf16.msra.mxu0 %v2669
    %6930 = vmatpush.bf16.msra.mxu0 %v2661
    %6931 = vmatpush.bf16.msra.mxu0 %v2653
    %6932 = vmatpush.bf16.msra.mxu0 %v2645
    %6933 = vmatpush.bf16.msra.mxu0 %v2637
    %6934 = vmatpush.bf16.msra.mxu0 %v2629
    %6935 = vmatpush.bf16.msra.mxu0 %v2621
    %6936 = vmatpush.bf16.msra.mxu0 %v2613
    %6937 = vmatmul.bf16.gmra.mxu0 %v6710
    %v6938 = vpop.f32.mrf.mxu0
    %v6939 = vadd.f32 %v1829, %v6938
    %v6940 = vpop.f32.mrf.mxu0
    %6941 = vdwg.mxu0
    %6942 = vmatpush.bf16.msra.mxu0 %v2733
    %6943 = vmatpush.bf16.msra.mxu0 %v2725
    %6944 = vmatpush.bf16.msra.mxu0 %v2717
    %6945 = vmatpush.bf16.msra.mxu0 %v2709
    %6946 = vmatpush.bf16.msra.mxu0 %v2701
    %6947 = vmatpush.bf16.msra.mxu0 %v2693
    %6948 = vmatpush.bf16.msra.mxu0 %v2685
    %6949 = vmatpush.bf16.msra.mxu0 %v2677
    %6950 = vmatmul.bf16.gmra.mxu0 %v6711
    %v6951 = vpop.f32.mrf.mxu0
    %v6952 = vadd.f32 %v6939, %v6951
    %v6953 = vpop.f32.mrf.mxu0
    %6954 = vdwg.mxu0
    %6955 = vmatpush.bf16.msra.mxu0 %v2797
    %6956 = vmatpush.bf16.msra.mxu0 %v2789
    %6957 = vmatpush.bf16.msra.mxu0 %v2781
    %6958 = vmatpush.bf16.msra.mxu0 %v2773
    %6959 = vmatpush.bf16.msra.mxu0 %v2765
    %6960 = vmatpush.bf16.msra.mxu0 %v2757
    %6961 = vmatpush.bf16.msra.mxu0 %v2749
    %6962 = vmatpush.bf16.msra.mxu0 %v2741
    %6963 = vmatmul.bf16.gmra.mxu0 %v6717
    %v6964 = vpop.f32.mrf.mxu0
    %v6965 = vadd.f32 %v6952, %v6964
    %v6966 = vpop.f32.mrf.mxu0
    %6967 = vdwg.mxu0
    %6968 = vmatpush.bf16.msra.mxu0 %v2861
    %6969 = vmatpush.bf16.msra.mxu0 %v2853
    %6970 = vmatpush.bf16.msra.mxu0 %v2845
    %6971 = vmatpush.bf16.msra.mxu0 %v2837
    %6972 = vmatpush.bf16.msra.mxu0 %v2829
    %6973 = vmatpush.bf16.msra.mxu0 %v2821
    %6974 = vmatpush.bf16.msra.mxu0 %v2813
    %6975 = vmatpush.bf16.msra.mxu0 %v2805
    %6976 = vmatmul.bf16.gmra.mxu0 %v6718
    %v6977 = vpop.f32.mrf.mxu0
    %v6978 = vadd.f32 %v6965, %v6977
    %v6979 = vpop.f32.mrf.mxu0
    %6980 = vdwg.mxu0
    %6981 = vmatpush.bf16.msra.mxu0 %v2670
    %6982 = vmatpush.bf16.msra.mxu0 %v2662
    %6983 = vmatpush.bf16.msra.mxu0 %v2654
    %6984 = vmatpush.bf16.msra.mxu0 %v2646
    %6985 = vmatpush.bf16.msra.mxu0 %v2638
    %6986 = vmatpush.bf16.msra.mxu0 %v2630
    %6987 = vmatpush.bf16.msra.mxu0 %v2622
    %6988 = vmatpush.bf16.msra.mxu0 %v2614
    %6989 = vmatmul.bf16.gmra.mxu0 %v6710
    %v6990 = vpop.f32.mrf.mxu0
    %v6991 = vadd.f32 %v1830, %v6990
    %v6992 = vpop.f32.mrf.mxu0
    %6993 = vdwg.mxu0
    %6994 = vmatpush.bf16.msra.mxu0 %v2734
    %6995 = vmatpush.bf16.msra.mxu0 %v2726
    %6996 = vmatpush.bf16.msra.mxu0 %v2718
    %6997 = vmatpush.bf16.msra.mxu0 %v2710
    %6998 = vmatpush.bf16.msra.mxu0 %v2702
    %6999 = vmatpush.bf16.msra.mxu0 %v2694
    %7000 = vmatpush.bf16.msra.mxu0 %v2686
    %7001 = vmatpush.bf16.msra.mxu0 %v2678
    %7002 = vmatmul.bf16.gmra.mxu0 %v6711
    %v7003 = vpop.f32.mrf.mxu0
    %v7004 = vadd.f32 %v6991, %v7003
    %v7005 = vpop.f32.mrf.mxu0
    %7006 = vdwg.mxu0
    %7007 = vmatpush.bf16.msra.mxu0 %v2798
    %7008 = vmatpush.bf16.msra.mxu0 %v2790
    %7009 = vmatpush.bf16.msra.mxu0 %v2782
    %7010 = vmatpush.bf16.msra.mxu0 %v2774
    %7011 = vmatpush.bf16.msra.mxu0 %v2766
    %7012 = vmatpush.bf16.msra.mxu0 %v2758
    %7013 = vmatpush.bf16.msra.mxu0 %v2750
    %7014 = vmatpush.bf16.msra.mxu0 %v2742
    %7015 = vmatmul.bf16.gmra.mxu0 %v6717
    %v7016 = vpop.f32.mrf.mxu0
    %v7017 = vadd.f32 %v7004, %v7016
    %v7018 = vpop.f32.mrf.mxu0
    %7019 = vdwg.mxu0
    %7020 = vmatpush.bf16.msra.mxu0 %v2862
    %7021 = vmatpush.bf16.msra.mxu0 %v2854
    %7022 = vmatpush.bf16.msra.mxu0 %v2846
    %7023 = vmatpush.bf16.msra.mxu0 %v2838
    %7024 = vmatpush.bf16.msra.mxu0 %v2830
    %7025 = vmatpush.bf16.msra.mxu0 %v2822
    %7026 = vmatpush.bf16.msra.mxu0 %v2814
    %7027 = vmatpush.bf16.msra.mxu0 %v2806
    %7028 = vmatmul.bf16.gmra.mxu0 %v6718
    %v7029 = vpop.f32.mrf.mxu0
    %v7030 = vadd.f32 %v7017, %v7029
    %v7031 = vpop.f32.mrf.mxu0
    %7032 = vdwg.mxu0
    %7033 = vmatpush.bf16.msra.mxu0 %v2671
    %7034 = vmatpush.bf16.msra.mxu0 %v2663
    %7035 = vmatpush.bf16.msra.mxu0 %v2655
    %7036 = vmatpush.bf16.msra.mxu0 %v2647
    %7037 = vmatpush.bf16.msra.mxu0 %v2639
    %7038 = vmatpush.bf16.msra.mxu0 %v2631
    %7039 = vmatpush.bf16.msra.mxu0 %v2623
    %7040 = vmatpush.bf16.msra.mxu0 %v2615
    %7041 = vmatmul.bf16.gmra.mxu0 %v6710
    %v7042 = vpop.f32.mrf.mxu0
    %v7043 = vadd.f32 %v1831, %v7042
    %v7044 = vpop.f32.mrf.mxu0
    %7045 = vdwg.mxu0
    %7046 = vmatpush.bf16.msra.mxu0 %v2735
    %7047 = vmatpush.bf16.msra.mxu0 %v2727
    %7048 = vmatpush.bf16.msra.mxu0 %v2719
    %7049 = vmatpush.bf16.msra.mxu0 %v2711
    %7050 = vmatpush.bf16.msra.mxu0 %v2703
    %7051 = vmatpush.bf16.msra.mxu0 %v2695
    %7052 = vmatpush.bf16.msra.mxu0 %v2687
    %7053 = vmatpush.bf16.msra.mxu0 %v2679
    %7054 = vmatmul.bf16.gmra.mxu0 %v6711
    %v7055 = vpop.f32.mrf.mxu0
    %v7056 = vadd.f32 %v7043, %v7055
    %v7057 = vpop.f32.mrf.mxu0
    %7058 = vdwg.mxu0
    %7059 = vmatpush.bf16.msra.mxu0 %v2799
    %7060 = vmatpush.bf16.msra.mxu0 %v2791
    %7061 = vmatpush.bf16.msra.mxu0 %v2783
    %7062 = vmatpush.bf16.msra.mxu0 %v2775
    %7063 = vmatpush.bf16.msra.mxu0 %v2767
    %7064 = vmatpush.bf16.msra.mxu0 %v2759
    %7065 = vmatpush.bf16.msra.mxu0 %v2751
    %7066 = vmatpush.bf16.msra.mxu0 %v2743
    %7067 = vmatmul.bf16.gmra.mxu0 %v6717
    %v7068 = vpop.f32.mrf.mxu0
    %v7069 = vadd.f32 %v7056, %v7068
    %v7070 = vpop.f32.mrf.mxu0
    %7071 = vdwg.mxu0
    %7072 = vmatpush.bf16.msra.mxu0 %v2863
    %7073 = vmatpush.bf16.msra.mxu0 %v2855
    %7074 = vmatpush.bf16.msra.mxu0 %v2847
    %7075 = vmatpush.bf16.msra.mxu0 %v2839
    %7076 = vmatpush.bf16.msra.mxu0 %v2831
    %7077 = vmatpush.bf16.msra.mxu0 %v2823
    %7078 = vmatpush.bf16.msra.mxu0 %v2815
    %7079 = vmatpush.bf16.msra.mxu0 %v2807
    %7080 = vmatmul.bf16.gmra.mxu0 %v6718
    %v7081 = vpop.f32.mrf.mxu0
    %v7082 = vadd.f32 %v7069, %v7081
    %v7083 = vpop.f32.mrf.mxu0
    %7084 = vdwg.mxu0
    %7085 = vmatpush.bf16.msra.mxu0 %v2672
    %7086 = vmatpush.bf16.msra.mxu0 %v2664
    %7087 = vmatpush.bf16.msra.mxu0 %v2656
    %7088 = vmatpush.bf16.msra.mxu0 %v2648
    %7089 = vmatpush.bf16.msra.mxu0 %v2640
    %7090 = vmatpush.bf16.msra.mxu0 %v2632
    %7091 = vmatpush.bf16.msra.mxu0 %v2624
    %7092 = vmatpush.bf16.msra.mxu0 %v2616
    %7093 = vmatmul.bf16.gmra.mxu0 %v6710
    %v7094 = vpop.f32.mrf.mxu0
    %v7095 = vadd.f32 %v1832, %v7094
    %v7096 = vpop.f32.mrf.mxu0
    %7097 = vdwg.mxu0
    %7098 = vmatpush.bf16.msra.mxu0 %v2736
    %7099 = vmatpush.bf16.msra.mxu0 %v2728
    %7100 = vmatpush.bf16.msra.mxu0 %v2720
    %7101 = vmatpush.bf16.msra.mxu0 %v2712
    %7102 = vmatpush.bf16.msra.mxu0 %v2704
    %7103 = vmatpush.bf16.msra.mxu0 %v2696
    %7104 = vmatpush.bf16.msra.mxu0 %v2688
    %7105 = vmatpush.bf16.msra.mxu0 %v2680
    %7106 = vmatmul.bf16.gmra.mxu0 %v6711
    %v7107 = vpop.f32.mrf.mxu0
    %v7108 = vadd.f32 %v7095, %v7107
    %v7109 = vpop.f32.mrf.mxu0
    %7110 = vdwg.mxu0
    %7111 = vmatpush.bf16.msra.mxu0 %v2800
    %7112 = vmatpush.bf16.msra.mxu0 %v2792
    %7113 = vmatpush.bf16.msra.mxu0 %v2784
    %7114 = vmatpush.bf16.msra.mxu0 %v2776
    %7115 = vmatpush.bf16.msra.mxu0 %v2768
    %7116 = vmatpush.bf16.msra.mxu0 %v2760
    %7117 = vmatpush.bf16.msra.mxu0 %v2752
    %7118 = vmatpush.bf16.msra.mxu0 %v2744
    %7119 = vmatmul.bf16.gmra.mxu0 %v6717
    %v7120 = vpop.f32.mrf.mxu0
    %v7121 = vadd.f32 %v7108, %v7120
    %v7122 = vpop.f32.mrf.mxu0
    %7123 = vdwg.mxu0
    %7124 = vmatpush.bf16.msra.mxu0 %v2864
    %7125 = vmatpush.bf16.msra.mxu0 %v2856
    %7126 = vmatpush.bf16.msra.mxu0 %v2848
    %7127 = vmatpush.bf16.msra.mxu0 %v2840
    %7128 = vmatpush.bf16.msra.mxu0 %v2832
    %7129 = vmatpush.bf16.msra.mxu0 %v2824
    %7130 = vmatpush.bf16.msra.mxu0 %v2816
    %7131 = vmatpush.bf16.msra.mxu0 %v2808
    %7132 = vmatmul.bf16.gmra.mxu0 %v6718
    %v7133 = vpop.f32.mrf.mxu0
    %v7134 = vadd.f32 %v7121, %v7133
    %v7135 = vpop.f32.mrf.mxu0
    %7136 = vdwg.mxu0
    %v7137 = vxor.u32 %v6770, 2147483648
    %v7138 = vxor.u32 %v6822, 2147483648
    %v7139 = vmul.f32 %v7137, 1.442695
    %v7140 = vpow.pop %v7139
    %v7141 = vmul.f32 %v7138, 1.442695
    %v7142 = vpow.pop %v7141
    %v7143 = vadd.f32 %v7140, 1.0
    %v7144 = vadd.f32 %v7142, 1.0
    %v7145 = vrcp.pop %v7143
    %v7146 = vmul.f32 %v7143, %v7145
    %v7147 = vsub.f32 1.0, %v7146
    %v7148 = vmul.f32 %v7145, %v7147
    %v7149 = vadd.f32 %v7145, %v7148
    %vm7150 = vweird.f32 %v7143
    %vm7151 = vweird.f32 %v7145
    %vm7152 = vmor %vm7150, %vm7151
    %v7153 = vsel %vm7152, %v7145, %v7149
    %v7154 = vand.u32 2147483647, %v7143
    %vm7155 = vcmp.eq.f32.partialorder %v7154, 8.507059e+37
    %v7156 = vand.u32 %v7143, 2147483648
    %v7157 = vor.u32 1.1754944e-38, %v7156
    %v7158 = vsel %vm7155, %v7157, %v7153
    %v7159 = vmul.f32 1.0, %v7158
    %v7160 = vrcp.pop %v7144
    %v7161 = vmul.f32 %v7144, %v7160
    %v7162 = vsub.f32 1.0, %v7161
    %v7163 = vmul.f32 %v7160, %v7162
    %v7164 = vadd.f32 %v7160, %v7163
    %vm7165 = vweird.f32 %v7144
    %vm7166 = vweird.f32 %v7160
    %vm7167 = vmor %vm7165, %vm7166
    %v7168 = vsel %vm7167, %v7160, %v7164
    %v7169 = vand.u32 2147483647, %v7144
    %vm7170 = vcmp.eq.f32.partialorder %v7169, 8.507059e+37
    %v7171 = vand.u32 %v7144, 2147483648
    %v7172 = vor.u32 1.1754944e-38, %v7171
    %v7173 = vsel %vm7170, %v7172, %v7168
    %v7174 = vmul.f32 1.0, %v7173
    %v7175 = vxor.u32 %v6874, 2147483648
    %v7176 = vxor.u32 %v6926, 2147483648
    %v7177 = vmul.f32 %v7175, 1.442695
    %v7178 = vpow.pop %v7177
    %v7179 = vmul.f32 %v7176, 1.442695
    %v7180 = vpow.pop %v7179
    %v7181 = vadd.f32 %v7178, 1.0
    %v7182 = vadd.f32 %v7180, 1.0
    %v7183 = vrcp.pop %v7181
    %v7184 = vmul.f32 %v7181, %v7183
    %v7185 = vsub.f32 1.0, %v7184
    %v7186 = vmul.f32 %v7183, %v7185
    %v7187 = vadd.f32 %v7183, %v7186
    %vm7188 = vweird.f32 %v7181
    %vm7189 = vweird.f32 %v7183
    %vm7190 = vmor %vm7188, %vm7189
    %v7191 = vsel %vm7190, %v7183, %v7187
    %v7192 = vand.u32 2147483647, %v7181
    %vm7193 = vcmp.eq.f32.partialorder %v7192, 8.507059e+37
    %v7194 = vand.u32 %v7181, 2147483648
    %v7195 = vor.u32 1.1754944e-38, %v7194
    %v7196 = vsel %vm7193, %v7195, %v7191
    %v7197 = vmul.f32 1.0, %v7196
    %v7198 = vrcp.pop %v7182
    %v7199 = vmul.f32 %v7182, %v7198
    %v7200 = vsub.f32 1.0, %v7199
    %v7201 = vmul.f32 %v7198, %v7200
    %v7202 = vadd.f32 %v7198, %v7201
    %vm7203 = vweird.f32 %v7182
    %vm7204 = vweird.f32 %v7198
    %vm7205 = vmor %vm7203, %vm7204
    %v7206 = vsel %vm7205, %v7198, %v7202
    %v7207 = vand.u32 2147483647, %v7182
    %vm7208 = vcmp.eq.f32.partialorder %v7207, 8.507059e+37
    %v7209 = vand.u32 %v7182, 2147483648
    %v7210 = vor.u32 1.1754944e-38, %v7209
    %v7211 = vsel %vm7208, %v7210, %v7206
    %v7212 = vmul.f32 1.0, %v7211
    %v7213 = vtanh.pop %v6978
    %v7214 = vtanh.pop %v7030
    %v7215 = vxor.u32 %v7082, 2147483648
    %v7216 = vxor.u32 %v7134, 2147483648
    %v7217 = vmul.f32 %v7215, 1.442695
    %v7218 = vpow.pop %v7217
    %v7219 = vmul.f32 %v7216, 1.442695
    %v7220 = vpow.pop %v7219
    %v7221 = vadd.f32 %v7218, 1.0
    %v7222 = vadd.f32 %v7220, 1.0
    %v7223 = vrcp.pop %v7221
    %v7224 = vmul.f32 %v7221, %v7223
    %v7225 = vsub.f32 1.0, %v7224
    %v7226 = vmul.f32 %v7223, %v7225
    %v7227 = vadd.f32 %v7223, %v7226
    %vm7228 = vweird.f32 %v7221
    %vm7229 = vweird.f32 %v7223
    %vm7230 = vmor %vm7228, %vm7229
    %v7231 = vsel %vm7230, %v7223, %v7227
    %v7232 = vand.u32 2147483647, %v7221
    %vm7233 = vcmp.eq.f32.partialorder %v7232, 8.507059e+37
    %v7234 = vand.u32 %v7221, 2147483648
    %v7235 = vor.u32 1.1754944e-38, %v7234
    %v7236 = vsel %vm7233, %v7235, %v7231
    %v7237 = vmul.f32 1.0, %v7236
    %v7238 = vrcp.pop %v7222
    %v7239 = vmul.f32 %v7222, %v7238
    %v7240 = vsub.f32 1.0, %v7239
    %v7241 = vmul.f32 %v7238, %v7240
    %v7242 = vadd.f32 %v7238, %v7241
    %vm7243 = vweird.f32 %v7222
    %vm7244 = vweird.f32 %v7238
    %vm7245 = vmor %vm7243, %vm7244
    %v7246 = vsel %vm7245, %v7238, %v7242
    %v7247 = vand.u32 2147483647, %v7222
    %vm7248 = vcmp.eq.f32.partialorder %v7247, 8.507059e+37
    %v7249 = vand.u32 %v7222, 2147483648
    %v7250 = vor.u32 1.1754944e-38, %v7249
    %v7251 = vsel %vm7248, %v7250, %v7246
    %v7252 = vmul.f32 1.0, %v7251
    %v7253 = vmul.f32 %v7197, %v6357
    %v7254 = vmul.f32 %v7212, %v6358
    %v7255 = vmul.f32 %v7159, %v7213
    %v7256 = vmul.f32 %v7174, %v7214
    %v7257 = vadd.f32 %v7253, %v7255
    %v7258 = vadd.f32 %v7254, %v7256
    %v7259 = vtanh.pop %v7257
    %v7260 = vtanh.pop %v7258
    %v7261 = vmul.f32 %v7237, %v7259
    %v7262 = vmul.f32 %v7252, %v7260
    %7263 = vmatpush.bf16.msra.mxu0 %v1018
    %7264 = vmatpush.bf16.msra.mxu0 %v1010
    %7265 = vmatpush.bf16.msra.mxu0 %v1002
    %7266 = vmatpush.bf16.msra.mxu0 %v994
    %7267 = vmatpush.bf16.msra.mxu0 %v986
    %7268 = vmatpush.bf16.msra.mxu0 %v978
    %7269 = vmatpush.bf16.msra.mxu0 %v970
    %7270 = vmatpush.bf16.msra.mxu0 %v962
    %7271 = vmatmul.bf16.gmra.mxu0 %v6710
    %v7272 = vpop.f32.mrf.mxu0
    %v7273 = vadd.f32 0.0, %v7272
    %v7274 = vpop.f32.mrf.mxu0
    %7275 = vdwg.mxu0
    %7276 = vmatpush.bf16.msra.mxu0 %v1082
    %7277 = vmatpush.bf16.msra.mxu0 %v1074
    %7278 = vmatpush.bf16.msra.mxu0 %v1066
    %7279 = vmatpush.bf16.msra.mxu0 %v1058
    %7280 = vmatpush.bf16.msra.mxu0 %v1050
    %7281 = vmatpush.bf16.msra.mxu0 %v1042
    %7282 = vmatpush.bf16.msra.mxu0 %v1034
    %7283 = vmatpush.bf16.msra.mxu0 %v1026
    %7284 = vmatmul.bf16.gmra.mxu0 %v6711
    %v7285 = vpop.f32.mrf.mxu0
    %v7286 = vadd.f32 %v7273, %v7285
    %v7287 = vpop.f32.mrf.mxu0
    %7288 = vdwg.mxu0
    %7289 = vmatpush.bf16.msra.mxu0 %v1019
    %7290 = vmatpush.bf16.msra.mxu0 %v1011
    %7291 = vmatpush.bf16.msra.mxu0 %v1003
    %7292 = vmatpush.bf16.msra.mxu0 %v995
    %7293 = vmatpush.bf16.msra.mxu0 %v987
    %7294 = vmatpush.bf16.msra.mxu0 %v979
    %7295 = vmatpush.bf16.msra.mxu0 %v971
    %7296 = vmatpush.bf16.msra.mxu0 %v963
    %7297 = vmatmul.bf16.gmra.mxu0 %v6710
    %v7298 = vpop.f32.mrf.mxu0
    %v7299 = vadd.f32 0.0, %v7298
    %v7300 = vpop.f32.mrf.mxu0
    %7301 = vdwg.mxu0
    %7302 = vmatpush.bf16.msra.mxu0 %v1083
    %7303 = vmatpush.bf16.msra.mxu0 %v1075
    %7304 = vmatpush.bf16.msra.mxu0 %v1067
    %7305 = vmatpush.bf16.msra.mxu0 %v1059
    %7306 = vmatpush.bf16.msra.mxu0 %v1051
    %7307 = vmatpush.bf16.msra.mxu0 %v1043
    %7308 = vmatpush.bf16.msra.mxu0 %v1035
    %7309 = vmatpush.bf16.msra.mxu0 %v1027
    %7310 = vmatmul.bf16.gmra.mxu0 %v6711
    %v7311 = vpop.f32.mrf.mxu0
    %v7312 = vadd.f32 %v7299, %v7311
    %v7313 = vpop.f32.mrf.mxu0
    %7314 = vdwg.mxu0
    %7315 = vmatpush.bf16.msra.mxu0 %v1020
    %7316 = vmatpush.bf16.msra.mxu0 %v1012
    %7317 = vmatpush.bf16.msra.mxu0 %v1004
    %7318 = vmatpush.bf16.msra.mxu0 %v996
    %7319 = vmatpush.bf16.msra.mxu0 %v988
    %7320 = vmatpush.bf16.msra.mxu0 %v980
    %7321 = vmatpush.bf16.msra.mxu0 %v972
    %7322 = vmatpush.bf16.msra.mxu0 %v964
    %7323 = vmatmul.bf16.gmra.mxu0 %v6710
    %v7324 = vpop.f32.mrf.mxu0
    %v7325 = vadd.f32 0.0, %v7324
    %v7326 = vpop.f32.mrf.mxu0
    %7327 = vdwg.mxu0
    %7328 = vmatpush.bf16.msra.mxu0 %v1084
    %7329 = vmatpush.bf16.msra.mxu0 %v1076
    %7330 = vmatpush.bf16.msra.mxu0 %v1068
    %7331 = vmatpush.bf16.msra.mxu0 %v1060
    %7332 = vmatpush.bf16.msra.mxu0 %v1052
    %7333 = vmatpush.bf16.msra.mxu0 %v1044
    %7334 = vmatpush.bf16.msra.mxu0 %v1036
    %7335 = vmatpush.bf16.msra.mxu0 %v1028
    %7336 = vmatmul.bf16.gmra.mxu0 %v6711
    %v7337 = vpop.f32.mrf.mxu0
    %v7338 = vadd.f32 %v7325, %v7337
    %v7339 = vpop.f32.mrf.mxu0
    %7340 = vdwg.mxu0
    %7341 = vmatpush.bf16.msra.mxu0 %v1021
    %7342 = vmatpush.bf16.msra.mxu0 %v1013
    %7343 = vmatpush.bf16.msra.mxu0 %v1005
    %7344 = vmatpush.bf16.msra.mxu0 %v997
    %7345 = vmatpush.bf16.msra.mxu0 %v989
    %7346 = vmatpush.bf16.msra.mxu0 %v981
    %7347 = vmatpush.bf16.msra.mxu0 %v973
    %7348 = vmatpush.bf16.msra.mxu0 %v965
    %7349 = vmatmul.bf16.gmra.mxu0 %v6710
    %v7350 = vpop.f32.mrf.mxu0
    %v7351 = vadd.f32 0.0, %v7350
    %v7352 = vpop.f32.mrf.mxu0
    %7353 = vdwg.mxu0
    %7354 = vmatpush.bf16.msra.mxu0 %v1085
    %7355 = vmatpush.bf16.msra.mxu0 %v1077
    %7356 = vmatpush.bf16.msra.mxu0 %v1069
    %7357 = vmatpush.bf16.msra.mxu0 %v1061
    %7358 = vmatpush.bf16.msra.mxu0 %v1053
    %7359 = vmatpush.bf16.msra.mxu0 %v1045
    %7360 = vmatpush.bf16.msra.mxu0 %v1037
    %7361 = vmatpush.bf16.msra.mxu0 %v1029
    %7362 = vmatmul.bf16.gmra.mxu0 %v6711
    %v7363 = vpop.f32.mrf.mxu0
    %v7364 = vadd.f32 %v7351, %v7363
    %v7365 = vpop.f32.mrf.mxu0
    %7366 = vdwg.mxu0
    %7367 = vmatpush.bf16.msra.mxu0 %v1022
    %7368 = vmatpush.bf16.msra.mxu0 %v1014
    %7369 = vmatpush.bf16.msra.mxu0 %v1006
    %7370 = vmatpush.bf16.msra.mxu0 %v998
    %7371 = vmatpush.bf16.msra.mxu0 %v990
    %7372 = vmatpush.bf16.msra.mxu0 %v982
    %7373 = vmatpush.bf16.msra.mxu0 %v974
    %7374 = vmatpush.bf16.msra.mxu0 %v966
    %7375 = vmatmul.bf16.gmra.mxu0 %v6710
    %v7376 = vpop.f32.mrf.mxu0
    %v7377 = vadd.f32 0.0, %v7376
    %v7378 = vpop.f32.mrf.mxu0
    %7379 = vdwg.mxu0
    %7380 = vmatpush.bf16.msra.mxu0 %v1086
    %7381 = vmatpush.bf16.msra.mxu0 %v1078
    %7382 = vmatpush.bf16.msra.mxu0 %v1070
    %7383 = vmatpush.bf16.msra.mxu0 %v1062
    %7384 = vmatpush.bf16.msra.mxu0 %v1054
    %7385 = vmatpush.bf16.msra.mxu0 %v1046
    %7386 = vmatpush.bf16.msra.mxu0 %v1038
    %7387 = vmatpush.bf16.msra.mxu0 %v1030
    %7388 = vmatmul.bf16.gmra.mxu0 %v6711
    %v7389 = vpop.f32.mrf.mxu0
    %v7390 = vadd.f32 %v7377, %v7389
    %v7391 = vpop.f32.mrf.mxu0
    %7392 = vdwg.mxu0
    %7393 = vmatpush.bf16.msra.mxu0 %v1023
    %7394 = vmatpush.bf16.msra.mxu0 %v1015
    %7395 = vmatpush.bf16.msra.mxu0 %v1007
    %7396 = vmatpush.bf16.msra.mxu0 %v999
    %7397 = vmatpush.bf16.msra.mxu0 %v991
    %7398 = vmatpush.bf16.msra.mxu0 %v983
    %7399 = vmatpush.bf16.msra.mxu0 %v975
    %7400 = vmatpush.bf16.msra.mxu0 %v967
    %7401 = vmatmul.bf16.gmra.mxu0 %v6710
    %v7402 = vpop.f32.mrf.mxu0
    %v7403 = vadd.f32 0.0, %v7402
    %v7404 = vpop.f32.mrf.mxu0
    %7405 = vdwg.mxu0
    %7406 = vmatpush.bf16.msra.mxu0 %v1087
    %7407 = vmatpush.bf16.msra.mxu0 %v1079
    %7408 = vmatpush.bf16.msra.mxu0 %v1071
    %7409 = vmatpush.bf16.msra.mxu0 %v1063
    %7410 = vmatpush.bf16.msra.mxu0 %v1055
    %7411 = vmatpush.bf16.msra.mxu0 %v1047
    %7412 = vmatpush.bf16.msra.mxu0 %v1039
    %7413 = vmatpush.bf16.msra.mxu0 %v1031
    %7414 = vmatmul.bf16.gmra.mxu0 %v6711
    %v7415 = vpop.f32.mrf.mxu0
    %v7416 = vadd.f32 %v7403, %v7415
    %v7417 = vpop.f32.mrf.mxu0
    %7418 = vdwg.mxu0
    %7419 = vmatpush.bf16.msra.mxu0 %v1024
    %7420 = vmatpush.bf16.msra.mxu0 %v1016
    %7421 = vmatpush.bf16.msra.mxu0 %v1008
    %7422 = vmatpush.bf16.msra.mxu0 %v1000
    %7423 = vmatpush.bf16.msra.mxu0 %v992
    %7424 = vmatpush.bf16.msra.mxu0 %v984
    %7425 = vmatpush.bf16.msra.mxu0 %v976
    %7426 = vmatpush.bf16.msra.mxu0 %v968
    %7427 = vmatmul.bf16.gmra.mxu0 %v6710
    %v7428 = vpop.f32.mrf.mxu0
    %v7429 = vadd.f32 0.0, %v7428
    %v7430 = vpop.f32.mrf.mxu0
    %7431 = vdwg.mxu0
    %7432 = vmatpush.bf16.msra.mxu0 %v1088
    %7433 = vmatpush.bf16.msra.mxu0 %v1080
    %7434 = vmatpush.bf16.msra.mxu0 %v1072
    %7435 = vmatpush.bf16.msra.mxu0 %v1064
    %7436 = vmatpush.bf16.msra.mxu0 %v1056
    %7437 = vmatpush.bf16.msra.mxu0 %v1048
    %7438 = vmatpush.bf16.msra.mxu0 %v1040
    %7439 = vmatpush.bf16.msra.mxu0 %v1032
    %7440 = vmatmul.bf16.gmra.mxu0 %v6711
    %v7441 = vpop.f32.mrf.mxu0
    %v7442 = vadd.f32 %v7429, %v7441
    %v7443 = vpop.f32.mrf.mxu0
    %7444 = vdwg.mxu0
    %7445 = vmatpush.bf16.msra.mxu0 %v1025
    %7446 = vmatpush.bf16.msra.mxu0 %v1017
    %7447 = vmatpush.bf16.msra.mxu0 %v1009
    %7448 = vmatpush.bf16.msra.mxu0 %v1001
    %7449 = vmatpush.bf16.msra.mxu0 %v993
    %7450 = vmatpush.bf16.msra.mxu0 %v985
    %7451 = vmatpush.bf16.msra.mxu0 %v977
    %7452 = vmatpush.bf16.msra.mxu0 %v969
    %7453 = vmatmul.bf16.gmra.mxu0 %v6710
    %v7454 = vpop.f32.mrf.mxu0
    %v7455 = vadd.f32 0.0, %v7454
    %v7456 = vpop.f32.mrf.mxu0
    %7457 = vdwg.mxu0
    %7458 = vmatpush.bf16.msra.mxu0 %v1089
    %7459 = vmatpush.bf16.msra.mxu0 %v1081
    %7460 = vmatpush.bf16.msra.mxu0 %v1073
    %7461 = vmatpush.bf16.msra.mxu0 %v1065
    %7462 = vmatpush.bf16.msra.mxu0 %v1057
    %7463 = vmatpush.bf16.msra.mxu0 %v1049
    %7464 = vmatpush.bf16.msra.mxu0 %v1041
    %7465 = vmatpush.bf16.msra.mxu0 %v1033
    %7466 = vmatmul.bf16.gmra.mxu0 %v6711
    %v7467 = vpop.f32.mrf.mxu0
    %v7468 = vadd.f32 %v7455, %v7467
    %v7469 = vpop.f32.mrf.mxu0
    %7470 = vdwg.mxu0
    %v7471 = vadd.f32 %v239, %v7286
    %v7472 = vadd.f32 %v268, %v7312
    %v7473 = vadd.f32 %v297, %v7338
    %v7474 = vadd.f32 %v326, %v7364
    %v7475 = vadd.f32 %v355, %v7390
    %v7476 = vadd.f32 %v384, %v7416
    %v7477 = vadd.f32 %v413, %v7442
    %v7478 = vadd.f32 %v442, %v7468
    %v7479 = vxor.u32 %v7471, 2147483648
    %v7480 = vxor.u32 %v7472, 2147483648
    %v7481 = vmul.f32 %v7479, 1.442695
    %v7482 = vpow.pop %v7481
    %v7483 = vmul.f32 %v7480, 1.442695
    %v7484 = vpow.pop %v7483
    %v7485 = vadd.f32 %v7482, 1.0
    %v7486 = vadd.f32 %v7484, 1.0
    %v7487 = vrcp.pop %v7485
    %v7488 = vmul.f32 %v7485, %v7487
    %v7489 = vsub.f32 1.0, %v7488
    %v7490 = vmul.f32 %v7487, %v7489
    %v7491 = vadd.f32 %v7487, %v7490
    %vm7492 = vweird.f32 %v7485
    %vm7493 = vweird.f32 %v7487
    %vm7494 = vmor %vm7492, %vm7493
    %v7495 = vsel %vm7494, %v7487, %v7491
    %v7496 = vand.u32 2147483647, %v7485
    %vm7497 = vcmp.eq.f32.partialorder %v7496, 8.507059e+37
    %v7498 = vand.u32 %v7485, 2147483648
    %v7499 = vor.u32 1.1754944e-38, %v7498
    %v7500 = vsel %vm7497, %v7499, %v7495
    %v7501 = vmul.f32 1.0, %v7500
    %v7502 = vrcp.pop %v7486
    %v7503 = vmul.f32 %v7486, %v7502
    %v7504 = vsub.f32 1.0, %v7503
    %v7505 = vmul.f32 %v7502, %v7504
    %v7506 = vadd.f32 %v7502, %v7505
    %vm7507 = vweird.f32 %v7486
    %vm7508 = vweird.f32 %v7502
    %vm7509 = vmor %vm7507, %vm7508
    %v7510 = vsel %vm7509, %v7502, %v7506
    %v7511 = vand.u32 2147483647, %v7486
    %vm7512 = vcmp.eq.f32.partialorder %v7511, 8.507059e+37
    %v7513 = vand.u32 %v7486, 2147483648
    %v7514 = vor.u32 1.1754944e-38, %v7513
    %v7515 = vsel %vm7512, %v7514, %v7510
    %v7516 = vmul.f32 1.0, %v7515
    %v7517 = vxor.u32 %v7473, 2147483648
    %v7518 = vxor.u32 %v7474, 2147483648
    %v7519 = vmul.f32 %v7517, 1.442695
    %v7520 = vpow.pop %v7519
    %v7521 = vmul.f32 %v7518, 1.442695
    %v7522 = vpow.pop %v7521
    %v7523 = vadd.f32 %v7520, 1.0
    %v7524 = vadd.f32 %v7522, 1.0
    %v7525 = vrcp.pop %v7523
    %v7526 = vmul.f32 %v7523, %v7525
    %v7527 = vsub.f32 1.0, %v7526
    %v7528 = vmul.f32 %v7525, %v7527
    %v7529 = vadd.f32 %v7525, %v7528
    %vm7530 = vweird.f32 %v7523
    %vm7531 = vweird.f32 %v7525
    %vm7532 = vmor %vm7530, %vm7531
    %v7533 = vsel %vm7532, %v7525, %v7529
    %v7534 = vand.u32 2147483647, %v7523
    %vm7535 = vcmp.eq.f32.partialorder %v7534, 8.507059e+37
    %v7536 = vand.u32 %v7523, 2147483648
    %v7537 = vor.u32 1.1754944e-38, %v7536
    %v7538 = vsel %vm7535, %v7537, %v7533
    %v7539 = vmul.f32 1.0, %v7538
    %v7540 = vrcp.pop %v7524
    %v7541 = vmul.f32 %v7524, %v7540
    %v7542 = vsub.f32 1.0, %v7541
    %v7543 = vmul.f32 %v7540, %v7542
    %v7544 = vadd.f32 %v7540, %v7543
    %vm7545 = vweird.f32 %v7524
    %vm7546 = vweird.f32 %v7540
    %vm7547 = vmor %vm7545, %vm7546
    %v7548 = vsel %vm7547, %v7540, %v7544
    %v7549 = vand.u32 2147483647, %v7524
    %vm7550 = vcmp.eq.f32.partialorder %v7549, 8.507059e+37
    %v7551 = vand.u32 %v7524, 2147483648
    %v7552 = vor.u32 1.1754944e-38, %v7551
    %v7553 = vsel %vm7550, %v7552, %v7548
    %v7554 = vmul.f32 1.0, %v7553
    %v7555 = vtanh.pop %v7475
    %v7556 = vtanh.pop %v7476
    %v7557 = vxor.u32 %v7477, 2147483648
    %v7558 = vxor.u32 %v7478, 2147483648
    %v7559 = vmul.f32 %v7557, 1.442695
    %v7560 = vpow.pop %v7559
    %v7561 = vmul.f32 %v7558, 1.442695
    %v7562 = vpow.pop %v7561
    %v7563 = vadd.f32 %v7560, 1.0
    %v7564 = vadd.f32 %v7562, 1.0
    %v7565 = vrcp.pop %v7563
    %v7566 = vmul.f32 %v7563, %v7565
    %v7567 = vsub.f32 1.0, %v7566
    %v7568 = vmul.f32 %v7565, %v7567
    %v7569 = vadd.f32 %v7565, %v7568
    %vm7570 = vweird.f32 %v7563
    %vm7571 = vweird.f32 %v7565
    %vm7572 = vmor %vm7570, %vm7571
    %v7573 = vsel %vm7572, %v7565, %v7569
    %v7574 = vand.u32 2147483647, %v7563
    %vm7575 = vcmp.eq.f32.partialorder %v7574, 8.507059e+37
    %v7576 = vand.u32 %v7563, 2147483648
    %v7577 = vor.u32 1.1754944e-38, %v7576
    %v7578 = vsel %vm7575, %v7577, %v7573
    %v7579 = vmul.f32 1.0, %v7578
    %v7580 = vrcp.pop %v7564
    %v7581 = vmul.f32 %v7564, %v7580
    %v7582 = vsub.f32 1.0, %v7581
    %v7583 = vmul.f32 %v7580, %v7582
    %v7584 = vadd.f32 %v7580, %v7583
    %vm7585 = vweird.f32 %v7564
    %vm7586 = vweird.f32 %v7580
    %vm7587 = vmor %vm7585, %vm7586
    %v7588 = vsel %vm7587, %v7580, %v7584
    %v7589 = vand.u32 2147483647, %v7564
    %vm7590 = vcmp.eq.f32.partialorder %v7589, 8.507059e+37
    %v7591 = vand.u32 %v7564, 2147483648
    %v7592 = vor.u32 1.1754944e-38, %v7591
    %v7593 = vsel %vm7590, %v7592, %v7588
    %v7594 = vmul.f32 1.0, %v7593
    %v7595 = vmul.f32 %v7539, %v6699
    %v7596 = vmul.f32 %v7554, %v6700
    %v7597 = vmul.f32 %v7501, %v7555
    %v7598 = vmul.f32 %v7516, %v7556
    %v7599 = vadd.f32 %v7595, %v7597
    %v7600 = vadd.f32 %v7596, %v7598
    %v7601 = vtanh.pop %v7599
    %v7602 = vtanh.pop %v7600
    %v7603 = vmul.f32 %v7579, %v7601
    %v7604 = vmul.f32 %v7594, %v7602
    %v7605 = vpack.c.bf16 %v7604, %v7603
    %v7606 = vpack.c.bf16 %v7262, %v7261
    %v7608 = vunpack.c.l.b16 %v7605
    %v7609 = vunpack.c.h.b16 %v7605
    %v7610 = vpack.c.b16 %v7608, %v7608
    %v7611 = vpack.c.b16 %v7609, %v7609
    %v7615 = vunpack.c.l.b16 %v7606
    %v7616 = vunpack.c.h.b16 %v7606
    %v7617 = vpack.c.b16 %v7615, %v7615
    %v7618 = vpack.c.b16 %v7616, %v7616
    %7621 = vmatpush.bf16.msra.mxu0 %v2665
    %7622 = vmatpush.bf16.msra.mxu0 %v2657
    %7623 = vmatpush.bf16.msra.mxu0 %v2649
    %7624 = vmatpush.bf16.msra.mxu0 %v2641
    %7625 = vmatpush.bf16.msra.mxu0 %v2633
    %7626 = vmatpush.bf16.msra.mxu0 %v2625
    %7627 = vmatpush.bf16.msra.mxu0 %v2617
    %7628 = vmatpush.bf16.msra.mxu0 %v2609
    %7629 = vmatmul.bf16.gmra.mxu0 %v7610
    %v7630 = vpop.f32.mrf.mxu0
    %v7631 = vadd.f32 %v1825, %v7630
    %v7632 = vpop.f32.mrf.mxu0
    %7633 = vdwg.mxu0
    %7634 = vmatpush.bf16.msra.mxu0 %v2729
    %7635 = vmatpush.bf16.msra.mxu0 %v2721
    %7636 = vmatpush.bf16.msra.mxu0 %v2713
    %7637 = vmatpush.bf16.msra.mxu0 %v2705
    %7638 = vmatpush.bf16.msra.mxu0 %v2697
    %7639 = vmatpush.bf16.msra.mxu0 %v2689
    %7640 = vmatpush.bf16.msra.mxu0 %v2681
    %7641 = vmatpush.bf16.msra.mxu0 %v2673
    %7642 = vmatmul.bf16.gmra.mxu0 %v7611
    %v7643 = vpop.f32.mrf.mxu0
    %v7644 = vadd.f32 %v7631, %v7643
    %v7645 = vpop.f32.mrf.mxu0
    %7646 = vdwg.mxu0
    %7647 = vmatpush.bf16.msra.mxu0 %v2793
    %7648 = vmatpush.bf16.msra.mxu0 %v2785
    %7649 = vmatpush.bf16.msra.mxu0 %v2777
    %7650 = vmatpush.bf16.msra.mxu0 %v2769
    %7651 = vmatpush.bf16.msra.mxu0 %v2761
    %7652 = vmatpush.bf16.msra.mxu0 %v2753
    %7653 = vmatpush.bf16.msra.mxu0 %v2745
    %7654 = vmatpush.bf16.msra.mxu0 %v2737
    %7655 = vmatmul.bf16.gmra.mxu0 %v7617
    %v7656 = vpop.f32.mrf.mxu0
    %v7657 = vadd.f32 %v7644, %v7656
    %v7658 = vpop.f32.mrf.mxu0
    %7659 = vdwg.mxu0
    %7660 = vmatpush.bf16.msra.mxu0 %v2857
    %7661 = vmatpush.bf16.msra.mxu0 %v2849
    %7662 = vmatpush.bf16.msra.mxu0 %v2841
    %7663 = vmatpush.bf16.msra.mxu0 %v2833
    %7664 = vmatpush.bf16.msra.mxu0 %v2825
    %7665 = vmatpush.bf16.msra.mxu0 %v2817
    %7666 = vmatpush.bf16.msra.mxu0 %v2809
    %7667 = vmatpush.bf16.msra.mxu0 %v2801
    %7668 = vmatmul.bf16.gmra.mxu0 %v7618
    %v7669 = vpop.f32.mrf.mxu0
    %v7670 = vadd.f32 %v7657, %v7669
    %v7671 = vpop.f32.mrf.mxu0
    %7672 = vdwg.mxu0
    %7673 = vmatpush.bf16.msra.mxu0 %v2666
    %7674 = vmatpush.bf16.msra.mxu0 %v2658
    %7675 = vmatpush.bf16.msra.mxu0 %v2650
    %7676 = vmatpush.bf16.msra.mxu0 %v2642
    %7677 = vmatpush.bf16.msra.mxu0 %v2634
    %7678 = vmatpush.bf16.msra.mxu0 %v2626
    %7679 = vmatpush.bf16.msra.mxu0 %v2618
    %7680 = vmatpush.bf16.msra.mxu0 %v2610
    %7681 = vmatmul.bf16.gmra.mxu0 %v7610
    %v7682 = vpop.f32.mrf.mxu0
    %v7683 = vadd.f32 %v1826, %v7682
    %v7684 = vpop.f32.mrf.mxu0
    %7685 = vdwg.mxu0
    %7686 = vmatpush.bf16.msra.mxu0 %v2730
    %7687 = vmatpush.bf16.msra.mxu0 %v2722
    %7688 = vmatpush.bf16.msra.mxu0 %v2714
    %7689 = vmatpush.bf16.msra.mxu0 %v2706
    %7690 = vmatpush.bf16.msra.mxu0 %v2698
    %7691 = vmatpush.bf16.msra.mxu0 %v2690
    %7692 = vmatpush.bf16.msra.mxu0 %v2682
    %7693 = vmatpush.bf16.msra.mxu0 %v2674
    %7694 = vmatmul.bf16.gmra.mxu0 %v7611
    %v7695 = vpop.f32.mrf.mxu0
    %v7696 = vadd.f32 %v7683, %v7695
    %v7697 = vpop.f32.mrf.mxu0
    %7698 = vdwg.mxu0
    %7699 = vmatpush.bf16.msra.mxu0 %v2794
    %7700 = vmatpush.bf16.msra.mxu0 %v2786
    %7701 = vmatpush.bf16.msra.mxu0 %v2778
    %7702 = vmatpush.bf16.msra.mxu0 %v2770
    %7703 = vmatpush.bf16.msra.mxu0 %v2762
    %7704 = vmatpush.bf16.msra.mxu0 %v2754
    %7705 = vmatpush.bf16.msra.mxu0 %v2746
    %7706 = vmatpush.bf16.msra.mxu0 %v2738
    %7707 = vmatmul.bf16.gmra.mxu0 %v7617
    %v7708 = vpop.f32.mrf.mxu0
    %v7709 = vadd.f32 %v7696, %v7708
    %v7710 = vpop.f32.mrf.mxu0
    %7711 = vdwg.mxu0
    %7712 = vmatpush.bf16.msra.mxu0 %v2858
    %7713 = vmatpush.bf16.msra.mxu0 %v2850
    %7714 = vmatpush.bf16.msra.mxu0 %v2842
    %7715 = vmatpush.bf16.msra.mxu0 %v2834
    %7716 = vmatpush.bf16.msra.mxu0 %v2826
    %7717 = vmatpush.bf16.msra.mxu0 %v2818
    %7718 = vmatpush.bf16.msra.mxu0 %v2810
    %7719 = vmatpush.bf16.msra.mxu0 %v2802
    %7720 = vmatmul.bf16.gmra.mxu0 %v7618
    %v7721 = vpop.f32.mrf.mxu0
    %v7722 = vadd.f32 %v7709, %v7721
    %v7723 = vpop.f32.mrf.mxu0
    %7724 = vdwg.mxu0
    %7725 = vmatpush.bf16.msra.mxu0 %v2667
    %7726 = vmatpush.bf16.msra.mxu0 %v2659
    %7727 = vmatpush.bf16.msra.mxu0 %v2651
    %7728 = vmatpush.bf16.msra.mxu0 %v2643
    %7729 = vmatpush.bf16.msra.mxu0 %v2635
    %7730 = vmatpush.bf16.msra.mxu0 %v2627
    %7731 = vmatpush.bf16.msra.mxu0 %v2619
    %7732 = vmatpush.bf16.msra.mxu0 %v2611
    %7733 = vmatmul.bf16.gmra.mxu0 %v7610
    %v7734 = vpop.f32.mrf.mxu0
    %v7735 = vadd.f32 %v1827, %v7734
    %v7736 = vpop.f32.mrf.mxu0
    %7737 = vdwg.mxu0
    %7738 = vmatpush.bf16.msra.mxu0 %v2731
    %7739 = vmatpush.bf16.msra.mxu0 %v2723
    %7740 = vmatpush.bf16.msra.mxu0 %v2715
    %7741 = vmatpush.bf16.msra.mxu0 %v2707
    %7742 = vmatpush.bf16.msra.mxu0 %v2699
    %7743 = vmatpush.bf16.msra.mxu0 %v2691
    %7744 = vmatpush.bf16.msra.mxu0 %v2683
    %7745 = vmatpush.bf16.msra.mxu0 %v2675
    %7746 = vmatmul.bf16.gmra.mxu0 %v7611
    %v7747 = vpop.f32.mrf.mxu0
    %v7748 = vadd.f32 %v7735, %v7747
    %v7749 = vpop.f32.mrf.mxu0
    %7750 = vdwg.mxu0
    %7751 = vmatpush.bf16.msra.mxu0 %v2795
    %7752 = vmatpush.bf16.msra.mxu0 %v2787
    %7753 = vmatpush.bf16.msra.mxu0 %v2779
    %7754 = vmatpush.bf16.msra.mxu0 %v2771
    %7755 = vmatpush.bf16.msra.mxu0 %v2763
    %7756 = vmatpush.bf16.msra.mxu0 %v2755
    %7757 = vmatpush.bf16.msra.mxu0 %v2747
    %7758 = vmatpush.bf16.msra.mxu0 %v2739
    %7759 = vmatmul.bf16.gmra.mxu0 %v7617
    %v7760 = vpop.f32.mrf.mxu0
    %v7761 = vadd.f32 %v7748, %v7760
    %v7762 = vpop.f32.mrf.mxu0
    %7763 = vdwg.mxu0
    %7764 = vmatpush.bf16.msra.mxu0 %v2859
    %7765 = vmatpush.bf16.msra.mxu0 %v2851
    %7766 = vmatpush.bf16.msra.mxu0 %v2843
    %7767 = vmatpush.bf16.msra.mxu0 %v2835
    %7768 = vmatpush.bf16.msra.mxu0 %v2827
    %7769 = vmatpush.bf16.msra.mxu0 %v2819
    %7770 = vmatpush.bf16.msra.mxu0 %v2811
    %7771 = vmatpush.bf16.msra.mxu0 %v2803
    %7772 = vmatmul.bf16.gmra.mxu0 %v7618
    %v7773 = vpop.f32.mrf.mxu0
    %v7774 = vadd.f32 %v7761, %v7773
    %v7775 = vpop.f32.mrf.mxu0
    %7776 = vdwg.mxu0
    %7777 = vmatpush.bf16.msra.mxu0 %v2668
    %7778 = vmatpush.bf16.msra.mxu0 %v2660
    %7779 = vmatpush.bf16.msra.mxu0 %v2652
    %7780 = vmatpush.bf16.msra.mxu0 %v2644
    %7781 = vmatpush.bf16.msra.mxu0 %v2636
    %7782 = vmatpush.bf16.msra.mxu0 %v2628
    %7783 = vmatpush.bf16.msra.mxu0 %v2620
    %7784 = vmatpush.bf16.msra.mxu0 %v2612
    %7785 = vmatmul.bf16.gmra.mxu0 %v7610
    %v7786 = vpop.f32.mrf.mxu0
    %v7787 = vadd.f32 %v1828, %v7786
    %v7788 = vpop.f32.mrf.mxu0
    %7789 = vdwg.mxu0
    %7790 = vmatpush.bf16.msra.mxu0 %v2732
    %7791 = vmatpush.bf16.msra.mxu0 %v2724
    %7792 = vmatpush.bf16.msra.mxu0 %v2716
    %7793 = vmatpush.bf16.msra.mxu0 %v2708
    %7794 = vmatpush.bf16.msra.mxu0 %v2700
    %7795 = vmatpush.bf16.msra.mxu0 %v2692
    %7796 = vmatpush.bf16.msra.mxu0 %v2684
    %7797 = vmatpush.bf16.msra.mxu0 %v2676
    %7798 = vmatmul.bf16.gmra.mxu0 %v7611
    %v7799 = vpop.f32.mrf.mxu0
    %v7800 = vadd.f32 %v7787, %v7799
    %v7801 = vpop.f32.mrf.mxu0
    %7802 = vdwg.mxu0
    %7803 = vmatpush.bf16.msra.mxu0 %v2796
    %7804 = vmatpush.bf16.msra.mxu0 %v2788
    %7805 = vmatpush.bf16.msra.mxu0 %v2780
    %7806 = vmatpush.bf16.msra.mxu0 %v2772
    %7807 = vmatpush.bf16.msra.mxu0 %v2764
    %7808 = vmatpush.bf16.msra.mxu0 %v2756
    %7809 = vmatpush.bf16.msra.mxu0 %v2748
    %7810 = vmatpush.bf16.msra.mxu0 %v2740
    %7811 = vmatmul.bf16.gmra.mxu0 %v7617
    %v7812 = vpop.f32.mrf.mxu0
    %v7813 = vadd.f32 %v7800, %v7812
    %v7814 = vpop.f32.mrf.mxu0
    %7815 = vdwg.mxu0
    %7816 = vmatpush.bf16.msra.mxu0 %v2860
    %7817 = vmatpush.bf16.msra.mxu0 %v2852
    %7818 = vmatpush.bf16.msra.mxu0 %v2844
    %7819 = vmatpush.bf16.msra.mxu0 %v2836
    %7820 = vmatpush.bf16.msra.mxu0 %v2828
    %7821 = vmatpush.bf16.msra.mxu0 %v2820
    %7822 = vmatpush.bf16.msra.mxu0 %v2812
    %7823 = vmatpush.bf16.msra.mxu0 %v2804
    %7824 = vmatmul.bf16.gmra.mxu0 %v7618
    %v7825 = vpop.f32.mrf.mxu0
    %v7826 = vadd.f32 %v7813, %v7825
    %v7827 = vpop.f32.mrf.mxu0
    %7828 = vdwg.mxu0
    %7829 = vmatpush.bf16.msra.mxu0 %v2669
    %7830 = vmatpush.bf16.msra.mxu0 %v2661
    %7831 = vmatpush.bf16.msra.mxu0 %v2653
    %7832 = vmatpush.bf16.msra.mxu0 %v2645
    %7833 = vmatpush.bf16.msra.mxu0 %v2637
    %7834 = vmatpush.bf16.msra.mxu0 %v2629
    %7835 = vmatpush.bf16.msra.mxu0 %v2621
    %7836 = vmatpush.bf16.msra.mxu0 %v2613
    %7837 = vmatmul.bf16.gmra.mxu0 %v7610
    %v7838 = vpop.f32.mrf.mxu0
    %v7839 = vadd.f32 %v1829, %v7838
    %v7840 = vpop.f32.mrf.mxu0
    %7841 = vdwg.mxu0
    %7842 = vmatpush.bf16.msra.mxu0 %v2733
    %7843 = vmatpush.bf16.msra.mxu0 %v2725
    %7844 = vmatpush.bf16.msra.mxu0 %v2717
    %7845 = vmatpush.bf16.msra.mxu0 %v2709
    %7846 = vmatpush.bf16.msra.mxu0 %v2701
    %7847 = vmatpush.bf16.msra.mxu0 %v2693
    %7848 = vmatpush.bf16.msra.mxu0 %v2685
    %7849 = vmatpush.bf16.msra.mxu0 %v2677
    %7850 = vmatmul.bf16.gmra.mxu0 %v7611
    %v7851 = vpop.f32.mrf.mxu0
    %v7852 = vadd.f32 %v7839, %v7851
    %v7853 = vpop.f32.mrf.mxu0
    %7854 = vdwg.mxu0
    %7855 = vmatpush.bf16.msra.mxu0 %v2797
    %7856 = vmatpush.bf16.msra.mxu0 %v2789
    %7857 = vmatpush.bf16.msra.mxu0 %v2781
    %7858 = vmatpush.bf16.msra.mxu0 %v2773
    %7859 = vmatpush.bf16.msra.mxu0 %v2765
    %7860 = vmatpush.bf16.msra.mxu0 %v2757
    %7861 = vmatpush.bf16.msra.mxu0 %v2749
    %7862 = vmatpush.bf16.msra.mxu0 %v2741
    %7863 = vmatmul.bf16.gmra.mxu0 %v7617
    %v7864 = vpop.f32.mrf.mxu0
    %v7865 = vadd.f32 %v7852, %v7864
    %v7866 = vpop.f32.mrf.mxu0
    %7867 = vdwg.mxu0
    %7868 = vmatpush.bf16.msra.mxu0 %v2861
    %7869 = vmatpush.bf16.msra.mxu0 %v2853
    %7870 = vmatpush.bf16.msra.mxu0 %v2845
    %7871 = vmatpush.bf16.msra.mxu0 %v2837
    %7872 = vmatpush.bf16.msra.mxu0 %v2829
    %7873 = vmatpush.bf16.msra.mxu0 %v2821
    %7874 = vmatpush.bf16.msra.mxu0 %v2813
    %7875 = vmatpush.bf16.msra.mxu0 %v2805
    %7876 = vmatmul.bf16.gmra.mxu0 %v7618
    %v7877 = vpop.f32.mrf.mxu0
    %v7878 = vadd.f32 %v7865, %v7877
    %v7879 = vpop.f32.mrf.mxu0
    %7880 = vdwg.mxu0
    %7881 = vmatpush.bf16.msra.mxu0 %v2670
    %7882 = vmatpush.bf16.msra.mxu0 %v2662
    %7883 = vmatpush.bf16.msra.mxu0 %v2654
    %7884 = vmatpush.bf16.msra.mxu0 %v2646
    %7885 = vmatpush.bf16.msra.mxu0 %v2638
    %7886 = vmatpush.bf16.msra.mxu0 %v2630
    %7887 = vmatpush.bf16.msra.mxu0 %v2622
    %7888 = vmatpush.bf16.msra.mxu0 %v2614
    %7889 = vmatmul.bf16.gmra.mxu0 %v7610
    %v7890 = vpop.f32.mrf.mxu0
    %v7891 = vadd.f32 %v1830, %v7890
    %v7892 = vpop.f32.mrf.mxu0
    %7893 = vdwg.mxu0
    %7894 = vmatpush.bf16.msra.mxu0 %v2734
    %7895 = vmatpush.bf16.msra.mxu0 %v2726
    %7896 = vmatpush.bf16.msra.mxu0 %v2718
    %7897 = vmatpush.bf16.msra.mxu0 %v2710
    %7898 = vmatpush.bf16.msra.mxu0 %v2702
    %7899 = vmatpush.bf16.msra.mxu0 %v2694
    %7900 = vmatpush.bf16.msra.mxu0 %v2686
    %7901 = vmatpush.bf16.msra.mxu0 %v2678
    %7902 = vmatmul.bf16.gmra.mxu0 %v7611
    %v7903 = vpop.f32.mrf.mxu0
    %v7904 = vadd.f32 %v7891, %v7903
    %v7905 = vpop.f32.mrf.mxu0
    %7906 = vdwg.mxu0
    %7907 = vmatpush.bf16.msra.mxu0 %v2798
    %7908 = vmatpush.bf16.msra.mxu0 %v2790
    %7909 = vmatpush.bf16.msra.mxu0 %v2782
    %7910 = vmatpush.bf16.msra.mxu0 %v2774
    %7911 = vmatpush.bf16.msra.mxu0 %v2766
    %7912 = vmatpush.bf16.msra.mxu0 %v2758
    %7913 = vmatpush.bf16.msra.mxu0 %v2750
    %7914 = vmatpush.bf16.msra.mxu0 %v2742
    %7915 = vmatmul.bf16.gmra.mxu0 %v7617
    %v7916 = vpop.f32.mrf.mxu0
    %v7917 = vadd.f32 %v7904, %v7916
    %v7918 = vpop.f32.mrf.mxu0
    %7919 = vdwg.mxu0
    %7920 = vmatpush.bf16.msra.mxu0 %v2862
    %7921 = vmatpush.bf16.msra.mxu0 %v2854
    %7922 = vmatpush.bf16.msra.mxu0 %v2846
    %7923 = vmatpush.bf16.msra.mxu0 %v2838
    %7924 = vmatpush.bf16.msra.mxu0 %v2830
    %7925 = vmatpush.bf16.msra.mxu0 %v2822
    %7926 = vmatpush.bf16.msra.mxu0 %v2814
    %7927 = vmatpush.bf16.msra.mxu0 %v2806
    %7928 = vmatmul.bf16.gmra.mxu0 %v7618
    %v7929 = vpop.f32.mrf.mxu0
    %v7930 = vadd.f32 %v7917, %v7929
    %v7931 = vpop.f32.mrf.mxu0
    %7932 = vdwg.mxu0
    %7933 = vmatpush.bf16.msra.mxu0 %v2671
    %7934 = vmatpush.bf16.msra.mxu0 %v2663
    %7935 = vmatpush.bf16.msra.mxu0 %v2655
    %7936 = vmatpush.bf16.msra.mxu0 %v2647
    %7937 = vmatpush.bf16.msra.mxu0 %v2639
    %7938 = vmatpush.bf16.msra.mxu0 %v2631
    %7939 = vmatpush.bf16.msra.mxu0 %v2623
    %7940 = vmatpush.bf16.msra.mxu0 %v2615
    %7941 = vmatmul.bf16.gmra.mxu0 %v7610
    %v7942 = vpop.f32.mrf.mxu0
    %v7943 = vadd.f32 %v1831, %v7942
    %v7944 = vpop.f32.mrf.mxu0
    %7945 = vdwg.mxu0
    %7946 = vmatpush.bf16.msra.mxu0 %v2735
    %7947 = vmatpush.bf16.msra.mxu0 %v2727
    %7948 = vmatpush.bf16.msra.mxu0 %v2719
    %7949 = vmatpush.bf16.msra.mxu0 %v2711
    %7950 = vmatpush.bf16.msra.mxu0 %v2703
    %7951 = vmatpush.bf16.msra.mxu0 %v2695
    %7952 = vmatpush.bf16.msra.mxu0 %v2687
    %7953 = vmatpush.bf16.msra.mxu0 %v2679
    %7954 = vmatmul.bf16.gmra.mxu0 %v7611
    %v7955 = vpop.f32.mrf.mxu0
    %v7956 = vadd.f32 %v7943, %v7955
    %v7957 = vpop.f32.mrf.mxu0
    %7958 = vdwg.mxu0
    %7959 = vmatpush.bf16.msra.mxu0 %v2799
    %7960 = vmatpush.bf16.msra.mxu0 %v2791
    %7961 = vmatpush.bf16.msra.mxu0 %v2783
    %7962 = vmatpush.bf16.msra.mxu0 %v2775
    %7963 = vmatpush.bf16.msra.mxu0 %v2767
    %7964 = vmatpush.bf16.msra.mxu0 %v2759
    %7965 = vmatpush.bf16.msra.mxu0 %v2751
    %7966 = vmatpush.bf16.msra.mxu0 %v2743
    %7967 = vmatmul.bf16.gmra.mxu0 %v7617
    %v7968 = vpop.f32.mrf.mxu0
    %v7969 = vadd.f32 %v7956, %v7968
    %v7970 = vpop.f32.mrf.mxu0
    %7971 = vdwg.mxu0
    %7972 = vmatpush.bf16.msra.mxu0 %v2863
    %7973 = vmatpush.bf16.msra.mxu0 %v2855
    %7974 = vmatpush.bf16.msra.mxu0 %v2847
    %7975 = vmatpush.bf16.msra.mxu0 %v2839
    %7976 = vmatpush.bf16.msra.mxu0 %v2831
    %7977 = vmatpush.bf16.msra.mxu0 %v2823
    %7978 = vmatpush.bf16.msra.mxu0 %v2815
    %7979 = vmatpush.bf16.msra.mxu0 %v2807
    %7980 = vmatmul.bf16.gmra.mxu0 %v7618
    %v7981 = vpop.f32.mrf.mxu0
    %v7982 = vadd.f32 %v7969, %v7981
    %v7983 = vpop.f32.mrf.mxu0
    %7984 = vdwg.mxu0
    %7985 = vmatpush.bf16.msra.mxu0 %v2672
    %7986 = vmatpush.bf16.msra.mxu0 %v2664
    %7987 = vmatpush.bf16.msra.mxu0 %v2656
    %7988 = vmatpush.bf16.msra.mxu0 %v2648
    %7989 = vmatpush.bf16.msra.mxu0 %v2640
    %7990 = vmatpush.bf16.msra.mxu0 %v2632
    %7991 = vmatpush.bf16.msra.mxu0 %v2624
    %7992 = vmatpush.bf16.msra.mxu0 %v2616
    %7993 = vmatmul.bf16.gmra.mxu0 %v7610
    %v7994 = vpop.f32.mrf.mxu0
    %v7995 = vadd.f32 %v1832, %v7994
    %v7996 = vpop.f32.mrf.mxu0
    %7997 = vdwg.mxu0
    %7998 = vmatpush.bf16.msra.mxu0 %v2736
    %7999 = vmatpush.bf16.msra.mxu0 %v2728
    %8000 = vmatpush.bf16.msra.mxu0 %v2720
    %8001 = vmatpush.bf16.msra.mxu0 %v2712
    %8002 = vmatpush.bf16.msra.mxu0 %v2704
    %8003 = vmatpush.bf16.msra.mxu0 %v2696
    %8004 = vmatpush.bf16.msra.mxu0 %v2688
    %8005 = vmatpush.bf16.msra.mxu0 %v2680
    %8006 = vmatmul.bf16.gmra.mxu0 %v7611
    %v8007 = vpop.f32.mrf.mxu0
    %v8008 = vadd.f32 %v7995, %v8007
    %v8009 = vpop.f32.mrf.mxu0
    %8010 = vdwg.mxu0
    %8011 = vmatpush.bf16.msra.mxu0 %v2800
    %8012 = vmatpush.bf16.msra.mxu0 %v2792
    %8013 = vmatpush.bf16.msra.mxu0 %v2784
    %8014 = vmatpush.bf16.msra.mxu0 %v2776
    %8015 = vmatpush.bf16.msra.mxu0 %v2768
    %8016 = vmatpush.bf16.msra.mxu0 %v2760
    %8017 = vmatpush.bf16.msra.mxu0 %v2752
    %8018 = vmatpush.bf16.msra.mxu0 %v2744
    %8019 = vmatmul.bf16.gmra.mxu0 %v7617
    %v8020 = vpop.f32.mrf.mxu0
    %v8021 = vadd.f32 %v8008, %v8020
    %v8022 = vpop.f32.mrf.mxu0
    %8023 = vdwg.mxu0
    %8024 = vmatpush.bf16.msra.mxu0 %v2864
    %8025 = vmatpush.bf16.msra.mxu0 %v2856
    %8026 = vmatpush.bf16.msra.mxu0 %v2848
    %8027 = vmatpush.bf16.msra.mxu0 %v2840
    %8028 = vmatpush.bf16.msra.mxu0 %v2832
    %8029 = vmatpush.bf16.msra.mxu0 %v2824
    %8030 = vmatpush.bf16.msra.mxu0 %v2816
    %8031 = vmatpush.bf16.msra.mxu0 %v2808
    %8032 = vmatmul.bf16.gmra.mxu0 %v7618
    %v8033 = vpop.f32.mrf.mxu0
    %v8034 = vadd.f32 %v8021, %v8033
    %v8035 = vpop.f32.mrf.mxu0
    %8036 = vdwg.mxu0
    %v8037 = vxor.u32 %v7670, 2147483648
    %v8038 = vxor.u32 %v7722, 2147483648
    %v8039 = vmul.f32 %v8037, 1.442695
    %v8040 = vpow.pop %v8039
    %v8041 = vmul.f32 %v8038, 1.442695
    %v8042 = vpow.pop %v8041
    %v8043 = vadd.f32 %v8040, 1.0
    %v8044 = vadd.f32 %v8042, 1.0
    %v8045 = vrcp.pop %v8043
    %v8046 = vmul.f32 %v8043, %v8045
    %v8047 = vsub.f32 1.0, %v8046
    %v8048 = vmul.f32 %v8045, %v8047
    %v8049 = vadd.f32 %v8045, %v8048
    %vm8050 = vweird.f32 %v8043
    %vm8051 = vweird.f32 %v8045
    %vm8052 = vmor %vm8050, %vm8051
    %v8053 = vsel %vm8052, %v8045, %v8049
    %v8054 = vand.u32 2147483647, %v8043
    %vm8055 = vcmp.eq.f32.partialorder %v8054, 8.507059e+37
    %v8056 = vand.u32 %v8043, 2147483648
    %v8057 = vor.u32 1.1754944e-38, %v8056
    %v8058 = vsel %vm8055, %v8057, %v8053
    %v8059 = vmul.f32 1.0, %v8058
    %v8060 = vrcp.pop %v8044
    %v8061 = vmul.f32 %v8044, %v8060
    %v8062 = vsub.f32 1.0, %v8061
    %v8063 = vmul.f32 %v8060, %v8062
    %v8064 = vadd.f32 %v8060, %v8063
    %vm8065 = vweird.f32 %v8044
    %vm8066 = vweird.f32 %v8060
    %vm8067 = vmor %vm8065, %vm8066
    %v8068 = vsel %vm8067, %v8060, %v8064
    %v8069 = vand.u32 2147483647, %v8044
    %vm8070 = vcmp.eq.f32.partialorder %v8069, 8.507059e+37
    %v8071 = vand.u32 %v8044, 2147483648
    %v8072 = vor.u32 1.1754944e-38, %v8071
    %v8073 = vsel %vm8070, %v8072, %v8068
    %v8074 = vmul.f32 1.0, %v8073
    %v8075 = vxor.u32 %v7774, 2147483648
    %v8076 = vxor.u32 %v7826, 2147483648
    %v8077 = vmul.f32 %v8075, 1.442695
    %v8078 = vpow.pop %v8077
    %v8079 = vmul.f32 %v8076, 1.442695
    %v8080 = vpow.pop %v8079
    %v8081 = vadd.f32 %v8078, 1.0
    %v8082 = vadd.f32 %v8080, 1.0
    %v8083 = vrcp.pop %v8081
    %v8084 = vmul.f32 %v8081, %v8083
    %v8085 = vsub.f32 1.0, %v8084
    %v8086 = vmul.f32 %v8083, %v8085
    %v8087 = vadd.f32 %v8083, %v8086
    %vm8088 = vweird.f32 %v8081
    %vm8089 = vweird.f32 %v8083
    %vm8090 = vmor %vm8088, %vm8089
    %v8091 = vsel %vm8090, %v8083, %v8087
    %v8092 = vand.u32 2147483647, %v8081
    %vm8093 = vcmp.eq.f32.partialorder %v8092, 8.507059e+37
    %v8094 = vand.u32 %v8081, 2147483648
    %v8095 = vor.u32 1.1754944e-38, %v8094
    %v8096 = vsel %vm8093, %v8095, %v8091
    %v8097 = vmul.f32 1.0, %v8096
    %v8098 = vrcp.pop %v8082
    %v8099 = vmul.f32 %v8082, %v8098
    %v8100 = vsub.f32 1.0, %v8099
    %v8101 = vmul.f32 %v8098, %v8100
    %v8102 = vadd.f32 %v8098, %v8101
    %vm8103 = vweird.f32 %v8082
    %vm8104 = vweird.f32 %v8098
    %vm8105 = vmor %vm8103, %vm8104
    %v8106 = vsel %vm8105, %v8098, %v8102
    %v8107 = vand.u32 2147483647, %v8082
    %vm8108 = vcmp.eq.f32.partialorder %v8107, 8.507059e+37
    %v8109 = vand.u32 %v8082, 2147483648
    %v8110 = vor.u32 1.1754944e-38, %v8109
    %v8111 = vsel %vm8108, %v8110, %v8106
    %v8112 = vmul.f32 1.0, %v8111
    %v8113 = vtanh.pop %v7878
    %v8114 = vtanh.pop %v7930
    %v8115 = vxor.u32 %v7982, 2147483648
    %v8116 = vxor.u32 %v8034, 2147483648
    %v8117 = vmul.f32 %v8115, 1.442695
    %v8118 = vpow.pop %v8117
    %v8119 = vmul.f32 %v8116, 1.442695
    %v8120 = vpow.pop %v8119
    %v8121 = vadd.f32 %v8118, 1.0
    %v8122 = vadd.f32 %v8120, 1.0
    %v8123 = vrcp.pop %v8121
    %v8124 = vmul.f32 %v8121, %v8123
    %v8125 = vsub.f32 1.0, %v8124
    %v8126 = vmul.f32 %v8123, %v8125
    %v8127 = vadd.f32 %v8123, %v8126
    %vm8128 = vweird.f32 %v8121
    %vm8129 = vweird.f32 %v8123
    %vm8130 = vmor %vm8128, %vm8129
    %v8131 = vsel %vm8130, %v8123, %v8127
    %v8132 = vand.u32 2147483647, %v8121
    %vm8133 = vcmp.eq.f32.partialorder %v8132, 8.507059e+37
    %v8134 = vand.u32 %v8121, 2147483648
    %v8135 = vor.u32 1.1754944e-38, %v8134
    %v8136 = vsel %vm8133, %v8135, %v8131
    %v8137 = vmul.f32 1.0, %v8136
    %v8138 = vrcp.pop %v8122
    %v8139 = vmul.f32 %v8122, %v8138
    %v8140 = vsub.f32 1.0, %v8139
    %v8141 = vmul.f32 %v8138, %v8140
    %v8142 = vadd.f32 %v8138, %v8141
    %vm8143 = vweird.f32 %v8122
    %vm8144 = vweird.f32 %v8138
    %vm8145 = vmor %vm8143, %vm8144
    %v8146 = vsel %vm8145, %v8138, %v8142
    %v8147 = vand.u32 2147483647, %v8122
    %vm8148 = vcmp.eq.f32.partialorder %v8147, 8.507059e+37
    %v8149 = vand.u32 %v8122, 2147483648
    %v8150 = vor.u32 1.1754944e-38, %v8149
    %v8151 = vsel %vm8148, %v8150, %v8146
    %v8152 = vmul.f32 1.0, %v8151
    %v8153 = vmul.f32 %v8097, %v7257
    %v8154 = vmul.f32 %v8112, %v7258
    %v8155 = vmul.f32 %v8059, %v8113
    %v8156 = vmul.f32 %v8074, %v8114
    %v8157 = vadd.f32 %v8153, %v8155
    %v8158 = vadd.f32 %v8154, %v8156
    %v8159 = vtanh.pop %v8157
    %v8160 = vtanh.pop %v8158
    %v8161 = vmul.f32 %v8137, %v8159
    %v8162 = vmul.f32 %v8152, %v8160
    %8163 = vmatpush.bf16.msra.mxu0 %v1018
    %8164 = vmatpush.bf16.msra.mxu0 %v1010
    %8165 = vmatpush.bf16.msra.mxu0 %v1002
    %8166 = vmatpush.bf16.msra.mxu0 %v994
    %8167 = vmatpush.bf16.msra.mxu0 %v986
    %8168 = vmatpush.bf16.msra.mxu0 %v978
    %8169 = vmatpush.bf16.msra.mxu0 %v970
    %8170 = vmatpush.bf16.msra.mxu0 %v962
    %8171 = vmatmul.bf16.gmra.mxu0 %v7610
    %v8172 = vpop.f32.mrf.mxu0
    %v8173 = vadd.f32 0.0, %v8172
    %v8174 = vpop.f32.mrf.mxu0
    %8175 = vdwg.mxu0
    %8176 = vmatpush.bf16.msra.mxu0 %v1082
    %8177 = vmatpush.bf16.msra.mxu0 %v1074
    %8178 = vmatpush.bf16.msra.mxu0 %v1066
    %8179 = vmatpush.bf16.msra.mxu0 %v1058
    %8180 = vmatpush.bf16.msra.mxu0 %v1050
    %8181 = vmatpush.bf16.msra.mxu0 %v1042
    %8182 = vmatpush.bf16.msra.mxu0 %v1034
    %8183 = vmatpush.bf16.msra.mxu0 %v1026
    %8184 = vmatmul.bf16.gmra.mxu0 %v7611
    %v8185 = vpop.f32.mrf.mxu0
    %v8186 = vadd.f32 %v8173, %v8185
    %v8187 = vpop.f32.mrf.mxu0
    %8188 = vdwg.mxu0
    %8189 = vmatpush.bf16.msra.mxu0 %v1019
    %8190 = vmatpush.bf16.msra.mxu0 %v1011
    %8191 = vmatpush.bf16.msra.mxu0 %v1003
    %8192 = vmatpush.bf16.msra.mxu0 %v995
    %8193 = vmatpush.bf16.msra.mxu0 %v987
    %8194 = vmatpush.bf16.msra.mxu0 %v979
    %8195 = vmatpush.bf16.msra.mxu0 %v971
    %8196 = vmatpush.bf16.msra.mxu0 %v963
    %8197 = vmatmul.bf16.gmra.mxu0 %v7610
    %v8198 = vpop.f32.mrf.mxu0
    %v8199 = vadd.f32 0.0, %v8198
    %v8200 = vpop.f32.mrf.mxu0
    %8201 = vdwg.mxu0
    %8202 = vmatpush.bf16.msra.mxu0 %v1083
    %8203 = vmatpush.bf16.msra.mxu0 %v1075
    %8204 = vmatpush.bf16.msra.mxu0 %v1067
    %8205 = vmatpush.bf16.msra.mxu0 %v1059
    %8206 = vmatpush.bf16.msra.mxu0 %v1051
    %8207 = vmatpush.bf16.msra.mxu0 %v1043
    %8208 = vmatpush.bf16.msra.mxu0 %v1035
    %8209 = vmatpush.bf16.msra.mxu0 %v1027
    %8210 = vmatmul.bf16.gmra.mxu0 %v7611
    %v8211 = vpop.f32.mrf.mxu0
    %v8212 = vadd.f32 %v8199, %v8211
    %v8213 = vpop.f32.mrf.mxu0
    %8214 = vdwg.mxu0
    %8215 = vmatpush.bf16.msra.mxu0 %v1020
    %8216 = vmatpush.bf16.msra.mxu0 %v1012
    %8217 = vmatpush.bf16.msra.mxu0 %v1004
    %8218 = vmatpush.bf16.msra.mxu0 %v996
    %8219 = vmatpush.bf16.msra.mxu0 %v988
    %8220 = vmatpush.bf16.msra.mxu0 %v980
    %8221 = vmatpush.bf16.msra.mxu0 %v972
    %8222 = vmatpush.bf16.msra.mxu0 %v964
    %8223 = vmatmul.bf16.gmra.mxu0 %v7610
    %v8224 = vpop.f32.mrf.mxu0
    %v8225 = vadd.f32 0.0, %v8224
    %v8226 = vpop.f32.mrf.mxu0
    %8227 = vdwg.mxu0
    %8228 = vmatpush.bf16.msra.mxu0 %v1084
    %8229 = vmatpush.bf16.msra.mxu0 %v1076
    %8230 = vmatpush.bf16.msra.mxu0 %v1068
    %8231 = vmatpush.bf16.msra.mxu0 %v1060
    %8232 = vmatpush.bf16.msra.mxu0 %v1052
    %8233 = vmatpush.bf16.msra.mxu0 %v1044
    %8234 = vmatpush.bf16.msra.mxu0 %v1036
    %8235 = vmatpush.bf16.msra.mxu0 %v1028
    %8236 = vmatmul.bf16.gmra.mxu0 %v7611
    %v8237 = vpop.f32.mrf.mxu0
    %v8238 = vadd.f32 %v8225, %v8237
    %v8239 = vpop.f32.mrf.mxu0
    %8240 = vdwg.mxu0
    %8241 = vmatpush.bf16.msra.mxu0 %v1021
    %8242 = vmatpush.bf16.msra.mxu0 %v1013
    %8243 = vmatpush.bf16.msra.mxu0 %v1005
    %8244 = vmatpush.bf16.msra.mxu0 %v997
    %8245 = vmatpush.bf16.msra.mxu0 %v989
    %8246 = vmatpush.bf16.msra.mxu0 %v981
    %8247 = vmatpush.bf16.msra.mxu0 %v973
    %8248 = vmatpush.bf16.msra.mxu0 %v965
    %8249 = vmatmul.bf16.gmra.mxu0 %v7610
    %v8250 = vpop.f32.mrf.mxu0
    %v8251 = vadd.f32 0.0, %v8250
    %v8252 = vpop.f32.mrf.mxu0
    %8253 = vdwg.mxu0
    %8254 = vmatpush.bf16.msra.mxu0 %v1085
    %8255 = vmatpush.bf16.msra.mxu0 %v1077
    %8256 = vmatpush.bf16.msra.mxu0 %v1069
    %8257 = vmatpush.bf16.msra.mxu0 %v1061
    %8258 = vmatpush.bf16.msra.mxu0 %v1053
    %8259 = vmatpush.bf16.msra.mxu0 %v1045
    %8260 = vmatpush.bf16.msra.mxu0 %v1037
    %8261 = vmatpush.bf16.msra.mxu0 %v1029
    %8262 = vmatmul.bf16.gmra.mxu0 %v7611
    %v8263 = vpop.f32.mrf.mxu0
    %v8264 = vadd.f32 %v8251, %v8263
    %v8265 = vpop.f32.mrf.mxu0
    %8266 = vdwg.mxu0
    %8267 = vmatpush.bf16.msra.mxu0 %v1022
    %8268 = vmatpush.bf16.msra.mxu0 %v1014
    %8269 = vmatpush.bf16.msra.mxu0 %v1006
    %8270 = vmatpush.bf16.msra.mxu0 %v998
    %8271 = vmatpush.bf16.msra.mxu0 %v990
    %8272 = vmatpush.bf16.msra.mxu0 %v982
    %8273 = vmatpush.bf16.msra.mxu0 %v974
    %8274 = vmatpush.bf16.msra.mxu0 %v966
    %8275 = vmatmul.bf16.gmra.mxu0 %v7610
    %v8276 = vpop.f32.mrf.mxu0
    %v8277 = vadd.f32 0.0, %v8276
    %v8278 = vpop.f32.mrf.mxu0
    %8279 = vdwg.mxu0
    %8280 = vmatpush.bf16.msra.mxu0 %v1086
    %8281 = vmatpush.bf16.msra.mxu0 %v1078
    %8282 = vmatpush.bf16.msra.mxu0 %v1070
    %8283 = vmatpush.bf16.msra.mxu0 %v1062
    %8284 = vmatpush.bf16.msra.mxu0 %v1054
    %8285 = vmatpush.bf16.msra.mxu0 %v1046
    %8286 = vmatpush.bf16.msra.mxu0 %v1038
    %8287 = vmatpush.bf16.msra.mxu0 %v1030
    %8288 = vmatmul.bf16.gmra.mxu0 %v7611
    %v8289 = vpop.f32.mrf.mxu0
    %v8290 = vadd.f32 %v8277, %v8289
    %v8291 = vpop.f32.mrf.mxu0
    %8292 = vdwg.mxu0
    %8293 = vmatpush.bf16.msra.mxu0 %v1023
    %8294 = vmatpush.bf16.msra.mxu0 %v1015
    %8295 = vmatpush.bf16.msra.mxu0 %v1007
    %8296 = vmatpush.bf16.msra.mxu0 %v999
    %8297 = vmatpush.bf16.msra.mxu0 %v991
    %8298 = vmatpush.bf16.msra.mxu0 %v983
    %8299 = vmatpush.bf16.msra.mxu0 %v975
    %8300 = vmatpush.bf16.msra.mxu0 %v967
    %8301 = vmatmul.bf16.gmra.mxu0 %v7610
    %v8302 = vpop.f32.mrf.mxu0
    %v8303 = vadd.f32 0.0, %v8302
    %v8304 = vpop.f32.mrf.mxu0
    %8305 = vdwg.mxu0
    %8306 = vmatpush.bf16.msra.mxu0 %v1087
    %8307 = vmatpush.bf16.msra.mxu0 %v1079
    %8308 = vmatpush.bf16.msra.mxu0 %v1071
    %8309 = vmatpush.bf16.msra.mxu0 %v1063
    %8310 = vmatpush.bf16.msra.mxu0 %v1055
    %8311 = vmatpush.bf16.msra.mxu0 %v1047
    %8312 = vmatpush.bf16.msra.mxu0 %v1039
    %8313 = vmatpush.bf16.msra.mxu0 %v1031
    %8314 = vmatmul.bf16.gmra.mxu0 %v7611
    %v8315 = vpop.f32.mrf.mxu0
    %v8316 = vadd.f32 %v8303, %v8315
    %v8317 = vpop.f32.mrf.mxu0
    %8318 = vdwg.mxu0
    %8319 = vmatpush.bf16.msra.mxu0 %v1024
    %8320 = vmatpush.bf16.msra.mxu0 %v1016
    %8321 = vmatpush.bf16.msra.mxu0 %v1008
    %8322 = vmatpush.bf16.msra.mxu0 %v1000
    %8323 = vmatpush.bf16.msra.mxu0 %v992
    %8324 = vmatpush.bf16.msra.mxu0 %v984
    %8325 = vmatpush.bf16.msra.mxu0 %v976
    %8326 = vmatpush.bf16.msra.mxu0 %v968
    %8327 = vmatmul.bf16.gmra.mxu0 %v7610
    %v8328 = vpop.f32.mrf.mxu0
    %v8329 = vadd.f32 0.0, %v8328
    %v8330 = vpop.f32.mrf.mxu0
    %8331 = vdwg.mxu0
    %8332 = vmatpush.bf16.msra.mxu0 %v1088
    %8333 = vmatpush.bf16.msra.mxu0 %v1080
    %8334 = vmatpush.bf16.msra.mxu0 %v1072
    %8335 = vmatpush.bf16.msra.mxu0 %v1064
    %8336 = vmatpush.bf16.msra.mxu0 %v1056
    %8337 = vmatpush.bf16.msra.mxu0 %v1048
    %8338 = vmatpush.bf16.msra.mxu0 %v1040
    %8339 = vmatpush.bf16.msra.mxu0 %v1032
    %8340 = vmatmul.bf16.gmra.mxu0 %v7611
    %v8341 = vpop.f32.mrf.mxu0
    %v8342 = vadd.f32 %v8329, %v8341
    %v8343 = vpop.f32.mrf.mxu0
    %8344 = vdwg.mxu0
    %8345 = vmatpush.bf16.msra.mxu0 %v1025
    %8346 = vmatpush.bf16.msra.mxu0 %v1017
    %8347 = vmatpush.bf16.msra.mxu0 %v1009
    %8348 = vmatpush.bf16.msra.mxu0 %v1001
    %8349 = vmatpush.bf16.msra.mxu0 %v993
    %8350 = vmatpush.bf16.msra.mxu0 %v985
    %8351 = vmatpush.bf16.msra.mxu0 %v977
    %8352 = vmatpush.bf16.msra.mxu0 %v969
    %8353 = vmatmul.bf16.gmra.mxu0 %v7610
    %v8354 = vpop.f32.mrf.mxu0
    %v8355 = vadd.f32 0.0, %v8354
    %v8356 = vpop.f32.mrf.mxu0
    %8357 = vdwg.mxu0
    %8358 = vmatpush.bf16.msra.mxu0 %v1089
    %8359 = vmatpush.bf16.msra.mxu0 %v1081
    %8360 = vmatpush.bf16.msra.mxu0 %v1073
    %8361 = vmatpush.bf16.msra.mxu0 %v1065
    %8362 = vmatpush.bf16.msra.mxu0 %v1057
    %8363 = vmatpush.bf16.msra.mxu0 %v1049
    %8364 = vmatpush.bf16.msra.mxu0 %v1041
    %8365 = vmatpush.bf16.msra.mxu0 %v1033
    %8366 = vmatmul.bf16.gmra.mxu0 %v7611
    %v8367 = vpop.f32.mrf.mxu0
    %v8368 = vadd.f32 %v8355, %v8367
    %v8369 = vpop.f32.mrf.mxu0
    %8370 = vdwg.mxu0
    %v8371 = vadd.f32 %v242, %v8186
    %v8372 = vadd.f32 %v271, %v8212
    %v8373 = vadd.f32 %v300, %v8238
    %v8374 = vadd.f32 %v329, %v8264
    %v8375 = vadd.f32 %v358, %v8290
    %v8376 = vadd.f32 %v387, %v8316
    %v8377 = vadd.f32 %v416, %v8342
    %v8378 = vadd.f32 %v445, %v8368
    %v8379 = vxor.u32 %v8371, 2147483648
    %v8380 = vxor.u32 %v8372, 2147483648
    %v8381 = vmul.f32 %v8379, 1.442695
    %v8382 = vpow.pop %v8381
    %v8383 = vmul.f32 %v8380, 1.442695
    %v8384 = vpow.pop %v8383
    %v8385 = vadd.f32 %v8382, 1.0
    %v8386 = vadd.f32 %v8384, 1.0
    %v8387 = vrcp.pop %v8385
    %v8388 = vmul.f32 %v8385, %v8387
    %v8389 = vsub.f32 1.0, %v8388
    %v8390 = vmul.f32 %v8387, %v8389
    %v8391 = vadd.f32 %v8387, %v8390
    %vm8392 = vweird.f32 %v8385
    %vm8393 = vweird.f32 %v8387
    %vm8394 = vmor %vm8392, %vm8393
    %v8395 = vsel %vm8394, %v8387, %v8391
    %v8396 = vand.u32 2147483647, %v8385
    %vm8397 = vcmp.eq.f32.partialorder %v8396, 8.507059e+37
    %v8398 = vand.u32 %v8385, 2147483648
    %v8399 = vor.u32 1.1754944e-38, %v8398
    %v8400 = vsel %vm8397, %v8399, %v8395
    %v8401 = vmul.f32 1.0, %v8400
    %v8402 = vrcp.pop %v8386
    %v8403 = vmul.f32 %v8386, %v8402
    %v8404 = vsub.f32 1.0, %v8403
    %v8405 = vmul.f32 %v8402, %v8404
    %v8406 = vadd.f32 %v8402, %v8405
    %vm8407 = vweird.f32 %v8386
    %vm8408 = vweird.f32 %v8402
    %vm8409 = vmor %vm8407, %vm8408
    %v8410 = vsel %vm8409, %v8402, %v8406
    %v8411 = vand.u32 2147483647, %v8386
    %vm8412 = vcmp.eq.f32.partialorder %v8411, 8.507059e+37
    %v8413 = vand.u32 %v8386, 2147483648
    %v8414 = vor.u32 1.1754944e-38, %v8413
    %v8415 = vsel %vm8412, %v8414, %v8410
    %v8416 = vmul.f32 1.0, %v8415
    %v8417 = vxor.u32 %v8373, 2147483648
    %v8418 = vxor.u32 %v8374, 2147483648
    %v8419 = vmul.f32 %v8417, 1.442695
    %v8420 = vpow.pop %v8419
    %v8421 = vmul.f32 %v8418, 1.442695
    %v8422 = vpow.pop %v8421
    %v8423 = vadd.f32 %v8420, 1.0
    %v8424 = vadd.f32 %v8422, 1.0
    %v8425 = vrcp.pop %v8423
    %v8426 = vmul.f32 %v8423, %v8425
    %v8427 = vsub.f32 1.0, %v8426
    %v8428 = vmul.f32 %v8425, %v8427
    %v8429 = vadd.f32 %v8425, %v8428
    %vm8430 = vweird.f32 %v8423
    %vm8431 = vweird.f32 %v8425
    %vm8432 = vmor %vm8430, %vm8431
    %v8433 = vsel %vm8432, %v8425, %v8429
    %v8434 = vand.u32 2147483647, %v8423
    %vm8435 = vcmp.eq.f32.partialorder %v8434, 8.507059e+37
    %v8436 = vand.u32 %v8423, 2147483648
    %v8437 = vor.u32 1.1754944e-38, %v8436
    %v8438 = vsel %vm8435, %v8437, %v8433
    %v8439 = vmul.f32 1.0, %v8438
    %v8440 = vrcp.pop %v8424
    %v8441 = vmul.f32 %v8424, %v8440
    %v8442 = vsub.f32 1.0, %v8441
    %v8443 = vmul.f32 %v8440, %v8442
    %v8444 = vadd.f32 %v8440, %v8443
    %vm8445 = vweird.f32 %v8424
    %vm8446 = vweird.f32 %v8440
    %vm8447 = vmor %vm8445, %vm8446
    %v8448 = vsel %vm8447, %v8440, %v8444
    %v8449 = vand.u32 2147483647, %v8424
    %vm8450 = vcmp.eq.f32.partialorder %v8449, 8.507059e+37
    %v8451 = vand.u32 %v8424, 2147483648
    %v8452 = vor.u32 1.1754944e-38, %v8451
    %v8453 = vsel %vm8450, %v8452, %v8448
    %v8454 = vmul.f32 1.0, %v8453
    %v8455 = vtanh.pop %v8375
    %v8456 = vtanh.pop %v8376
    %v8457 = vxor.u32 %v8377, 2147483648
    %v8458 = vxor.u32 %v8378, 2147483648
    %v8459 = vmul.f32 %v8457, 1.442695
    %v8460 = vpow.pop %v8459
    %v8461 = vmul.f32 %v8458, 1.442695
    %v8462 = vpow.pop %v8461
    %v8463 = vadd.f32 %v8460, 1.0
    %v8464 = vadd.f32 %v8462, 1.0
    %v8465 = vrcp.pop %v8463
    %v8466 = vmul.f32 %v8463, %v8465
    %v8467 = vsub.f32 1.0, %v8466
    %v8468 = vmul.f32 %v8465, %v8467
    %v8469 = vadd.f32 %v8465, %v8468
    %vm8470 = vweird.f32 %v8463
    %vm8471 = vweird.f32 %v8465
    %vm8472 = vmor %vm8470, %vm8471
    %v8473 = vsel %vm8472, %v8465, %v8469
    %v8474 = vand.u32 2147483647, %v8463
    %vm8475 = vcmp.eq.f32.partialorder %v8474, 8.507059e+37
    %v8476 = vand.u32 %v8463, 2147483648
    %v8477 = vor.u32 1.1754944e-38, %v8476
    %v8478 = vsel %vm8475, %v8477, %v8473
    %v8479 = vmul.f32 1.0, %v8478
    %v8480 = vrcp.pop %v8464
    %v8481 = vmul.f32 %v8464, %v8480
    %v8482 = vsub.f32 1.0, %v8481
    %v8483 = vmul.f32 %v8480, %v8482
    %v8484 = vadd.f32 %v8480, %v8483
    %vm8485 = vweird.f32 %v8464
    %vm8486 = vweird.f32 %v8480
    %vm8487 = vmor %vm8485, %vm8486
    %v8488 = vsel %vm8487, %v8480, %v8484
    %v8489 = vand.u32 2147483647, %v8464
    %vm8490 = vcmp.eq.f32.partialorder %v8489, 8.507059e+37
    %v8491 = vand.u32 %v8464, 2147483648
    %v8492 = vor.u32 1.1754944e-38, %v8491
    %v8493 = vsel %vm8490, %v8492, %v8488
    %v8494 = vmul.f32 1.0, %v8493
    %v8495 = vmul.f32 %v8439, %v7599
    %v8496 = vmul.f32 %v8454, %v7600
    %v8497 = vmul.f32 %v8401, %v8455
    %v8498 = vmul.f32 %v8416, %v8456
    %v8499 = vadd.f32 %v8495, %v8497
    %v8500 = vadd.f32 %v8496, %v8498
    %v8501 = vtanh.pop %v8499
    %v8502 = vtanh.pop %v8500
    %v8503 = vmul.f32 %v8479, %v8501
    %v8504 = vmul.f32 %v8494, %v8502
    %v8505 = vpack.c.bf16 %v8504, %v8503
    %v8506 = vpack.c.bf16 %v8162, %v8161
    %v8508 = vunpack.c.l.b16 %v8505
    %v8509 = vunpack.c.h.b16 %v8505
    %v8510 = vpack.c.b16 %v8508, %v8508
    %v8511 = vpack.c.b16 %v8509, %v8509
    %v8515 = vunpack.c.l.b16 %v8506
    %v8516 = vunpack.c.h.b16 %v8506
    %v8517 = vpack.c.b16 %v8515, %v8515
    %v8518 = vpack.c.b16 %v8516, %v8516
    %8521 = vmatpush.bf16.msra.mxu0 %v2665
    %8522 = vmatpush.bf16.msra.mxu0 %v2657
    %8523 = vmatpush.bf16.msra.mxu0 %v2649
    %8524 = vmatpush.bf16.msra.mxu0 %v2641
    %8525 = vmatpush.bf16.msra.mxu0 %v2633
    %8526 = vmatpush.bf16.msra.mxu0 %v2625
    %8527 = vmatpush.bf16.msra.mxu0 %v2617
    %8528 = vmatpush.bf16.msra.mxu0 %v2609
    %8529 = vmatmul.bf16.gmra.mxu0 %v8510
    %v8530 = vpop.f32.mrf.mxu0
    %v8531 = vadd.f32 %v1825, %v8530
    %v8532 = vpop.f32.mrf.mxu0
    %8533 = vdwg.mxu0
    %8534 = vmatpush.bf16.msra.mxu0 %v2729
    %8535 = vmatpush.bf16.msra.mxu0 %v2721
    %8536 = vmatpush.bf16.msra.mxu0 %v2713
    %8537 = vmatpush.bf16.msra.mxu0 %v2705
    %8538 = vmatpush.bf16.msra.mxu0 %v2697
    %8539 = vmatpush.bf16.msra.mxu0 %v2689
    %8540 = vmatpush.bf16.msra.mxu0 %v2681
    %8541 = vmatpush.bf16.msra.mxu0 %v2673
    %8542 = vmatmul.bf16.gmra.mxu0 %v8511
    %v8543 = vpop.f32.mrf.mxu0
    %v8544 = vadd.f32 %v8531, %v8543
    %v8545 = vpop.f32.mrf.mxu0
    %8546 = vdwg.mxu0
    %8547 = vmatpush.bf16.msra.mxu0 %v2793
    %8548 = vmatpush.bf16.msra.mxu0 %v2785
    %8549 = vmatpush.bf16.msra.mxu0 %v2777
    %8550 = vmatpush.bf16.msra.mxu0 %v2769
    %8551 = vmatpush.bf16.msra.mxu0 %v2761
    %8552 = vmatpush.bf16.msra.mxu0 %v2753
    %8553 = vmatpush.bf16.msra.mxu0 %v2745
    %8554 = vmatpush.bf16.msra.mxu0 %v2737
    %8555 = vmatmul.bf16.gmra.mxu0 %v8517
    %v8556 = vpop.f32.mrf.mxu0
    %v8557 = vadd.f32 %v8544, %v8556
    %v8558 = vpop.f32.mrf.mxu0
    %8559 = vdwg.mxu0
    %8560 = vmatpush.bf16.msra.mxu0 %v2857
    %8561 = vmatpush.bf16.msra.mxu0 %v2849
    %8562 = vmatpush.bf16.msra.mxu0 %v2841
    %8563 = vmatpush.bf16.msra.mxu0 %v2833
    %8564 = vmatpush.bf16.msra.mxu0 %v2825
    %8565 = vmatpush.bf16.msra.mxu0 %v2817
    %8566 = vmatpush.bf16.msra.mxu0 %v2809
    %8567 = vmatpush.bf16.msra.mxu0 %v2801
    %8568 = vmatmul.bf16.gmra.mxu0 %v8518
    %v8569 = vpop.f32.mrf.mxu0
    %v8570 = vadd.f32 %v8557, %v8569
    %v8571 = vpop.f32.mrf.mxu0
    %8572 = vdwg.mxu0
    %8573 = vmatpush.bf16.msra.mxu0 %v2666
    %8574 = vmatpush.bf16.msra.mxu0 %v2658
    %8575 = vmatpush.bf16.msra.mxu0 %v2650
    %8576 = vmatpush.bf16.msra.mxu0 %v2642
    %8577 = vmatpush.bf16.msra.mxu0 %v2634
    %8578 = vmatpush.bf16.msra.mxu0 %v2626
    %8579 = vmatpush.bf16.msra.mxu0 %v2618
    %8580 = vmatpush.bf16.msra.mxu0 %v2610
    %8581 = vmatmul.bf16.gmra.mxu0 %v8510
    %v8582 = vpop.f32.mrf.mxu0
    %v8583 = vadd.f32 %v1826, %v8582
    %v8584 = vpop.f32.mrf.mxu0
    %8585 = vdwg.mxu0
    %8586 = vmatpush.bf16.msra.mxu0 %v2730
    %8587 = vmatpush.bf16.msra.mxu0 %v2722
    %8588 = vmatpush.bf16.msra.mxu0 %v2714
    %8589 = vmatpush.bf16.msra.mxu0 %v2706
    %8590 = vmatpush.bf16.msra.mxu0 %v2698
    %8591 = vmatpush.bf16.msra.mxu0 %v2690
    %8592 = vmatpush.bf16.msra.mxu0 %v2682
    %8593 = vmatpush.bf16.msra.mxu0 %v2674
    %8594 = vmatmul.bf16.gmra.mxu0 %v8511
    %v8595 = vpop.f32.mrf.mxu0
    %v8596 = vadd.f32 %v8583, %v8595
    %v8597 = vpop.f32.mrf.mxu0
    %8598 = vdwg.mxu0
    %8599 = vmatpush.bf16.msra.mxu0 %v2794
    %8600 = vmatpush.bf16.msra.mxu0 %v2786
    %8601 = vmatpush.bf16.msra.mxu0 %v2778
    %8602 = vmatpush.bf16.msra.mxu0 %v2770
    %8603 = vmatpush.bf16.msra.mxu0 %v2762
    %8604 = vmatpush.bf16.msra.mxu0 %v2754
    %8605 = vmatpush.bf16.msra.mxu0 %v2746
    %8606 = vmatpush.bf16.msra.mxu0 %v2738
    %8607 = vmatmul.bf16.gmra.mxu0 %v8517
    %v8608 = vpop.f32.mrf.mxu0
    %v8609 = vadd.f32 %v8596, %v8608
    %v8610 = vpop.f32.mrf.mxu0
    %8611 = vdwg.mxu0
    %8612 = vmatpush.bf16.msra.mxu0 %v2858
    %8613 = vmatpush.bf16.msra.mxu0 %v2850
    %8614 = vmatpush.bf16.msra.mxu0 %v2842
    %8615 = vmatpush.bf16.msra.mxu0 %v2834
    %8616 = vmatpush.bf16.msra.mxu0 %v2826
    %8617 = vmatpush.bf16.msra.mxu0 %v2818
    %8618 = vmatpush.bf16.msra.mxu0 %v2810
    %8619 = vmatpush.bf16.msra.mxu0 %v2802
    %8620 = vmatmul.bf16.gmra.mxu0 %v8518
    %v8621 = vpop.f32.mrf.mxu0
    %v8622 = vadd.f32 %v8609, %v8621
    %v8623 = vpop.f32.mrf.mxu0
    %8624 = vdwg.mxu0
    %8625 = vmatpush.bf16.msra.mxu0 %v2667
    %8626 = vmatpush.bf16.msra.mxu0 %v2659
    %8627 = vmatpush.bf16.msra.mxu0 %v2651
    %8628 = vmatpush.bf16.msra.mxu0 %v2643
    %8629 = vmatpush.bf16.msra.mxu0 %v2635
    %8630 = vmatpush.bf16.msra.mxu0 %v2627
    %8631 = vmatpush.bf16.msra.mxu0 %v2619
    %8632 = vmatpush.bf16.msra.mxu0 %v2611
    %8633 = vmatmul.bf16.gmra.mxu0 %v8510
    %v8634 = vpop.f32.mrf.mxu0
    %v8635 = vadd.f32 %v1827, %v8634
    %v8636 = vpop.f32.mrf.mxu0
    %8637 = vdwg.mxu0
    %8638 = vmatpush.bf16.msra.mxu0 %v2731
    %8639 = vmatpush.bf16.msra.mxu0 %v2723
    %8640 = vmatpush.bf16.msra.mxu0 %v2715
    %8641 = vmatpush.bf16.msra.mxu0 %v2707
    %8642 = vmatpush.bf16.msra.mxu0 %v2699
    %8643 = vmatpush.bf16.msra.mxu0 %v2691
    %8644 = vmatpush.bf16.msra.mxu0 %v2683
    %8645 = vmatpush.bf16.msra.mxu0 %v2675
    %8646 = vmatmul.bf16.gmra.mxu0 %v8511
    %v8647 = vpop.f32.mrf.mxu0
    %v8648 = vadd.f32 %v8635, %v8647
    %v8649 = vpop.f32.mrf.mxu0
    %8650 = vdwg.mxu0
    %8651 = vmatpush.bf16.msra.mxu0 %v2795
    %8652 = vmatpush.bf16.msra.mxu0 %v2787
    %8653 = vmatpush.bf16.msra.mxu0 %v2779
    %8654 = vmatpush.bf16.msra.mxu0 %v2771
    %8655 = vmatpush.bf16.msra.mxu0 %v2763
    %8656 = vmatpush.bf16.msra.mxu0 %v2755
    %8657 = vmatpush.bf16.msra.mxu0 %v2747
    %8658 = vmatpush.bf16.msra.mxu0 %v2739
    %8659 = vmatmul.bf16.gmra.mxu0 %v8517
    %v8660 = vpop.f32.mrf.mxu0
    %v8661 = vadd.f32 %v8648, %v8660
    %v8662 = vpop.f32.mrf.mxu0
    %8663 = vdwg.mxu0
    %8664 = vmatpush.bf16.msra.mxu0 %v2859
    %8665 = vmatpush.bf16.msra.mxu0 %v2851
    %8666 = vmatpush.bf16.msra.mxu0 %v2843
    %8667 = vmatpush.bf16.msra.mxu0 %v2835
    %8668 = vmatpush.bf16.msra.mxu0 %v2827
    %8669 = vmatpush.bf16.msra.mxu0 %v2819
    %8670 = vmatpush.bf16.msra.mxu0 %v2811
    %8671 = vmatpush.bf16.msra.mxu0 %v2803
    %8672 = vmatmul.bf16.gmra.mxu0 %v8518
    %v8673 = vpop.f32.mrf.mxu0
    %v8674 = vadd.f32 %v8661, %v8673
    %v8675 = vpop.f32.mrf.mxu0
    %8676 = vdwg.mxu0
    %8677 = vmatpush.bf16.msra.mxu0 %v2668
    %8678 = vmatpush.bf16.msra.mxu0 %v2660
    %8679 = vmatpush.bf16.msra.mxu0 %v2652
    %8680 = vmatpush.bf16.msra.mxu0 %v2644
    %8681 = vmatpush.bf16.msra.mxu0 %v2636
    %8682 = vmatpush.bf16.msra.mxu0 %v2628
    %8683 = vmatpush.bf16.msra.mxu0 %v2620
    %8684 = vmatpush.bf16.msra.mxu0 %v2612
    %8685 = vmatmul.bf16.gmra.mxu0 %v8510
    %v8686 = vpop.f32.mrf.mxu0
    %v8687 = vadd.f32 %v1828, %v8686
    %v8688 = vpop.f32.mrf.mxu0
    %8689 = vdwg.mxu0
    %8690 = vmatpush.bf16.msra.mxu0 %v2732
    %8691 = vmatpush.bf16.msra.mxu0 %v2724
    %8692 = vmatpush.bf16.msra.mxu0 %v2716
    %8693 = vmatpush.bf16.msra.mxu0 %v2708
    %8694 = vmatpush.bf16.msra.mxu0 %v2700
    %8695 = vmatpush.bf16.msra.mxu0 %v2692
    %8696 = vmatpush.bf16.msra.mxu0 %v2684
    %8697 = vmatpush.bf16.msra.mxu0 %v2676
    %8698 = vmatmul.bf16.gmra.mxu0 %v8511
    %v8699 = vpop.f32.mrf.mxu0
    %v8700 = vadd.f32 %v8687, %v8699
    %v8701 = vpop.f32.mrf.mxu0
    %8702 = vdwg.mxu0
    %8703 = vmatpush.bf16.msra.mxu0 %v2796
    %8704 = vmatpush.bf16.msra.mxu0 %v2788
    %8705 = vmatpush.bf16.msra.mxu0 %v2780
    %8706 = vmatpush.bf16.msra.mxu0 %v2772
    %8707 = vmatpush.bf16.msra.mxu0 %v2764
    %8708 = vmatpush.bf16.msra.mxu0 %v2756
    %8709 = vmatpush.bf16.msra.mxu0 %v2748
    %8710 = vmatpush.bf16.msra.mxu0 %v2740
    %8711 = vmatmul.bf16.gmra.mxu0 %v8517
    %v8712 = vpop.f32.mrf.mxu0
    %v8713 = vadd.f32 %v8700, %v8712
    %v8714 = vpop.f32.mrf.mxu0
    %8715 = vdwg.mxu0
    %8716 = vmatpush.bf16.msra.mxu0 %v2860
    %8717 = vmatpush.bf16.msra.mxu0 %v2852
    %8718 = vmatpush.bf16.msra.mxu0 %v2844
    %8719 = vmatpush.bf16.msra.mxu0 %v2836
    %8720 = vmatpush.bf16.msra.mxu0 %v2828
    %8721 = vmatpush.bf16.msra.mxu0 %v2820
    %8722 = vmatpush.bf16.msra.mxu0 %v2812
    %8723 = vmatpush.bf16.msra.mxu0 %v2804
    %8724 = vmatmul.bf16.gmra.mxu0 %v8518
    %v8725 = vpop.f32.mrf.mxu0
    %v8726 = vadd.f32 %v8713, %v8725
    %v8727 = vpop.f32.mrf.mxu0
    %8728 = vdwg.mxu0
    %8729 = vmatpush.bf16.msra.mxu0 %v2669
    %8730 = vmatpush.bf16.msra.mxu0 %v2661
    %8731 = vmatpush.bf16.msra.mxu0 %v2653
    %8732 = vmatpush.bf16.msra.mxu0 %v2645
    %8733 = vmatpush.bf16.msra.mxu0 %v2637
    %8734 = vmatpush.bf16.msra.mxu0 %v2629
    %8735 = vmatpush.bf16.msra.mxu0 %v2621
    %8736 = vmatpush.bf16.msra.mxu0 %v2613
    %8737 = vmatmul.bf16.gmra.mxu0 %v8510
    %v8738 = vpop.f32.mrf.mxu0
    %v8739 = vadd.f32 %v1829, %v8738
    %v8740 = vpop.f32.mrf.mxu0
    %8741 = vdwg.mxu0
    %8742 = vmatpush.bf16.msra.mxu0 %v2733
    %8743 = vmatpush.bf16.msra.mxu0 %v2725
    %8744 = vmatpush.bf16.msra.mxu0 %v2717
    %8745 = vmatpush.bf16.msra.mxu0 %v2709
    %8746 = vmatpush.bf16.msra.mxu0 %v2701
    %8747 = vmatpush.bf16.msra.mxu0 %v2693
    %8748 = vmatpush.bf16.msra.mxu0 %v2685
    %8749 = vmatpush.bf16.msra.mxu0 %v2677
    %8750 = vmatmul.bf16.gmra.mxu0 %v8511
    %v8751 = vpop.f32.mrf.mxu0
    %v8752 = vadd.f32 %v8739, %v8751
    %v8753 = vpop.f32.mrf.mxu0
    %8754 = vdwg.mxu0
    %8755 = vmatpush.bf16.msra.mxu0 %v2797
    %8756 = vmatpush.bf16.msra.mxu0 %v2789
    %8757 = vmatpush.bf16.msra.mxu0 %v2781
    %8758 = vmatpush.bf16.msra.mxu0 %v2773
    %8759 = vmatpush.bf16.msra.mxu0 %v2765
    %8760 = vmatpush.bf16.msra.mxu0 %v2757
    %8761 = vmatpush.bf16.msra.mxu0 %v2749
    %8762 = vmatpush.bf16.msra.mxu0 %v2741
    %8763 = vmatmul.bf16.gmra.mxu0 %v8517
    %v8764 = vpop.f32.mrf.mxu0
    %v8765 = vadd.f32 %v8752, %v8764
    %v8766 = vpop.f32.mrf.mxu0
    %8767 = vdwg.mxu0
    %8768 = vmatpush.bf16.msra.mxu0 %v2861
    %8769 = vmatpush.bf16.msra.mxu0 %v2853
    %8770 = vmatpush.bf16.msra.mxu0 %v2845
    %8771 = vmatpush.bf16.msra.mxu0 %v2837
    %8772 = vmatpush.bf16.msra.mxu0 %v2829
    %8773 = vmatpush.bf16.msra.mxu0 %v2821
    %8774 = vmatpush.bf16.msra.mxu0 %v2813
    %8775 = vmatpush.bf16.msra.mxu0 %v2805
    %8776 = vmatmul.bf16.gmra.mxu0 %v8518
    %v8777 = vpop.f32.mrf.mxu0
    %v8778 = vadd.f32 %v8765, %v8777
    %v8779 = vpop.f32.mrf.mxu0
    %8780 = vdwg.mxu0
    %8781 = vmatpush.bf16.msra.mxu0 %v2670
    %8782 = vmatpush.bf16.msra.mxu0 %v2662
    %8783 = vmatpush.bf16.msra.mxu0 %v2654
    %8784 = vmatpush.bf16.msra.mxu0 %v2646
    %8785 = vmatpush.bf16.msra.mxu0 %v2638
    %8786 = vmatpush.bf16.msra.mxu0 %v2630
    %8787 = vmatpush.bf16.msra.mxu0 %v2622
    %8788 = vmatpush.bf16.msra.mxu0 %v2614
    %8789 = vmatmul.bf16.gmra.mxu0 %v8510
    %v8790 = vpop.f32.mrf.mxu0
    %v8791 = vadd.f32 %v1830, %v8790
    %v8792 = vpop.f32.mrf.mxu0
    %8793 = vdwg.mxu0
    %8794 = vmatpush.bf16.msra.mxu0 %v2734
    %8795 = vmatpush.bf16.msra.mxu0 %v2726
    %8796 = vmatpush.bf16.msra.mxu0 %v2718
    %8797 = vmatpush.bf16.msra.mxu0 %v2710
    %8798 = vmatpush.bf16.msra.mxu0 %v2702
    %8799 = vmatpush.bf16.msra.mxu0 %v2694
    %8800 = vmatpush.bf16.msra.mxu0 %v2686
    %8801 = vmatpush.bf16.msra.mxu0 %v2678
    %8802 = vmatmul.bf16.gmra.mxu0 %v8511
    %v8803 = vpop.f32.mrf.mxu0
    %v8804 = vadd.f32 %v8791, %v8803
    %v8805 = vpop.f32.mrf.mxu0
    %8806 = vdwg.mxu0
    %8807 = vmatpush.bf16.msra.mxu0 %v2798
    %8808 = vmatpush.bf16.msra.mxu0 %v2790
    %8809 = vmatpush.bf16.msra.mxu0 %v2782
    %8810 = vmatpush.bf16.msra.mxu0 %v2774
    %8811 = vmatpush.bf16.msra.mxu0 %v2766
    %8812 = vmatpush.bf16.msra.mxu0 %v2758
    %8813 = vmatpush.bf16.msra.mxu0 %v2750
    %8814 = vmatpush.bf16.msra.mxu0 %v2742
    %8815 = vmatmul.bf16.gmra.mxu0 %v8517
    %v8816 = vpop.f32.mrf.mxu0
    %v8817 = vadd.f32 %v8804, %v8816
    %v8818 = vpop.f32.mrf.mxu0
    %8819 = vdwg.mxu0
    %8820 = vmatpush.bf16.msra.mxu0 %v2862
    %8821 = vmatpush.bf16.msra.mxu0 %v2854
    %8822 = vmatpush.bf16.msra.mxu0 %v2846
    %8823 = vmatpush.bf16.msra.mxu0 %v2838
    %8824 = vmatpush.bf16.msra.mxu0 %v2830
    %8825 = vmatpush.bf16.msra.mxu0 %v2822
    %8826 = vmatpush.bf16.msra.mxu0 %v2814
    %8827 = vmatpush.bf16.msra.mxu0 %v2806
    %8828 = vmatmul.bf16.gmra.mxu0 %v8518
    %v8829 = vpop.f32.mrf.mxu0
    %v8830 = vadd.f32 %v8817, %v8829
    %v8831 = vpop.f32.mrf.mxu0
    %8832 = vdwg.mxu0
    %8833 = vmatpush.bf16.msra.mxu0 %v2671
    %8834 = vmatpush.bf16.msra.mxu0 %v2663
    %8835 = vmatpush.bf16.msra.mxu0 %v2655
    %8836 = vmatpush.bf16.msra.mxu0 %v2647
    %8837 = vmatpush.bf16.msra.mxu0 %v2639
    %8838 = vmatpush.bf16.msra.mxu0 %v2631
    %8839 = vmatpush.bf16.msra.mxu0 %v2623
    %8840 = vmatpush.bf16.msra.mxu0 %v2615
    %8841 = vmatmul.bf16.gmra.mxu0 %v8510
    %v8842 = vpop.f32.mrf.mxu0
    %v8843 = vadd.f32 %v1831, %v8842
    %v8844 = vpop.f32.mrf.mxu0
    %8845 = vdwg.mxu0
    %8846 = vmatpush.bf16.msra.mxu0 %v2735
    %8847 = vmatpush.bf16.msra.mxu0 %v2727
    %8848 = vmatpush.bf16.msra.mxu0 %v2719
    %8849 = vmatpush.bf16.msra.mxu0 %v2711
    %8850 = vmatpush.bf16.msra.mxu0 %v2703
    %8851 = vmatpush.bf16.msra.mxu0 %v2695
    %8852 = vmatpush.bf16.msra.mxu0 %v2687
    %8853 = vmatpush.bf16.msra.mxu0 %v2679
    %8854 = vmatmul.bf16.gmra.mxu0 %v8511
    %v8855 = vpop.f32.mrf.mxu0
    %v8856 = vadd.f32 %v8843, %v8855
    %v8857 = vpop.f32.mrf.mxu0
    %8858 = vdwg.mxu0
    %8859 = vmatpush.bf16.msra.mxu0 %v2799
    %8860 = vmatpush.bf16.msra.mxu0 %v2791
    %8861 = vmatpush.bf16.msra.mxu0 %v2783
    %8862 = vmatpush.bf16.msra.mxu0 %v2775
    %8863 = vmatpush.bf16.msra.mxu0 %v2767
    %8864 = vmatpush.bf16.msra.mxu0 %v2759
    %8865 = vmatpush.bf16.msra.mxu0 %v2751
    %8866 = vmatpush.bf16.msra.mxu0 %v2743
    %8867 = vmatmul.bf16.gmra.mxu0 %v8517
    %v8868 = vpop.f32.mrf.mxu0
    %v8869 = vadd.f32 %v8856, %v8868
    %v8870 = vpop.f32.mrf.mxu0
    %8871 = vdwg.mxu0
    %8872 = vmatpush.bf16.msra.mxu0 %v2863
    %8873 = vmatpush.bf16.msra.mxu0 %v2855
    %8874 = vmatpush.bf16.msra.mxu0 %v2847
    %8875 = vmatpush.bf16.msra.mxu0 %v2839
    %8876 = vmatpush.bf16.msra.mxu0 %v2831
    %8877 = vmatpush.bf16.msra.mxu0 %v2823
    %8878 = vmatpush.bf16.msra.mxu0 %v2815
    %8879 = vmatpush.bf16.msra.mxu0 %v2807
    %8880 = vmatmul.bf16.gmra.mxu0 %v8518
    %v8881 = vpop.f32.mrf.mxu0
    %v8882 = vadd.f32 %v8869, %v8881
    %v8883 = vpop.f32.mrf.mxu0
    %8884 = vdwg.mxu0
    %8885 = vmatpush.bf16.msra.mxu0 %v2672
    %8886 = vmatpush.bf16.msra.mxu0 %v2664
    %8887 = vmatpush.bf16.msra.mxu0 %v2656
    %8888 = vmatpush.bf16.msra.mxu0 %v2648
    %8889 = vmatpush.bf16.msra.mxu0 %v2640
    %8890 = vmatpush.bf16.msra.mxu0 %v2632
    %8891 = vmatpush.bf16.msra.mxu0 %v2624
    %8892 = vmatpush.bf16.msra.mxu0 %v2616
    %8893 = vmatmul.bf16.gmra.mxu0 %v8510
    %v8894 = vpop.f32.mrf.mxu0
    %v8895 = vadd.f32 %v1832, %v8894
    %v8896 = vpop.f32.mrf.mxu0
    %8897 = vdwg.mxu0
    %8898 = vmatpush.bf16.msra.mxu0 %v2736
    %8899 = vmatpush.bf16.msra.mxu0 %v2728
    %8900 = vmatpush.bf16.msra.mxu0 %v2720
    %8901 = vmatpush.bf16.msra.mxu0 %v2712
    %8902 = vmatpush.bf16.msra.mxu0 %v2704
    %8903 = vmatpush.bf16.msra.mxu0 %v2696
    %8904 = vmatpush.bf16.msra.mxu0 %v2688
    %8905 = vmatpush.bf16.msra.mxu0 %v2680
    %8906 = vmatmul.bf16.gmra.mxu0 %v8511
    %v8907 = vpop.f32.mrf.mxu0
    %v8908 = vadd.f32 %v8895, %v8907
    %v8909 = vpop.f32.mrf.mxu0
    %8910 = vdwg.mxu0
    %8911 = vmatpush.bf16.msra.mxu0 %v2800
    %8912 = vmatpush.bf16.msra.mxu0 %v2792
    %8913 = vmatpush.bf16.msra.mxu0 %v2784
    %8914 = vmatpush.bf16.msra.mxu0 %v2776
    %8915 = vmatpush.bf16.msra.mxu0 %v2768
    %8916 = vmatpush.bf16.msra.mxu0 %v2760
    %8917 = vmatpush.bf16.msra.mxu0 %v2752
    %8918 = vmatpush.bf16.msra.mxu0 %v2744
    %8919 = vmatmul.bf16.gmra.mxu0 %v8517
    %v8920 = vpop.f32.mrf.mxu0
    %v8921 = vadd.f32 %v8908, %v8920
    %v8922 = vpop.f32.mrf.mxu0
    %8923 = vdwg.mxu0
    %8924 = vmatpush.bf16.msra.mxu0 %v2864
    %8925 = vmatpush.bf16.msra.mxu0 %v2856
    %8926 = vmatpush.bf16.msra.mxu0 %v2848
    %8927 = vmatpush.bf16.msra.mxu0 %v2840
    %8928 = vmatpush.bf16.msra.mxu0 %v2832
    %8929 = vmatpush.bf16.msra.mxu0 %v2824
    %8930 = vmatpush.bf16.msra.mxu0 %v2816
    %8931 = vmatpush.bf16.msra.mxu0 %v2808
    %8932 = vmatmul.bf16.gmra.mxu0 %v8518
    %v8933 = vpop.f32.mrf.mxu0
    %v8934 = vadd.f32 %v8921, %v8933
    %v8935 = vpop.f32.mrf.mxu0
    %8936 = vdwg.mxu0
    %v8937 = vxor.u32 %v8570, 2147483648
    %v8938 = vxor.u32 %v8622, 2147483648
    %v8939 = vmul.f32 %v8937, 1.442695
    %v8940 = vpow.pop %v8939
    %v8941 = vmul.f32 %v8938, 1.442695
    %v8942 = vpow.pop %v8941
    %v8943 = vadd.f32 %v8940, 1.0
    %v8944 = vadd.f32 %v8942, 1.0
    %v8945 = vrcp.pop %v8943
    %v8946 = vmul.f32 %v8943, %v8945
    %v8947 = vsub.f32 1.0, %v8946
    %v8948 = vmul.f32 %v8945, %v8947
    %v8949 = vadd.f32 %v8945, %v8948
    %vm8950 = vweird.f32 %v8943
    %vm8951 = vweird.f32 %v8945
    %vm8952 = vmor %vm8950, %vm8951
    %v8953 = vsel %vm8952, %v8945, %v8949
    %v8954 = vand.u32 2147483647, %v8943
    %vm8955 = vcmp.eq.f32.partialorder %v8954, 8.507059e+37
    %v8956 = vand.u32 %v8943, 2147483648
    %v8957 = vor.u32 1.1754944e-38, %v8956
    %v8958 = vsel %vm8955, %v8957, %v8953
    %v8959 = vmul.f32 1.0, %v8958
    %v8960 = vrcp.pop %v8944
    %v8961 = vmul.f32 %v8944, %v8960
    %v8962 = vsub.f32 1.0, %v8961
    %v8963 = vmul.f32 %v8960, %v8962
    %v8964 = vadd.f32 %v8960, %v8963
    %vm8965 = vweird.f32 %v8944
    %vm8966 = vweird.f32 %v8960
    %vm8967 = vmor %vm8965, %vm8966
    %v8968 = vsel %vm8967, %v8960, %v8964
    %v8969 = vand.u32 2147483647, %v8944
    %vm8970 = vcmp.eq.f32.partialorder %v8969, 8.507059e+37
    %v8971 = vand.u32 %v8944, 2147483648
    %v8972 = vor.u32 1.1754944e-38, %v8971
    %v8973 = vsel %vm8970, %v8972, %v8968
    %v8974 = vmul.f32 1.0, %v8973
    %v8975 = vxor.u32 %v8674, 2147483648
    %v8976 = vxor.u32 %v8726, 2147483648
    %v8977 = vmul.f32 %v8975, 1.442695
    %v8978 = vpow.pop %v8977
    %v8979 = vmul.f32 %v8976, 1.442695
    %v8980 = vpow.pop %v8979
    %v8981 = vadd.f32 %v8978, 1.0
    %v8982 = vadd.f32 %v8980, 1.0
    %v8983 = vrcp.pop %v8981
    %v8984 = vmul.f32 %v8981, %v8983
    %v8985 = vsub.f32 1.0, %v8984
    %v8986 = vmul.f32 %v8983, %v8985
    %v8987 = vadd.f32 %v8983, %v8986
    %vm8988 = vweird.f32 %v8981
    %vm8989 = vweird.f32 %v8983
    %vm8990 = vmor %vm8988, %vm8989
    %v8991 = vsel %vm8990, %v8983, %v8987
    %v8992 = vand.u32 2147483647, %v8981
    %vm8993 = vcmp.eq.f32.partialorder %v8992, 8.507059e+37
    %v8994 = vand.u32 %v8981, 2147483648
    %v8995 = vor.u32 1.1754944e-38, %v8994
    %v8996 = vsel %vm8993, %v8995, %v8991
    %v8997 = vmul.f32 1.0, %v8996
    %v8998 = vrcp.pop %v8982
    %v8999 = vmul.f32 %v8982, %v8998
    %v9000 = vsub.f32 1.0, %v8999
    %v9001 = vmul.f32 %v8998, %v9000
    %v9002 = vadd.f32 %v8998, %v9001
    %vm9003 = vweird.f32 %v8982
    %vm9004 = vweird.f32 %v8998
    %vm9005 = vmor %vm9003, %vm9004
    %v9006 = vsel %vm9005, %v8998, %v9002
    %v9007 = vand.u32 2147483647, %v8982
    %vm9008 = vcmp.eq.f32.partialorder %v9007, 8.507059e+37
    %v9009 = vand.u32 %v8982, 2147483648
    %v9010 = vor.u32 1.1754944e-38, %v9009
    %v9011 = vsel %vm9008, %v9010, %v9006
    %v9012 = vmul.f32 1.0, %v9011
    %v9013 = vtanh.pop %v8778
    %v9014 = vtanh.pop %v8830
    %v9015 = vxor.u32 %v8882, 2147483648
    %v9016 = vxor.u32 %v8934, 2147483648
    %v9017 = vmul.f32 %v9015, 1.442695
    %v9018 = vpow.pop %v9017
    %v9019 = vmul.f32 %v9016, 1.442695
    %v9020 = vpow.pop %v9019
    %v9021 = vadd.f32 %v9018, 1.0
    %v9022 = vadd.f32 %v9020, 1.0
    %v9023 = vrcp.pop %v9021
    %v9024 = vmul.f32 %v9021, %v9023
    %v9025 = vsub.f32 1.0, %v9024
    %v9026 = vmul.f32 %v9023, %v9025
    %v9027 = vadd.f32 %v9023, %v9026
    %vm9028 = vweird.f32 %v9021
    %vm9029 = vweird.f32 %v9023
    %vm9030 = vmor %vm9028, %vm9029
    %v9031 = vsel %vm9030, %v9023, %v9027
    %v9032 = vand.u32 2147483647, %v9021
    %vm9033 = vcmp.eq.f32.partialorder %v9032, 8.507059e+37
    %v9034 = vand.u32 %v9021, 2147483648
    %v9035 = vor.u32 1.1754944e-38, %v9034
    %v9036 = vsel %vm9033, %v9035, %v9031
    %v9037 = vmul.f32 1.0, %v9036
    %v9038 = vrcp.pop %v9022
    %v9039 = vmul.f32 %v9022, %v9038
    %v9040 = vsub.f32 1.0, %v9039
    %v9041 = vmul.f32 %v9038, %v9040
    %v9042 = vadd.f32 %v9038, %v9041
    %vm9043 = vweird.f32 %v9022
    %vm9044 = vweird.f32 %v9038
    %vm9045 = vmor %vm9043, %vm9044
    %v9046 = vsel %vm9045, %v9038, %v9042
    %v9047 = vand.u32 2147483647, %v9022
    %vm9048 = vcmp.eq.f32.partialorder %v9047, 8.507059e+37
    %v9049 = vand.u32 %v9022, 2147483648
    %v9050 = vor.u32 1.1754944e-38, %v9049
    %v9051 = vsel %vm9048, %v9050, %v9046
    %v9052 = vmul.f32 1.0, %v9051
    %v9053 = vmul.f32 %v8997, %v8157
    %v9054 = vmul.f32 %v9012, %v8158
    %v9055 = vmul.f32 %v8959, %v9013
    %v9056 = vmul.f32 %v8974, %v9014
    %v9057 = vadd.f32 %v9053, %v9055
    %v9058 = vadd.f32 %v9054, %v9056
    %v9059 = vtanh.pop %v9057
    %v9060 = vtanh.pop %v9058
    %v9061 = vmul.f32 %v9037, %v9059
    %v9062 = vmul.f32 %v9052, %v9060
    %9063 = vmatpush.bf16.msra.mxu0 %v1018
    %9064 = vmatpush.bf16.msra.mxu0 %v1010
    %9065 = vmatpush.bf16.msra.mxu0 %v1002
    %9066 = vmatpush.bf16.msra.mxu0 %v994
    %9067 = vmatpush.bf16.msra.mxu0 %v986
    %9068 = vmatpush.bf16.msra.mxu0 %v978
    %9069 = vmatpush.bf16.msra.mxu0 %v970
    %9070 = vmatpush.bf16.msra.mxu0 %v962
    %9071 = vmatmul.bf16.gmra.mxu0 %v8510
    %v9072 = vpop.f32.mrf.mxu0
    %v9073 = vadd.f32 0.0, %v9072
    %v9074 = vpop.f32.mrf.mxu0
    %9075 = vdwg.mxu0
    %9076 = vmatpush.bf16.msra.mxu0 %v1082
    %9077 = vmatpush.bf16.msra.mxu0 %v1074
    %9078 = vmatpush.bf16.msra.mxu0 %v1066
    %9079 = vmatpush.bf16.msra.mxu0 %v1058
    %9080 = vmatpush.bf16.msra.mxu0 %v1050
    %9081 = vmatpush.bf16.msra.mxu0 %v1042
    %9082 = vmatpush.bf16.msra.mxu0 %v1034
    %9083 = vmatpush.bf16.msra.mxu0 %v1026
    %9084 = vmatmul.bf16.gmra.mxu0 %v8511
    %v9085 = vpop.f32.mrf.mxu0
    %v9086 = vadd.f32 %v9073, %v9085
    %v9087 = vpop.f32.mrf.mxu0
    %9088 = vdwg.mxu0
    %9089 = vmatpush.bf16.msra.mxu0 %v1019
    %9090 = vmatpush.bf16.msra.mxu0 %v1011
    %9091 = vmatpush.bf16.msra.mxu0 %v1003
    %9092 = vmatpush.bf16.msra.mxu0 %v995
    %9093 = vmatpush.bf16.msra.mxu0 %v987
    %9094 = vmatpush.bf16.msra.mxu0 %v979
    %9095 = vmatpush.bf16.msra.mxu0 %v971
    %9096 = vmatpush.bf16.msra.mxu0 %v963
    %9097 = vmatmul.bf16.gmra.mxu0 %v8510
    %v9098 = vpop.f32.mrf.mxu0
    %v9099 = vadd.f32 0.0, %v9098
    %v9100 = vpop.f32.mrf.mxu0
    %9101 = vdwg.mxu0
    %9102 = vmatpush.bf16.msra.mxu0 %v1083
    %9103 = vmatpush.bf16.msra.mxu0 %v1075
    %9104 = vmatpush.bf16.msra.mxu0 %v1067
    %9105 = vmatpush.bf16.msra.mxu0 %v1059
    %9106 = vmatpush.bf16.msra.mxu0 %v1051
    %9107 = vmatpush.bf16.msra.mxu0 %v1043
    %9108 = vmatpush.bf16.msra.mxu0 %v1035
    %9109 = vmatpush.bf16.msra.mxu0 %v1027
    %9110 = vmatmul.bf16.gmra.mxu0 %v8511
    %v9111 = vpop.f32.mrf.mxu0
    %v9112 = vadd.f32 %v9099, %v9111
    %v9113 = vpop.f32.mrf.mxu0
    %9114 = vdwg.mxu0
    %9115 = vmatpush.bf16.msra.mxu0 %v1020
    %9116 = vmatpush.bf16.msra.mxu0 %v1012
    %9117 = vmatpush.bf16.msra.mxu0 %v1004
    %9118 = vmatpush.bf16.msra.mxu0 %v996
    %9119 = vmatpush.bf16.msra.mxu0 %v988
    %9120 = vmatpush.bf16.msra.mxu0 %v980
    %9121 = vmatpush.bf16.msra.mxu0 %v972
    %9122 = vmatpush.bf16.msra.mxu0 %v964
    %9123 = vmatmul.bf16.gmra.mxu0 %v8510
    %v9124 = vpop.f32.mrf.mxu0
    %v9125 = vadd.f32 0.0, %v9124
    %v9126 = vpop.f32.mrf.mxu0
    %9127 = vdwg.mxu0
    %9128 = vmatpush.bf16.msra.mxu0 %v1084
    %9129 = vmatpush.bf16.msra.mxu0 %v1076
    %9130 = vmatpush.bf16.msra.mxu0 %v1068
    %9131 = vmatpush.bf16.msra.mxu0 %v1060
    %9132 = vmatpush.bf16.msra.mxu0 %v1052
    %9133 = vmatpush.bf16.msra.mxu0 %v1044
    %9134 = vmatpush.bf16.msra.mxu0 %v1036
    %9135 = vmatpush.bf16.msra.mxu0 %v1028
    %9136 = vmatmul.bf16.gmra.mxu0 %v8511
    %v9137 = vpop.f32.mrf.mxu0
    %v9138 = vadd.f32 %v9125, %v9137
    %v9139 = vpop.f32.mrf.mxu0
    %9140 = vdwg.mxu0
    %9141 = vmatpush.bf16.msra.mxu0 %v1021
    %9142 = vmatpush.bf16.msra.mxu0 %v1013
    %9143 = vmatpush.bf16.msra.mxu0 %v1005
    %9144 = vmatpush.bf16.msra.mxu0 %v997
    %9145 = vmatpush.bf16.msra.mxu0 %v989
    %9146 = vmatpush.bf16.msra.mxu0 %v981
    %9147 = vmatpush.bf16.msra.mxu0 %v973
    %9148 = vmatpush.bf16.msra.mxu0 %v965
    %9149 = vmatmul.bf16.gmra.mxu0 %v8510
    %v9150 = vpop.f32.mrf.mxu0
    %v9151 = vadd.f32 0.0, %v9150
    %v9152 = vpop.f32.mrf.mxu0
    %9153 = vdwg.mxu0
    %9154 = vmatpush.bf16.msra.mxu0 %v1085
    %9155 = vmatpush.bf16.msra.mxu0 %v1077
    %9156 = vmatpush.bf16.msra.mxu0 %v1069
    %9157 = vmatpush.bf16.msra.mxu0 %v1061
    %9158 = vmatpush.bf16.msra.mxu0 %v1053
    %9159 = vmatpush.bf16.msra.mxu0 %v1045
    %9160 = vmatpush.bf16.msra.mxu0 %v1037
    %9161 = vmatpush.bf16.msra.mxu0 %v1029
    %9162 = vmatmul.bf16.gmra.mxu0 %v8511
    %v9163 = vpop.f32.mrf.mxu0
    %v9164 = vadd.f32 %v9151, %v9163
    %v9165 = vpop.f32.mrf.mxu0
    %9166 = vdwg.mxu0
    %9167 = vmatpush.bf16.msra.mxu0 %v1022
    %9168 = vmatpush.bf16.msra.mxu0 %v1014
    %9169 = vmatpush.bf16.msra.mxu0 %v1006
    %9170 = vmatpush.bf16.msra.mxu0 %v998
    %9171 = vmatpush.bf16.msra.mxu0 %v990
    %9172 = vmatpush.bf16.msra.mxu0 %v982
    %9173 = vmatpush.bf16.msra.mxu0 %v974
    %9174 = vmatpush.bf16.msra.mxu0 %v966
    %9175 = vmatmul.bf16.gmra.mxu0 %v8510
    %v9176 = vpop.f32.mrf.mxu0
    %v9177 = vadd.f32 0.0, %v9176
    %v9178 = vpop.f32.mrf.mxu0
    %9179 = vdwg.mxu0
    %9180 = vmatpush.bf16.msra.mxu0 %v1086
    %9181 = vmatpush.bf16.msra.mxu0 %v1078
    %9182 = vmatpush.bf16.msra.mxu0 %v1070
    %9183 = vmatpush.bf16.msra.mxu0 %v1062
    %9184 = vmatpush.bf16.msra.mxu0 %v1054
    %9185 = vmatpush.bf16.msra.mxu0 %v1046
    %9186 = vmatpush.bf16.msra.mxu0 %v1038
    %9187 = vmatpush.bf16.msra.mxu0 %v1030
    %9188 = vmatmul.bf16.gmra.mxu0 %v8511
    %v9189 = vpop.f32.mrf.mxu0
    %v9190 = vadd.f32 %v9177, %v9189
    %v9191 = vpop.f32.mrf.mxu0
    %9192 = vdwg.mxu0
    %9193 = vmatpush.bf16.msra.mxu0 %v1023
    %9194 = vmatpush.bf16.msra.mxu0 %v1015
    %9195 = vmatpush.bf16.msra.mxu0 %v1007
    %9196 = vmatpush.bf16.msra.mxu0 %v999
    %9197 = vmatpush.bf16.msra.mxu0 %v991
    %9198 = vmatpush.bf16.msra.mxu0 %v983
    %9199 = vmatpush.bf16.msra.mxu0 %v975
    %9200 = vmatpush.bf16.msra.mxu0 %v967
    %9201 = vmatmul.bf16.gmra.mxu0 %v8510
    %v9202 = vpop.f32.mrf.mxu0
    %v9203 = vadd.f32 0.0, %v9202
    %v9204 = vpop.f32.mrf.mxu0
    %9205 = vdwg.mxu0
    %9206 = vmatpush.bf16.msra.mxu0 %v1087
    %9207 = vmatpush.bf16.msra.mxu0 %v1079
    %9208 = vmatpush.bf16.msra.mxu0 %v1071
    %9209 = vmatpush.bf16.msra.mxu0 %v1063
    %9210 = vmatpush.bf16.msra.mxu0 %v1055
    %9211 = vmatpush.bf16.msra.mxu0 %v1047
    %9212 = vmatpush.bf16.msra.mxu0 %v1039
    %9213 = vmatpush.bf16.msra.mxu0 %v1031
    %9214 = vmatmul.bf16.gmra.mxu0 %v8511
    %v9215 = vpop.f32.mrf.mxu0
    %v9216 = vadd.f32 %v9203, %v9215
    %v9217 = vpop.f32.mrf.mxu0
    %9218 = vdwg.mxu0
    %9219 = vmatpush.bf16.msra.mxu0 %v1024
    %9220 = vmatpush.bf16.msra.mxu0 %v1016
    %9221 = vmatpush.bf16.msra.mxu0 %v1008
    %9222 = vmatpush.bf16.msra.mxu0 %v1000
    %9223 = vmatpush.bf16.msra.mxu0 %v992
    %9224 = vmatpush.bf16.msra.mxu0 %v984
    %9225 = vmatpush.bf16.msra.mxu0 %v976
    %9226 = vmatpush.bf16.msra.mxu0 %v968
    %9227 = vmatmul.bf16.gmra.mxu0 %v8510
    %v9228 = vpop.f32.mrf.mxu0
    %v9229 = vadd.f32 0.0, %v9228
    %v9230 = vpop.f32.mrf.mxu0
    %9231 = vdwg.mxu0
    %9232 = vmatpush.bf16.msra.mxu0 %v1088
    %9233 = vmatpush.bf16.msra.mxu0 %v1080
    %9234 = vmatpush.bf16.msra.mxu0 %v1072
    %9235 = vmatpush.bf16.msra.mxu0 %v1064
    %9236 = vmatpush.bf16.msra.mxu0 %v1056
    %9237 = vmatpush.bf16.msra.mxu0 %v1048
    %9238 = vmatpush.bf16.msra.mxu0 %v1040
    %9239 = vmatpush.bf16.msra.mxu0 %v1032
    %9240 = vmatmul.bf16.gmra.mxu0 %v8511
    %v9241 = vpop.f32.mrf.mxu0
    %v9242 = vadd.f32 %v9229, %v9241
    %v9243 = vpop.f32.mrf.mxu0
    %9244 = vdwg.mxu0
    %9245 = vmatpush.bf16.msra.mxu0 %v1025
    %9246 = vmatpush.bf16.msra.mxu0 %v1017
    %9247 = vmatpush.bf16.msra.mxu0 %v1009
    %9248 = vmatpush.bf16.msra.mxu0 %v1001
    %9249 = vmatpush.bf16.msra.mxu0 %v993
    %9250 = vmatpush.bf16.msra.mxu0 %v985
    %9251 = vmatpush.bf16.msra.mxu0 %v977
    %9252 = vmatpush.bf16.msra.mxu0 %v969
    %9253 = vmatmul.bf16.gmra.mxu0 %v8510
    %v9254 = vpop.f32.mrf.mxu0
    %v9255 = vadd.f32 0.0, %v9254
    %v9256 = vpop.f32.mrf.mxu0
    %9257 = vdwg.mxu0
    %9258 = vmatpush.bf16.msra.mxu0 %v1089
    %9259 = vmatpush.bf16.msra.mxu0 %v1081
    %9260 = vmatpush.bf16.msra.mxu0 %v1073
    %9261 = vmatpush.bf16.msra.mxu0 %v1065
    %9262 = vmatpush.bf16.msra.mxu0 %v1057
    %9263 = vmatpush.bf16.msra.mxu0 %v1049
    %9264 = vmatpush.bf16.msra.mxu0 %v1041
    %9265 = vmatpush.bf16.msra.mxu0 %v1033
    %9266 = vmatmul.bf16.gmra.mxu0 %v8511
    %v9267 = vpop.f32.mrf.mxu0
    %v9268 = vadd.f32 %v9255, %v9267
    %v9269 = vpop.f32.mrf.mxu0
    %9270 = vdwg.mxu0
    %v9271 = vadd.f32 %v244, %v9086
    %v9272 = vadd.f32 %v273, %v9112
    %v9273 = vadd.f32 %v302, %v9138
    %v9274 = vadd.f32 %v331, %v9164
    %v9275 = vadd.f32 %v360, %v9190
    %v9276 = vadd.f32 %v389, %v9216
    %v9277 = vadd.f32 %v418, %v9242
    %v9278 = vadd.f32 %v447, %v9268
    %v9279 = vxor.u32 %v9271, 2147483648
    %v9280 = vxor.u32 %v9272, 2147483648
    %v9281 = vmul.f32 %v9279, 1.442695
    %v9282 = vpow.pop %v9281
    %v9283 = vmul.f32 %v9280, 1.442695
    %v9284 = vpow.pop %v9283
    %v9285 = vadd.f32 %v9282, 1.0
    %v9286 = vadd.f32 %v9284, 1.0
    %v9287 = vrcp.pop %v9285
    %v9288 = vmul.f32 %v9285, %v9287
    %v9289 = vsub.f32 1.0, %v9288
    %v9290 = vmul.f32 %v9287, %v9289
    %v9291 = vadd.f32 %v9287, %v9290
    %vm9292 = vweird.f32 %v9285
    %vm9293 = vweird.f32 %v9287
    %vm9294 = vmor %vm9292, %vm9293
    %v9295 = vsel %vm9294, %v9287, %v9291
    %v9296 = vand.u32 2147483647, %v9285
    %vm9297 = vcmp.eq.f32.partialorder %v9296, 8.507059e+37
    %v9298 = vand.u32 %v9285, 2147483648
    %v9299 = vor.u32 1.1754944e-38, %v9298
    %v9300 = vsel %vm9297, %v9299, %v9295
    %v9301 = vmul.f32 1.0, %v9300
    %v9302 = vrcp.pop %v9286
    %v9303 = vmul.f32 %v9286, %v9302
    %v9304 = vsub.f32 1.0, %v9303
    %v9305 = vmul.f32 %v9302, %v9304
    %v9306 = vadd.f32 %v9302, %v9305
    %vm9307 = vweird.f32 %v9286
    %vm9308 = vweird.f32 %v9302
    %vm9309 = vmor %vm9307, %vm9308
    %v9310 = vsel %vm9309, %v9302, %v9306
    %v9311 = vand.u32 2147483647, %v9286
    %vm9312 = vcmp.eq.f32.partialorder %v9311, 8.507059e+37
    %v9313 = vand.u32 %v9286, 2147483648
    %v9314 = vor.u32 1.1754944e-38, %v9313
    %v9315 = vsel %vm9312, %v9314, %v9310
    %v9316 = vmul.f32 1.0, %v9315
    %v9317 = vxor.u32 %v9273, 2147483648
    %v9318 = vxor.u32 %v9274, 2147483648
    %v9319 = vmul.f32 %v9317, 1.442695
    %v9320 = vpow.pop %v9319
    %v9321 = vmul.f32 %v9318, 1.442695
    %v9322 = vpow.pop %v9321
    %v9323 = vadd.f32 %v9320, 1.0
    %v9324 = vadd.f32 %v9322, 1.0
    %v9325 = vrcp.pop %v9323
    %v9326 = vmul.f32 %v9323, %v9325
    %v9327 = vsub.f32 1.0, %v9326
    %v9328 = vmul.f32 %v9325, %v9327
    %v9329 = vadd.f32 %v9325, %v9328
    %vm9330 = vweird.f32 %v9323
    %vm9331 = vweird.f32 %v9325
    %vm9332 = vmor %vm9330, %vm9331
    %v9333 = vsel %vm9332, %v9325, %v9329
    %v9334 = vand.u32 2147483647, %v9323
    %vm9335 = vcmp.eq.f32.partialorder %v9334, 8.507059e+37
    %v9336 = vand.u32 %v9323, 2147483648
    %v9337 = vor.u32 1.1754944e-38, %v9336
    %v9338 = vsel %vm9335, %v9337, %v9333
    %v9339 = vmul.f32 1.0, %v9338
    %v9340 = vrcp.pop %v9324
    %v9341 = vmul.f32 %v9324, %v9340
    %v9342 = vsub.f32 1.0, %v9341
    %v9343 = vmul.f32 %v9340, %v9342
    %v9344 = vadd.f32 %v9340, %v9343
    %vm9345 = vweird.f32 %v9324
    %vm9346 = vweird.f32 %v9340
    %vm9347 = vmor %vm9345, %vm9346
    %v9348 = vsel %vm9347, %v9340, %v9344
    %v9349 = vand.u32 2147483647, %v9324
    %vm9350 = vcmp.eq.f32.partialorder %v9349, 8.507059e+37
    %v9351 = vand.u32 %v9324, 2147483648
    %v9352 = vor.u32 1.1754944e-38, %v9351
    %v9353 = vsel %vm9350, %v9352, %v9348
    %v9354 = vmul.f32 1.0, %v9353
    %v9355 = vtanh.pop %v9275
    %v9356 = vtanh.pop %v9276
    %v9357 = vxor.u32 %v9277, 2147483648
    %v9358 = vxor.u32 %v9278, 2147483648
    %v9359 = vmul.f32 %v9357, 1.442695
    %v9360 = vpow.pop %v9359
    %v9361 = vmul.f32 %v9358, 1.442695
    %v9362 = vpow.pop %v9361
    %v9363 = vadd.f32 %v9360, 1.0
    %v9364 = vadd.f32 %v9362, 1.0
    %v9365 = vrcp.pop %v9363
    %v9366 = vmul.f32 %v9363, %v9365
    %v9367 = vsub.f32 1.0, %v9366
    %v9368 = vmul.f32 %v9365, %v9367
    %v9369 = vadd.f32 %v9365, %v9368
    %vm9370 = vweird.f32 %v9363
    %vm9371 = vweird.f32 %v9365
    %vm9372 = vmor %vm9370, %vm9371
    %v9373 = vsel %vm9372, %v9365, %v9369
    %v9374 = vand.u32 2147483647, %v9363
    %vm9375 = vcmp.eq.f32.partialorder %v9374, 8.507059e+37
    %v9376 = vand.u32 %v9363, 2147483648
    %v9377 = vor.u32 1.1754944e-38, %v9376
    %v9378 = vsel %vm9375, %v9377, %v9373
    %v9379 = vmul.f32 1.0, %v9378
    %v9380 = vrcp.pop %v9364
    %v9381 = vmul.f32 %v9364, %v9380
    %v9382 = vsub.f32 1.0, %v9381
    %v9383 = vmul.f32 %v9380, %v9382
    %v9384 = vadd.f32 %v9380, %v9383
    %vm9385 = vweird.f32 %v9364
    %vm9386 = vweird.f32 %v9380
    %vm9387 = vmor %vm9385, %vm9386
    %v9388 = vsel %vm9387, %v9380, %v9384
    %v9389 = vand.u32 2147483647, %v9364
    %vm9390 = vcmp.eq.f32.partialorder %v9389, 8.507059e+37
    %v9391 = vand.u32 %v9364, 2147483648
    %v9392 = vor.u32 1.1754944e-38, %v9391
    %v9393 = vsel %vm9390, %v9392, %v9388
    %v9394 = vmul.f32 1.0, %v9393
    %v9395 = vmul.f32 %v9339, %v8499
    %v9396 = vmul.f32 %v9354, %v8500
    %v9397 = vmul.f32 %v9301, %v9355
    %v9398 = vmul.f32 %v9316, %v9356
    %v9399 = vadd.f32 %v9395, %v9397
    %v9400 = vadd.f32 %v9396, %v9398
    %v9401 = vtanh.pop %v9399
    %v9402 = vtanh.pop %v9400
    %v9403 = vmul.f32 %v9379, %v9401
    %v9404 = vmul.f32 %v9394, %v9402
    %v9405 = vpack.c.bf16 %v9404, %v9403
    %v9406 = vpack.c.bf16 %v9062, %v9061
    %v9408 = vunpack.c.l.b16 %v9405
    %v9409 = vunpack.c.h.b16 %v9405
    %v9410 = vpack.c.b16 %v9408, %v9408
    %v9411 = vpack.c.b16 %v9409, %v9409
    %v9415 = vunpack.c.l.b16 %v9406
    %v9416 = vunpack.c.h.b16 %v9406
    %v9417 = vpack.c.b16 %v9415, %v9415
    %v9418 = vpack.c.b16 %v9416, %v9416
    %9421 = vmatpush.bf16.msra.mxu0 %v2665
    %9422 = vmatpush.bf16.msra.mxu0 %v2657
    %9423 = vmatpush.bf16.msra.mxu0 %v2649
    %9424 = vmatpush.bf16.msra.mxu0 %v2641
    %9425 = vmatpush.bf16.msra.mxu0 %v2633
    %9426 = vmatpush.bf16.msra.mxu0 %v2625
    %9427 = vmatpush.bf16.msra.mxu0 %v2617
    %9428 = vmatpush.bf16.msra.mxu0 %v2609
    %9429 = vmatmul.bf16.gmra.mxu0 %v9410
    %v9430 = vpop.f32.mrf.mxu0
    %v9431 = vadd.f32 %v1825, %v9430
    %v9432 = vpop.f32.mrf.mxu0
    %9433 = vdwg.mxu0
    %9434 = vmatpush.bf16.msra.mxu0 %v2729
    %9435 = vmatpush.bf16.msra.mxu0 %v2721
    %9436 = vmatpush.bf16.msra.mxu0 %v2713
    %9437 = vmatpush.bf16.msra.mxu0 %v2705
    %9438 = vmatpush.bf16.msra.mxu0 %v2697
    %9439 = vmatpush.bf16.msra.mxu0 %v2689
    %9440 = vmatpush.bf16.msra.mxu0 %v2681
    %9441 = vmatpush.bf16.msra.mxu0 %v2673
    %9442 = vmatmul.bf16.gmra.mxu0 %v9411
    %v9443 = vpop.f32.mrf.mxu0
    %v9444 = vadd.f32 %v9431, %v9443
    %v9445 = vpop.f32.mrf.mxu0
    %9446 = vdwg.mxu0
    %9447 = vmatpush.bf16.msra.mxu0 %v2793
    %9448 = vmatpush.bf16.msra.mxu0 %v2785
    %9449 = vmatpush.bf16.msra.mxu0 %v2777
    %9450 = vmatpush.bf16.msra.mxu0 %v2769
    %9451 = vmatpush.bf16.msra.mxu0 %v2761
    %9452 = vmatpush.bf16.msra.mxu0 %v2753
    %9453 = vmatpush.bf16.msra.mxu0 %v2745
    %9454 = vmatpush.bf16.msra.mxu0 %v2737
    %9455 = vmatmul.bf16.gmra.mxu0 %v9417
    %v9456 = vpop.f32.mrf.mxu0
    %v9457 = vadd.f32 %v9444, %v9456
    %v9458 = vpop.f32.mrf.mxu0
    %9459 = vdwg.mxu0
    %9460 = vmatpush.bf16.msra.mxu0 %v2857
    %9461 = vmatpush.bf16.msra.mxu0 %v2849
    %9462 = vmatpush.bf16.msra.mxu0 %v2841
    %9463 = vmatpush.bf16.msra.mxu0 %v2833
    %9464 = vmatpush.bf16.msra.mxu0 %v2825
    %9465 = vmatpush.bf16.msra.mxu0 %v2817
    %9466 = vmatpush.bf16.msra.mxu0 %v2809
    %9467 = vmatpush.bf16.msra.mxu0 %v2801
    %9468 = vmatmul.bf16.gmra.mxu0 %v9418
    %v9469 = vpop.f32.mrf.mxu0
    %v9470 = vadd.f32 %v9457, %v9469
    %v9471 = vpop.f32.mrf.mxu0
    %9472 = vdwg.mxu0
    %9473 = vmatpush.bf16.msra.mxu0 %v2666
    %9474 = vmatpush.bf16.msra.mxu0 %v2658
    %9475 = vmatpush.bf16.msra.mxu0 %v2650
    %9476 = vmatpush.bf16.msra.mxu0 %v2642
    %9477 = vmatpush.bf16.msra.mxu0 %v2634
    %9478 = vmatpush.bf16.msra.mxu0 %v2626
    %9479 = vmatpush.bf16.msra.mxu0 %v2618
    %9480 = vmatpush.bf16.msra.mxu0 %v2610
    %9481 = vmatmul.bf16.gmra.mxu0 %v9410
    %v9482 = vpop.f32.mrf.mxu0
    %v9483 = vadd.f32 %v1826, %v9482
    %v9484 = vpop.f32.mrf.mxu0
    %9485 = vdwg.mxu0
    %9486 = vmatpush.bf16.msra.mxu0 %v2730
    %9487 = vmatpush.bf16.msra.mxu0 %v2722
    %9488 = vmatpush.bf16.msra.mxu0 %v2714
    %9489 = vmatpush.bf16.msra.mxu0 %v2706
    %9490 = vmatpush.bf16.msra.mxu0 %v2698
    %9491 = vmatpush.bf16.msra.mxu0 %v2690
    %9492 = vmatpush.bf16.msra.mxu0 %v2682
    %9493 = vmatpush.bf16.msra.mxu0 %v2674
    %9494 = vmatmul.bf16.gmra.mxu0 %v9411
    %v9495 = vpop.f32.mrf.mxu0
    %v9496 = vadd.f32 %v9483, %v9495
    %v9497 = vpop.f32.mrf.mxu0
    %9498 = vdwg.mxu0
    %9499 = vmatpush.bf16.msra.mxu0 %v2794
    %9500 = vmatpush.bf16.msra.mxu0 %v2786
    %9501 = vmatpush.bf16.msra.mxu0 %v2778
    %9502 = vmatpush.bf16.msra.mxu0 %v2770
    %9503 = vmatpush.bf16.msra.mxu0 %v2762
    %9504 = vmatpush.bf16.msra.mxu0 %v2754
    %9505 = vmatpush.bf16.msra.mxu0 %v2746
    %9506 = vmatpush.bf16.msra.mxu0 %v2738
    %9507 = vmatmul.bf16.gmra.mxu0 %v9417
    %v9508 = vpop.f32.mrf.mxu0
    %v9509 = vadd.f32 %v9496, %v9508
    %v9510 = vpop.f32.mrf.mxu0
    %9511 = vdwg.mxu0
    %9512 = vmatpush.bf16.msra.mxu0 %v2858
    %9513 = vmatpush.bf16.msra.mxu0 %v2850
    %9514 = vmatpush.bf16.msra.mxu0 %v2842
    %9515 = vmatpush.bf16.msra.mxu0 %v2834
    %9516 = vmatpush.bf16.msra.mxu0 %v2826
    %9517 = vmatpush.bf16.msra.mxu0 %v2818
    %9518 = vmatpush.bf16.msra.mxu0 %v2810
    %9519 = vmatpush.bf16.msra.mxu0 %v2802
    %9520 = vmatmul.bf16.gmra.mxu0 %v9418
    %v9521 = vpop.f32.mrf.mxu0
    %v9522 = vadd.f32 %v9509, %v9521
    %v9523 = vpop.f32.mrf.mxu0
    %9524 = vdwg.mxu0
    %9525 = vmatpush.bf16.msra.mxu0 %v2667
    %9526 = vmatpush.bf16.msra.mxu0 %v2659
    %9527 = vmatpush.bf16.msra.mxu0 %v2651
    %9528 = vmatpush.bf16.msra.mxu0 %v2643
    %9529 = vmatpush.bf16.msra.mxu0 %v2635
    %9530 = vmatpush.bf16.msra.mxu0 %v2627
    %9531 = vmatpush.bf16.msra.mxu0 %v2619
    %9532 = vmatpush.bf16.msra.mxu0 %v2611
    %9533 = vmatmul.bf16.gmra.mxu0 %v9410
    %v9534 = vpop.f32.mrf.mxu0
    %v9535 = vadd.f32 %v1827, %v9534
    %v9536 = vpop.f32.mrf.mxu0
    %9537 = vdwg.mxu0
    %9538 = vmatpush.bf16.msra.mxu0 %v2731
    %9539 = vmatpush.bf16.msra.mxu0 %v2723
    %9540 = vmatpush.bf16.msra.mxu0 %v2715
    %9541 = vmatpush.bf16.msra.mxu0 %v2707
    %9542 = vmatpush.bf16.msra.mxu0 %v2699
    %9543 = vmatpush.bf16.msra.mxu0 %v2691
    %9544 = vmatpush.bf16.msra.mxu0 %v2683
    %9545 = vmatpush.bf16.msra.mxu0 %v2675
    %9546 = vmatmul.bf16.gmra.mxu0 %v9411
    %v9547 = vpop.f32.mrf.mxu0
    %v9548 = vadd.f32 %v9535, %v9547
    %v9549 = vpop.f32.mrf.mxu0
    %9550 = vdwg.mxu0
    %9551 = vmatpush.bf16.msra.mxu0 %v2795
    %9552 = vmatpush.bf16.msra.mxu0 %v2787
    %9553 = vmatpush.bf16.msra.mxu0 %v2779
    %9554 = vmatpush.bf16.msra.mxu0 %v2771
    %9555 = vmatpush.bf16.msra.mxu0 %v2763
    %9556 = vmatpush.bf16.msra.mxu0 %v2755
    %9557 = vmatpush.bf16.msra.mxu0 %v2747
    %9558 = vmatpush.bf16.msra.mxu0 %v2739
    %9559 = vmatmul.bf16.gmra.mxu0 %v9417
    %v9560 = vpop.f32.mrf.mxu0
    %v9561 = vadd.f32 %v9548, %v9560
    %v9562 = vpop.f32.mrf.mxu0
    %9563 = vdwg.mxu0
    %9564 = vmatpush.bf16.msra.mxu0 %v2859
    %9565 = vmatpush.bf16.msra.mxu0 %v2851
    %9566 = vmatpush.bf16.msra.mxu0 %v2843
    %9567 = vmatpush.bf16.msra.mxu0 %v2835
    %9568 = vmatpush.bf16.msra.mxu0 %v2827
    %9569 = vmatpush.bf16.msra.mxu0 %v2819
    %9570 = vmatpush.bf16.msra.mxu0 %v2811
    %9571 = vmatpush.bf16.msra.mxu0 %v2803
    %9572 = vmatmul.bf16.gmra.mxu0 %v9418
    %v9573 = vpop.f32.mrf.mxu0
    %v9574 = vadd.f32 %v9561, %v9573
    %v9575 = vpop.f32.mrf.mxu0
    %9576 = vdwg.mxu0
    %9577 = vmatpush.bf16.msra.mxu0 %v2668
    %9578 = vmatpush.bf16.msra.mxu0 %v2660
    %9579 = vmatpush.bf16.msra.mxu0 %v2652
    %9580 = vmatpush.bf16.msra.mxu0 %v2644
    %9581 = vmatpush.bf16.msra.mxu0 %v2636
    %9582 = vmatpush.bf16.msra.mxu0 %v2628
    %9583 = vmatpush.bf16.msra.mxu0 %v2620
    %9584 = vmatpush.bf16.msra.mxu0 %v2612
    %9585 = vmatmul.bf16.gmra.mxu0 %v9410
    %v9586 = vpop.f32.mrf.mxu0
    %v9587 = vadd.f32 %v1828, %v9586
    %v9588 = vpop.f32.mrf.mxu0
    %9589 = vdwg.mxu0
    %9590 = vmatpush.bf16.msra.mxu0 %v2732
    %9591 = vmatpush.bf16.msra.mxu0 %v2724
    %9592 = vmatpush.bf16.msra.mxu0 %v2716
    %9593 = vmatpush.bf16.msra.mxu0 %v2708
    %9594 = vmatpush.bf16.msra.mxu0 %v2700
    %9595 = vmatpush.bf16.msra.mxu0 %v2692
    %9596 = vmatpush.bf16.msra.mxu0 %v2684
    %9597 = vmatpush.bf16.msra.mxu0 %v2676
    %9598 = vmatmul.bf16.gmra.mxu0 %v9411
    %v9599 = vpop.f32.mrf.mxu0
    %v9600 = vadd.f32 %v9587, %v9599
    %v9601 = vpop.f32.mrf.mxu0
    %9602 = vdwg.mxu0
    %9603 = vmatpush.bf16.msra.mxu0 %v2796
    %9604 = vmatpush.bf16.msra.mxu0 %v2788
    %9605 = vmatpush.bf16.msra.mxu0 %v2780
    %9606 = vmatpush.bf16.msra.mxu0 %v2772
    %9607 = vmatpush.bf16.msra.mxu0 %v2764
    %9608 = vmatpush.bf16.msra.mxu0 %v2756
    %9609 = vmatpush.bf16.msra.mxu0 %v2748
    %9610 = vmatpush.bf16.msra.mxu0 %v2740
    %9611 = vmatmul.bf16.gmra.mxu0 %v9417
    %v9612 = vpop.f32.mrf.mxu0
    %v9613 = vadd.f32 %v9600, %v9612
    %v9614 = vpop.f32.mrf.mxu0
    %9615 = vdwg.mxu0
    %9616 = vmatpush.bf16.msra.mxu0 %v2860
    %9617 = vmatpush.bf16.msra.mxu0 %v2852
    %9618 = vmatpush.bf16.msra.mxu0 %v2844
    %9619 = vmatpush.bf16.msra.mxu0 %v2836
    %9620 = vmatpush.bf16.msra.mxu0 %v2828
    %9621 = vmatpush.bf16.msra.mxu0 %v2820
    %9622 = vmatpush.bf16.msra.mxu0 %v2812
    %9623 = vmatpush.bf16.msra.mxu0 %v2804
    %9624 = vmatmul.bf16.gmra.mxu0 %v9418
    %v9625 = vpop.f32.mrf.mxu0
    %v9626 = vadd.f32 %v9613, %v9625
    %v9627 = vpop.f32.mrf.mxu0
    %9628 = vdwg.mxu0
    %9629 = vmatpush.bf16.msra.mxu0 %v2669
    %9630 = vmatpush.bf16.msra.mxu0 %v2661
    %9631 = vmatpush.bf16.msra.mxu0 %v2653
    %9632 = vmatpush.bf16.msra.mxu0 %v2645
    %9633 = vmatpush.bf16.msra.mxu0 %v2637
    %9634 = vmatpush.bf16.msra.mxu0 %v2629
    %9635 = vmatpush.bf16.msra.mxu0 %v2621
    %9636 = vmatpush.bf16.msra.mxu0 %v2613
    %9637 = vmatmul.bf16.gmra.mxu0 %v9410
    %v9638 = vpop.f32.mrf.mxu0
    %v9639 = vadd.f32 %v1829, %v9638
    %v9640 = vpop.f32.mrf.mxu0
    %9641 = vdwg.mxu0
    %9642 = vmatpush.bf16.msra.mxu0 %v2733
    %9643 = vmatpush.bf16.msra.mxu0 %v2725
    %9644 = vmatpush.bf16.msra.mxu0 %v2717
    %9645 = vmatpush.bf16.msra.mxu0 %v2709
    %9646 = vmatpush.bf16.msra.mxu0 %v2701
    %9647 = vmatpush.bf16.msra.mxu0 %v2693
    %9648 = vmatpush.bf16.msra.mxu0 %v2685
    %9649 = vmatpush.bf16.msra.mxu0 %v2677
    %9650 = vmatmul.bf16.gmra.mxu0 %v9411
    %v9651 = vpop.f32.mrf.mxu0
    %v9652 = vadd.f32 %v9639, %v9651
    %v9653 = vpop.f32.mrf.mxu0
    %9654 = vdwg.mxu0
    %9655 = vmatpush.bf16.msra.mxu0 %v2797
    %9656 = vmatpush.bf16.msra.mxu0 %v2789
    %9657 = vmatpush.bf16.msra.mxu0 %v2781
    %9658 = vmatpush.bf16.msra.mxu0 %v2773
    %9659 = vmatpush.bf16.msra.mxu0 %v2765
    %9660 = vmatpush.bf16.msra.mxu0 %v2757
    %9661 = vmatpush.bf16.msra.mxu0 %v2749
    %9662 = vmatpush.bf16.msra.mxu0 %v2741
    %9663 = vmatmul.bf16.gmra.mxu0 %v9417
    %v9664 = vpop.f32.mrf.mxu0
    %v9665 = vadd.f32 %v9652, %v9664
    %v9666 = vpop.f32.mrf.mxu0
    %9667 = vdwg.mxu0
    %9668 = vmatpush.bf16.msra.mxu0 %v2861
    %9669 = vmatpush.bf16.msra.mxu0 %v2853
    %9670 = vmatpush.bf16.msra.mxu0 %v2845
    %9671 = vmatpush.bf16.msra.mxu0 %v2837
    %9672 = vmatpush.bf16.msra.mxu0 %v2829
    %9673 = vmatpush.bf16.msra.mxu0 %v2821
    %9674 = vmatpush.bf16.msra.mxu0 %v2813
    %9675 = vmatpush.bf16.msra.mxu0 %v2805
    %9676 = vmatmul.bf16.gmra.mxu0 %v9418
    %v9677 = vpop.f32.mrf.mxu0
    %v9678 = vadd.f32 %v9665, %v9677
    %v9679 = vpop.f32.mrf.mxu0
    %9680 = vdwg.mxu0
    %9681 = vmatpush.bf16.msra.mxu0 %v2670
    %9682 = vmatpush.bf16.msra.mxu0 %v2662
    %9683 = vmatpush.bf16.msra.mxu0 %v2654
    %9684 = vmatpush.bf16.msra.mxu0 %v2646
    %9685 = vmatpush.bf16.msra.mxu0 %v2638
    %9686 = vmatpush.bf16.msra.mxu0 %v2630
    %9687 = vmatpush.bf16.msra.mxu0 %v2622
    %9688 = vmatpush.bf16.msra.mxu0 %v2614
    %9689 = vmatmul.bf16.gmra.mxu0 %v9410
    %v9690 = vpop.f32.mrf.mxu0
    %v9691 = vadd.f32 %v1830, %v9690
    %v9692 = vpop.f32.mrf.mxu0
    %9693 = vdwg.mxu0
    %9694 = vmatpush.bf16.msra.mxu0 %v2734
    %9695 = vmatpush.bf16.msra.mxu0 %v2726
    %9696 = vmatpush.bf16.msra.mxu0 %v2718
    %9697 = vmatpush.bf16.msra.mxu0 %v2710
    %9698 = vmatpush.bf16.msra.mxu0 %v2702
    %9699 = vmatpush.bf16.msra.mxu0 %v2694
    %9700 = vmatpush.bf16.msra.mxu0 %v2686
    %9701 = vmatpush.bf16.msra.mxu0 %v2678
    %9702 = vmatmul.bf16.gmra.mxu0 %v9411
    %v9703 = vpop.f32.mrf.mxu0
    %v9704 = vadd.f32 %v9691, %v9703
    %v9705 = vpop.f32.mrf.mxu0
    %9706 = vdwg.mxu0
    %9707 = vmatpush.bf16.msra.mxu0 %v2798
    %9708 = vmatpush.bf16.msra.mxu0 %v2790
    %9709 = vmatpush.bf16.msra.mxu0 %v2782
    %9710 = vmatpush.bf16.msra.mxu0 %v2774
    %9711 = vmatpush.bf16.msra.mxu0 %v2766
    %9712 = vmatpush.bf16.msra.mxu0 %v2758
    %9713 = vmatpush.bf16.msra.mxu0 %v2750
    %9714 = vmatpush.bf16.msra.mxu0 %v2742
    %9715 = vmatmul.bf16.gmra.mxu0 %v9417
    %v9716 = vpop.f32.mrf.mxu0
    %v9717 = vadd.f32 %v9704, %v9716
    %v9718 = vpop.f32.mrf.mxu0
    %9719 = vdwg.mxu0
    %9720 = vmatpush.bf16.msra.mxu0 %v2862
    %9721 = vmatpush.bf16.msra.mxu0 %v2854
    %9722 = vmatpush.bf16.msra.mxu0 %v2846
    %9723 = vmatpush.bf16.msra.mxu0 %v2838
    %9724 = vmatpush.bf16.msra.mxu0 %v2830
    %9725 = vmatpush.bf16.msra.mxu0 %v2822
    %9726 = vmatpush.bf16.msra.mxu0 %v2814
    %9727 = vmatpush.bf16.msra.mxu0 %v2806
    %9728 = vmatmul.bf16.gmra.mxu0 %v9418
    %v9729 = vpop.f32.mrf.mxu0
    %v9730 = vadd.f32 %v9717, %v9729
    %v9731 = vpop.f32.mrf.mxu0
    %9732 = vdwg.mxu0
    %9733 = vmatpush.bf16.msra.mxu0 %v2671
    %9734 = vmatpush.bf16.msra.mxu0 %v2663
    %9735 = vmatpush.bf16.msra.mxu0 %v2655
    %9736 = vmatpush.bf16.msra.mxu0 %v2647
    %9737 = vmatpush.bf16.msra.mxu0 %v2639
    %9738 = vmatpush.bf16.msra.mxu0 %v2631
    %9739 = vmatpush.bf16.msra.mxu0 %v2623
    %9740 = vmatpush.bf16.msra.mxu0 %v2615
    %9741 = vmatmul.bf16.gmra.mxu0 %v9410
    %v9742 = vpop.f32.mrf.mxu0
    %v9743 = vadd.f32 %v1831, %v9742
    %v9744 = vpop.f32.mrf.mxu0
    %9745 = vdwg.mxu0
    %9746 = vmatpush.bf16.msra.mxu0 %v2735
    %9747 = vmatpush.bf16.msra.mxu0 %v2727
    %9748 = vmatpush.bf16.msra.mxu0 %v2719
    %9749 = vmatpush.bf16.msra.mxu0 %v2711
    %9750 = vmatpush.bf16.msra.mxu0 %v2703
    %9751 = vmatpush.bf16.msra.mxu0 %v2695
    %9752 = vmatpush.bf16.msra.mxu0 %v2687
    %9753 = vmatpush.bf16.msra.mxu0 %v2679
    %9754 = vmatmul.bf16.gmra.mxu0 %v9411
    %v9755 = vpop.f32.mrf.mxu0
    %v9756 = vadd.f32 %v9743, %v9755
    %v9757 = vpop.f32.mrf.mxu0
    %9758 = vdwg.mxu0
    %9759 = vmatpush.bf16.msra.mxu0 %v2799
    %9760 = vmatpush.bf16.msra.mxu0 %v2791
    %9761 = vmatpush.bf16.msra.mxu0 %v2783
    %9762 = vmatpush.bf16.msra.mxu0 %v2775
    %9763 = vmatpush.bf16.msra.mxu0 %v2767
    %9764 = vmatpush.bf16.msra.mxu0 %v2759
    %9765 = vmatpush.bf16.msra.mxu0 %v2751
    %9766 = vmatpush.bf16.msra.mxu0 %v2743
    %9767 = vmatmul.bf16.gmra.mxu0 %v9417
    %v9768 = vpop.f32.mrf.mxu0
    %v9769 = vadd.f32 %v9756, %v9768
    %v9770 = vpop.f32.mrf.mxu0
    %9771 = vdwg.mxu0
    %9772 = vmatpush.bf16.msra.mxu0 %v2863
    %9773 = vmatpush.bf16.msra.mxu0 %v2855
    %9774 = vmatpush.bf16.msra.mxu0 %v2847
    %9775 = vmatpush.bf16.msra.mxu0 %v2839
    %9776 = vmatpush.bf16.msra.mxu0 %v2831
    %9777 = vmatpush.bf16.msra.mxu0 %v2823
    %9778 = vmatpush.bf16.msra.mxu0 %v2815
    %9779 = vmatpush.bf16.msra.mxu0 %v2807
    %9780 = vmatmul.bf16.gmra.mxu0 %v9418
    %v9781 = vpop.f32.mrf.mxu0
    %v9782 = vadd.f32 %v9769, %v9781
    %v9783 = vpop.f32.mrf.mxu0
    %9784 = vdwg.mxu0
    %9785 = vmatpush.bf16.msra.mxu0 %v2672
    %9786 = vmatpush.bf16.msra.mxu0 %v2664
    %9787 = vmatpush.bf16.msra.mxu0 %v2656
    %9788 = vmatpush.bf16.msra.mxu0 %v2648
    %9789 = vmatpush.bf16.msra.mxu0 %v2640
    %9790 = vmatpush.bf16.msra.mxu0 %v2632
    %9791 = vmatpush.bf16.msra.mxu0 %v2624
    %9792 = vmatpush.bf16.msra.mxu0 %v2616
    %9793 = vmatmul.bf16.gmra.mxu0 %v9410
    %v9794 = vpop.f32.mrf.mxu0
    %v9795 = vadd.f32 %v1832, %v9794
    %v9796 = vpop.f32.mrf.mxu0
    %9797 = vdwg.mxu0
    %9798 = vmatpush.bf16.msra.mxu0 %v2736
    %9799 = vmatpush.bf16.msra.mxu0 %v2728
    %9800 = vmatpush.bf16.msra.mxu0 %v2720
    %9801 = vmatpush.bf16.msra.mxu0 %v2712
    %9802 = vmatpush.bf16.msra.mxu0 %v2704
    %9803 = vmatpush.bf16.msra.mxu0 %v2696
    %9804 = vmatpush.bf16.msra.mxu0 %v2688
    %9805 = vmatpush.bf16.msra.mxu0 %v2680
    %9806 = vmatmul.bf16.gmra.mxu0 %v9411
    %v9807 = vpop.f32.mrf.mxu0
    %v9808 = vadd.f32 %v9795, %v9807
    %v9809 = vpop.f32.mrf.mxu0
    %9810 = vdwg.mxu0
    %9811 = vmatpush.bf16.msra.mxu0 %v2800
    %9812 = vmatpush.bf16.msra.mxu0 %v2792
    %9813 = vmatpush.bf16.msra.mxu0 %v2784
    %9814 = vmatpush.bf16.msra.mxu0 %v2776
    %9815 = vmatpush.bf16.msra.mxu0 %v2768
    %9816 = vmatpush.bf16.msra.mxu0 %v2760
    %9817 = vmatpush.bf16.msra.mxu0 %v2752
    %9818 = vmatpush.bf16.msra.mxu0 %v2744
    %9819 = vmatmul.bf16.gmra.mxu0 %v9417
    %v9820 = vpop.f32.mrf.mxu0
    %v9821 = vadd.f32 %v9808, %v9820
    %v9822 = vpop.f32.mrf.mxu0
    %9823 = vdwg.mxu0
    %9824 = vmatpush.bf16.msra.mxu0 %v2864
    %9825 = vmatpush.bf16.msra.mxu0 %v2856
    %9826 = vmatpush.bf16.msra.mxu0 %v2848
    %9827 = vmatpush.bf16.msra.mxu0 %v2840
    %9828 = vmatpush.bf16.msra.mxu0 %v2832
    %9829 = vmatpush.bf16.msra.mxu0 %v2824
    %9830 = vmatpush.bf16.msra.mxu0 %v2816
    %9831 = vmatpush.bf16.msra.mxu0 %v2808
    %9832 = vmatmul.bf16.gmra.mxu0 %v9418
    %v9833 = vpop.f32.mrf.mxu0
    %v9834 = vadd.f32 %v9821, %v9833
    %v9835 = vpop.f32.mrf.mxu0
    %9836 = vdwg.mxu0
    %v9837 = vxor.u32 %v9470, 2147483648
    %v9838 = vxor.u32 %v9522, 2147483648
    %v9839 = vmul.f32 %v9837, 1.442695
    %v9840 = vpow.pop %v9839
    %v9841 = vmul.f32 %v9838, 1.442695
    %v9842 = vpow.pop %v9841
    %v9843 = vadd.f32 %v9840, 1.0
    %v9844 = vadd.f32 %v9842, 1.0
    %v9845 = vrcp.pop %v9843
    %v9846 = vmul.f32 %v9843, %v9845
    %v9847 = vsub.f32 1.0, %v9846
    %v9848 = vmul.f32 %v9845, %v9847
    %v9849 = vadd.f32 %v9845, %v9848
    %vm9850 = vweird.f32 %v9843
    %vm9851 = vweird.f32 %v9845
    %vm9852 = vmor %vm9850, %vm9851
    %v9853 = vsel %vm9852, %v9845, %v9849
    %v9854 = vand.u32 2147483647, %v9843
    %vm9855 = vcmp.eq.f32.partialorder %v9854, 8.507059e+37
    %v9856 = vand.u32 %v9843, 2147483648
    %v9857 = vor.u32 1.1754944e-38, %v9856
    %v9858 = vsel %vm9855, %v9857, %v9853
    %v9859 = vmul.f32 1.0, %v9858
    %v9860 = vrcp.pop %v9844
    %v9861 = vmul.f32 %v9844, %v9860
    %v9862 = vsub.f32 1.0, %v9861
    %v9863 = vmul.f32 %v9860, %v9862
    %v9864 = vadd.f32 %v9860, %v9863
    %vm9865 = vweird.f32 %v9844
    %vm9866 = vweird.f32 %v9860
    %vm9867 = vmor %vm9865, %vm9866
    %v9868 = vsel %vm9867, %v9860, %v9864
    %v9869 = vand.u32 2147483647, %v9844
    %vm9870 = vcmp.eq.f32.partialorder %v9869, 8.507059e+37
    %v9871 = vand.u32 %v9844, 2147483648
    %v9872 = vor.u32 1.1754944e-38, %v9871
    %v9873 = vsel %vm9870, %v9872, %v9868
    %v9874 = vmul.f32 1.0, %v9873
    %v9875 = vxor.u32 %v9574, 2147483648
    %v9876 = vxor.u32 %v9626, 2147483648
    %v9877 = vmul.f32 %v9875, 1.442695
    %v9878 = vpow.pop %v9877
    %v9879 = vmul.f32 %v9876, 1.442695
    %v9880 = vpow.pop %v9879
    %v9881 = vadd.f32 %v9878, 1.0
    %v9882 = vadd.f32 %v9880, 1.0
    %v9883 = vrcp.pop %v9881
    %v9884 = vmul.f32 %v9881, %v9883
    %v9885 = vsub.f32 1.0, %v9884
    %v9886 = vmul.f32 %v9883, %v9885
    %v9887 = vadd.f32 %v9883, %v9886
    %vm9888 = vweird.f32 %v9881
    %vm9889 = vweird.f32 %v9883
    %vm9890 = vmor %vm9888, %vm9889
    %v9891 = vsel %vm9890, %v9883, %v9887
    %v9892 = vand.u32 2147483647, %v9881
    %vm9893 = vcmp.eq.f32.partialorder %v9892, 8.507059e+37
    %v9894 = vand.u32 %v9881, 2147483648
    %v9895 = vor.u32 1.1754944e-38, %v9894
    %v9896 = vsel %vm9893, %v9895, %v9891
    %v9897 = vmul.f32 1.0, %v9896
    %v9898 = vrcp.pop %v9882
    %v9899 = vmul.f32 %v9882, %v9898
    %v9900 = vsub.f32 1.0, %v9899
    %v9901 = vmul.f32 %v9898, %v9900
    %v9902 = vadd.f32 %v9898, %v9901
    %vm9903 = vweird.f32 %v9882
    %vm9904 = vweird.f32 %v9898
    %vm9905 = vmor %vm9903, %vm9904
    %v9906 = vsel %vm9905, %v9898, %v9902
    %v9907 = vand.u32 2147483647, %v9882
    %vm9908 = vcmp.eq.f32.partialorder %v9907, 8.507059e+37
    %v9909 = vand.u32 %v9882, 2147483648
    %v9910 = vor.u32 1.1754944e-38, %v9909
    %v9911 = vsel %vm9908, %v9910, %v9906
    %v9912 = vmul.f32 1.0, %v9911
    %v9913 = vtanh.pop %v9678
    %v9914 = vtanh.pop %v9730
    %v9915 = vxor.u32 %v9782, 2147483648
    %v9916 = vxor.u32 %v9834, 2147483648
    %v9917 = vmul.f32 %v9915, 1.442695
    %v9918 = vpow.pop %v9917
    %v9919 = vmul.f32 %v9916, 1.442695
    %v9920 = vpow.pop %v9919
    %v9921 = vadd.f32 %v9918, 1.0
    %v9922 = vadd.f32 %v9920, 1.0
    %v9923 = vrcp.pop %v9921
    %v9924 = vmul.f32 %v9921, %v9923
    %v9925 = vsub.f32 1.0, %v9924
    %v9926 = vmul.f32 %v9923, %v9925
    %v9927 = vadd.f32 %v9923, %v9926
    %vm9928 = vweird.f32 %v9921
    %vm9929 = vweird.f32 %v9923
    %vm9930 = vmor %vm9928, %vm9929
    %v9931 = vsel %vm9930, %v9923, %v9927
    %v9932 = vand.u32 2147483647, %v9921
    %vm9933 = vcmp.eq.f32.partialorder %v9932, 8.507059e+37
    %v9934 = vand.u32 %v9921, 2147483648
    %v9935 = vor.u32 1.1754944e-38, %v9934
    %v9936 = vsel %vm9933, %v9935, %v9931
    %v9937 = vmul.f32 1.0, %v9936
    %v9938 = vrcp.pop %v9922
    %v9939 = vmul.f32 %v9922, %v9938
    %v9940 = vsub.f32 1.0, %v9939
    %v9941 = vmul.f32 %v9938, %v9940
    %v9942 = vadd.f32 %v9938, %v9941
    %vm9943 = vweird.f32 %v9922
    %vm9944 = vweird.f32 %v9938
    %vm9945 = vmor %vm9943, %vm9944
    %v9946 = vsel %vm9945, %v9938, %v9942
    %v9947 = vand.u32 2147483647, %v9922
    %vm9948 = vcmp.eq.f32.partialorder %v9947, 8.507059e+37
    %v9949 = vand.u32 %v9922, 2147483648
    %v9950 = vor.u32 1.1754944e-38, %v9949
    %v9951 = vsel %vm9948, %v9950, %v9946
    %v9952 = vmul.f32 1.0, %v9951
    %v9953 = vmul.f32 %v9897, %v9057
    %v9954 = vmul.f32 %v9912, %v9058
    %v9955 = vmul.f32 %v9859, %v9913
    %v9956 = vmul.f32 %v9874, %v9914
    %v9957 = vadd.f32 %v9953, %v9955
    %v9958 = vadd.f32 %v9954, %v9956
    %v9959 = vtanh.pop %v9957
    %v9960 = vtanh.pop %v9958
    %v9961 = vmul.f32 %v9937, %v9959
    %v9962 = vmul.f32 %v9952, %v9960
    %vm9963 = vcmp.gt.f32.partialorder %v9961, 0.0
    %vm9964 = vcmp.gt.f32.partialorder %v9962, 0.0
    %v9965 = vmul.f32 %v9961, 0.01
    %v9966 = vmul.f32 %v9962, 0.01
    %v9967 = vsel %vm9963, %v9961, %v9965
    %v9968 = vsel %vm9964, %v9962, %v9966
    %v9969 = vpack.c.bf16 %v9967, %v9967
    %v9970 = vpack.c.bf16 %v9968, %v9968
    %v9971 = vld [vmem:[%s6] sm:$0xf]
    %v9972 = vld [vmem:[%s6 + $0x4] sm:$0xf]
    %v9973 = vld [vmem:[%s6 + $0x8] sm:$0xf]
    %v9974 = vld [vmem:[%s6 + $0xc] sm:$0xf]
    %v9975 = vld [vmem:[%s6 + $0x10] sm:$0xf]
    %v9976 = vld [vmem:[%s6 + $0x14] sm:$0xf]
    %v9977 = vld [vmem:[%s6 + $0x18] sm:$0xf]
    %v9978 = vld [vmem:[%s6 + $0x1c] sm:$0xf]
    %v9979 = vld [vmem:[%s6 + $0x20] sm:$0xf]
    %v9980 = vld [vmem:[%s6 + $0x24] sm:$0xf]
    %v9981 = vld [vmem:[%s6 + $0x28] sm:$0xf]
    %v9982 = vld [vmem:[%s6 + $0x2c] sm:$0xf]
    %v9983 = vld [vmem:[%s6 + $0x30] sm:$0xf]
    %v9984 = vld [vmem:[%s6 + $0x34] sm:$0xf]
    %v9985 = vld [vmem:[%s6 + $0x38] sm:$0xf]
    %v9986 = vld [vmem:[%s6 + $0x3c] sm:$0xf]
    %v9987 = vld [vmem:[%s6 + $0x40] sm:$0xf]
    %v9988 = vld [vmem:[%s6 + $0x44] sm:$0xf]
    %v9989 = vld [vmem:[%s6 + $0x48] sm:$0xf]
    %v9990 = vld [vmem:[%s6 + $0x4c] sm:$0xf]
    %v9991 = vld [vmem:[%s6 + $0x50] sm:$0xf]
    %v9992 = vld [vmem:[%s6 + $0x54] sm:$0xf]
    %v9993 = vld [vmem:[%s6 + $0x58] sm:$0xf]
    %v9994 = vld [vmem:[%s6 + $0x5c] sm:$0xf]
    %v9995 = vld [vmem:[%s6 + $0x60] sm:$0xf]
    %v9996 = vld [vmem:[%s6 + $0x64] sm:$0xf]
    %v9997 = vld [vmem:[%s6 + $0x68] sm:$0xf]
    %v9998 = vld [vmem:[%s6 + $0x6c] sm:$0xf]
    %v9999 = vld [vmem:[%s6 + $0x70] sm:$0xf]
    %v10000 = vld [vmem:[%s6 + $0x74] sm:$0xf]
    %v10001 = vld [vmem:[%s6 + $0x78] sm:$0xf]
    %v10002 = vld [vmem:[%s6 + $0x7c] sm:$0xf]
    %v10003 = vld [vmem:[%s7] sm:$0x1]
    %v10005 = vperm.slane %v10003, 0
    %v10039 = vunpack.c.l.b16 %v9971
    %v10040 = vunpack.c.l.b16 %v9972
    %v10041 = vunpack.c.l.b16 %v9973
    %v10042 = vunpack.c.l.b16 %v9974
    %v10043 = vunpack.c.l.b16 %v9975
    %v10044 = vunpack.c.l.b16 %v9976
    %v10045 = vunpack.c.l.b16 %v9977
    %v10046 = vunpack.c.l.b16 %v9978
    %v10047 = vunpack.c.l.b16 %v9979
    %v10048 = vunpack.c.l.b16 %v9980
    %v10049 = vunpack.c.l.b16 %v9981
    %v10050 = vunpack.c.l.b16 %v9982
    %v10051 = vunpack.c.l.b16 %v9983
    %v10052 = vunpack.c.l.b16 %v9984
    %v10053 = vunpack.c.l.b16 %v9985
    %v10054 = vunpack.c.l.b16 %v9986
    %v10055 = vunpack.c.l.b16 %v9987
    %v10056 = vunpack.c.l.b16 %v9988
    %v10057 = vunpack.c.l.b16 %v9989
    %v10058 = vunpack.c.l.b16 %v9990
    %v10059 = vunpack.c.l.b16 %v9991
    %v10060 = vunpack.c.l.b16 %v9992
    %v10061 = vunpack.c.l.b16 %v9993
    %v10062 = vunpack.c.l.b16 %v9994
    %v10063 = vunpack.c.l.b16 %v9995
    %v10064 = vunpack.c.l.b16 %v9996
    %v10065 = vunpack.c.l.b16 %v9997
    %v10066 = vunpack.c.l.b16 %v9998
    %v10067 = vunpack.c.l.b16 %v9999
    %v10068 = vunpack.c.l.b16 %v10000
    %v10069 = vunpack.c.l.b16 %v10001
    %v10070 = vunpack.c.l.b16 %v10002
    %v10071 = vpack.c.b16 %v10040, %v10039
    %v10072 = vpack.c.b16 %v10042, %v10041
    %v10073 = vpack.c.b16 %v10044, %v10043
    %v10074 = vpack.c.b16 %v10046, %v10045
    %v10075 = vpack.c.b16 %v10048, %v10047
    %v10076 = vpack.c.b16 %v10050, %v10049
    %v10077 = vpack.c.b16 %v10052, %v10051
    %v10078 = vpack.c.b16 %v10054, %v10053
    %v10079 = vpack.c.b16 %v10056, %v10055
    %v10080 = vpack.c.b16 %v10058, %v10057
    %v10081 = vpack.c.b16 %v10060, %v10059
    %v10082 = vpack.c.b16 %v10062, %v10061
    %v10083 = vpack.c.b16 %v10064, %v10063
    %v10084 = vpack.c.b16 %v10066, %v10065
    %v10085 = vpack.c.b16 %v10068, %v10067
    %v10086 = vpack.c.b16 %v10070, %v10069
    %10103 = vmatpush.bf16.msra.mxu0 %v10078
    %10104 = vmatpush.bf16.msra.mxu0 %v10077
    %10105 = vmatpush.bf16.msra.mxu0 %v10076
    %10106 = vmatpush.bf16.msra.mxu0 %v10075
    %10107 = vmatpush.bf16.msra.mxu0 %v10074
    %10108 = vmatpush.bf16.msra.mxu0 %v10073
    %10109 = vmatpush.bf16.msra.mxu0 %v10072
    %10110 = vmatpush.bf16.msra.mxu0 %v10071
    %10111 = vmatmul.bf16.gmra.mxu0 %v9969
    %v10112 = vpop.f32.mrf.mxu0
    %v10113 = vadd.f32 %v10005, %v10112
    %v10114 = vpop.f32.mrf.mxu0
    %10115 = vdwg.mxu0
    %10116 = vmatpush.bf16.msra.mxu0 %v10086
    %10117 = vmatpush.bf16.msra.mxu0 %v10085
    %10118 = vmatpush.bf16.msra.mxu0 %v10084
    %10119 = vmatpush.bf16.msra.mxu0 %v10083
    %10120 = vmatpush.bf16.msra.mxu0 %v10082
    %10121 = vmatpush.bf16.msra.mxu0 %v10081
    %10122 = vmatpush.bf16.msra.mxu0 %v10080
    %10123 = vmatpush.bf16.msra.mxu0 %v10079
    %10124 = vmatmul.bf16.gmra.mxu0 %v9970
    %v10125 = vpop.f32.mrf.mxu0
    %v10126 = vadd.f32 %v10113, %v10125
    %v10127 = vpop.f32.mrf.mxu0
    %10128 = vdwg.mxu0
    %v10129 = vmul.f32 %v10126, %v10126
    %v10130 = vsel %vm204, %v10129, 0.0
    %10131 = vadd.xlane.f32.xlu0 %v10130
    %v10132 = vpop.xlane.xlu0 %10131
    %v10133 = vmax.f32 %v10132, 1e-24
    %v10134 = vrsqrt.pop %v10133
    %v10135 = vmul.f32 %v10134, %v10133
    %v10136 = vmul.f32 %v10135, %v10134
    %v10137 = vmul.f32 0.5, %v10136
    %v10138 = vsub.f32 1.5, %v10137
    %v10139 = vmul.f32 %v10134, %v10138
    %vm10140 = vweird.f32 %v10133
    %vm10141 = vweird.f32 %v10134
    %vm10142 = vmor %vm10140, %vm10141
    %v10143 = vsel %vm10142, %v10134, %v10139
    %v10144 = vmul.f32 %v10126, %v10143
    %10145 = vst.msk [vmem:[%s8] sm:$0xff] %vm204, %v10144
    // Predicated region
    $region42: #{lstm_forward.1} parent=1 // pred_check
      _
    $region43: #{lstm_forward.1} parent=1 // pred_check_branch
      %10147 = sbr.rel (0) target = $region45
    $region44: #{lstm_forward.1} parent=1 // pred_region
      _
    $region45: #{lstm_forward.1} parent=1 // pred_fallthru
      _
    // Predicated region
    $region46: #{lstm_forward.1} parent=1 // pred_check
      _
    $region47: #{lstm_forward.1} parent=1 // pred_check_branch
      %10149 = sbr.rel (0) target = $region49
    $region48: #{lstm_forward.1} parent=1 // pred_region
      _
    $region49: #{lstm_forward.1} parent=1 // pred_fallthru
      _
    %10150 = vsyncpa [#allocation3], 1
    %10151 = vsyncpa [#allocation5], 1

</llo_original>
